<compile_context>
chip_gen: v5e
topology: v5e:2x2
jax: 0.10.0
libtpu: 0.0.40
codegen_flags: <defaults>
</compile_context>

<pallas_src>
import math
import functools

import jax
import jax.numpy as jnp
from jax.experimental import pallas as pl
from jax.experimental.pallas import tpu as pltpu  # noqa: F401  (TPU backend)


# ----------------------------------------------------------------------------
# Fully fused forward-pass kernel
# ----------------------------------------------------------------------------
def _fused_transformer_kernel(*refs, batch, seq, nhead, n_enc, n_dec, d_model):
    """refs = (src2d, pe2d, *flat_params, out).  Everything runs in one invocation."""
    out_ref = refs[-1]
    it = iter(refs[:-1])
    src = next(it)[...]   # (B*S, input_dim)
    pe = next(it)[...]    # (B*S, D)

    def nxt():
        return next(it)[...]

    D = d_model
    dh = D // nhead
    scale = 1.0 / math.sqrt(dh)

    def dot32(a, b):
        return jnp.dot(a, b, preferred_element_type=jnp.float32)

    def linear(x, act=None):
        w = nxt()
        b = nxt()
        y = dot32(x, w) + b
        if act == "relu":                      # nn.Transformer default activation
            y = jnp.maximum(y, 0.0)
        elif act == "leaky_relu":              # PyTorch default negative_slope=0.01
            y = jnp.where(y >= 0.0, y, 0.01 * y)
        return y

    def layernorm(x, eps=1e-5):
        g = nxt()
        b = nxt()
        mu = jnp.mean(x, axis=-1, keepdims=True)
        c = x - mu
        var = jnp.mean(c * c, axis=-1, keepdims=True)
        return c * jax.lax.rsqrt(var + eps) * g + b

    def sdpa(q, k, v, sq, sk):
        """All heads, all batches; output projection folded into per-head accumulation."""
        wo = nxt()
        bo = nxt()
        acc = None
        for h in range(nhead):
            cols = slice(h * dh, (h + 1) * dh)
            qh = q[:, cols].reshape(batch, sq, dh)
            kh = k[:, cols].reshape(batch, sk, dh)
            vh = v[:, cols].reshape(batch, sk, dh)
            s = jnp.einsum("bqd,bkd->bqk", qh, kh,
                           preferred_element_type=jnp.float32) * scale
            m = jnp.max(s, axis=-1, keepdims=True)
            p = jnp.exp(s - m)
            p = p * pl.reciprocal(jnp.sum(p, axis=-1, keepdims=True), approx=True)
            oh = jnp.einsum("bqk,bkd->bqd", p, vh,
                            preferred_element_type=jnp.float32)
            contrib = dot32(oh.reshape(batch * sq, dh), wo[cols, :])
            acc = contrib if acc is None else acc + contrib
        return acc + bo

    def self_attn(x):
        qkv = linear(x)                                   # fused (D, 3D) projection
        return sdpa(qkv[:, :D], qkv[:, D:2 * D], qkv[:, 2 * D:], seq, seq)

    def cross_attn(x, memory):
        q = linear(x)                                     # (D, D)
        kv = linear(memory)                               # fused (D, 2D)
        return sdpa(q, kv[:, :D], kv[:, D:], seq, seq)

    # input projection + positional encoding
    x = linear(src) + pe

    # encoder (post-norm layers + final encoder LayerNorm, as in nn.Transformer)
    mem = x
    for _ in range(n_enc):
        mem = layernorm(mem + self_attn(mem))
        ff = linear(mem, act="relu")
        ff = linear(ff)
        mem = layernorm(mem + ff)
    mem = layernorm(mem)

    # decoder (self-attn, cross-attn, FFN; final decoder LayerNorm)
    y = x                                                 # tgt = src.clone()
    for _ in range(n_dec):
        y = layernorm(y + self_attn(y))
        y = layernorm(y + cross_attn(y, mem))
        ff = linear(y, act="relu")
        ff = linear(ff)
        y = layernorm(y + ff)
    y = layernorm(y)

    # output head: 64 -> 32 -> 1 with LeakyReLU, intermediates stay in VMEM
    h = linear(y, act="leaky_relu")
    h = linear(h, act="leaky_relu")
    out_ref[...] = linear(h).astype(out_ref.dtype)


# ----------------------------------------------------------------------------
# Wrapper (jitted) — builds PE, flattens params, single pallas_call
# ----------------------------------------------------------------------------
def positional_encoding(seq_len, d_model):
    position = jnp.arange(seq_len, dtype=jnp.float32)[:, None]
    div_term = jnp.exp(
        jnp.arange(0, d_model, 2, dtype=jnp.float32) * (-math.log(10000.0) / d_model)
    )
    pe = jnp.zeros((seq_len, d_model), jnp.float32)
    pe = pe.at[:, 0::2].set(jnp.sin(position * div_term))
    pe = pe.at[:, 1::2].set(jnp.cos(position * div_term))
    return pe


def _flatten_params(params):
    """Flat parameter list in the exact order the kernel consumes it."""
    flat = []
    flat += list(params["in_proj"])
    for lp in params["enc"]:
        flat += list(lp["qkv"]) + list(lp["out"]) + list(lp["ln1"])
        flat += list(lp["ff1"]) + list(lp["ff2"]) + list(lp["ln2"])
    flat += list(params["enc_norm"])
    for lp in params["dec"]:
        flat += list(lp["sqkv"]) + list(lp["sout"]) + list(lp["ln1"])
        flat += list(lp["cq"]) + list(lp["ckv"]) + list(lp["cout"]) + list(lp["ln2"])
        flat += list(lp["ff1"]) + list(lp["ff2"]) + list(lp["ln3"])
    flat += list(params["dec_norm"])
    for wb in params["out"]:
        flat += list(wb)
    return flat


@functools.partial(jax.jit, static_argnames=("nhead",))
def time_series_transformer(src, params, *, nhead):
    B, S, in_dim = src.shape
    D = params["in_proj"][0].shape[1]
    n_enc = len(params["enc"])
    n_dec = len(params["dec"])

    src2d = src.reshape(B * S, in_dim)
    pe2d = jnp.broadcast_to(positional_encoding(S, D)[None], (B, S, D)).reshape(B * S, D)
    flat = _flatten_params(params)

    kernel = functools.partial(
        _fused_transformer_kernel,
        batch=B, seq=S, nhead=nhead, n_enc=n_enc, n_dec=n_dec, d_model=D,
    )
    out = pl.pallas_call(
        kernel,
        out_shape=jax.ShapeDtypeStruct((B * S, 1), jnp.float32),
    )(src2d, pe2d, *flat)
    return out.reshape(B, S, 1)


# ----------------------------------------------------------------------------
# Deterministic parameter initialization (fused QKV / KV weight layouts)
# ----------------------------------------------------------------------------
def init_params(key, input_dim, d_model, nhead, n_enc, n_dec, d_ff):
    keys = iter(jax.random.split(key, 256))

    def lin(fi, fo):
        w = jax.random.normal(next(keys), (fi, fo), jnp.float32) / math.sqrt(fi)
        b = jax.random.normal(next(keys), (1, fo), jnp.float32) * 0.02
        return w, b

    def ln():
        return (jnp.ones((1, d_model), jnp.float32), jnp.zeros((1, d_model), jnp.float32))

    params = {"in_proj": lin(input_dim, d_model)}
    params["enc"] = [
        dict(qkv=lin(d_model, 3 * d_model), out=lin(d_model, d_model), ln1=ln(),
             ff1=lin(d_model, d_ff), ff2=lin(d_ff, d_model), ln2=ln())
        for _ in range(n_enc)
    ]
    params["enc_norm"] = ln()
    params["dec"] = [
        dict(sqkv=lin(d_model, 3 * d_model), sout=lin(d_model, d_model), ln1=ln(),
             cq=lin(d_model, d_model), ckv=lin(d_model, 2 * d_model),
             cout=lin(d_model, d_model), ln2=ln(),
             ff1=lin(d_model, d_ff), ff2=lin(d_ff, d_model), ln3=ln())
        for _ in range(n_dec)
    ]
    params["dec_norm"] = ln()
    params["out"] = [lin(d_model, 64), lin(64, 32), lin(32, 1)]
    return params


# ----------------------------------------------------------------------------
if __name__ == "__main__":
    B, S = 2, 8
    input_dim, d_model, nhead = 4, 32, 4
    n_enc, n_dec, d_ff = 2, 2, 64

    src = jax.random.normal(jax.random.PRNGKey(0), (B, S, input_dim), jnp.float32)
    params = init_params(jax.random.PRNGKey(42), input_dim, d_model, nhead, n_enc, n_dec, d_ff)

    out = time_series_transformer(src, params, nhead=nhead)
    out = jax.block_until_ready(out)
    assert out.shape == (B, S, 1) and out.dtype == jnp.float32
    assert bool(jnp.all(jnp.isfinite(out)))
    print("KERNEL_OK")
</pallas_src>

<mosaic_0001>
module attributes {stable_mosaic.version = 11 : i64} {
  func.func @_fused_transformer_kernel(%arg0: memref<16x4xf32, #tpu.memory_space<vmem>>, %arg1: memref<16x32xf32, #tpu.memory_space<vmem>>, %arg2: memref<4x32xf32, #tpu.memory_space<vmem>>, %arg3: memref<1x32xf32, #tpu.memory_space<vmem>>, %arg4: memref<32x96xf32, #tpu.memory_space<vmem>>, %arg5: memref<1x96xf32, #tpu.memory_space<vmem>>, %arg6: memref<32x32xf32, #tpu.memory_space<vmem>>, %arg7: memref<1x32xf32, #tpu.memory_space<vmem>>, %arg8: memref<1x32xf32, #tpu.memory_space<vmem>>, %arg9: memref<1x32xf32, #tpu.memory_space<vmem>>, %arg10: memref<32x64xf32, #tpu.memory_space<vmem>>, %arg11: memref<1x64xf32, #tpu.memory_space<vmem>>, %arg12: memref<64x32xf32, #tpu.memory_space<vmem>>, %arg13: memref<1x32xf32, #tpu.memory_space<vmem>>, %arg14: memref<1x32xf32, #tpu.memory_space<vmem>>, %arg15: memref<1x32xf32, #tpu.memory_space<vmem>>, %arg16: memref<32x96xf32, #tpu.memory_space<vmem>>, %arg17: memref<1x96xf32, #tpu.memory_space<vmem>>, %arg18: memref<32x32xf32, #tpu.memory_space<vmem>>, %arg19: memref<1x32xf32, #tpu.memory_space<vmem>>, %arg20: memref<1x32xf32, #tpu.memory_space<vmem>>, %arg21: memref<1x32xf32, #tpu.memory_space<vmem>>, %arg22: memref<32x64xf32, #tpu.memory_space<vmem>>, %arg23: memref<1x64xf32, #tpu.memory_space<vmem>>, %arg24: memref<64x32xf32, #tpu.memory_space<vmem>>, %arg25: memref<1x32xf32, #tpu.memory_space<vmem>>, %arg26: memref<1x32xf32, #tpu.memory_space<vmem>>, %arg27: memref<1x32xf32, #tpu.memory_space<vmem>>, %arg28: memref<1x32xf32, #tpu.memory_space<vmem>>, %arg29: memref<1x32xf32, #tpu.memory_space<vmem>>, %arg30: memref<32x96xf32, #tpu.memory_space<vmem>>, %arg31: memref<1x96xf32, #tpu.memory_space<vmem>>, %arg32: memref<32x32xf32, #tpu.memory_space<vmem>>, %arg33: memref<1x32xf32, #tpu.memory_space<vmem>>, %arg34: memref<1x32xf32, #tpu.memory_space<vmem>>, %arg35: memref<1x32xf32, #tpu.memory_space<vmem>>, %arg36: memref<32x32xf32, #tpu.memory_space<vmem>>, %arg37: memref<1x32xf32, #tpu.memory_space<vmem>>, %arg38: memref<32x64xf32, #tpu.memory_space<vmem>>, %arg39: memref<1x64xf32, #tpu.memory_space<vmem>>, %arg40: memref<32x32xf32, #tpu.memory_space<vmem>>, %arg41: memref<1x32xf32, #tpu.memory_space<vmem>>, %arg42: memref<1x32xf32, #tpu.memory_space<vmem>>, %arg43: memref<1x32xf32, #tpu.memory_space<vmem>>, %arg44: memref<32x64xf32, #tpu.memory_space<vmem>>, %arg45: memref<1x64xf32, #tpu.memory_space<vmem>>, %arg46: memref<64x32xf32, #tpu.memory_space<vmem>>, %arg47: memref<1x32xf32, #tpu.memory_space<vmem>>, %arg48: memref<1x32xf32, #tpu.memory_space<vmem>>, %arg49: memref<1x32xf32, #tpu.memory_space<vmem>>, %arg50: memref<32x96xf32, #tpu.memory_space<vmem>>, %arg51: memref<1x96xf32, #tpu.memory_space<vmem>>, %arg52: memref<32x32xf32, #tpu.memory_space<vmem>>, %arg53: memref<1x32xf32, #tpu.memory_space<vmem>>, %arg54: memref<1x32xf32, #tpu.memory_space<vmem>>, %arg55: memref<1x32xf32, #tpu.memory_space<vmem>>, %arg56: memref<32x32xf32, #tpu.memory_space<vmem>>, %arg57: memref<1x32xf32, #tpu.memory_space<vmem>>, %arg58: memref<32x64xf32, #tpu.memory_space<vmem>>, %arg59: memref<1x64xf32, #tpu.memory_space<vmem>>, %arg60: memref<32x32xf32, #tpu.memory_space<vmem>>, %arg61: memref<1x32xf32, #tpu.memory_space<vmem>>, %arg62: memref<1x32xf32, #tpu.memory_space<vmem>>, %arg63: memref<1x32xf32, #tpu.memory_space<vmem>>, %arg64: memref<32x64xf32, #tpu.memory_space<vmem>>, %arg65: memref<1x64xf32, #tpu.memory_space<vmem>>, %arg66: memref<64x32xf32, #tpu.memory_space<vmem>>, %arg67: memref<1x32xf32, #tpu.memory_space<vmem>>, %arg68: memref<1x32xf32, #tpu.memory_space<vmem>>, %arg69: memref<1x32xf32, #tpu.memory_space<vmem>>, %arg70: memref<1x32xf32, #tpu.memory_space<vmem>>, %arg71: memref<1x32xf32, #tpu.memory_space<vmem>>, %arg72: memref<32x64xf32, #tpu.memory_space<vmem>>, %arg73: memref<1x64xf32, #tpu.memory_space<vmem>>, %arg74: memref<64x32xf32, #tpu.memory_space<vmem>>, %arg75: memref<1x32xf32, #tpu.memory_space<vmem>>, %arg76: memref<32x1xf32, #tpu.memory_space<vmem>>, %arg77: memref<1x1xf32, #tpu.memory_space<vmem>>, %arg78: memref<16x1xf32, #tpu.memory_space<vmem>>) attributes {dimension_semantics = [], scalar_prefetch = 0 : i64, scratch_operands = 0 : i64, tpu.core_type = #tpu.core_type<tc>} {
    %c0 = arith.constant 0 : index
    %c0_0 = arith.constant 0 : index
    %0 = vector.load %arg0[%c0, %c0_0] : memref<16x4xf32, #tpu.memory_space<vmem>>, vector<16x4xf32>
    %c0_1 = arith.constant 0 : index
    %c0_2 = arith.constant 0 : index
    %1 = vector.load %arg1[%c0_1, %c0_2] : memref<16x32xf32, #tpu.memory_space<vmem>>, vector<16x32xf32>
    %c0_3 = arith.constant 0 : index
    %c0_4 = arith.constant 0 : index
    %2 = vector.load %arg2[%c0_3, %c0_4] : memref<4x32xf32, #tpu.memory_space<vmem>>, vector<4x32xf32>
    %c0_5 = arith.constant 0 : index
    %c0_6 = arith.constant 0 : index
    %3 = vector.load %arg3[%c0_5, %c0_6] : memref<1x32xf32, #tpu.memory_space<vmem>>, vector<1x32xf32>
    %cst = arith.constant dense<0.000000e+00> : vector<16x32xf32>
    %4 = tpu.matmul %0, %2, %cst {dimension_numbers = #tpu.dot_dimension_numbers<[1], [0], [0], [1], [0, 0, 1, 1], [], []>} : vector<16x4xf32>, vector<4x32xf32>, vector<16x32xf32> -> vector<16x32xf32>
    %5 = vector.broadcast %3 : vector<1x32xf32> to vector<16x32xf32>
    %6 = arith.addf %4, %5 : vector<16x32xf32>
    %7 = arith.addf %6, %1 : vector<16x32xf32>
    %c0_7 = arith.constant 0 : index
    %c0_8 = arith.constant 0 : index
    %8 = vector.load %arg4[%c0_7, %c0_8] : memref<32x96xf32, #tpu.memory_space<vmem>>, vector<32x96xf32>
    %c0_9 = arith.constant 0 : index
    %c0_10 = arith.constant 0 : index
    %9 = vector.load %arg5[%c0_9, %c0_10] : memref<1x96xf32, #tpu.memory_space<vmem>>, vector<1x96xf32>
    %cst_11 = arith.constant dense<0.000000e+00> : vector<16x96xf32>
    %10 = tpu.matmul %7, %8, %cst_11 {dimension_numbers = #tpu.dot_dimension_numbers<[1], [0], [0], [1], [0, 0, 1, 1], [], []>} : vector<16x32xf32>, vector<32x96xf32>, vector<16x96xf32> -> vector<16x96xf32>
    %11 = vector.broadcast %9 : vector<1x96xf32> to vector<16x96xf32>
    %12 = arith.addf %10, %11 : vector<16x96xf32>
    %13 = vector.extract_strided_slice %12 {offsets = [0, 0], sizes = [16, 32], strides = [1, 1]} : vector<16x96xf32> to vector<16x32xf32>
    %14 = vector.extract_strided_slice %12 {offsets = [0, 32], sizes = [16, 32], strides = [1, 1]} : vector<16x96xf32> to vector<16x32xf32>
    %15 = vector.extract_strided_slice %12 {offsets = [0, 64], sizes = [16, 32], strides = [1, 1]} : vector<16x96xf32> to vector<16x32xf32>
    %c0_12 = arith.constant 0 : index
    %c0_13 = arith.constant 0 : index
    %16 = vector.load %arg6[%c0_12, %c0_13] : memref<32x32xf32, #tpu.memory_space<vmem>>, vector<32x32xf32>
    %c0_14 = arith.constant 0 : index
    %c0_15 = arith.constant 0 : index
    %17 = vector.load %arg7[%c0_14, %c0_15] : memref<1x32xf32, #tpu.memory_space<vmem>>, vector<1x32xf32>
    %18 = vector.extract_strided_slice %13 {offsets = [0, 0], sizes = [16, 8], strides = [1, 1]} : vector<16x32xf32> to vector<16x8xf32>
    %19 = vector.shape_cast %18 : vector<16x8xf32> to vector<2x8x8xf32>
    %20 = vector.extract_strided_slice %14 {offsets = [0, 0], sizes = [16, 8], strides = [1, 1]} : vector<16x32xf32> to vector<16x8xf32>
    %21 = vector.shape_cast %20 : vector<16x8xf32> to vector<2x8x8xf32>
    %22 = vector.extract_strided_slice %15 {offsets = [0, 0], sizes = [16, 8], strides = [1, 1]} : vector<16x32xf32> to vector<16x8xf32>
    %23 = vector.shape_cast %22 : vector<16x8xf32> to vector<2x8x8xf32>
    "tpu.trace_start"() <{level = 10 : i32, message = "bqd,bkd->bqk"}> : () -> ()
    %cst_16 = arith.constant dense<0.000000e+00> : vector<2x8x8xf32>
    %24 = tpu.matmul %19, %21, %cst_16 {dimension_numbers = #tpu.dot_dimension_numbers<[2], [2], [1], [1], [0, 0, 0, 1, 1, 1], [0], [0]>} : vector<2x8x8xf32>, vector<2x8x8xf32>, vector<2x8x8xf32> -> vector<2x8x8xf32>
    "tpu.trace_stop"() : () -> ()
    %cst_17 = arith.constant 0.353553385 : f32
    %25 = vector.broadcast %cst_17 : f32 to vector<2x8x8xf32>
    %26 = arith.mulf %24, %25 : vector<2x8x8xf32>
    %cst_18 = arith.constant dense<0xFF800000> : vector<2x8xf32>
    %27 = vector.multi_reduction <maximumf>, %26, %cst_18 [2] : vector<2x8x8xf32> to vector<2x8xf32>
    %28 = vector.shape_cast %27 : vector<2x8xf32> to vector<2x8x1xf32>
    %29 = vector.broadcast %28 : vector<2x8x1xf32> to vector<2x8x8xf32>
    %30 = arith.subf %26, %29 : vector<2x8x8xf32>
    %31 = math.exp %30 : vector<2x8x8xf32>
    %cst_19 = arith.constant dense<0.000000e+00> : vector<2x8xf32>
    %32 = vector.multi_reduction <add>, %31, %cst_19 [2] : vector<2x8x8xf32> to vector<2x8xf32>
    %33 = vector.shape_cast %32 : vector<2x8xf32> to vector<2x8x1xf32>
    %34 = tpu.reciprocal %33 {approx = true} : vector<2x8x1xf32> -> vector<2x8x1xf32>
    %35 = vector.broadcast %34 : vector<2x8x1xf32> to vector<2x8x8xf32>
    %36 = arith.mulf %31, %35 : vector<2x8x8xf32>
    "tpu.trace_start"() <{level = 10 : i32, message = "bqk,bkd->bqd"}> : () -> ()
    %cst_20 = arith.constant dense<0.000000e+00> : vector<2x8x8xf32>
    %37 = tpu.matmul %36, %23, %cst_20 {dimension_numbers = #tpu.dot_dimension_numbers<[2], [1], [1], [2], [0, 0, 0, 1, 1, 2], [0], [0]>} : vector<2x8x8xf32>, vector<2x8x8xf32>, vector<2x8x8xf32> -> vector<2x8x8xf32>
    "tpu.trace_stop"() : () -> ()
    %38 = vector.shape_cast %37 : vector<2x8x8xf32> to vector<16x8xf32>
    %39 = vector.extract_strided_slice %16 {offsets = [0, 0], sizes = [8, 32], strides = [1, 1]} : vector<32x32xf32> to vector<8x32xf32>
    %cst_21 = arith.constant dense<0.000000e+00> : vector<16x32xf32>
    %40 = tpu.matmul %38, %39, %cst_21 {dimension_numbers = #tpu.dot_dimension_numbers<[1], [0], [0], [1], [0, 0, 1, 1], [], []>} : vector<16x8xf32>, vector<8x32xf32>, vector<16x32xf32> -> vector<16x32xf32>
    %41 = vector.extract_strided_slice %13 {offsets = [0, 8], sizes = [16, 8], strides = [1, 1]} : vector<16x32xf32> to vector<16x8xf32>
    %42 = vector.shape_cast %41 : vector<16x8xf32> to vector<2x8x8xf32>
    %43 = vector.extract_strided_slice %14 {offsets = [0, 8], sizes = [16, 8], strides = [1, 1]} : vector<16x32xf32> to vector<16x8xf32>
    %44 = vector.shape_cast %43 : vector<16x8xf32> to vector<2x8x8xf32>
    %45 = vector.extract_strided_slice %15 {offsets = [0, 8], sizes = [16, 8], strides = [1, 1]} : vector<16x32xf32> to vector<16x8xf32>
    %46 = vector.shape_cast %45 : vector<16x8xf32> to vector<2x8x8xf32>
    "tpu.trace_start"() <{level = 10 : i32, message = "bqd,bkd->bqk"}> : () -> ()
    %cst_22 = arith.constant dense<0.000000e+00> : vector<2x8x8xf32>
    %47 = tpu.matmul %42, %44, %cst_22 {dimension_numbers = #tpu.dot_dimension_numbers<[2], [2], [1], [1], [0, 0, 0, 1, 1, 1], [0], [0]>} : vector<2x8x8xf32>, vector<2x8x8xf32>, vector<2x8x8xf32> -> vector<2x8x8xf32>
    "tpu.trace_stop"() : () -> ()
    %cst_23 = arith.constant 0.353553385 : f32
    %48 = vector.broadcast %cst_23 : f32 to vector<2x8x8xf32>
    %49 = arith.mulf %47, %48 : vector<2x8x8xf32>
    %cst_24 = arith.constant dense<0xFF800000> : vector<2x8xf32>
    %50 = vector.multi_reduction <maximumf>, %49, %cst_24 [2] : vector<2x8x8xf32> to vector<2x8xf32>
    %51 = vector.shape_cast %50 : vector<2x8xf32> to vector<2x8x1xf32>
    %52 = vector.broadcast %51 : vector<2x8x1xf32> to vector<2x8x8xf32>
    %53 = arith.subf %49, %52 : vector<2x8x8xf32>
    %54 = math.exp %53 : vector<2x8x8xf32>
    %cst_25 = arith.constant dense<0.000000e+00> : vector<2x8xf32>
    %55 = vector.multi_reduction <add>, %54, %cst_25 [2] : vector<2x8x8xf32> to vector<2x8xf32>
    %56 = vector.shape_cast %55 : vector<2x8xf32> to vector<2x8x1xf32>
    %57 = tpu.reciprocal %56 {approx = true} : vector<2x8x1xf32> -> vector<2x8x1xf32>
    %58 = vector.broadcast %57 : vector<2x8x1xf32> to vector<2x8x8xf32>
    %59 = arith.mulf %54, %58 : vector<2x8x8xf32>
    "tpu.trace_start"() <{level = 10 : i32, message = "bqk,bkd->bqd"}> : () -> ()
    %cst_26 = arith.constant dense<0.000000e+00> : vector<2x8x8xf32>
    %60 = tpu.matmul %59, %46, %cst_26 {dimension_numbers = #tpu.dot_dimension_numbers<[2], [1], [1], [2], [0, 0, 0, 1, 1, 2], [0], [0]>} : vector<2x8x8xf32>, vector<2x8x8xf32>, vector<2x8x8xf32> -> vector<2x8x8xf32>
    "tpu.trace_stop"() : () -> ()
    %61 = vector.shape_cast %60 : vector<2x8x8xf32> to vector<16x8xf32>
    %62 = vector.extract_strided_slice %16 {offsets = [8, 0], sizes = [8, 32], strides = [1, 1]} : vector<32x32xf32> to vector<8x32xf32>
    %cst_27 = arith.constant dense<0.000000e+00> : vector<16x32xf32>
    %63 = tpu.matmul %61, %62, %cst_27 {dimension_numbers = #tpu.dot_dimension_numbers<[1], [0], [0], [1], [0, 0, 1, 1], [], []>} : vector<16x8xf32>, vector<8x32xf32>, vector<16x32xf32> -> vector<16x32xf32>
    %64 = arith.addf %40, %63 : vector<16x32xf32>
    %65 = vector.extract_strided_slice %13 {offsets = [0, 16], sizes = [16, 8], strides = [1, 1]} : vector<16x32xf32> to vector<16x8xf32>
    %66 = vector.shape_cast %65 : vector<16x8xf32> to vector<2x8x8xf32>
    %67 = vector.extract_strided_slice %14 {offsets = [0, 16], sizes = [16, 8], strides = [1, 1]} : vector<16x32xf32> to vector<16x8xf32>
    %68 = vector.shape_cast %67 : vector<16x8xf32> to vector<2x8x8xf32>
    %69 = vector.extract_strided_slice %15 {offsets = [0, 16], sizes = [16, 8], strides = [1, 1]} : vector<16x32xf32> to vector<16x8xf32>
    %70 = vector.shape_cast %69 : vector<16x8xf32> to vector<2x8x8xf32>
    "tpu.trace_start"() <{level = 10 : i32, message = "bqd,bkd->bqk"}> : () -> ()
    %cst_28 = arith.constant dense<0.000000e+00> : vector<2x8x8xf32>
    %71 = tpu.matmul %66, %68, %cst_28 {dimension_numbers = #tpu.dot_dimension_numbers<[2], [2], [1], [1], [0, 0, 0, 1, 1, 1], [0], [0]>} : vector<2x8x8xf32>, vector<2x8x8xf32>, vector<2x8x8xf32> -> vector<2x8x8xf32>
    "tpu.trace_stop"() : () -> ()
    %cst_29 = arith.constant 0.353553385 : f32
    %72 = vector.broadcast %cst_29 : f32 to vector<2x8x8xf32>
    %73 = arith.mulf %71, %72 : vector<2x8x8xf32>
    %cst_30 = arith.constant dense<0xFF800000> : vector<2x8xf32>
    %74 = vector.multi_reduction <maximumf>, %73, %cst_30 [2] : vector<2x8x8xf32> to vector<2x8xf32>
    %75 = vector.shape_cast %74 : vector<2x8xf32> to vector<2x8x1xf32>
    %76 = vector.broadcast %75 : vector<2x8x1xf32> to vector<2x8x8xf32>
    %77 = arith.subf %73, %76 : vector<2x8x8xf32>
    %78 = math.exp %77 : vector<2x8x8xf32>
    %cst_31 = arith.constant dense<0.000000e+00> : vector<2x8xf32>
    %79 = vector.multi_reduction <add>, %78, %cst_31 [2] : vector<2x8x8xf32> to vector<2x8xf32>
    %80 = vector.shape_cast %79 : vector<2x8xf32> to vector<2x8x1xf32>
    %81 = tpu.reciprocal %80 {approx = true} : vector<2x8x1xf32> -> vector<2x8x1xf32>
    %82 = vector.broadcast %81 : vector<2x8x1xf32> to vector<2x8x8xf32>
    %83 = arith.mulf %78, %82 : vector<2x8x8xf32>
    "tpu.trace_start"() <{level = 10 : i32, message = "bqk,bkd->bqd"}> : () -> ()
    %cst_32 = arith.constant dense<0.000000e+00> : vector<2x8x8xf32>
    %84 = tpu.matmul %83, %70, %cst_32 {dimension_numbers = #tpu.dot_dimension_numbers<[2], [1], [1], [2], [0, 0, 0, 1, 1, 2], [0], [0]>} : vector<2x8x8xf32>, vector<2x8x8xf32>, vector<2x8x8xf32> -> vector<2x8x8xf32>
    "tpu.trace_stop"() : () -> ()
    %85 = vector.shape_cast %84 : vector<2x8x8xf32> to vector<16x8xf32>
    %86 = vector.extract_strided_slice %16 {offsets = [16, 0], sizes = [8, 32], strides = [1, 1]} : vector<32x32xf32> to vector<8x32xf32>
    %cst_33 = arith.constant dense<0.000000e+00> : vector<16x32xf32>
    %87 = tpu.matmul %85, %86, %cst_33 {dimension_numbers = #tpu.dot_dimension_numbers<[1], [0], [0], [1], [0, 0, 1, 1], [], []>} : vector<16x8xf32>, vector<8x32xf32>, vector<16x32xf32> -> vector<16x32xf32>
    %88 = arith.addf %64, %87 : vector<16x32xf32>
    %89 = vector.extract_strided_slice %13 {offsets = [0, 24], sizes = [16, 8], strides = [1, 1]} : vector<16x32xf32> to vector<16x8xf32>
    %90 = vector.shape_cast %89 : vector<16x8xf32> to vector<2x8x8xf32>
    %91 = vector.extract_strided_slice %14 {offsets = [0, 24], sizes = [16, 8], strides = [1, 1]} : vector<16x32xf32> to vector<16x8xf32>
    %92 = vector.shape_cast %91 : vector<16x8xf32> to vector<2x8x8xf32>
    %93 = vector.extract_strided_slice %15 {offsets = [0, 24], sizes = [16, 8], strides = [1, 1]} : vector<16x32xf32> to vector<16x8xf32>
    %94 = vector.shape_cast %93 : vector<16x8xf32> to vector<2x8x8xf32>
    "tpu.trace_start"() <{level = 10 : i32, message = "bqd,bkd->bqk"}> : () -> ()
    %cst_34 = arith.constant dense<0.000000e+00> : vector<2x8x8xf32>
    %95 = tpu.matmul %90, %92, %cst_34 {dimension_numbers = #tpu.dot_dimension_numbers<[2], [2], [1], [1], [0, 0, 0, 1, 1, 1], [0], [0]>} : vector<2x8x8xf32>, vector<2x8x8xf32>, vector<2x8x8xf32> -> vector<2x8x8xf32>
    "tpu.trace_stop"() : () -> ()
    %cst_35 = arith.constant 0.353553385 : f32
    %96 = vector.broadcast %cst_35 : f32 to vector<2x8x8xf32>
    %97 = arith.mulf %95, %96 : vector<2x8x8xf32>
    %cst_36 = arith.constant dense<0xFF800000> : vector<2x8xf32>
    %98 = vector.multi_reduction <maximumf>, %97, %cst_36 [2] : vector<2x8x8xf32> to vector<2x8xf32>
    %99 = vector.shape_cast %98 : vector<2x8xf32> to vector<2x8x1xf32>
    %100 = vector.broadcast %99 : vector<2x8x1xf32> to vector<2x8x8xf32>
    %101 = arith.subf %97, %100 : vector<2x8x8xf32>
    %102 = math.exp %101 : vector<2x8x8xf32>
    %cst_37 = arith.constant dense<0.000000e+00> : vector<2x8xf32>
    %103 = vector.multi_reduction <add>, %102, %cst_37 [2] : vector<2x8x8xf32> to vector<2x8xf32>
    %104 = vector.shape_cast %103 : vector<2x8xf32> to vector<2x8x1xf32>
    %105 = tpu.reciprocal %104 {approx = true} : vector<2x8x1xf32> -> vector<2x8x1xf32>
    %106 = vector.broadcast %105 : vector<2x8x1xf32> to vector<2x8x8xf32>
    %107 = arith.mulf %102, %106 : vector<2x8x8xf32>
    "tpu.trace_start"() <{level = 10 : i32, message = "bqk,bkd->bqd"}> : () -> ()
    %cst_38 = arith.constant dense<0.000000e+00> : vector<2x8x8xf32>
    %108 = tpu.matmul %107, %94, %cst_38 {dimension_numbers = #tpu.dot_dimension_numbers<[2], [1], [1], [2], [0, 0, 0, 1, 1, 2], [0], [0]>} : vector<2x8x8xf32>, vector<2x8x8xf32>, vector<2x8x8xf32> -> vector<2x8x8xf32>
    "tpu.trace_stop"() : () -> ()
    %109 = vector.shape_cast %108 : vector<2x8x8xf32> to vector<16x8xf32>
    %110 = vector.extract_strided_slice %16 {offsets = [24, 0], sizes = [8, 32], strides = [1, 1]} : vector<32x32xf32> to vector<8x32xf32>
    %cst_39 = arith.constant dense<0.000000e+00> : vector<16x32xf32>
    %111 = tpu.matmul %109, %110, %cst_39 {dimension_numbers = #tpu.dot_dimension_numbers<[1], [0], [0], [1], [0, 0, 1, 1], [], []>} : vector<16x8xf32>, vector<8x32xf32>, vector<16x32xf32> -> vector<16x32xf32>
    %112 = arith.addf %88, %111 : vector<16x32xf32>
    %113 = vector.broadcast %17 : vector<1x32xf32> to vector<16x32xf32>
    %114 = arith.addf %112, %113 : vector<16x32xf32>
    %115 = arith.addf %7, %114 : vector<16x32xf32>
    %c0_40 = arith.constant 0 : index
    %c0_41 = arith.constant 0 : index
    %116 = vector.load %arg8[%c0_40, %c0_41] : memref<1x32xf32, #tpu.memory_space<vmem>>, vector<1x32xf32>
    %c0_42 = arith.constant 0 : index
    %c0_43 = arith.constant 0 : index
    %117 = vector.load %arg9[%c0_42, %c0_43] : memref<1x32xf32, #tpu.memory_space<vmem>>, vector<1x32xf32>
    %cst_44 = arith.constant dense<0.000000e+00> : vector<16xf32>
    %118 = vector.multi_reduction <add>, %115, %cst_44 [1] : vector<16x32xf32> to vector<16xf32>
    %119 = vector.shape_cast %118 : vector<16xf32> to vector<16x1xf32>
    %cst_45 = arith.constant 3.200000e+01 : f32
    %120 = vector.broadcast %cst_45 : f32 to vector<16x1xf32>
    %121 = arith.divf %119, %120 : vector<16x1xf32>
    %122 = vector.broadcast %121 : vector<16x1xf32> to vector<16x32xf32>
    %123 = arith.subf %115, %122 : vector<16x32xf32>
    %124 = arith.mulf %123, %123 : vector<16x32xf32>
    %cst_46 = arith.constant dense<0.000000e+00> : vector<16xf32>
    %125 = vector.multi_reduction <add>, %124, %cst_46 [1] : vector<16x32xf32> to vector<16xf32>
    %126 = vector.shape_cast %125 : vector<16xf32> to vector<16x1xf32>
    %cst_47 = arith.constant 3.200000e+01 : f32
    %127 = vector.broadcast %cst_47 : f32 to vector<16x1xf32>
    %128 = arith.divf %126, %127 : vector<16x1xf32>
    %cst_48 = arith.constant 9.99999974E-6 : f32
    %129 = vector.broadcast %cst_48 : f32 to vector<16x1xf32>
    %130 = arith.addf %128, %129 : vector<16x1xf32>
    %131 = math.rsqrt %130 : vector<16x1xf32>
    %132 = vector.broadcast %131 : vector<16x1xf32> to vector<16x32xf32>
    %133 = arith.mulf %123, %132 : vector<16x32xf32>
    %134 = vector.broadcast %116 : vector<1x32xf32> to vector<16x32xf32>
    %135 = arith.mulf %133, %134 : vector<16x32xf32>
    %136 = vector.broadcast %117 : vector<1x32xf32> to vector<16x32xf32>
    %137 = arith.addf %135, %136 : vector<16x32xf32>
    %c0_49 = arith.constant 0 : index
    %c0_50 = arith.constant 0 : index
    %138 = vector.load %arg10[%c0_49, %c0_50] : memref<32x64xf32, #tpu.memory_space<vmem>>, vector<32x64xf32>
    %c0_51 = arith.constant 0 : index
    %c0_52 = arith.constant 0 : index
    %139 = vector.load %arg11[%c0_51, %c0_52] : memref<1x64xf32, #tpu.memory_space<vmem>>, vector<1x64xf32>
    %cst_53 = arith.constant dense<0.000000e+00> : vector<16x64xf32>
    %140 = tpu.matmul %137, %138, %cst_53 {dimension_numbers = #tpu.dot_dimension_numbers<[1], [0], [0], [1], [0, 0, 1, 1], [], []>} : vector<16x32xf32>, vector<32x64xf32>, vector<16x64xf32> -> vector<16x64xf32>
    %141 = vector.broadcast %139 : vector<1x64xf32> to vector<16x64xf32>
    %142 = arith.addf %140, %141 : vector<16x64xf32>
    %cst_54 = arith.constant 0.000000e+00 : f32
    %143 = vector.broadcast %cst_54 : f32 to vector<16x64xf32>
    %144 = arith.maximumf %142, %143 : vector<16x64xf32>
    %c0_55 = arith.constant 0 : index
    %c0_56 = arith.constant 0 : index
    %145 = vector.load %arg12[%c0_55, %c0_56] : memref<64x32xf32, #tpu.memory_space<vmem>>, vector<64x32xf32>
    %c0_57 = arith.constant 0 : index
    %c0_58 = arith.constant 0 : index
    %146 = vector.load %arg13[%c0_57, %c0_58] : memref<1x32xf32, #tpu.memory_space<vmem>>, vector<1x32xf32>
    %cst_59 = arith.constant dense<0.000000e+00> : vector<16x32xf32>
    %147 = tpu.matmul %144, %145, %cst_59 {dimension_numbers = #tpu.dot_dimension_numbers<[1], [0], [0], [1], [0, 0, 1, 1], [], []>} : vector<16x64xf32>, vector<64x32xf32>, vector<16x32xf32> -> vector<16x32xf32>
    %148 = vector.broadcast %146 : vector<1x32xf32> to vector<16x32xf32>
    %149 = arith.addf %147, %148 : vector<16x32xf32>
    %150 = arith.addf %137, %149 : vector<16x32xf32>
    %c0_60 = arith.constant 0 : index
    %c0_61 = arith.constant 0 : index
    %151 = vector.load %arg14[%c0_60, %c0_61] : memref<1x32xf32, #tpu.memory_space<vmem>>, vector<1x32xf32>
    %c0_62 = arith.constant 0 : index
    %c0_63 = arith.constant 0 : index
    %152 = vector.load %arg15[%c0_62, %c0_63] : memref<1x32xf32, #tpu.memory_space<vmem>>, vector<1x32xf32>
    %cst_64 = arith.constant dense<0.000000e+00> : vector<16xf32>
    %153 = vector.multi_reduction <add>, %150, %cst_64 [1] : vector<16x32xf32> to vector<16xf32>
    %154 = vector.shape_cast %153 : vector<16xf32> to vector<16x1xf32>
    %cst_65 = arith.constant 3.200000e+01 : f32
    %155 = vector.broadcast %cst_65 : f32 to vector<16x1xf32>
    %156 = arith.divf %154, %155 : vector<16x1xf32>
    %157 = vector.broadcast %156 : vector<16x1xf32> to vector<16x32xf32>
    %158 = arith.subf %150, %157 : vector<16x32xf32>
    %159 = arith.mulf %158, %158 : vector<16x32xf32>
    %cst_66 = arith.constant dense<0.000000e+00> : vector<16xf32>
    %160 = vector.multi_reduction <add>, %159, %cst_66 [1] : vector<16x32xf32> to vector<16xf32>
    %161 = vector.shape_cast %160 : vector<16xf32> to vector<16x1xf32>
    %cst_67 = arith.constant 3.200000e+01 : f32
    %162 = vector.broadcast %cst_67 : f32 to vector<16x1xf32>
    %163 = arith.divf %161, %162 : vector<16x1xf32>
    %cst_68 = arith.constant 9.99999974E-6 : f32
    %164 = vector.broadcast %cst_68 : f32 to vector<16x1xf32>
    %165 = arith.addf %163, %164 : vector<16x1xf32>
    %166 = math.rsqrt %165 : vector<16x1xf32>
    %167 = vector.broadcast %166 : vector<16x1xf32> to vector<16x32xf32>
    %168 = arith.mulf %158, %167 : vector<16x32xf32>
    %169 = vector.broadcast %151 : vector<1x32xf32> to vector<16x32xf32>
    %170 = arith.mulf %168, %169 : vector<16x32xf32>
    %171 = vector.broadcast %152 : vector<1x32xf32> to vector<16x32xf32>
    %172 = arith.addf %170, %171 : vector<16x32xf32>
    %c0_69 = arith.constant 0 : index
    %c0_70 = arith.constant 0 : index
    %173 = vector.load %arg16[%c0_69, %c0_70] : memref<32x96xf32, #tpu.memory_space<vmem>>, vector<32x96xf32>
    %c0_71 = arith.constant 0 : index
    %c0_72 = arith.constant 0 : index
    %174 = vector.load %arg17[%c0_71, %c0_72] : memref<1x96xf32, #tpu.memory_space<vmem>>, vector<1x96xf32>
    %cst_73 = arith.constant dense<0.000000e+00> : vector<16x96xf32>
    %175 = tpu.matmul %172, %173, %cst_73 {dimension_numbers = #tpu.dot_dimension_numbers<[1], [0], [0], [1], [0, 0, 1, 1], [], []>} : vector<16x32xf32>, vector<32x96xf32>, vector<16x96xf32> -> vector<16x96xf32>
    %176 = vector.broadcast %174 : vector<1x96xf32> to vector<16x96xf32>
    %177 = arith.addf %175, %176 : vector<16x96xf32>
    %178 = vector.extract_strided_slice %177 {offsets = [0, 0], sizes = [16, 32], strides = [1, 1]} : vector<16x96xf32> to vector<16x32xf32>
    %179 = vector.extract_strided_slice %177 {offsets = [0, 32], sizes = [16, 32], strides = [1, 1]} : vector<16x96xf32> to vector<16x32xf32>
    %180 = vector.extract_strided_slice %177 {offsets = [0, 64], sizes = [16, 32], strides = [1, 1]} : vector<16x96xf32> to vector<16x32xf32>
    %c0_74 = arith.constant 0 : index
    %c0_75 = arith.constant 0 : index
    %181 = vector.load %arg18[%c0_74, %c0_75] : memref<32x32xf32, #tpu.memory_space<vmem>>, vector<32x32xf32>
    %c0_76 = arith.constant 0 : index
    %c0_77 = arith.constant 0 : index
    %182 = vector.load %arg19[%c0_76, %c0_77] : memref<1x32xf32, #tpu.memory_space<vmem>>, vector<1x32xf32>
    %183 = vector.extract_strided_slice %178 {offsets = [0, 0], sizes = [16, 8], strides = [1, 1]} : vector<16x32xf32> to vector<16x8xf32>
    %184 = vector.shape_cast %183 : vector<16x8xf32> to vector<2x8x8xf32>
    %185 = vector.extract_strided_slice %179 {offsets = [0, 0], sizes = [16, 8], strides = [1, 1]} : vector<16x32xf32> to vector<16x8xf32>
    %186 = vector.shape_cast %185 : vector<16x8xf32> to vector<2x8x8xf32>
    %187 = vector.extract_strided_slice %180 {offsets = [0, 0], sizes = [16, 8], strides = [1, 1]} : vector<16x32xf32> to vector<16x8xf32>
    %188 = vector.shape_cast %187 : vector<16x8xf32> to vector<2x8x8xf32>
    "tpu.trace_start"() <{level = 10 : i32, message = "bqd,bkd->bqk"}> : () -> ()
    %cst_78 = arith.constant dense<0.000000e+00> : vector<2x8x8xf32>
    %189 = tpu.matmul %184, %186, %cst_78 {dimension_numbers = #tpu.dot_dimension_numbers<[2], [2], [1], [1], [0, 0, 0, 1, 1, 1], [0], [0]>} : vector<2x8x8xf32>, vector<2x8x8xf32>, vector<2x8x8xf32> -> vector<2x8x8xf32>
    "tpu.trace_stop"() : () -> ()
    %cst_79 = arith.constant 0.353553385 : f32
    %190 = vector.broadcast %cst_79 : f32 to vector<2x8x8xf32>
    %191 = arith.mulf %189, %190 : vector<2x8x8xf32>
    %cst_80 = arith.constant dense<0xFF800000> : vector<2x8xf32>
    %192 = vector.multi_reduction <maximumf>, %191, %cst_80 [2] : vector<2x8x8xf32> to vector<2x8xf32>
    %193 = vector.shape_cast %192 : vector<2x8xf32> to vector<2x8x1xf32>
    %194 = vector.broadcast %193 : vector<2x8x1xf32> to vector<2x8x8xf32>
    %195 = arith.subf %191, %194 : vector<2x8x8xf32>
    %196 = math.exp %195 : vector<2x8x8xf32>
    %cst_81 = arith.constant dense<0.000000e+00> : vector<2x8xf32>
    %197 = vector.multi_reduction <add>, %196, %cst_81 [2] : vector<2x8x8xf32> to vector<2x8xf32>
    %198 = vector.shape_cast %197 : vector<2x8xf32> to vector<2x8x1xf32>
    %199 = tpu.reciprocal %198 {approx = true} : vector<2x8x1xf32> -> vector<2x8x1xf32>
    %200 = vector.broadcast %199 : vector<2x8x1xf32> to vector<2x8x8xf32>
    %201 = arith.mulf %196, %200 : vector<2x8x8xf32>
    "tpu.trace_start"() <{level = 10 : i32, message = "bqk,bkd->bqd"}> : () -> ()
    %cst_82 = arith.constant dense<0.000000e+00> : vector<2x8x8xf32>
    %202 = tpu.matmul %201, %188, %cst_82 {dimension_numbers = #tpu.dot_dimension_numbers<[2], [1], [1], [2], [0, 0, 0, 1, 1, 2], [0], [0]>} : vector<2x8x8xf32>, vector<2x8x8xf32>, vector<2x8x8xf32> -> vector<2x8x8xf32>
    "tpu.trace_stop"() : () -> ()
    %203 = vector.shape_cast %202 : vector<2x8x8xf32> to vector<16x8xf32>
    %204 = vector.extract_strided_slice %181 {offsets = [0, 0], sizes = [8, 32], strides = [1, 1]} : vector<32x32xf32> to vector<8x32xf32>
    %cst_83 = arith.constant dense<0.000000e+00> : vector<16x32xf32>
    %205 = tpu.matmul %203, %204, %cst_83 {dimension_numbers = #tpu.dot_dimension_numbers<[1], [0], [0], [1], [0, 0, 1, 1], [], []>} : vector<16x8xf32>, vector<8x32xf32>, vector<16x32xf32> -> vector<16x32xf32>
    %206 = vector.extract_strided_slice %178 {offsets = [0, 8], sizes = [16, 8], strides = [1, 1]} : vector<16x32xf32> to vector<16x8xf32>
    %207 = vector.shape_cast %206 : vector<16x8xf32> to vector<2x8x8xf32>
    %208 = vector.extract_strided_slice %179 {offsets = [0, 8], sizes = [16, 8], strides = [1, 1]} : vector<16x32xf32> to vector<16x8xf32>
    %209 = vector.shape_cast %208 : vector<16x8xf32> to vector<2x8x8xf32>
    %210 = vector.extract_strided_slice %180 {offsets = [0, 8], sizes = [16, 8], strides = [1, 1]} : vector<16x32xf32> to vector<16x8xf32>
    %211 = vector.shape_cast %210 : vector<16x8xf32> to vector<2x8x8xf32>
    "tpu.trace_start"() <{level = 10 : i32, message = "bqd,bkd->bqk"}> : () -> ()
    %cst_84 = arith.constant dense<0.000000e+00> : vector<2x8x8xf32>
    %212 = tpu.matmul %207, %209, %cst_84 {dimension_numbers = #tpu.dot_dimension_numbers<[2], [2], [1], [1], [0, 0, 0, 1, 1, 1], [0], [0]>} : vector<2x8x8xf32>, vector<2x8x8xf32>, vector<2x8x8xf32> -> vector<2x8x8xf32>
    "tpu.trace_stop"() : () -> ()
    %cst_85 = arith.constant 0.353553385 : f32
    %213 = vector.broadcast %cst_85 : f32 to vector<2x8x8xf32>
    %214 = arith.mulf %212, %213 : vector<2x8x8xf32>
    %cst_86 = arith.constant dense<0xFF800000> : vector<2x8xf32>
    %215 = vector.multi_reduction <maximumf>, %214, %cst_86 [2] : vector<2x8x8xf32> to vector<2x8xf32>
    %216 = vector.shape_cast %215 : vector<2x8xf32> to vector<2x8x1xf32>
    %217 = vector.broadcast %216 : vector<2x8x1xf32> to vector<2x8x8xf32>
    %218 = arith.subf %214, %217 : vector<2x8x8xf32>
    %219 = math.exp %218 : vector<2x8x8xf32>
    %cst_87 = arith.constant dense<0.000000e+00> : vector<2x8xf32>
    %220 = vector.multi_reduction <add>, %219, %cst_87 [2] : vector<2x8x8xf32> to vector<2x8xf32>
    %221 = vector.shape_cast %220 : vector<2x8xf32> to vector<2x8x1xf32>
    %222 = tpu.reciprocal %221 {approx = true} : vector<2x8x1xf32> -> vector<2x8x1xf32>
    %223 = vector.broadcast %222 : vector<2x8x1xf32> to vector<2x8x8xf32>
    %224 = arith.mulf %219, %223 : vector<2x8x8xf32>
    "tpu.trace_start"() <{level = 10 : i32, message = "bqk,bkd->bqd"}> : () -> ()
    %cst_88 = arith.constant dense<0.000000e+00> : vector<2x8x8xf32>
    %225 = tpu.matmul %224, %211, %cst_88 {dimension_numbers = #tpu.dot_dimension_numbers<[2], [1], [1], [2], [0, 0, 0, 1, 1, 2], [0], [0]>} : vector<2x8x8xf32>, vector<2x8x8xf32>, vector<2x8x8xf32> -> vector<2x8x8xf32>
    "tpu.trace_stop"() : () -> ()
    %226 = vector.shape_cast %225 : vector<2x8x8xf32> to vector<16x8xf32>
    %227 = vector.extract_strided_slice %181 {offsets = [8, 0], sizes = [8, 32], strides = [1, 1]} : vector<32x32xf32> to vector<8x32xf32>
    %cst_89 = arith.constant dense<0.000000e+00> : vector<16x32xf32>
    %228 = tpu.matmul %226, %227, %cst_89 {dimension_numbers = #tpu.dot_dimension_numbers<[1], [0], [0], [1], [0, 0, 1, 1], [], []>} : vector<16x8xf32>, vector<8x32xf32>, vector<16x32xf32> -> vector<16x32xf32>
    %229 = arith.addf %205, %228 : vector<16x32xf32>
    %230 = vector.extract_strided_slice %178 {offsets = [0, 16], sizes = [16, 8], strides = [1, 1]} : vector<16x32xf32> to vector<16x8xf32>
    %231 = vector.shape_cast %230 : vector<16x8xf32> to vector<2x8x8xf32>
    %232 = vector.extract_strided_slice %179 {offsets = [0, 16], sizes = [16, 8], strides = [1, 1]} : vector<16x32xf32> to vector<16x8xf32>
    %233 = vector.shape_cast %232 : vector<16x8xf32> to vector<2x8x8xf32>
    %234 = vector.extract_strided_slice %180 {offsets = [0, 16], sizes = [16, 8], strides = [1, 1]} : vector<16x32xf32> to vector<16x8xf32>
    %235 = vector.shape_cast %234 : vector<16x8xf32> to vector<2x8x8xf32>
    "tpu.trace_start"() <{level = 10 : i32, message = "bqd,bkd->bqk"}> : () -> ()
    %cst_90 = arith.constant dense<0.000000e+00> : vector<2x8x8xf32>
    %236 = tpu.matmul %231, %233, %cst_90 {dimension_numbers = #tpu.dot_dimension_numbers<[2], [2], [1], [1], [0, 0, 0, 1, 1, 1], [0], [0]>} : vector<2x8x8xf32>, vector<2x8x8xf32>, vector<2x8x8xf32> -> vector<2x8x8xf32>
    "tpu.trace_stop"() : () -> ()
    %cst_91 = arith.constant 0.353553385 : f32
    %237 = vector.broadcast %cst_91 : f32 to vector<2x8x8xf32>
    %238 = arith.mulf %236, %237 : vector<2x8x8xf32>
    %cst_92 = arith.constant dense<0xFF800000> : vector<2x8xf32>
    %239 = vector.multi_reduction <maximumf>, %238, %cst_92 [2] : vector<2x8x8xf32> to vector<2x8xf32>
    %240 = vector.shape_cast %239 : vector<2x8xf32> to vector<2x8x1xf32>
    %241 = vector.broadcast %240 : vector<2x8x1xf32> to vector<2x8x8xf32>
    %242 = arith.subf %238, %241 : vector<2x8x8xf32>
    %243 = math.exp %242 : vector<2x8x8xf32>
    %cst_93 = arith.constant dense<0.000000e+00> : vector<2x8xf32>
    %244 = vector.multi_reduction <add>, %243, %cst_93 [2] : vector<2x8x8xf32> to vector<2x8xf32>
    %245 = vector.shape_cast %244 : vector<2x8xf32> to vector<2x8x1xf32>
    %246 = tpu.reciprocal %245 {approx = true} : vector<2x8x1xf32> -> vector<2x8x1xf32>
    %247 = vector.broadcast %246 : vector<2x8x1xf32> to vector<2x8x8xf32>
    %248 = arith.mulf %243, %247 : vector<2x8x8xf32>
    "tpu.trace_start"() <{level = 10 : i32, message = "bqk,bkd->bqd"}> : () -> ()
    %cst_94 = arith.constant dense<0.000000e+00> : vector<2x8x8xf32>
    %249 = tpu.matmul %248, %235, %cst_94 {dimension_numbers = #tpu.dot_dimension_numbers<[2], [1], [1], [2], [0, 0, 0, 1, 1, 2], [0], [0]>} : vector<2x8x8xf32>, vector<2x8x8xf32>, vector<2x8x8xf32> -> vector<2x8x8xf32>
    "tpu.trace_stop"() : () -> ()
    %250 = vector.shape_cast %249 : vector<2x8x8xf32> to vector<16x8xf32>
    %251 = vector.extract_strided_slice %181 {offsets = [16, 0], sizes = [8, 32], strides = [1, 1]} : vector<32x32xf32> to vector<8x32xf32>
    %cst_95 = arith.constant dense<0.000000e+00> : vector<16x32xf32>
    %252 = tpu.matmul %250, %251, %cst_95 {dimension_numbers = #tpu.dot_dimension_numbers<[1], [0], [0], [1], [0, 0, 1, 1], [], []>} : vector<16x8xf32>, vector<8x32xf32>, vector<16x32xf32> -> vector<16x32xf32>
    %253 = arith.addf %229, %252 : vector<16x32xf32>
    %254 = vector.extract_strided_slice %178 {offsets = [0, 24], sizes = [16, 8], strides = [1, 1]} : vector<16x32xf32> to vector<16x8xf32>
    %255 = vector.shape_cast %254 : vector<16x8xf32> to vector<2x8x8xf32>
    %256 = vector.extract_strided_slice %179 {offsets = [0, 24], sizes = [16, 8], strides = [1, 1]} : vector<16x32xf32> to vector<16x8xf32>
    %257 = vector.shape_cast %256 : vector<16x8xf32> to vector<2x8x8xf32>
    %258 = vector.extract_strided_slice %180 {offsets = [0, 24], sizes = [16, 8], strides = [1, 1]} : vector<16x32xf32> to vector<16x8xf32>
    %259 = vector.shape_cast %258 : vector<16x8xf32> to vector<2x8x8xf32>
    "tpu.trace_start"() <{level = 10 : i32, message = "bqd,bkd->bqk"}> : () -> ()
    %cst_96 = arith.constant dense<0.000000e+00> : vector<2x8x8xf32>
    %260 = tpu.matmul %255, %257, %cst_96 {dimension_numbers = #tpu.dot_dimension_numbers<[2], [2], [1], [1], [0, 0, 0, 1, 1, 1], [0], [0]>} : vector<2x8x8xf32>, vector<2x8x8xf32>, vector<2x8x8xf32> -> vector<2x8x8xf32>
    "tpu.trace_stop"() : () -> ()
    %cst_97 = arith.constant 0.353553385 : f32
    %261 = vector.broadcast %cst_97 : f32 to vector<2x8x8xf32>
    %262 = arith.mulf %260, %261 : vector<2x8x8xf32>
    %cst_98 = arith.constant dense<0xFF800000> : vector<2x8xf32>
    %263 = vector.multi_reduction <maximumf>, %262, %cst_98 [2] : vector<2x8x8xf32> to vector<2x8xf32>
    %264 = vector.shape_cast %263 : vector<2x8xf32> to vector<2x8x1xf32>
    %265 = vector.broadcast %264 : vector<2x8x1xf32> to vector<2x8x8xf32>
    %266 = arith.subf %262, %265 : vector<2x8x8xf32>
    %267 = math.exp %266 : vector<2x8x8xf32>
    %cst_99 = arith.constant dense<0.000000e+00> : vector<2x8xf32>
    %268 = vector.multi_reduction <add>, %267, %cst_99 [2] : vector<2x8x8xf32> to vector<2x8xf32>
    %269 = vector.shape_cast %268 : vector<2x8xf32> to vector<2x8x1xf32>
    %270 = tpu.reciprocal %269 {approx = true} : vector<2x8x1xf32> -> vector<2x8x1xf32>
    %271 = vector.broadcast %270 : vector<2x8x1xf32> to vector<2x8x8xf32>
    %272 = arith.mulf %267, %271 : vector<2x8x8xf32>
    "tpu.trace_start"() <{level = 10 : i32, message = "bqk,bkd->bqd"}> : () -> ()
    %cst_100 = arith.constant dense<0.000000e+00> : vector<2x8x8xf32>
    %273 = tpu.matmul %272, %259, %cst_100 {dimension_numbers = #tpu.dot_dimension_numbers<[2], [1], [1], [2], [0, 0, 0, 1, 1, 2], [0], [0]>} : vector<2x8x8xf32>, vector<2x8x8xf32>, vector<2x8x8xf32> -> vector<2x8x8xf32>
    "tpu.trace_stop"() : () -> ()
    %274 = vector.shape_cast %273 : vector<2x8x8xf32> to vector<16x8xf32>
    %275 = vector.extract_strided_slice %181 {offsets = [24, 0], sizes = [8, 32], strides = [1, 1]} : vector<32x32xf32> to vector<8x32xf32>
    %cst_101 = arith.constant dense<0.000000e+00> : vector<16x32xf32>
    %276 = tpu.matmul %274, %275, %cst_101 {dimension_numbers = #tpu.dot_dimension_numbers<[1], [0], [0], [1], [0, 0, 1, 1], [], []>} : vector<16x8xf32>, vector<8x32xf32>, vector<16x32xf32> -> vector<16x32xf32>
    %277 = arith.addf %253, %276 : vector<16x32xf32>
    %278 = vector.broadcast %182 : vector<1x32xf32> to vector<16x32xf32>
    %279 = arith.addf %277, %278 : vector<16x32xf32>
    %280 = arith.addf %172, %279 : vector<16x32xf32>
    %c0_102 = arith.constant 0 : index
    %c0_103 = arith.constant 0 : index
    %281 = vector.load %arg20[%c0_102, %c0_103] : memref<1x32xf32, #tpu.memory_space<vmem>>, vector<1x32xf32>
    %c0_104 = arith.constant 0 : index
    %c0_105 = arith.constant 0 : index
    %282 = vector.load %arg21[%c0_104, %c0_105] : memref<1x32xf32, #tpu.memory_space<vmem>>, vector<1x32xf32>
    %cst_106 = arith.constant dense<0.000000e+00> : vector<16xf32>
    %283 = vector.multi_reduction <add>, %280, %cst_106 [1] : vector<16x32xf32> to vector<16xf32>
    %284 = vector.shape_cast %283 : vector<16xf32> to vector<16x1xf32>
    %cst_107 = arith.constant 3.200000e+01 : f32
    %285 = vector.broadcast %cst_107 : f32 to vector<16x1xf32>
    %286 = arith.divf %284, %285 : vector<16x1xf32>
    %287 = vector.broadcast %286 : vector<16x1xf32> to vector<16x32xf32>
    %288 = arith.subf %280, %287 : vector<16x32xf32>
    %289 = arith.mulf %288, %288 : vector<16x32xf32>
    %cst_108 = arith.constant dense<0.000000e+00> : vector<16xf32>
    %290 = vector.multi_reduction <add>, %289, %cst_108 [1] : vector<16x32xf32> to vector<16xf32>
    %291 = vector.shape_cast %290 : vector<16xf32> to vector<16x1xf32>
    %cst_109 = arith.constant 3.200000e+01 : f32
    %292 = vector.broadcast %cst_109 : f32 to vector<16x1xf32>
    %293 = arith.divf %291, %292 : vector<16x1xf32>
    %cst_110 = arith.constant 9.99999974E-6 : f32
    %294 = vector.broadcast %cst_110 : f32 to vector<16x1xf32>
    %295 = arith.addf %293, %294 : vector<16x1xf32>
    %296 = math.rsqrt %295 : vector<16x1xf32>
    %297 = vector.broadcast %296 : vector<16x1xf32> to vector<16x32xf32>
    %298 = arith.mulf %288, %297 : vector<16x32xf32>
    %299 = vector.broadcast %281 : vector<1x32xf32> to vector<16x32xf32>
    %300 = arith.mulf %298, %299 : vector<16x32xf32>
    %301 = vector.broadcast %282 : vector<1x32xf32> to vector<16x32xf32>
    %302 = arith.addf %300, %301 : vector<16x32xf32>
    %c0_111 = arith.constant 0 : index
    %c0_112 = arith.constant 0 : index
    %303 = vector.load %arg22[%c0_111, %c0_112] : memref<32x64xf32, #tpu.memory_space<vmem>>, vector<32x64xf32>
    %c0_113 = arith.constant 0 : index
    %c0_114 = arith.constant 0 : index
    %304 = vector.load %arg23[%c0_113, %c0_114] : memref<1x64xf32, #tpu.memory_space<vmem>>, vector<1x64xf32>
    %cst_115 = arith.constant dense<0.000000e+00> : vector<16x64xf32>
    %305 = tpu.matmul %302, %303, %cst_115 {dimension_numbers = #tpu.dot_dimension_numbers<[1], [0], [0], [1], [0, 0, 1, 1], [], []>} : vector<16x32xf32>, vector<32x64xf32>, vector<16x64xf32> -> vector<16x64xf32>
    %306 = vector.broadcast %304 : vector<1x64xf32> to vector<16x64xf32>
    %307 = arith.addf %305, %306 : vector<16x64xf32>
    %cst_116 = arith.constant 0.000000e+00 : f32
    %308 = vector.broadcast %cst_116 : f32 to vector<16x64xf32>
    %309 = arith.maximumf %307, %308 : vector<16x64xf32>
    %c0_117 = arith.constant 0 : index
    %c0_118 = arith.constant 0 : index
    %310 = vector.load %arg24[%c0_117, %c0_118] : memref<64x32xf32, #tpu.memory_space<vmem>>, vector<64x32xf32>
    %c0_119 = arith.constant 0 : index
    %c0_120 = arith.constant 0 : index
    %311 = vector.load %arg25[%c0_119, %c0_120] : memref<1x32xf32, #tpu.memory_space<vmem>>, vector<1x32xf32>
    %cst_121 = arith.constant dense<0.000000e+00> : vector<16x32xf32>
    %312 = tpu.matmul %309, %310, %cst_121 {dimension_numbers = #tpu.dot_dimension_numbers<[1], [0], [0], [1], [0, 0, 1, 1], [], []>} : vector<16x64xf32>, vector<64x32xf32>, vector<16x32xf32> -> vector<16x32xf32>
    %313 = vector.broadcast %311 : vector<1x32xf32> to vector<16x32xf32>
    %314 = arith.addf %312, %313 : vector<16x32xf32>
    %315 = arith.addf %302, %314 : vector<16x32xf32>
    %c0_122 = arith.constant 0 : index
    %c0_123 = arith.constant 0 : index
    %316 = vector.load %arg26[%c0_122, %c0_123] : memref<1x32xf32, #tpu.memory_space<vmem>>, vector<1x32xf32>
    %c0_124 = arith.constant 0 : index
    %c0_125 = arith.constant 0 : index
    %317 = vector.load %arg27[%c0_124, %c0_125] : memref<1x32xf32, #tpu.memory_space<vmem>>, vector<1x32xf32>
    %cst_126 = arith.constant dense<0.000000e+00> : vector<16xf32>
    %318 = vector.multi_reduction <add>, %315, %cst_126 [1] : vector<16x32xf32> to vector<16xf32>
    %319 = vector.shape_cast %318 : vector<16xf32> to vector<16x1xf32>
    %cst_127 = arith.constant 3.200000e+01 : f32
    %320 = vector.broadcast %cst_127 : f32 to vector<16x1xf32>
    %321 = arith.divf %319, %320 : vector<16x1xf32>
    %322 = vector.broadcast %321 : vector<16x1xf32> to vector<16x32xf32>
    %323 = arith.subf %315, %322 : vector<16x32xf32>
    %324 = arith.mulf %323, %323 : vector<16x32xf32>
    %cst_128 = arith.constant dense<0.000000e+00> : vector<16xf32>
    %325 = vector.multi_reduction <add>, %324, %cst_128 [1] : vector<16x32xf32> to vector<16xf32>
    %326 = vector.shape_cast %325 : vector<16xf32> to vector<16x1xf32>
    %cst_129 = arith.constant 3.200000e+01 : f32
    %327 = vector.broadcast %cst_129 : f32 to vector<16x1xf32>
    %328 = arith.divf %326, %327 : vector<16x1xf32>
    %cst_130 = arith.constant 9.99999974E-6 : f32
    %329 = vector.broadcast %cst_130 : f32 to vector<16x1xf32>
    %330 = arith.addf %328, %329 : vector<16x1xf32>
    %331 = math.rsqrt %330 : vector<16x1xf32>
    %332 = vector.broadcast %331 : vector<16x1xf32> to vector<16x32xf32>
    %333 = arith.mulf %323, %332 : vector<16x32xf32>
    %334 = vector.broadcast %316 : vector<1x32xf32> to vector<16x32xf32>
    %335 = arith.mulf %333, %334 : vector<16x32xf32>
    %336 = vector.broadcast %317 : vector<1x32xf32> to vector<16x32xf32>
    %337 = arith.addf %335, %336 : vector<16x32xf32>
    %c0_131 = arith.constant 0 : index
    %c0_132 = arith.constant 0 : index
    %338 = vector.load %arg28[%c0_131, %c0_132] : memref<1x32xf32, #tpu.memory_space<vmem>>, vector<1x32xf32>
    %c0_133 = arith.constant 0 : index
    %c0_134 = arith.constant 0 : index
    %339 = vector.load %arg29[%c0_133, %c0_134] : memref<1x32xf32, #tpu.memory_space<vmem>>, vector<1x32xf32>
    %cst_135 = arith.constant dense<0.000000e+00> : vector<16xf32>
    %340 = vector.multi_reduction <add>, %337, %cst_135 [1] : vector<16x32xf32> to vector<16xf32>
    %341 = vector.shape_cast %340 : vector<16xf32> to vector<16x1xf32>
    %cst_136 = arith.constant 3.200000e+01 : f32
    %342 = vector.broadcast %cst_136 : f32 to vector<16x1xf32>
    %343 = arith.divf %341, %342 : vector<16x1xf32>
    %344 = vector.broadcast %343 : vector<16x1xf32> to vector<16x32xf32>
    %345 = arith.subf %337, %344 : vector<16x32xf32>
    %346 = arith.mulf %345, %345 : vector<16x32xf32>
    %cst_137 = arith.constant dense<0.000000e+00> : vector<16xf32>
    %347 = vector.multi_reduction <add>, %346, %cst_137 [1] : vector<16x32xf32> to vector<16xf32>
    %348 = vector.shape_cast %347 : vector<16xf32> to vector<16x1xf32>
    %cst_138 = arith.constant 3.200000e+01 : f32
    %349 = vector.broadcast %cst_138 : f32 to vector<16x1xf32>
    %350 = arith.divf %348, %349 : vector<16x1xf32>
    %cst_139 = arith.constant 9.99999974E-6 : f32
    %351 = vector.broadcast %cst_139 : f32 to vector<16x1xf32>
    %352 = arith.addf %350, %351 : vector<16x1xf32>
    %353 = math.rsqrt %352 : vector<16x1xf32>
    %354 = vector.broadcast %353 : vector<16x1xf32> to vector<16x32xf32>
    %355 = arith.mulf %345, %354 : vector<16x32xf32>
    %356 = vector.broadcast %338 : vector<1x32xf32> to vector<16x32xf32>
    %357 = arith.mulf %355, %356 : vector<16x32xf32>
    %358 = vector.broadcast %339 : vector<1x32xf32> to vector<16x32xf32>
    %359 = arith.addf %357, %358 : vector<16x32xf32>
    %c0_140 = arith.constant 0 : index
    %c0_141 = arith.constant 0 : index
    %360 = vector.load %arg30[%c0_140, %c0_141] : memref<32x96xf32, #tpu.memory_space<vmem>>, vector<32x96xf32>
    %c0_142 = arith.constant 0 : index
    %c0_143 = arith.constant 0 : index
    %361 = vector.load %arg31[%c0_142, %c0_143] : memref<1x96xf32, #tpu.memory_space<vmem>>, vector<1x96xf32>
    %cst_144 = arith.constant dense<0.000000e+00> : vector<16x96xf32>
    %362 = tpu.matmul %7, %360, %cst_144 {dimension_numbers = #tpu.dot_dimension_numbers<[1], [0], [0], [1], [0, 0, 1, 1], [], []>} : vector<16x32xf32>, vector<32x96xf32>, vector<16x96xf32> -> vector<16x96xf32>
    %363 = vector.broadcast %361 : vector<1x96xf32> to vector<16x96xf32>
    %364 = arith.addf %362, %363 : vector<16x96xf32>
    %365 = vector.extract_strided_slice %364 {offsets = [0, 0], sizes = [16, 32], strides = [1, 1]} : vector<16x96xf32> to vector<16x32xf32>
    %366 = vector.extract_strided_slice %364 {offsets = [0, 32], sizes = [16, 32], strides = [1, 1]} : vector<16x96xf32> to vector<16x32xf32>
    %367 = vector.extract_strided_slice %364 {offsets = [0, 64], sizes = [16, 32], strides = [1, 1]} : vector<16x96xf32> to vector<16x32xf32>
    %c0_145 = arith.constant 0 : index
    %c0_146 = arith.constant 0 : index
    %368 = vector.load %arg32[%c0_145, %c0_146] : memref<32x32xf32, #tpu.memory_space<vmem>>, vector<32x32xf32>
    %c0_147 = arith.constant 0 : index
    %c0_148 = arith.constant 0 : index
    %369 = vector.load %arg33[%c0_147, %c0_148] : memref<1x32xf32, #tpu.memory_space<vmem>>, vector<1x32xf32>
    %370 = vector.extract_strided_slice %365 {offsets = [0, 0], sizes = [16, 8], strides = [1, 1]} : vector<16x32xf32> to vector<16x8xf32>
    %371 = vector.shape_cast %370 : vector<16x8xf32> to vector<2x8x8xf32>
    %372 = vector.extract_strided_slice %366 {offsets = [0, 0], sizes = [16, 8], strides = [1, 1]} : vector<16x32xf32> to vector<16x8xf32>
    %373 = vector.shape_cast %372 : vector<16x8xf32> to vector<2x8x8xf32>
    %374 = vector.extract_strided_slice %367 {offsets = [0, 0], sizes = [16, 8], strides = [1, 1]} : vector<16x32xf32> to vector<16x8xf32>
    %375 = vector.shape_cast %374 : vector<16x8xf32> to vector<2x8x8xf32>
    "tpu.trace_start"() <{level = 10 : i32, message = "bqd,bkd->bqk"}> : () -> ()
    %cst_149 = arith.constant dense<0.000000e+00> : vector<2x8x8xf32>
    %376 = tpu.matmul %371, %373, %cst_149 {dimension_numbers = #tpu.dot_dimension_numbers<[2], [2], [1], [1], [0, 0, 0, 1, 1, 1], [0], [0]>} : vector<2x8x8xf32>, vector<2x8x8xf32>, vector<2x8x8xf32> -> vector<2x8x8xf32>
    "tpu.trace_stop"() : () -> ()
    %cst_150 = arith.constant 0.353553385 : f32
    %377 = vector.broadcast %cst_150 : f32 to vector<2x8x8xf32>
    %378 = arith.mulf %376, %377 : vector<2x8x8xf32>
    %cst_151 = arith.constant dense<0xFF800000> : vector<2x8xf32>
    %379 = vector.multi_reduction <maximumf>, %378, %cst_151 [2] : vector<2x8x8xf32> to vector<2x8xf32>
    %380 = vector.shape_cast %379 : vector<2x8xf32> to vector<2x8x1xf32>
    %381 = vector.broadcast %380 : vector<2x8x1xf32> to vector<2x8x8xf32>
    %382 = arith.subf %378, %381 : vector<2x8x8xf32>
    %383 = math.exp %382 : vector<2x8x8xf32>
    %cst_152 = arith.constant dense<0.000000e+00> : vector<2x8xf32>
    %384 = vector.multi_reduction <add>, %383, %cst_152 [2] : vector<2x8x8xf32> to vector<2x8xf32>
    %385 = vector.shape_cast %384 : vector<2x8xf32> to vector<2x8x1xf32>
    %386 = tpu.reciprocal %385 {approx = true} : vector<2x8x1xf32> -> vector<2x8x1xf32>
    %387 = vector.broadcast %386 : vector<2x8x1xf32> to vector<2x8x8xf32>
    %388 = arith.mulf %383, %387 : vector<2x8x8xf32>
    "tpu.trace_start"() <{level = 10 : i32, message = "bqk,bkd->bqd"}> : () -> ()
    %cst_153 = arith.constant dense<0.000000e+00> : vector<2x8x8xf32>
    %389 = tpu.matmul %388, %375, %cst_153 {dimension_numbers = #tpu.dot_dimension_numbers<[2], [1], [1], [2], [0, 0, 0, 1, 1, 2], [0], [0]>} : vector<2x8x8xf32>, vector<2x8x8xf32>, vector<2x8x8xf32> -> vector<2x8x8xf32>
    "tpu.trace_stop"() : () -> ()
    %390 = vector.shape_cast %389 : vector<2x8x8xf32> to vector<16x8xf32>
    %391 = vector.extract_strided_slice %368 {offsets = [0, 0], sizes = [8, 32], strides = [1, 1]} : vector<32x32xf32> to vector<8x32xf32>
    %cst_154 = arith.constant dense<0.000000e+00> : vector<16x32xf32>
    %392 = tpu.matmul %390, %391, %cst_154 {dimension_numbers = #tpu.dot_dimension_numbers<[1], [0], [0], [1], [0, 0, 1, 1], [], []>} : vector<16x8xf32>, vector<8x32xf32>, vector<16x32xf32> -> vector<16x32xf32>
    %393 = vector.extract_strided_slice %365 {offsets = [0, 8], sizes = [16, 8], strides = [1, 1]} : vector<16x32xf32> to vector<16x8xf32>
    %394 = vector.shape_cast %393 : vector<16x8xf32> to vector<2x8x8xf32>
    %395 = vector.extract_strided_slice %366 {offsets = [0, 8], sizes = [16, 8], strides = [1, 1]} : vector<16x32xf32> to vector<16x8xf32>
    %396 = vector.shape_cast %395 : vector<16x8xf32> to vector<2x8x8xf32>
    %397 = vector.extract_strided_slice %367 {offsets = [0, 8], sizes = [16, 8], strides = [1, 1]} : vector<16x32xf32> to vector<16x8xf32>
    %398 = vector.shape_cast %397 : vector<16x8xf32> to vector<2x8x8xf32>
    "tpu.trace_start"() <{level = 10 : i32, message = "bqd,bkd->bqk"}> : () -> ()
    %cst_155 = arith.constant dense<0.000000e+00> : vector<2x8x8xf32>
    %399 = tpu.matmul %394, %396, %cst_155 {dimension_numbers = #tpu.dot_dimension_numbers<[2], [2], [1], [1], [0, 0, 0, 1, 1, 1], [0], [0]>} : vector<2x8x8xf32>, vector<2x8x8xf32>, vector<2x8x8xf32> -> vector<2x8x8xf32>
    "tpu.trace_stop"() : () -> ()
    %cst_156 = arith.constant 0.353553385 : f32
    %400 = vector.broadcast %cst_156 : f32 to vector<2x8x8xf32>
    %401 = arith.mulf %399, %400 : vector<2x8x8xf32>
    %cst_157 = arith.constant dense<0xFF800000> : vector<2x8xf32>
    %402 = vector.multi_reduction <maximumf>, %401, %cst_157 [2] : vector<2x8x8xf32> to vector<2x8xf32>
    %403 = vector.shape_cast %402 : vector<2x8xf32> to vector<2x8x1xf32>
    %404 = vector.broadcast %403 : vector<2x8x1xf32> to vector<2x8x8xf32>
    %405 = arith.subf %401, %404 : vector<2x8x8xf32>
    %406 = math.exp %405 : vector<2x8x8xf32>
    %cst_158 = arith.constant dense<0.000000e+00> : vector<2x8xf32>
    %407 = vector.multi_reduction <add>, %406, %cst_158 [2] : vector<2x8x8xf32> to vector<2x8xf32>
    %408 = vector.shape_cast %407 : vector<2x8xf32> to vector<2x8x1xf32>
    %409 = tpu.reciprocal %408 {approx = true} : vector<2x8x1xf32> -> vector<2x8x1xf32>
    %410 = vector.broadcast %409 : vector<2x8x1xf32> to vector<2x8x8xf32>
    %411 = arith.mulf %406, %410 : vector<2x8x8xf32>
    "tpu.trace_start"() <{level = 10 : i32, message = "bqk,bkd->bqd"}> : () -> ()
    %cst_159 = arith.constant dense<0.000000e+00> : vector<2x8x8xf32>
    %412 = tpu.matmul %411, %398, %cst_159 {dimension_numbers = #tpu.dot_dimension_numbers<[2], [1], [1], [2], [0, 0, 0, 1, 1, 2], [0], [0]>} : vector<2x8x8xf32>, vector<2x8x8xf32>, vector<2x8x8xf32> -> vector<2x8x8xf32>
    "tpu.trace_stop"() : () -> ()
    %413 = vector.shape_cast %412 : vector<2x8x8xf32> to vector<16x8xf32>
    %414 = vector.extract_strided_slice %368 {offsets = [8, 0], sizes = [8, 32], strides = [1, 1]} : vector<32x32xf32> to vector<8x32xf32>
    %cst_160 = arith.constant dense<0.000000e+00> : vector<16x32xf32>
    %415 = tpu.matmul %413, %414, %cst_160 {dimension_numbers = #tpu.dot_dimension_numbers<[1], [0], [0], [1], [0, 0, 1, 1], [], []>} : vector<16x8xf32>, vector<8x32xf32>, vector<16x32xf32> -> vector<16x32xf32>
    %416 = arith.addf %392, %415 : vector<16x32xf32>
    %417 = vector.extract_strided_slice %365 {offsets = [0, 16], sizes = [16, 8], strides = [1, 1]} : vector<16x32xf32> to vector<16x8xf32>
    %418 = vector.shape_cast %417 : vector<16x8xf32> to vector<2x8x8xf32>
    %419 = vector.extract_strided_slice %366 {offsets = [0, 16], sizes = [16, 8], strides = [1, 1]} : vector<16x32xf32> to vector<16x8xf32>
    %420 = vector.shape_cast %419 : vector<16x8xf32> to vector<2x8x8xf32>
    %421 = vector.extract_strided_slice %367 {offsets = [0, 16], sizes = [16, 8], strides = [1, 1]} : vector<16x32xf32> to vector<16x8xf32>
    %422 = vector.shape_cast %421 : vector<16x8xf32> to vector<2x8x8xf32>
    "tpu.trace_start"() <{level = 10 : i32, message = "bqd,bkd->bqk"}> : () -> ()
    %cst_161 = arith.constant dense<0.000000e+00> : vector<2x8x8xf32>
    %423 = tpu.matmul %418, %420, %cst_161 {dimension_numbers = #tpu.dot_dimension_numbers<[2], [2], [1], [1], [0, 0, 0, 1, 1, 1], [0], [0]>} : vector<2x8x8xf32>, vector<2x8x8xf32>, vector<2x8x8xf32> -> vector<2x8x8xf32>
    "tpu.trace_stop"() : () -> ()
    %cst_162 = arith.constant 0.353553385 : f32
    %424 = vector.broadcast %cst_162 : f32 to vector<2x8x8xf32>
    %425 = arith.mulf %423, %424 : vector<2x8x8xf32>
    %cst_163 = arith.constant dense<0xFF800000> : vector<2x8xf32>
    %426 = vector.multi_reduction <maximumf>, %425, %cst_163 [2] : vector<2x8x8xf32> to vector<2x8xf32>
    %427 = vector.shape_cast %426 : vector<2x8xf32> to vector<2x8x1xf32>
    %428 = vector.broadcast %427 : vector<2x8x1xf32> to vector<2x8x8xf32>
    %429 = arith.subf %425, %428 : vector<2x8x8xf32>
    %430 = math.exp %429 : vector<2x8x8xf32>
    %cst_164 = arith.constant dense<0.000000e+00> : vector<2x8xf32>
    %431 = vector.multi_reduction <add>, %430, %cst_164 [2] : vector<2x8x8xf32> to vector<2x8xf32>
    %432 = vector.shape_cast %431 : vector<2x8xf32> to vector<2x8x1xf32>
    %433 = tpu.reciprocal %432 {approx = true} : vector<2x8x1xf32> -> vector<2x8x1xf32>
    %434 = vector.broadcast %433 : vector<2x8x1xf32> to vector<2x8x8xf32>
    %435 = arith.mulf %430, %434 : vector<2x8x8xf32>
    "tpu.trace_start"() <{level = 10 : i32, message = "bqk,bkd->bqd"}> : () -> ()
    %cst_165 = arith.constant dense<0.000000e+00> : vector<2x8x8xf32>
    %436 = tpu.matmul %435, %422, %cst_165 {dimension_numbers = #tpu.dot_dimension_numbers<[2], [1], [1], [2], [0, 0, 0, 1, 1, 2], [0], [0]>} : vector<2x8x8xf32>, vector<2x8x8xf32>, vector<2x8x8xf32> -> vector<2x8x8xf32>
    "tpu.trace_stop"() : () -> ()
    %437 = vector.shape_cast %436 : vector<2x8x8xf32> to vector<16x8xf32>
    %438 = vector.extract_strided_slice %368 {offsets = [16, 0], sizes = [8, 32], strides = [1, 1]} : vector<32x32xf32> to vector<8x32xf32>
    %cst_166 = arith.constant dense<0.000000e+00> : vector<16x32xf32>
    %439 = tpu.matmul %437, %438, %cst_166 {dimension_numbers = #tpu.dot_dimension_numbers<[1], [0], [0], [1], [0, 0, 1, 1], [], []>} : vector<16x8xf32>, vector<8x32xf32>, vector<16x32xf32> -> vector<16x32xf32>
    %440 = arith.addf %416, %439 : vector<16x32xf32>
    %441 = vector.extract_strided_slice %365 {offsets = [0, 24], sizes = [16, 8], strides = [1, 1]} : vector<16x32xf32> to vector<16x8xf32>
    %442 = vector.shape_cast %441 : vector<16x8xf32> to vector<2x8x8xf32>
    %443 = vector.extract_strided_slice %366 {offsets = [0, 24], sizes = [16, 8], strides = [1, 1]} : vector<16x32xf32> to vector<16x8xf32>
    %444 = vector.shape_cast %443 : vector<16x8xf32> to vector<2x8x8xf32>
    %445 = vector.extract_strided_slice %367 {offsets = [0, 24], sizes = [16, 8], strides = [1, 1]} : vector<16x32xf32> to vector<16x8xf32>
    %446 = vector.shape_cast %445 : vector<16x8xf32> to vector<2x8x8xf32>
    "tpu.trace_start"() <{level = 10 : i32, message = "bqd,bkd->bqk"}> : () -> ()
    %cst_167 = arith.constant dense<0.000000e+00> : vector<2x8x8xf32>
    %447 = tpu.matmul %442, %444, %cst_167 {dimension_numbers = #tpu.dot_dimension_numbers<[2], [2], [1], [1], [0, 0, 0, 1, 1, 1], [0], [0]>} : vector<2x8x8xf32>, vector<2x8x8xf32>, vector<2x8x8xf32> -> vector<2x8x8xf32>
    "tpu.trace_stop"() : () -> ()
    %cst_168 = arith.constant 0.353553385 : f32
    %448 = vector.broadcast %cst_168 : f32 to vector<2x8x8xf32>
    %449 = arith.mulf %447, %448 : vector<2x8x8xf32>
    %cst_169 = arith.constant dense<0xFF800000> : vector<2x8xf32>
    %450 = vector.multi_reduction <maximumf>, %449, %cst_169 [2] : vector<2x8x8xf32> to vector<2x8xf32>
    %451 = vector.shape_cast %450 : vector<2x8xf32> to vector<2x8x1xf32>
    %452 = vector.broadcast %451 : vector<2x8x1xf32> to vector<2x8x8xf32>
    %453 = arith.subf %449, %452 : vector<2x8x8xf32>
    %454 = math.exp %453 : vector<2x8x8xf32>
    %cst_170 = arith.constant dense<0.000000e+00> : vector<2x8xf32>
    %455 = vector.multi_reduction <add>, %454, %cst_170 [2] : vector<2x8x8xf32> to vector<2x8xf32>
    %456 = vector.shape_cast %455 : vector<2x8xf32> to vector<2x8x1xf32>
    %457 = tpu.reciprocal %456 {approx = true} : vector<2x8x1xf32> -> vector<2x8x1xf32>
    %458 = vector.broadcast %457 : vector<2x8x1xf32> to vector<2x8x8xf32>
    %459 = arith.mulf %454, %458 : vector<2x8x8xf32>
    "tpu.trace_start"() <{level = 10 : i32, message = "bqk,bkd->bqd"}> : () -> ()
    %cst_171 = arith.constant dense<0.000000e+00> : vector<2x8x8xf32>
    %460 = tpu.matmul %459, %446, %cst_171 {dimension_numbers = #tpu.dot_dimension_numbers<[2], [1], [1], [2], [0, 0, 0, 1, 1, 2], [0], [0]>} : vector<2x8x8xf32>, vector<2x8x8xf32>, vector<2x8x8xf32> -> vector<2x8x8xf32>
    "tpu.trace_stop"() : () -> ()
    %461 = vector.shape_cast %460 : vector<2x8x8xf32> to vector<16x8xf32>
    %462 = vector.extract_strided_slice %368 {offsets = [24, 0], sizes = [8, 32], strides = [1, 1]} : vector<32x32xf32> to vector<8x32xf32>
    %cst_172 = arith.constant dense<0.000000e+00> : vector<16x32xf32>
    %463 = tpu.matmul %461, %462, %cst_172 {dimension_numbers = #tpu.dot_dimension_numbers<[1], [0], [0], [1], [0, 0, 1, 1], [], []>} : vector<16x8xf32>, vector<8x32xf32>, vector<16x32xf32> -> vector<16x32xf32>
    %464 = arith.addf %440, %463 : vector<16x32xf32>
    %465 = vector.broadcast %369 : vector<1x32xf32> to vector<16x32xf32>
    %466 = arith.addf %464, %465 : vector<16x32xf32>
    %467 = arith.addf %7, %466 : vector<16x32xf32>
    %c0_173 = arith.constant 0 : index
    %c0_174 = arith.constant 0 : index
    %468 = vector.load %arg34[%c0_173, %c0_174] : memref<1x32xf32, #tpu.memory_space<vmem>>, vector<1x32xf32>
    %c0_175 = arith.constant 0 : index
    %c0_176 = arith.constant 0 : index
    %469 = vector.load %arg35[%c0_175, %c0_176] : memref<1x32xf32, #tpu.memory_space<vmem>>, vector<1x32xf32>
    %cst_177 = arith.constant dense<0.000000e+00> : vector<16xf32>
    %470 = vector.multi_reduction <add>, %467, %cst_177 [1] : vector<16x32xf32> to vector<16xf32>
    %471 = vector.shape_cast %470 : vector<16xf32> to vector<16x1xf32>
    %cst_178 = arith.constant 3.200000e+01 : f32
    %472 = vector.broadcast %cst_178 : f32 to vector<16x1xf32>
    %473 = arith.divf %471, %472 : vector<16x1xf32>
    %474 = vector.broadcast %473 : vector<16x1xf32> to vector<16x32xf32>
    %475 = arith.subf %467, %474 : vector<16x32xf32>
    %476 = arith.mulf %475, %475 : vector<16x32xf32>
    %cst_179 = arith.constant dense<0.000000e+00> : vector<16xf32>
    %477 = vector.multi_reduction <add>, %476, %cst_179 [1] : vector<16x32xf32> to vector<16xf32>
    %478 = vector.shape_cast %477 : vector<16xf32> to vector<16x1xf32>
    %cst_180 = arith.constant 3.200000e+01 : f32
    %479 = vector.broadcast %cst_180 : f32 to vector<16x1xf32>
    %480 = arith.divf %478, %479 : vector<16x1xf32>
    %cst_181 = arith.constant 9.99999974E-6 : f32
    %481 = vector.broadcast %cst_181 : f32 to vector<16x1xf32>
    %482 = arith.addf %480, %481 : vector<16x1xf32>
    %483 = math.rsqrt %482 : vector<16x1xf32>
    %484 = vector.broadcast %483 : vector<16x1xf32> to vector<16x32xf32>
    %485 = arith.mulf %475, %484 : vector<16x32xf32>
    %486 = vector.broadcast %468 : vector<1x32xf32> to vector<16x32xf32>
    %487 = arith.mulf %485, %486 : vector<16x32xf32>
    %488 = vector.broadcast %469 : vector<1x32xf32> to vector<16x32xf32>
    %489 = arith.addf %487, %488 : vector<16x32xf32>
    %c0_182 = arith.constant 0 : index
    %c0_183 = arith.constant 0 : index
    %490 = vector.load %arg36[%c0_182, %c0_183] : memref<32x32xf32, #tpu.memory_space<vmem>>, vector<32x32xf32>
    %c0_184 = arith.constant 0 : index
    %c0_185 = arith.constant 0 : index
    %491 = vector.load %arg37[%c0_184, %c0_185] : memref<1x32xf32, #tpu.memory_space<vmem>>, vector<1x32xf32>
    %cst_186 = arith.constant dense<0.000000e+00> : vector<16x32xf32>
    %492 = tpu.matmul %489, %490, %cst_186 {dimension_numbers = #tpu.dot_dimension_numbers<[1], [0], [0], [1], [0, 0, 1, 1], [], []>} : vector<16x32xf32>, vector<32x32xf32>, vector<16x32xf32> -> vector<16x32xf32>
    %493 = vector.broadcast %491 : vector<1x32xf32> to vector<16x32xf32>
    %494 = arith.addf %492, %493 : vector<16x32xf32>
    %c0_187 = arith.constant 0 : index
    %c0_188 = arith.constant 0 : index
    %495 = vector.load %arg38[%c0_187, %c0_188] : memref<32x64xf32, #tpu.memory_space<vmem>>, vector<32x64xf32>
    %c0_189 = arith.constant 0 : index
    %c0_190 = arith.constant 0 : index
    %496 = vector.load %arg39[%c0_189, %c0_190] : memref<1x64xf32, #tpu.memory_space<vmem>>, vector<1x64xf32>
    %cst_191 = arith.constant dense<0.000000e+00> : vector<16x64xf32>
    %497 = tpu.matmul %359, %495, %cst_191 {dimension_numbers = #tpu.dot_dimension_numbers<[1], [0], [0], [1], [0, 0, 1, 1], [], []>} : vector<16x32xf32>, vector<32x64xf32>, vector<16x64xf32> -> vector<16x64xf32>
    %498 = vector.broadcast %496 : vector<1x64xf32> to vector<16x64xf32>
    %499 = arith.addf %497, %498 : vector<16x64xf32>
    %500 = vector.extract_strided_slice %499 {offsets = [0, 0], sizes = [16, 32], strides = [1, 1]} : vector<16x64xf32> to vector<16x32xf32>
    %501 = vector.extract_strided_slice %499 {offsets = [0, 32], sizes = [16, 32], strides = [1, 1]} : vector<16x64xf32> to vector<16x32xf32>
    %c0_192 = arith.constant 0 : index
    %c0_193 = arith.constant 0 : index
    %502 = vector.load %arg40[%c0_192, %c0_193] : memref<32x32xf32, #tpu.memory_space<vmem>>, vector<32x32xf32>
    %c0_194 = arith.constant 0 : index
    %c0_195 = arith.constant 0 : index
    %503 = vector.load %arg41[%c0_194, %c0_195] : memref<1x32xf32, #tpu.memory_space<vmem>>, vector<1x32xf32>
    %504 = vector.extract_strided_slice %494 {offsets = [0, 0], sizes = [16, 8], strides = [1, 1]} : vector<16x32xf32> to vector<16x8xf32>
    %505 = vector.shape_cast %504 : vector<16x8xf32> to vector<2x8x8xf32>
    %506 = vector.extract_strided_slice %500 {offsets = [0, 0], sizes = [16, 8], strides = [1, 1]} : vector<16x32xf32> to vector<16x8xf32>
    %507 = vector.shape_cast %506 : vector<16x8xf32> to vector<2x8x8xf32>
    %508 = vector.extract_strided_slice %501 {offsets = [0, 0], sizes = [16, 8], strides = [1, 1]} : vector<16x32xf32> to vector<16x8xf32>
    %509 = vector.shape_cast %508 : vector<16x8xf32> to vector<2x8x8xf32>
    "tpu.trace_start"() <{level = 10 : i32, message = "bqd,bkd->bqk"}> : () -> ()
    %cst_196 = arith.constant dense<0.000000e+00> : vector<2x8x8xf32>
    %510 = tpu.matmul %505, %507, %cst_196 {dimension_numbers = #tpu.dot_dimension_numbers<[2], [2], [1], [1], [0, 0, 0, 1, 1, 1], [0], [0]>} : vector<2x8x8xf32>, vector<2x8x8xf32>, vector<2x8x8xf32> -> vector<2x8x8xf32>
    "tpu.trace_stop"() : () -> ()
    %cst_197 = arith.constant 0.353553385 : f32
    %511 = vector.broadcast %cst_197 : f32 to vector<2x8x8xf32>
    %512 = arith.mulf %510, %511 : vector<2x8x8xf32>
    %cst_198 = arith.constant dense<0xFF800000> : vector<2x8xf32>
    %513 = vector.multi_reduction <maximumf>, %512, %cst_198 [2] : vector<2x8x8xf32> to vector<2x8xf32>
    %514 = vector.shape_cast %513 : vector<2x8xf32> to vector<2x8x1xf32>
    %515 = vector.broadcast %514 : vector<2x8x1xf32> to vector<2x8x8xf32>
    %516 = arith.subf %512, %515 : vector<2x8x8xf32>
    %517 = math.exp %516 : vector<2x8x8xf32>
    %cst_199 = arith.constant dense<0.000000e+00> : vector<2x8xf32>
    %518 = vector.multi_reduction <add>, %517, %cst_199 [2] : vector<2x8x8xf32> to vector<2x8xf32>
    %519 = vector.shape_cast %518 : vector<2x8xf32> to vector<2x8x1xf32>
    %520 = tpu.reciprocal %519 {approx = true} : vector<2x8x1xf32> -> vector<2x8x1xf32>
    %521 = vector.broadcast %520 : vector<2x8x1xf32> to vector<2x8x8xf32>
    %522 = arith.mulf %517, %521 : vector<2x8x8xf32>
    "tpu.trace_start"() <{level = 10 : i32, message = "bqk,bkd->bqd"}> : () -> ()
    %cst_200 = arith.constant dense<0.000000e+00> : vector<2x8x8xf32>
    %523 = tpu.matmul %522, %509, %cst_200 {dimension_numbers = #tpu.dot_dimension_numbers<[2], [1], [1], [2], [0, 0, 0, 1, 1, 2], [0], [0]>} : vector<2x8x8xf32>, vector<2x8x8xf32>, vector<2x8x8xf32> -> vector<2x8x8xf32>
    "tpu.trace_stop"() : () -> ()
    %524 = vector.shape_cast %523 : vector<2x8x8xf32> to vector<16x8xf32>
    %525 = vector.extract_strided_slice %502 {offsets = [0, 0], sizes = [8, 32], strides = [1, 1]} : vector<32x32xf32> to vector<8x32xf32>
    %cst_201 = arith.constant dense<0.000000e+00> : vector<16x32xf32>
    %526 = tpu.matmul %524, %525, %cst_201 {dimension_numbers = #tpu.dot_dimension_numbers<[1], [0], [0], [1], [0, 0, 1, 1], [], []>} : vector<16x8xf32>, vector<8x32xf32>, vector<16x32xf32> -> vector<16x32xf32>
    %527 = vector.extract_strided_slice %494 {offsets = [0, 8], sizes = [16, 8], strides = [1, 1]} : vector<16x32xf32> to vector<16x8xf32>
    %528 = vector.shape_cast %527 : vector<16x8xf32> to vector<2x8x8xf32>
    %529 = vector.extract_strided_slice %500 {offsets = [0, 8], sizes = [16, 8], strides = [1, 1]} : vector<16x32xf32> to vector<16x8xf32>
    %530 = vector.shape_cast %529 : vector<16x8xf32> to vector<2x8x8xf32>
    %531 = vector.extract_strided_slice %501 {offsets = [0, 8], sizes = [16, 8], strides = [1, 1]} : vector<16x32xf32> to vector<16x8xf32>
    %532 = vector.shape_cast %531 : vector<16x8xf32> to vector<2x8x8xf32>
    "tpu.trace_start"() <{level = 10 : i32, message = "bqd,bkd->bqk"}> : () -> ()
    %cst_202 = arith.constant dense<0.000000e+00> : vector<2x8x8xf32>
    %533 = tpu.matmul %528, %530, %cst_202 {dimension_numbers = #tpu.dot_dimension_numbers<[2], [2], [1], [1], [0, 0, 0, 1, 1, 1], [0], [0]>} : vector<2x8x8xf32>, vector<2x8x8xf32>, vector<2x8x8xf32> -> vector<2x8x8xf32>
    "tpu.trace_stop"() : () -> ()
    %cst_203 = arith.constant 0.353553385 : f32
    %534 = vector.broadcast %cst_203 : f32 to vector<2x8x8xf32>
    %535 = arith.mulf %533, %534 : vector<2x8x8xf32>
    %cst_204 = arith.constant dense<0xFF800000> : vector<2x8xf32>
    %536 = vector.multi_reduction <maximumf>, %535, %cst_204 [2] : vector<2x8x8xf32> to vector<2x8xf32>
    %537 = vector.shape_cast %536 : vector<2x8xf32> to vector<2x8x1xf32>
    %538 = vector.broadcast %537 : vector<2x8x1xf32> to vector<2x8x8xf32>
    %539 = arith.subf %535, %538 : vector<2x8x8xf32>
    %540 = math.exp %539 : vector<2x8x8xf32>
    %cst_205 = arith.constant dense<0.000000e+00> : vector<2x8xf32>
    %541 = vector.multi_reduction <add>, %540, %cst_205 [2] : vector<2x8x8xf32> to vector<2x8xf32>
    %542 = vector.shape_cast %541 : vector<2x8xf32> to vector<2x8x1xf32>
    %543 = tpu.reciprocal %542 {approx = true} : vector<2x8x1xf32> -> vector<2x8x1xf32>
    %544 = vector.broadcast %543 : vector<2x8x1xf32> to vector<2x8x8xf32>
    %545 = arith.mulf %540, %544 : vector<2x8x8xf32>
    "tpu.trace_start"() <{level = 10 : i32, message = "bqk,bkd->bqd"}> : () -> ()
    %cst_206 = arith.constant dense<0.000000e+00> : vector<2x8x8xf32>
    %546 = tpu.matmul %545, %532, %cst_206 {dimension_numbers = #tpu.dot_dimension_numbers<[2], [1], [1], [2], [0, 0, 0, 1, 1, 2], [0], [0]>} : vector<2x8x8xf32>, vector<2x8x8xf32>, vector<2x8x8xf32> -> vector<2x8x8xf32>
    "tpu.trace_stop"() : () -> ()
    %547 = vector.shape_cast %546 : vector<2x8x8xf32> to vector<16x8xf32>
    %548 = vector.extract_strided_slice %502 {offsets = [8, 0], sizes = [8, 32], strides = [1, 1]} : vector<32x32xf32> to vector<8x32xf32>
    %cst_207 = arith.constant dense<0.000000e+00> : vector<16x32xf32>
    %549 = tpu.matmul %547, %548, %cst_207 {dimension_numbers = #tpu.dot_dimension_numbers<[1], [0], [0], [1], [0, 0, 1, 1], [], []>} : vector<16x8xf32>, vector<8x32xf32>, vector<16x32xf32> -> vector<16x32xf32>
    %550 = arith.addf %526, %549 : vector<16x32xf32>
    %551 = vector.extract_strided_slice %494 {offsets = [0, 16], sizes = [16, 8], strides = [1, 1]} : vector<16x32xf32> to vector<16x8xf32>
    %552 = vector.shape_cast %551 : vector<16x8xf32> to vector<2x8x8xf32>
    %553 = vector.extract_strided_slice %500 {offsets = [0, 16], sizes = [16, 8], strides = [1, 1]} : vector<16x32xf32> to vector<16x8xf32>
    %554 = vector.shape_cast %553 : vector<16x8xf32> to vector<2x8x8xf32>
    %555 = vector.extract_strided_slice %501 {offsets = [0, 16], sizes = [16, 8], strides = [1, 1]} : vector<16x32xf32> to vector<16x8xf32>
    %556 = vector.shape_cast %555 : vector<16x8xf32> to vector<2x8x8xf32>
    "tpu.trace_start"() <{level = 10 : i32, message = "bqd,bkd->bqk"}> : () -> ()
    %cst_208 = arith.constant dense<0.000000e+00> : vector<2x8x8xf32>
    %557 = tpu.matmul %552, %554, %cst_208 {dimension_numbers = #tpu.dot_dimension_numbers<[2], [2], [1], [1], [0, 0, 0, 1, 1, 1], [0], [0]>} : vector<2x8x8xf32>, vector<2x8x8xf32>, vector<2x8x8xf32> -> vector<2x8x8xf32>
    "tpu.trace_stop"() : () -> ()
    %cst_209 = arith.constant 0.353553385 : f32
    %558 = vector.broadcast %cst_209 : f32 to vector<2x8x8xf32>
    %559 = arith.mulf %557, %558 : vector<2x8x8xf32>
    %cst_210 = arith.constant dense<0xFF800000> : vector<2x8xf32>
    %560 = vector.multi_reduction <maximumf>, %559, %cst_210 [2] : vector<2x8x8xf32> to vector<2x8xf32>
    %561 = vector.shape_cast %560 : vector<2x8xf32> to vector<2x8x1xf32>
    %562 = vector.broadcast %561 : vector<2x8x1xf32> to vector<2x8x8xf32>
    %563 = arith.subf %559, %562 : vector<2x8x8xf32>
    %564 = math.exp %563 : vector<2x8x8xf32>
    %cst_211 = arith.constant dense<0.000000e+00> : vector<2x8xf32>
    %565 = vector.multi_reduction <add>, %564, %cst_211 [2] : vector<2x8x8xf32> to vector<2x8xf32>
    %566 = vector.shape_cast %565 : vector<2x8xf32> to vector<2x8x1xf32>
    %567 = tpu.reciprocal %566 {approx = true} : vector<2x8x1xf32> -> vector<2x8x1xf32>
    %568 = vector.broadcast %567 : vector<2x8x1xf32> to vector<2x8x8xf32>
    %569 = arith.mulf %564, %568 : vector<2x8x8xf32>
    "tpu.trace_start"() <{level = 10 : i32, message = "bqk,bkd->bqd"}> : () -> ()
    %cst_212 = arith.constant dense<0.000000e+00> : vector<2x8x8xf32>
    %570 = tpu.matmul %569, %556, %cst_212 {dimension_numbers = #tpu.dot_dimension_numbers<[2], [1], [1], [2], [0, 0, 0, 1, 1, 2], [0], [0]>} : vector<2x8x8xf32>, vector<2x8x8xf32>, vector<2x8x8xf32> -> vector<2x8x8xf32>
    "tpu.trace_stop"() : () -> ()
    %571 = vector.shape_cast %570 : vector<2x8x8xf32> to vector<16x8xf32>
    %572 = vector.extract_strided_slice %502 {offsets = [16, 0], sizes = [8, 32], strides = [1, 1]} : vector<32x32xf32> to vector<8x32xf32>
    %cst_213 = arith.constant dense<0.000000e+00> : vector<16x32xf32>
    %573 = tpu.matmul %571, %572, %cst_213 {dimension_numbers = #tpu.dot_dimension_numbers<[1], [0], [0], [1], [0, 0, 1, 1], [], []>} : vector<16x8xf32>, vector<8x32xf32>, vector<16x32xf32> -> vector<16x32xf32>
    %574 = arith.addf %550, %573 : vector<16x32xf32>
    %575 = vector.extract_strided_slice %494 {offsets = [0, 24], sizes = [16, 8], strides = [1, 1]} : vector<16x32xf32> to vector<16x8xf32>
    %576 = vector.shape_cast %575 : vector<16x8xf32> to vector<2x8x8xf32>
    %577 = vector.extract_strided_slice %500 {offsets = [0, 24], sizes = [16, 8], strides = [1, 1]} : vector<16x32xf32> to vector<16x8xf32>
    %578 = vector.shape_cast %577 : vector<16x8xf32> to vector<2x8x8xf32>
    %579 = vector.extract_strided_slice %501 {offsets = [0, 24], sizes = [16, 8], strides = [1, 1]} : vector<16x32xf32> to vector<16x8xf32>
    %580 = vector.shape_cast %579 : vector<16x8xf32> to vector<2x8x8xf32>
    "tpu.trace_start"() <{level = 10 : i32, message = "bqd,bkd->bqk"}> : () -> ()
    %cst_214 = arith.constant dense<0.000000e+00> : vector<2x8x8xf32>
    %581 = tpu.matmul %576, %578, %cst_214 {dimension_numbers = #tpu.dot_dimension_numbers<[2], [2], [1], [1], [0, 0, 0, 1, 1, 1], [0], [0]>} : vector<2x8x8xf32>, vector<2x8x8xf32>, vector<2x8x8xf32> -> vector<2x8x8xf32>
    "tpu.trace_stop"() : () -> ()
    %cst_215 = arith.constant 0.353553385 : f32
    %582 = vector.broadcast %cst_215 : f32 to vector<2x8x8xf32>
    %583 = arith.mulf %581, %582 : vector<2x8x8xf32>
    %cst_216 = arith.constant dense<0xFF800000> : vector<2x8xf32>
    %584 = vector.multi_reduction <maximumf>, %583, %cst_216 [2] : vector<2x8x8xf32> to vector<2x8xf32>
    %585 = vector.shape_cast %584 : vector<2x8xf32> to vector<2x8x1xf32>
    %586 = vector.broadcast %585 : vector<2x8x1xf32> to vector<2x8x8xf32>
    %587 = arith.subf %583, %586 : vector<2x8x8xf32>
    %588 = math.exp %587 : vector<2x8x8xf32>
    %cst_217 = arith.constant dense<0.000000e+00> : vector<2x8xf32>
    %589 = vector.multi_reduction <add>, %588, %cst_217 [2] : vector<2x8x8xf32> to vector<2x8xf32>
    %590 = vector.shape_cast %589 : vector<2x8xf32> to vector<2x8x1xf32>
    %591 = tpu.reciprocal %590 {approx = true} : vector<2x8x1xf32> -> vector<2x8x1xf32>
    %592 = vector.broadcast %591 : vector<2x8x1xf32> to vector<2x8x8xf32>
    %593 = arith.mulf %588, %592 : vector<2x8x8xf32>
    "tpu.trace_start"() <{level = 10 : i32, message = "bqk,bkd->bqd"}> : () -> ()
    %cst_218 = arith.constant dense<0.000000e+00> : vector<2x8x8xf32>
    %594 = tpu.matmul %593, %580, %cst_218 {dimension_numbers = #tpu.dot_dimension_numbers<[2], [1], [1], [2], [0, 0, 0, 1, 1, 2], [0], [0]>} : vector<2x8x8xf32>, vector<2x8x8xf32>, vector<2x8x8xf32> -> vector<2x8x8xf32>
    "tpu.trace_stop"() : () -> ()
    %595 = vector.shape_cast %594 : vector<2x8x8xf32> to vector<16x8xf32>
    %596 = vector.extract_strided_slice %502 {offsets = [24, 0], sizes = [8, 32], strides = [1, 1]} : vector<32x32xf32> to vector<8x32xf32>
    %cst_219 = arith.constant dense<0.000000e+00> : vector<16x32xf32>
    %597 = tpu.matmul %595, %596, %cst_219 {dimension_numbers = #tpu.dot_dimension_numbers<[1], [0], [0], [1], [0, 0, 1, 1], [], []>} : vector<16x8xf32>, vector<8x32xf32>, vector<16x32xf32> -> vector<16x32xf32>
    %598 = arith.addf %574, %597 : vector<16x32xf32>
    %599 = vector.broadcast %503 : vector<1x32xf32> to vector<16x32xf32>
    %600 = arith.addf %598, %599 : vector<16x32xf32>
    %601 = arith.addf %489, %600 : vector<16x32xf32>
    %c0_220 = arith.constant 0 : index
    %c0_221 = arith.constant 0 : index
    %602 = vector.load %arg42[%c0_220, %c0_221] : memref<1x32xf32, #tpu.memory_space<vmem>>, vector<1x32xf32>
    %c0_222 = arith.constant 0 : index
    %c0_223 = arith.constant 0 : index
    %603 = vector.load %arg43[%c0_222, %c0_223] : memref<1x32xf32, #tpu.memory_space<vmem>>, vector<1x32xf32>
    %cst_224 = arith.constant dense<0.000000e+00> : vector<16xf32>
    %604 = vector.multi_reduction <add>, %601, %cst_224 [1] : vector<16x32xf32> to vector<16xf32>
    %605 = vector.shape_cast %604 : vector<16xf32> to vector<16x1xf32>
    %cst_225 = arith.constant 3.200000e+01 : f32
    %606 = vector.broadcast %cst_225 : f32 to vector<16x1xf32>
    %607 = arith.divf %605, %606 : vector<16x1xf32>
    %608 = vector.broadcast %607 : vector<16x1xf32> to vector<16x32xf32>
    %609 = arith.subf %601, %608 : vector<16x32xf32>
    %610 = arith.mulf %609, %609 : vector<16x32xf32>
    %cst_226 = arith.constant dense<0.000000e+00> : vector<16xf32>
    %611 = vector.multi_reduction <add>, %610, %cst_226 [1] : vector<16x32xf32> to vector<16xf32>
    %612 = vector.shape_cast %611 : vector<16xf32> to vector<16x1xf32>
    %cst_227 = arith.constant 3.200000e+01 : f32
    %613 = vector.broadcast %cst_227 : f32 to vector<16x1xf32>
    %614 = arith.divf %612, %613 : vector<16x1xf32>
    %cst_228 = arith.constant 9.99999974E-6 : f32
    %615 = vector.broadcast %cst_228 : f32 to vector<16x1xf32>
    %616 = arith.addf %614, %615 : vector<16x1xf32>
    %617 = math.rsqrt %616 : vector<16x1xf32>
    %618 = vector.broadcast %617 : vector<16x1xf32> to vector<16x32xf32>
    %619 = arith.mulf %609, %618 : vector<16x32xf32>
    %620 = vector.broadcast %602 : vector<1x32xf32> to vector<16x32xf32>
    %621 = arith.mulf %619, %620 : vector<16x32xf32>
    %622 = vector.broadcast %603 : vector<1x32xf32> to vector<16x32xf32>
    %623 = arith.addf %621, %622 : vector<16x32xf32>
    %c0_229 = arith.constant 0 : index
    %c0_230 = arith.constant 0 : index
    %624 = vector.load %arg44[%c0_229, %c0_230] : memref<32x64xf32, #tpu.memory_space<vmem>>, vector<32x64xf32>
    %c0_231 = arith.constant 0 : index
    %c0_232 = arith.constant 0 : index
    %625 = vector.load %arg45[%c0_231, %c0_232] : memref<1x64xf32, #tpu.memory_space<vmem>>, vector<1x64xf32>
    %cst_233 = arith.constant dense<0.000000e+00> : vector<16x64xf32>
    %626 = tpu.matmul %623, %624, %cst_233 {dimension_numbers = #tpu.dot_dimension_numbers<[1], [0], [0], [1], [0, 0, 1, 1], [], []>} : vector<16x32xf32>, vector<32x64xf32>, vector<16x64xf32> -> vector<16x64xf32>
    %627 = vector.broadcast %625 : vector<1x64xf32> to vector<16x64xf32>
    %628 = arith.addf %626, %627 : vector<16x64xf32>
    %cst_234 = arith.constant 0.000000e+00 : f32
    %629 = vector.broadcast %cst_234 : f32 to vector<16x64xf32>
    %630 = arith.maximumf %628, %629 : vector<16x64xf32>
    %c0_235 = arith.constant 0 : index
    %c0_236 = arith.constant 0 : index
    %631 = vector.load %arg46[%c0_235, %c0_236] : memref<64x32xf32, #tpu.memory_space<vmem>>, vector<64x32xf32>
    %c0_237 = arith.constant 0 : index
    %c0_238 = arith.constant 0 : index
    %632 = vector.load %arg47[%c0_237, %c0_238] : memref<1x32xf32, #tpu.memory_space<vmem>>, vector<1x32xf32>
    %cst_239 = arith.constant dense<0.000000e+00> : vector<16x32xf32>
    %633 = tpu.matmul %630, %631, %cst_239 {dimension_numbers = #tpu.dot_dimension_numbers<[1], [0], [0], [1], [0, 0, 1, 1], [], []>} : vector<16x64xf32>, vector<64x32xf32>, vector<16x32xf32> -> vector<16x32xf32>
    %634 = vector.broadcast %632 : vector<1x32xf32> to vector<16x32xf32>
    %635 = arith.addf %633, %634 : vector<16x32xf32>
    %636 = arith.addf %623, %635 : vector<16x32xf32>
    %c0_240 = arith.constant 0 : index
    %c0_241 = arith.constant 0 : index
    %637 = vector.load %arg48[%c0_240, %c0_241] : memref<1x32xf32, #tpu.memory_space<vmem>>, vector<1x32xf32>
    %c0_242 = arith.constant 0 : index
    %c0_243 = arith.constant 0 : index
    %638 = vector.load %arg49[%c0_242, %c0_243] : memref<1x32xf32, #tpu.memory_space<vmem>>, vector<1x32xf32>
    %cst_244 = arith.constant dense<0.000000e+00> : vector<16xf32>
    %639 = vector.multi_reduction <add>, %636, %cst_244 [1] : vector<16x32xf32> to vector<16xf32>
    %640 = vector.shape_cast %639 : vector<16xf32> to vector<16x1xf32>
    %cst_245 = arith.constant 3.200000e+01 : f32
    %641 = vector.broadcast %cst_245 : f32 to vector<16x1xf32>
    %642 = arith.divf %640, %641 : vector<16x1xf32>
    %643 = vector.broadcast %642 : vector<16x1xf32> to vector<16x32xf32>
    %644 = arith.subf %636, %643 : vector<16x32xf32>
    %645 = arith.mulf %644, %644 : vector<16x32xf32>
    %cst_246 = arith.constant dense<0.000000e+00> : vector<16xf32>
    %646 = vector.multi_reduction <add>, %645, %cst_246 [1] : vector<16x32xf32> to vector<16xf32>
    %647 = vector.shape_cast %646 : vector<16xf32> to vector<16x1xf32>
    %cst_247 = arith.constant 3.200000e+01 : f32
    %648 = vector.broadcast %cst_247 : f32 to vector<16x1xf32>
    %649 = arith.divf %647, %648 : vector<16x1xf32>
    %cst_248 = arith.constant 9.99999974E-6 : f32
    %650 = vector.broadcast %cst_248 : f32 to vector<16x1xf32>
    %651 = arith.addf %649, %650 : vector<16x1xf32>
    %652 = math.rsqrt %651 : vector<16x1xf32>
    %653 = vector.broadcast %652 : vector<16x1xf32> to vector<16x32xf32>
    %654 = arith.mulf %644, %653 : vector<16x32xf32>
    %655 = vector.broadcast %637 : vector<1x32xf32> to vector<16x32xf32>
    %656 = arith.mulf %654, %655 : vector<16x32xf32>
    %657 = vector.broadcast %638 : vector<1x32xf32> to vector<16x32xf32>
    %658 = arith.addf %656, %657 : vector<16x32xf32>
    %c0_249 = arith.constant 0 : index
    %c0_250 = arith.constant 0 : index
    %659 = vector.load %arg50[%c0_249, %c0_250] : memref<32x96xf32, #tpu.memory_space<vmem>>, vector<32x96xf32>
    %c0_251 = arith.constant 0 : index
    %c0_252 = arith.constant 0 : index
    %660 = vector.load %arg51[%c0_251, %c0_252] : memref<1x96xf32, #tpu.memory_space<vmem>>, vector<1x96xf32>
    %cst_253 = arith.constant dense<0.000000e+00> : vector<16x96xf32>
    %661 = tpu.matmul %658, %659, %cst_253 {dimension_numbers = #tpu.dot_dimension_numbers<[1], [0], [0], [1], [0, 0, 1, 1], [], []>} : vector<16x32xf32>, vector<32x96xf32>, vector<16x96xf32> -> vector<16x96xf32>
    %662 = vector.broadcast %660 : vector<1x96xf32> to vector<16x96xf32>
    %663 = arith.addf %661, %662 : vector<16x96xf32>
    %664 = vector.extract_strided_slice %663 {offsets = [0, 0], sizes = [16, 32], strides = [1, 1]} : vector<16x96xf32> to vector<16x32xf32>
    %665 = vector.extract_strided_slice %663 {offsets = [0, 32], sizes = [16, 32], strides = [1, 1]} : vector<16x96xf32> to vector<16x32xf32>
    %666 = vector.extract_strided_slice %663 {offsets = [0, 64], sizes = [16, 32], strides = [1, 1]} : vector<16x96xf32> to vector<16x32xf32>
    %c0_254 = arith.constant 0 : index
    %c0_255 = arith.constant 0 : index
    %667 = vector.load %arg52[%c0_254, %c0_255] : memref<32x32xf32, #tpu.memory_space<vmem>>, vector<32x32xf32>
    %c0_256 = arith.constant 0 : index
    %c0_257 = arith.constant 0 : index
    %668 = vector.load %arg53[%c0_256, %c0_257] : memref<1x32xf32, #tpu.memory_space<vmem>>, vector<1x32xf32>
    %669 = vector.extract_strided_slice %664 {offsets = [0, 0], sizes = [16, 8], strides = [1, 1]} : vector<16x32xf32> to vector<16x8xf32>
    %670 = vector.shape_cast %669 : vector<16x8xf32> to vector<2x8x8xf32>
    %671 = vector.extract_strided_slice %665 {offsets = [0, 0], sizes = [16, 8], strides = [1, 1]} : vector<16x32xf32> to vector<16x8xf32>
    %672 = vector.shape_cast %671 : vector<16x8xf32> to vector<2x8x8xf32>
    %673 = vector.extract_strided_slice %666 {offsets = [0, 0], sizes = [16, 8], strides = [1, 1]} : vector<16x32xf32> to vector<16x8xf32>
    %674 = vector.shape_cast %673 : vector<16x8xf32> to vector<2x8x8xf32>
    "tpu.trace_start"() <{level = 10 : i32, message = "bqd,bkd->bqk"}> : () -> ()
    %cst_258 = arith.constant dense<0.000000e+00> : vector<2x8x8xf32>
    %675 = tpu.matmul %670, %672, %cst_258 {dimension_numbers = #tpu.dot_dimension_numbers<[2], [2], [1], [1], [0, 0, 0, 1, 1, 1], [0], [0]>} : vector<2x8x8xf32>, vector<2x8x8xf32>, vector<2x8x8xf32> -> vector<2x8x8xf32>
    "tpu.trace_stop"() : () -> ()
    %cst_259 = arith.constant 0.353553385 : f32
    %676 = vector.broadcast %cst_259 : f32 to vector<2x8x8xf32>
    %677 = arith.mulf %675, %676 : vector<2x8x8xf32>
    %cst_260 = arith.constant dense<0xFF800000> : vector<2x8xf32>
    %678 = vector.multi_reduction <maximumf>, %677, %cst_260 [2] : vector<2x8x8xf32> to vector<2x8xf32>
    %679 = vector.shape_cast %678 : vector<2x8xf32> to vector<2x8x1xf32>
    %680 = vector.broadcast %679 : vector<2x8x1xf32> to vector<2x8x8xf32>
    %681 = arith.subf %677, %680 : vector<2x8x8xf32>
    %682 = math.exp %681 : vector<2x8x8xf32>
    %cst_261 = arith.constant dense<0.000000e+00> : vector<2x8xf32>
    %683 = vector.multi_reduction <add>, %682, %cst_261 [2] : vector<2x8x8xf32> to vector<2x8xf32>
    %684 = vector.shape_cast %683 : vector<2x8xf32> to vector<2x8x1xf32>
    %685 = tpu.reciprocal %684 {approx = true} : vector<2x8x1xf32> -> vector<2x8x1xf32>
    %686 = vector.broadcast %685 : vector<2x8x1xf32> to vector<2x8x8xf32>
    %687 = arith.mulf %682, %686 : vector<2x8x8xf32>
    "tpu.trace_start"() <{level = 10 : i32, message = "bqk,bkd->bqd"}> : () -> ()
    %cst_262 = arith.constant dense<0.000000e+00> : vector<2x8x8xf32>
    %688 = tpu.matmul %687, %674, %cst_262 {dimension_numbers = #tpu.dot_dimension_numbers<[2], [1], [1], [2], [0, 0, 0, 1, 1, 2], [0], [0]>} : vector<2x8x8xf32>, vector<2x8x8xf32>, vector<2x8x8xf32> -> vector<2x8x8xf32>
    "tpu.trace_stop"() : () -> ()
    %689 = vector.shape_cast %688 : vector<2x8x8xf32> to vector<16x8xf32>
    %690 = vector.extract_strided_slice %667 {offsets = [0, 0], sizes = [8, 32], strides = [1, 1]} : vector<32x32xf32> to vector<8x32xf32>
    %cst_263 = arith.constant dense<0.000000e+00> : vector<16x32xf32>
    %691 = tpu.matmul %689, %690, %cst_263 {dimension_numbers = #tpu.dot_dimension_numbers<[1], [0], [0], [1], [0, 0, 1, 1], [], []>} : vector<16x8xf32>, vector<8x32xf32>, vector<16x32xf32> -> vector<16x32xf32>
    %692 = vector.extract_strided_slice %664 {offsets = [0, 8], sizes = [16, 8], strides = [1, 1]} : vector<16x32xf32> to vector<16x8xf32>
    %693 = vector.shape_cast %692 : vector<16x8xf32> to vector<2x8x8xf32>
    %694 = vector.extract_strided_slice %665 {offsets = [0, 8], sizes = [16, 8], strides = [1, 1]} : vector<16x32xf32> to vector<16x8xf32>
    %695 = vector.shape_cast %694 : vector<16x8xf32> to vector<2x8x8xf32>
    %696 = vector.extract_strided_slice %666 {offsets = [0, 8], sizes = [16, 8], strides = [1, 1]} : vector<16x32xf32> to vector<16x8xf32>
    %697 = vector.shape_cast %696 : vector<16x8xf32> to vector<2x8x8xf32>
    "tpu.trace_start"() <{level = 10 : i32, message = "bqd,bkd->bqk"}> : () -> ()
    %cst_264 = arith.constant dense<0.000000e+00> : vector<2x8x8xf32>
    %698 = tpu.matmul %693, %695, %cst_264 {dimension_numbers = #tpu.dot_dimension_numbers<[2], [2], [1], [1], [0, 0, 0, 1, 1, 1], [0], [0]>} : vector<2x8x8xf32>, vector<2x8x8xf32>, vector<2x8x8xf32> -> vector<2x8x8xf32>
    "tpu.trace_stop"() : () -> ()
    %cst_265 = arith.constant 0.353553385 : f32
    %699 = vector.broadcast %cst_265 : f32 to vector<2x8x8xf32>
    %700 = arith.mulf %698, %699 : vector<2x8x8xf32>
    %cst_266 = arith.constant dense<0xFF800000> : vector<2x8xf32>
    %701 = vector.multi_reduction <maximumf>, %700, %cst_266 [2] : vector<2x8x8xf32> to vector<2x8xf32>
    %702 = vector.shape_cast %701 : vector<2x8xf32> to vector<2x8x1xf32>
    %703 = vector.broadcast %702 : vector<2x8x1xf32> to vector<2x8x8xf32>
    %704 = arith.subf %700, %703 : vector<2x8x8xf32>
    %705 = math.exp %704 : vector<2x8x8xf32>
    %cst_267 = arith.constant dense<0.000000e+00> : vector<2x8xf32>
    %706 = vector.multi_reduction <add>, %705, %cst_267 [2] : vector<2x8x8xf32> to vector<2x8xf32>
    %707 = vector.shape_cast %706 : vector<2x8xf32> to vector<2x8x1xf32>
    %708 = tpu.reciprocal %707 {approx = true} : vector<2x8x1xf32> -> vector<2x8x1xf32>
    %709 = vector.broadcast %708 : vector<2x8x1xf32> to vector<2x8x8xf32>
    %710 = arith.mulf %705, %709 : vector<2x8x8xf32>
    "tpu.trace_start"() <{level = 10 : i32, message = "bqk,bkd->bqd"}> : () -> ()
    %cst_268 = arith.constant dense<0.000000e+00> : vector<2x8x8xf32>
    %711 = tpu.matmul %710, %697, %cst_268 {dimension_numbers = #tpu.dot_dimension_numbers<[2], [1], [1], [2], [0, 0, 0, 1, 1, 2], [0], [0]>} : vector<2x8x8xf32>, vector<2x8x8xf32>, vector<2x8x8xf32> -> vector<2x8x8xf32>
    "tpu.trace_stop"() : () -> ()
    %712 = vector.shape_cast %711 : vector<2x8x8xf32> to vector<16x8xf32>
    %713 = vector.extract_strided_slice %667 {offsets = [8, 0], sizes = [8, 32], strides = [1, 1]} : vector<32x32xf32> to vector<8x32xf32>
    %cst_269 = arith.constant dense<0.000000e+00> : vector<16x32xf32>
    %714 = tpu.matmul %712, %713, %cst_269 {dimension_numbers = #tpu.dot_dimension_numbers<[1], [0], [0], [1], [0, 0, 1, 1], [], []>} : vector<16x8xf32>, vector<8x32xf32>, vector<16x32xf32> -> vector<16x32xf32>
    %715 = arith.addf %691, %714 : vector<16x32xf32>
    %716 = vector.extract_strided_slice %664 {offsets = [0, 16], sizes = [16, 8], strides = [1, 1]} : vector<16x32xf32> to vector<16x8xf32>
    %717 = vector.shape_cast %716 : vector<16x8xf32> to vector<2x8x8xf32>
    %718 = vector.extract_strided_slice %665 {offsets = [0, 16], sizes = [16, 8], strides = [1, 1]} : vector<16x32xf32> to vector<16x8xf32>
    %719 = vector.shape_cast %718 : vector<16x8xf32> to vector<2x8x8xf32>
    %720 = vector.extract_strided_slice %666 {offsets = [0, 16], sizes = [16, 8], strides = [1, 1]} : vector<16x32xf32> to vector<16x8xf32>
    %721 = vector.shape_cast %720 : vector<16x8xf32> to vector<2x8x8xf32>
    "tpu.trace_start"() <{level = 10 : i32, message = "bqd,bkd->bqk"}> : () -> ()
    %cst_270 = arith.constant dense<0.000000e+00> : vector<2x8x8xf32>
    %722 = tpu.matmul %717, %719, %cst_270 {dimension_numbers = #tpu.dot_dimension_numbers<[2], [2], [1], [1], [0, 0, 0, 1, 1, 1], [0], [0]>} : vector<2x8x8xf32>, vector<2x8x8xf32>, vector<2x8x8xf32> -> vector<2x8x8xf32>
    "tpu.trace_stop"() : () -> ()
    %cst_271 = arith.constant 0.353553385 : f32
    %723 = vector.broadcast %cst_271 : f32 to vector<2x8x8xf32>
    %724 = arith.mulf %722, %723 : vector<2x8x8xf32>
    %cst_272 = arith.constant dense<0xFF800000> : vector<2x8xf32>
    %725 = vector.multi_reduction <maximumf>, %724, %cst_272 [2] : vector<2x8x8xf32> to vector<2x8xf32>
    %726 = vector.shape_cast %725 : vector<2x8xf32> to vector<2x8x1xf32>
    %727 = vector.broadcast %726 : vector<2x8x1xf32> to vector<2x8x8xf32>
    %728 = arith.subf %724, %727 : vector<2x8x8xf32>
    %729 = math.exp %728 : vector<2x8x8xf32>
    %cst_273 = arith.constant dense<0.000000e+00> : vector<2x8xf32>
    %730 = vector.multi_reduction <add>, %729, %cst_273 [2] : vector<2x8x8xf32> to vector<2x8xf32>
    %731 = vector.shape_cast %730 : vector<2x8xf32> to vector<2x8x1xf32>
    %732 = tpu.reciprocal %731 {approx = true} : vector<2x8x1xf32> -> vector<2x8x1xf32>
    %733 = vector.broadcast %732 : vector<2x8x1xf32> to vector<2x8x8xf32>
    %734 = arith.mulf %729, %733 : vector<2x8x8xf32>
    "tpu.trace_start"() <{level = 10 : i32, message = "bqk,bkd->bqd"}> : () -> ()
    %cst_274 = arith.constant dense<0.000000e+00> : vector<2x8x8xf32>
    %735 = tpu.matmul %734, %721, %cst_274 {dimension_numbers = #tpu.dot_dimension_numbers<[2], [1], [1], [2], [0, 0, 0, 1, 1, 2], [0], [0]>} : vector<2x8x8xf32>, vector<2x8x8xf32>, vector<2x8x8xf32> -> vector<2x8x8xf32>
    "tpu.trace_stop"() : () -> ()
    %736 = vector.shape_cast %735 : vector<2x8x8xf32> to vector<16x8xf32>
    %737 = vector.extract_strided_slice %667 {offsets = [16, 0], sizes = [8, 32], strides = [1, 1]} : vector<32x32xf32> to vector<8x32xf32>
    %cst_275 = arith.constant dense<0.000000e+00> : vector<16x32xf32>
    %738 = tpu.matmul %736, %737, %cst_275 {dimension_numbers = #tpu.dot_dimension_numbers<[1], [0], [0], [1], [0, 0, 1, 1], [], []>} : vector<16x8xf32>, vector<8x32xf32>, vector<16x32xf32> -> vector<16x32xf32>
    %739 = arith.addf %715, %738 : vector<16x32xf32>
    %740 = vector.extract_strided_slice %664 {offsets = [0, 24], sizes = [16, 8], strides = [1, 1]} : vector<16x32xf32> to vector<16x8xf32>
    %741 = vector.shape_cast %740 : vector<16x8xf32> to vector<2x8x8xf32>
    %742 = vector.extract_strided_slice %665 {offsets = [0, 24], sizes = [16, 8], strides = [1, 1]} : vector<16x32xf32> to vector<16x8xf32>
    %743 = vector.shape_cast %742 : vector<16x8xf32> to vector<2x8x8xf32>
    %744 = vector.extract_strided_slice %666 {offsets = [0, 24], sizes = [16, 8], strides = [1, 1]} : vector<16x32xf32> to vector<16x8xf32>
    %745 = vector.shape_cast %744 : vector<16x8xf32> to vector<2x8x8xf32>
    "tpu.trace_start"() <{level = 10 : i32, message = "bqd,bkd->bqk"}> : () -> ()
    %cst_276 = arith.constant dense<0.000000e+00> : vector<2x8x8xf32>
    %746 = tpu.matmul %741, %743, %cst_276 {dimension_numbers = #tpu.dot_dimension_numbers<[2], [2], [1], [1], [0, 0, 0, 1, 1, 1], [0], [0]>} : vector<2x8x8xf32>, vector<2x8x8xf32>, vector<2x8x8xf32> -> vector<2x8x8xf32>
    "tpu.trace_stop"() : () -> ()
    %cst_277 = arith.constant 0.353553385 : f32
    %747 = vector.broadcast %cst_277 : f32 to vector<2x8x8xf32>
    %748 = arith.mulf %746, %747 : vector<2x8x8xf32>
    %cst_278 = arith.constant dense<0xFF800000> : vector<2x8xf32>
    %749 = vector.multi_reduction <maximumf>, %748, %cst_278 [2] : vector<2x8x8xf32> to vector<2x8xf32>
    %750 = vector.shape_cast %749 : vector<2x8xf32> to vector<2x8x1xf32>
    %751 = vector.broadcast %750 : vector<2x8x1xf32> to vector<2x8x8xf32>
    %752 = arith.subf %748, %751 : vector<2x8x8xf32>
    %753 = math.exp %752 : vector<2x8x8xf32>
    %cst_279 = arith.constant dense<0.000000e+00> : vector<2x8xf32>
    %754 = vector.multi_reduction <add>, %753, %cst_279 [2] : vector<2x8x8xf32> to vector<2x8xf32>
    %755 = vector.shape_cast %754 : vector<2x8xf32> to vector<2x8x1xf32>
    %756 = tpu.reciprocal %755 {approx = true} : vector<2x8x1xf32> -> vector<2x8x1xf32>
    %757 = vector.broadcast %756 : vector<2x8x1xf32> to vector<2x8x8xf32>
    %758 = arith.mulf %753, %757 : vector<2x8x8xf32>
    "tpu.trace_start"() <{level = 10 : i32, message = "bqk,bkd->bqd"}> : () -> ()
    %cst_280 = arith.constant dense<0.000000e+00> : vector<2x8x8xf32>
    %759 = tpu.matmul %758, %745, %cst_280 {dimension_numbers = #tpu.dot_dimension_numbers<[2], [1], [1], [2], [0, 0, 0, 1, 1, 2], [0], [0]>} : vector<2x8x8xf32>, vector<2x8x8xf32>, vector<2x8x8xf32> -> vector<2x8x8xf32>
    "tpu.trace_stop"() : () -> ()
    %760 = vector.shape_cast %759 : vector<2x8x8xf32> to vector<16x8xf32>
    %761 = vector.extract_strided_slice %667 {offsets = [24, 0], sizes = [8, 32], strides = [1, 1]} : vector<32x32xf32> to vector<8x32xf32>
    %cst_281 = arith.constant dense<0.000000e+00> : vector<16x32xf32>
    %762 = tpu.matmul %760, %761, %cst_281 {dimension_numbers = #tpu.dot_dimension_numbers<[1], [0], [0], [1], [0, 0, 1, 1], [], []>} : vector<16x8xf32>, vector<8x32xf32>, vector<16x32xf32> -> vector<16x32xf32>
    %763 = arith.addf %739, %762 : vector<16x32xf32>
    %764 = vector.broadcast %668 : vector<1x32xf32> to vector<16x32xf32>
    %765 = arith.addf %763, %764 : vector<16x32xf32>
    %766 = arith.addf %658, %765 : vector<16x32xf32>
    %c0_282 = arith.constant 0 : index
    %c0_283 = arith.constant 0 : index
    %767 = vector.load %arg54[%c0_282, %c0_283] : memref<1x32xf32, #tpu.memory_space<vmem>>, vector<1x32xf32>
    %c0_284 = arith.constant 0 : index
    %c0_285 = arith.constant 0 : index
    %768 = vector.load %arg55[%c0_284, %c0_285] : memref<1x32xf32, #tpu.memory_space<vmem>>, vector<1x32xf32>
    %cst_286 = arith.constant dense<0.000000e+00> : vector<16xf32>
    %769 = vector.multi_reduction <add>, %766, %cst_286 [1] : vector<16x32xf32> to vector<16xf32>
    %770 = vector.shape_cast %769 : vector<16xf32> to vector<16x1xf32>
    %cst_287 = arith.constant 3.200000e+01 : f32
    %771 = vector.broadcast %cst_287 : f32 to vector<16x1xf32>
    %772 = arith.divf %770, %771 : vector<16x1xf32>
    %773 = vector.broadcast %772 : vector<16x1xf32> to vector<16x32xf32>
    %774 = arith.subf %766, %773 : vector<16x32xf32>
    %775 = arith.mulf %774, %774 : vector<16x32xf32>
    %cst_288 = arith.constant dense<0.000000e+00> : vector<16xf32>
    %776 = vector.multi_reduction <add>, %775, %cst_288 [1] : vector<16x32xf32> to vector<16xf32>
    %777 = vector.shape_cast %776 : vector<16xf32> to vector<16x1xf32>
    %cst_289 = arith.constant 3.200000e+01 : f32
    %778 = vector.broadcast %cst_289 : f32 to vector<16x1xf32>
    %779 = arith.divf %777, %778 : vector<16x1xf32>
    %cst_290 = arith.constant 9.99999974E-6 : f32
    %780 = vector.broadcast %cst_290 : f32 to vector<16x1xf32>
    %781 = arith.addf %779, %780 : vector<16x1xf32>
    %782 = math.rsqrt %781 : vector<16x1xf32>
    %783 = vector.broadcast %782 : vector<16x1xf32> to vector<16x32xf32>
    %784 = arith.mulf %774, %783 : vector<16x32xf32>
    %785 = vector.broadcast %767 : vector<1x32xf32> to vector<16x32xf32>
    %786 = arith.mulf %784, %785 : vector<16x32xf32>
    %787 = vector.broadcast %768 : vector<1x32xf32> to vector<16x32xf32>
    %788 = arith.addf %786, %787 : vector<16x32xf32>
    %c0_291 = arith.constant 0 : index
    %c0_292 = arith.constant 0 : index
    %789 = vector.load %arg56[%c0_291, %c0_292] : memref<32x32xf32, #tpu.memory_space<vmem>>, vector<32x32xf32>
    %c0_293 = arith.constant 0 : index
    %c0_294 = arith.constant 0 : index
    %790 = vector.load %arg57[%c0_293, %c0_294] : memref<1x32xf32, #tpu.memory_space<vmem>>, vector<1x32xf32>
    %cst_295 = arith.constant dense<0.000000e+00> : vector<16x32xf32>
    %791 = tpu.matmul %788, %789, %cst_295 {dimension_numbers = #tpu.dot_dimension_numbers<[1], [0], [0], [1], [0, 0, 1, 1], [], []>} : vector<16x32xf32>, vector<32x32xf32>, vector<16x32xf32> -> vector<16x32xf32>
    %792 = vector.broadcast %790 : vector<1x32xf32> to vector<16x32xf32>
    %793 = arith.addf %791, %792 : vector<16x32xf32>
    %c0_296 = arith.constant 0 : index
    %c0_297 = arith.constant 0 : index
    %794 = vector.load %arg58[%c0_296, %c0_297] : memref<32x64xf32, #tpu.memory_space<vmem>>, vector<32x64xf32>
    %c0_298 = arith.constant 0 : index
    %c0_299 = arith.constant 0 : index
    %795 = vector.load %arg59[%c0_298, %c0_299] : memref<1x64xf32, #tpu.memory_space<vmem>>, vector<1x64xf32>
    %cst_300 = arith.constant dense<0.000000e+00> : vector<16x64xf32>
    %796 = tpu.matmul %359, %794, %cst_300 {dimension_numbers = #tpu.dot_dimension_numbers<[1], [0], [0], [1], [0, 0, 1, 1], [], []>} : vector<16x32xf32>, vector<32x64xf32>, vector<16x64xf32> -> vector<16x64xf32>
    %797 = vector.broadcast %795 : vector<1x64xf32> to vector<16x64xf32>
    %798 = arith.addf %796, %797 : vector<16x64xf32>
    %799 = vector.extract_strided_slice %798 {offsets = [0, 0], sizes = [16, 32], strides = [1, 1]} : vector<16x64xf32> to vector<16x32xf32>
    %800 = vector.extract_strided_slice %798 {offsets = [0, 32], sizes = [16, 32], strides = [1, 1]} : vector<16x64xf32> to vector<16x32xf32>
    %c0_301 = arith.constant 0 : index
    %c0_302 = arith.constant 0 : index
    %801 = vector.load %arg60[%c0_301, %c0_302] : memref<32x32xf32, #tpu.memory_space<vmem>>, vector<32x32xf32>
    %c0_303 = arith.constant 0 : index
    %c0_304 = arith.constant 0 : index
    %802 = vector.load %arg61[%c0_303, %c0_304] : memref<1x32xf32, #tpu.memory_space<vmem>>, vector<1x32xf32>
    %803 = vector.extract_strided_slice %793 {offsets = [0, 0], sizes = [16, 8], strides = [1, 1]} : vector<16x32xf32> to vector<16x8xf32>
    %804 = vector.shape_cast %803 : vector<16x8xf32> to vector<2x8x8xf32>
    %805 = vector.extract_strided_slice %799 {offsets = [0, 0], sizes = [16, 8], strides = [1, 1]} : vector<16x32xf32> to vector<16x8xf32>
    %806 = vector.shape_cast %805 : vector<16x8xf32> to vector<2x8x8xf32>
    %807 = vector.extract_strided_slice %800 {offsets = [0, 0], sizes = [16, 8], strides = [1, 1]} : vector<16x32xf32> to vector<16x8xf32>
    %808 = vector.shape_cast %807 : vector<16x8xf32> to vector<2x8x8xf32>
    "tpu.trace_start"() <{level = 10 : i32, message = "bqd,bkd->bqk"}> : () -> ()
    %cst_305 = arith.constant dense<0.000000e+00> : vector<2x8x8xf32>
    %809 = tpu.matmul %804, %806, %cst_305 {dimension_numbers = #tpu.dot_dimension_numbers<[2], [2], [1], [1], [0, 0, 0, 1, 1, 1], [0], [0]>} : vector<2x8x8xf32>, vector<2x8x8xf32>, vector<2x8x8xf32> -> vector<2x8x8xf32>
    "tpu.trace_stop"() : () -> ()
    %cst_306 = arith.constant 0.353553385 : f32
    %810 = vector.broadcast %cst_306 : f32 to vector<2x8x8xf32>
    %811 = arith.mulf %809, %810 : vector<2x8x8xf32>
    %cst_307 = arith.constant dense<0xFF800000> : vector<2x8xf32>
    %812 = vector.multi_reduction <maximumf>, %811, %cst_307 [2] : vector<2x8x8xf32> to vector<2x8xf32>
    %813 = vector.shape_cast %812 : vector<2x8xf32> to vector<2x8x1xf32>
    %814 = vector.broadcast %813 : vector<2x8x1xf32> to vector<2x8x8xf32>
    %815 = arith.subf %811, %814 : vector<2x8x8xf32>
    %816 = math.exp %815 : vector<2x8x8xf32>
    %cst_308 = arith.constant dense<0.000000e+00> : vector<2x8xf32>
    %817 = vector.multi_reduction <add>, %816, %cst_308 [2] : vector<2x8x8xf32> to vector<2x8xf32>
    %818 = vector.shape_cast %817 : vector<2x8xf32> to vector<2x8x1xf32>
    %819 = tpu.reciprocal %818 {approx = true} : vector<2x8x1xf32> -> vector<2x8x1xf32>
    %820 = vector.broadcast %819 : vector<2x8x1xf32> to vector<2x8x8xf32>
    %821 = arith.mulf %816, %820 : vector<2x8x8xf32>
    "tpu.trace_start"() <{level = 10 : i32, message = "bqk,bkd->bqd"}> : () -> ()
    %cst_309 = arith.constant dense<0.000000e+00> : vector<2x8x8xf32>
    %822 = tpu.matmul %821, %808, %cst_309 {dimension_numbers = #tpu.dot_dimension_numbers<[2], [1], [1], [2], [0, 0, 0, 1, 1, 2], [0], [0]>} : vector<2x8x8xf32>, vector<2x8x8xf32>, vector<2x8x8xf32> -> vector<2x8x8xf32>
    "tpu.trace_stop"() : () -> ()
    %823 = vector.shape_cast %822 : vector<2x8x8xf32> to vector<16x8xf32>
    %824 = vector.extract_strided_slice %801 {offsets = [0, 0], sizes = [8, 32], strides = [1, 1]} : vector<32x32xf32> to vector<8x32xf32>
    %cst_310 = arith.constant dense<0.000000e+00> : vector<16x32xf32>
    %825 = tpu.matmul %823, %824, %cst_310 {dimension_numbers = #tpu.dot_dimension_numbers<[1], [0], [0], [1], [0, 0, 1, 1], [], []>} : vector<16x8xf32>, vector<8x32xf32>, vector<16x32xf32> -> vector<16x32xf32>
    %826 = vector.extract_strided_slice %793 {offsets = [0, 8], sizes = [16, 8], strides = [1, 1]} : vector<16x32xf32> to vector<16x8xf32>
    %827 = vector.shape_cast %826 : vector<16x8xf32> to vector<2x8x8xf32>
    %828 = vector.extract_strided_slice %799 {offsets = [0, 8], sizes = [16, 8], strides = [1, 1]} : vector<16x32xf32> to vector<16x8xf32>
    %829 = vector.shape_cast %828 : vector<16x8xf32> to vector<2x8x8xf32>
    %830 = vector.extract_strided_slice %800 {offsets = [0, 8], sizes = [16, 8], strides = [1, 1]} : vector<16x32xf32> to vector<16x8xf32>
    %831 = vector.shape_cast %830 : vector<16x8xf32> to vector<2x8x8xf32>
    "tpu.trace_start"() <{level = 10 : i32, message = "bqd,bkd->bqk"}> : () -> ()
    %cst_311 = arith.constant dense<0.000000e+00> : vector<2x8x8xf32>
    %832 = tpu.matmul %827, %829, %cst_311 {dimension_numbers = #tpu.dot_dimension_numbers<[2], [2], [1], [1], [0, 0, 0, 1, 1, 1], [0], [0]>} : vector<2x8x8xf32>, vector<2x8x8xf32>, vector<2x8x8xf32> -> vector<2x8x8xf32>
    "tpu.trace_stop"() : () -> ()
    %cst_312 = arith.constant 0.353553385 : f32
    %833 = vector.broadcast %cst_312 : f32 to vector<2x8x8xf32>
    %834 = arith.mulf %832, %833 : vector<2x8x8xf32>
    %cst_313 = arith.constant dense<0xFF800000> : vector<2x8xf32>
    %835 = vector.multi_reduction <maximumf>, %834, %cst_313 [2] : vector<2x8x8xf32> to vector<2x8xf32>
    %836 = vector.shape_cast %835 : vector<2x8xf32> to vector<2x8x1xf32>
    %837 = vector.broadcast %836 : vector<2x8x1xf32> to vector<2x8x8xf32>
    %838 = arith.subf %834, %837 : vector<2x8x8xf32>
    %839 = math.exp %838 : vector<2x8x8xf32>
    %cst_314 = arith.constant dense<0.000000e+00> : vector<2x8xf32>
    %840 = vector.multi_reduction <add>, %839, %cst_314 [2] : vector<2x8x8xf32> to vector<2x8xf32>
    %841 = vector.shape_cast %840 : vector<2x8xf32> to vector<2x8x1xf32>
    %842 = tpu.reciprocal %841 {approx = true} : vector<2x8x1xf32> -> vector<2x8x1xf32>
    %843 = vector.broadcast %842 : vector<2x8x1xf32> to vector<2x8x8xf32>
    %844 = arith.mulf %839, %843 : vector<2x8x8xf32>
    "tpu.trace_start"() <{level = 10 : i32, message = "bqk,bkd->bqd"}> : () -> ()
    %cst_315 = arith.constant dense<0.000000e+00> : vector<2x8x8xf32>
    %845 = tpu.matmul %844, %831, %cst_315 {dimension_numbers = #tpu.dot_dimension_numbers<[2], [1], [1], [2], [0, 0, 0, 1, 1, 2], [0], [0]>} : vector<2x8x8xf32>, vector<2x8x8xf32>, vector<2x8x8xf32> -> vector<2x8x8xf32>
    "tpu.trace_stop"() : () -> ()
    %846 = vector.shape_cast %845 : vector<2x8x8xf32> to vector<16x8xf32>
    %847 = vector.extract_strided_slice %801 {offsets = [8, 0], sizes = [8, 32], strides = [1, 1]} : vector<32x32xf32> to vector<8x32xf32>
    %cst_316 = arith.constant dense<0.000000e+00> : vector<16x32xf32>
    %848 = tpu.matmul %846, %847, %cst_316 {dimension_numbers = #tpu.dot_dimension_numbers<[1], [0], [0], [1], [0, 0, 1, 1], [], []>} : vector<16x8xf32>, vector<8x32xf32>, vector<16x32xf32> -> vector<16x32xf32>
    %849 = arith.addf %825, %848 : vector<16x32xf32>
    %850 = vector.extract_strided_slice %793 {offsets = [0, 16], sizes = [16, 8], strides = [1, 1]} : vector<16x32xf32> to vector<16x8xf32>
    %851 = vector.shape_cast %850 : vector<16x8xf32> to vector<2x8x8xf32>
    %852 = vector.extract_strided_slice %799 {offsets = [0, 16], sizes = [16, 8], strides = [1, 1]} : vector<16x32xf32> to vector<16x8xf32>
    %853 = vector.shape_cast %852 : vector<16x8xf32> to vector<2x8x8xf32>
    %854 = vector.extract_strided_slice %800 {offsets = [0, 16], sizes = [16, 8], strides = [1, 1]} : vector<16x32xf32> to vector<16x8xf32>
    %855 = vector.shape_cast %854 : vector<16x8xf32> to vector<2x8x8xf32>
    "tpu.trace_start"() <{level = 10 : i32, message = "bqd,bkd->bqk"}> : () -> ()
    %cst_317 = arith.constant dense<0.000000e+00> : vector<2x8x8xf32>
    %856 = tpu.matmul %851, %853, %cst_317 {dimension_numbers = #tpu.dot_dimension_numbers<[2], [2], [1], [1], [0, 0, 0, 1, 1, 1], [0], [0]>} : vector<2x8x8xf32>, vector<2x8x8xf32>, vector<2x8x8xf32> -> vector<2x8x8xf32>
    "tpu.trace_stop"() : () -> ()
    %cst_318 = arith.constant 0.353553385 : f32
    %857 = vector.broadcast %cst_318 : f32 to vector<2x8x8xf32>
    %858 = arith.mulf %856, %857 : vector<2x8x8xf32>
    %cst_319 = arith.constant dense<0xFF800000> : vector<2x8xf32>
    %859 = vector.multi_reduction <maximumf>, %858, %cst_319 [2] : vector<2x8x8xf32> to vector<2x8xf32>
    %860 = vector.shape_cast %859 : vector<2x8xf32> to vector<2x8x1xf32>
    %861 = vector.broadcast %860 : vector<2x8x1xf32> to vector<2x8x8xf32>
    %862 = arith.subf %858, %861 : vector<2x8x8xf32>
    %863 = math.exp %862 : vector<2x8x8xf32>
    %cst_320 = arith.constant dense<0.000000e+00> : vector<2x8xf32>
    %864 = vector.multi_reduction <add>, %863, %cst_320 [2] : vector<2x8x8xf32> to vector<2x8xf32>
    %865 = vector.shape_cast %864 : vector<2x8xf32> to vector<2x8x1xf32>
    %866 = tpu.reciprocal %865 {approx = true} : vector<2x8x1xf32> -> vector<2x8x1xf32>
    %867 = vector.broadcast %866 : vector<2x8x1xf32> to vector<2x8x8xf32>
    %868 = arith.mulf %863, %867 : vector<2x8x8xf32>
    "tpu.trace_start"() <{level = 10 : i32, message = "bqk,bkd->bqd"}> : () -> ()
    %cst_321 = arith.constant dense<0.000000e+00> : vector<2x8x8xf32>
    %869 = tpu.matmul %868, %855, %cst_321 {dimension_numbers = #tpu.dot_dimension_numbers<[2], [1], [1], [2], [0, 0, 0, 1, 1, 2], [0], [0]>} : vector<2x8x8xf32>, vector<2x8x8xf32>, vector<2x8x8xf32> -> vector<2x8x8xf32>
    "tpu.trace_stop"() : () -> ()
    %870 = vector.shape_cast %869 : vector<2x8x8xf32> to vector<16x8xf32>
    %871 = vector.extract_strided_slice %801 {offsets = [16, 0], sizes = [8, 32], strides = [1, 1]} : vector<32x32xf32> to vector<8x32xf32>
    %cst_322 = arith.constant dense<0.000000e+00> : vector<16x32xf32>
    %872 = tpu.matmul %870, %871, %cst_322 {dimension_numbers = #tpu.dot_dimension_numbers<[1], [0], [0], [1], [0, 0, 1, 1], [], []>} : vector<16x8xf32>, vector<8x32xf32>, vector<16x32xf32> -> vector<16x32xf32>
    %873 = arith.addf %849, %872 : vector<16x32xf32>
    %874 = vector.extract_strided_slice %793 {offsets = [0, 24], sizes = [16, 8], strides = [1, 1]} : vector<16x32xf32> to vector<16x8xf32>
    %875 = vector.shape_cast %874 : vector<16x8xf32> to vector<2x8x8xf32>
    %876 = vector.extract_strided_slice %799 {offsets = [0, 24], sizes = [16, 8], strides = [1, 1]} : vector<16x32xf32> to vector<16x8xf32>
    %877 = vector.shape_cast %876 : vector<16x8xf32> to vector<2x8x8xf32>
    %878 = vector.extract_strided_slice %800 {offsets = [0, 24], sizes = [16, 8], strides = [1, 1]} : vector<16x32xf32> to vector<16x8xf32>
    %879 = vector.shape_cast %878 : vector<16x8xf32> to vector<2x8x8xf32>
    "tpu.trace_start"() <{level = 10 : i32, message = "bqd,bkd->bqk"}> : () -> ()
    %cst_323 = arith.constant dense<0.000000e+00> : vector<2x8x8xf32>
    %880 = tpu.matmul %875, %877, %cst_323 {dimension_numbers = #tpu.dot_dimension_numbers<[2], [2], [1], [1], [0, 0, 0, 1, 1, 1], [0], [0]>} : vector<2x8x8xf32>, vector<2x8x8xf32>, vector<2x8x8xf32> -> vector<2x8x8xf32>
    "tpu.trace_stop"() : () -> ()
    %cst_324 = arith.constant 0.353553385 : f32
    %881 = vector.broadcast %cst_324 : f32 to vector<2x8x8xf32>
    %882 = arith.mulf %880, %881 : vector<2x8x8xf32>
    %cst_325 = arith.constant dense<0xFF800000> : vector<2x8xf32>
    %883 = vector.multi_reduction <maximumf>, %882, %cst_325 [2] : vector<2x8x8xf32> to vector<2x8xf32>
    %884 = vector.shape_cast %883 : vector<2x8xf32> to vector<2x8x1xf32>
    %885 = vector.broadcast %884 : vector<2x8x1xf32> to vector<2x8x8xf32>
    %886 = arith.subf %882, %885 : vector<2x8x8xf32>
    %887 = math.exp %886 : vector<2x8x8xf32>
    %cst_326 = arith.constant dense<0.000000e+00> : vector<2x8xf32>
    %888 = vector.multi_reduction <add>, %887, %cst_326 [2] : vector<2x8x8xf32> to vector<2x8xf32>
    %889 = vector.shape_cast %888 : vector<2x8xf32> to vector<2x8x1xf32>
    %890 = tpu.reciprocal %889 {approx = true} : vector<2x8x1xf32> -> vector<2x8x1xf32>
    %891 = vector.broadcast %890 : vector<2x8x1xf32> to vector<2x8x8xf32>
    %892 = arith.mulf %887, %891 : vector<2x8x8xf32>
    "tpu.trace_start"() <{level = 10 : i32, message = "bqk,bkd->bqd"}> : () -> ()
    %cst_327 = arith.constant dense<0.000000e+00> : vector<2x8x8xf32>
    %893 = tpu.matmul %892, %879, %cst_327 {dimension_numbers = #tpu.dot_dimension_numbers<[2], [1], [1], [2], [0, 0, 0, 1, 1, 2], [0], [0]>} : vector<2x8x8xf32>, vector<2x8x8xf32>, vector<2x8x8xf32> -> vector<2x8x8xf32>
    "tpu.trace_stop"() : () -> ()
    %894 = vector.shape_cast %893 : vector<2x8x8xf32> to vector<16x8xf32>
    %895 = vector.extract_strided_slice %801 {offsets = [24, 0], sizes = [8, 32], strides = [1, 1]} : vector<32x32xf32> to vector<8x32xf32>
    %cst_328 = arith.constant dense<0.000000e+00> : vector<16x32xf32>
    %896 = tpu.matmul %894, %895, %cst_328 {dimension_numbers = #tpu.dot_dimension_numbers<[1], [0], [0], [1], [0, 0, 1, 1], [], []>} : vector<16x8xf32>, vector<8x32xf32>, vector<16x32xf32> -> vector<16x32xf32>
    %897 = arith.addf %873, %896 : vector<16x32xf32>
    %898 = vector.broadcast %802 : vector<1x32xf32> to vector<16x32xf32>
    %899 = arith.addf %897, %898 : vector<16x32xf32>
    %900 = arith.addf %788, %899 : vector<16x32xf32>
    %c0_329 = arith.constant 0 : index
    %c0_330 = arith.constant 0 : index
    %901 = vector.load %arg62[%c0_329, %c0_330] : memref<1x32xf32, #tpu.memory_space<vmem>>, vector<1x32xf32>
    %c0_331 = arith.constant 0 : index
    %c0_332 = arith.constant 0 : index
    %902 = vector.load %arg63[%c0_331, %c0_332] : memref<1x32xf32, #tpu.memory_space<vmem>>, vector<1x32xf32>
    %cst_333 = arith.constant dense<0.000000e+00> : vector<16xf32>
    %903 = vector.multi_reduction <add>, %900, %cst_333 [1] : vector<16x32xf32> to vector<16xf32>
    %904 = vector.shape_cast %903 : vector<16xf32> to vector<16x1xf32>
    %cst_334 = arith.constant 3.200000e+01 : f32
    %905 = vector.broadcast %cst_334 : f32 to vector<16x1xf32>
    %906 = arith.divf %904, %905 : vector<16x1xf32>
    %907 = vector.broadcast %906 : vector<16x1xf32> to vector<16x32xf32>
    %908 = arith.subf %900, %907 : vector<16x32xf32>
    %909 = arith.mulf %908, %908 : vector<16x32xf32>
    %cst_335 = arith.constant dense<0.000000e+00> : vector<16xf32>
    %910 = vector.multi_reduction <add>, %909, %cst_335 [1] : vector<16x32xf32> to vector<16xf32>
    %911 = vector.shape_cast %910 : vector<16xf32> to vector<16x1xf32>
    %cst_336 = arith.constant 3.200000e+01 : f32
    %912 = vector.broadcast %cst_336 : f32 to vector<16x1xf32>
    %913 = arith.divf %911, %912 : vector<16x1xf32>
    %cst_337 = arith.constant 9.99999974E-6 : f32
    %914 = vector.broadcast %cst_337 : f32 to vector<16x1xf32>
    %915 = arith.addf %913, %914 : vector<16x1xf32>
    %916 = math.rsqrt %915 : vector<16x1xf32>
    %917 = vector.broadcast %916 : vector<16x1xf32> to vector<16x32xf32>
    %918 = arith.mulf %908, %917 : vector<16x32xf32>
    %919 = vector.broadcast %901 : vector<1x32xf32> to vector<16x32xf32>
    %920 = arith.mulf %918, %919 : vector<16x32xf32>
    %921 = vector.broadcast %902 : vector<1x32xf32> to vector<16x32xf32>
    %922 = arith.addf %920, %921 : vector<16x32xf32>
    %c0_338 = arith.constant 0 : index
    %c0_339 = arith.constant 0 : index
    %923 = vector.load %arg64[%c0_338, %c0_339] : memref<32x64xf32, #tpu.memory_space<vmem>>, vector<32x64xf32>
    %c0_340 = arith.constant 0 : index
    %c0_341 = arith.constant 0 : index
    %924 = vector.load %arg65[%c0_340, %c0_341] : memref<1x64xf32, #tpu.memory_space<vmem>>, vector<1x64xf32>
    %cst_342 = arith.constant dense<0.000000e+00> : vector<16x64xf32>
    %925 = tpu.matmul %922, %923, %cst_342 {dimension_numbers = #tpu.dot_dimension_numbers<[1], [0], [0], [1], [0, 0, 1, 1], [], []>} : vector<16x32xf32>, vector<32x64xf32>, vector<16x64xf32> -> vector<16x64xf32>
    %926 = vector.broadcast %924 : vector<1x64xf32> to vector<16x64xf32>
    %927 = arith.addf %925, %926 : vector<16x64xf32>
    %cst_343 = arith.constant 0.000000e+00 : f32
    %928 = vector.broadcast %cst_343 : f32 to vector<16x64xf32>
    %929 = arith.maximumf %927, %928 : vector<16x64xf32>
    %c0_344 = arith.constant 0 : index
    %c0_345 = arith.constant 0 : index
    %930 = vector.load %arg66[%c0_344, %c0_345] : memref<64x32xf32, #tpu.memory_space<vmem>>, vector<64x32xf32>
    %c0_346 = arith.constant 0 : index
    %c0_347 = arith.constant 0 : index
    %931 = vector.load %arg67[%c0_346, %c0_347] : memref<1x32xf32, #tpu.memory_space<vmem>>, vector<1x32xf32>
    %cst_348 = arith.constant dense<0.000000e+00> : vector<16x32xf32>
    %932 = tpu.matmul %929, %930, %cst_348 {dimension_numbers = #tpu.dot_dimension_numbers<[1], [0], [0], [1], [0, 0, 1, 1], [], []>} : vector<16x64xf32>, vector<64x32xf32>, vector<16x32xf32> -> vector<16x32xf32>
    %933 = vector.broadcast %931 : vector<1x32xf32> to vector<16x32xf32>
    %934 = arith.addf %932, %933 : vector<16x32xf32>
    %935 = arith.addf %922, %934 : vector<16x32xf32>
    %c0_349 = arith.constant 0 : index
    %c0_350 = arith.constant 0 : index
    %936 = vector.load %arg68[%c0_349, %c0_350] : memref<1x32xf32, #tpu.memory_space<vmem>>, vector<1x32xf32>
    %c0_351 = arith.constant 0 : index
    %c0_352 = arith.constant 0 : index
    %937 = vector.load %arg69[%c0_351, %c0_352] : memref<1x32xf32, #tpu.memory_space<vmem>>, vector<1x32xf32>
    %cst_353 = arith.constant dense<0.000000e+00> : vector<16xf32>
    %938 = vector.multi_reduction <add>, %935, %cst_353 [1] : vector<16x32xf32> to vector<16xf32>
    %939 = vector.shape_cast %938 : vector<16xf32> to vector<16x1xf32>
    %cst_354 = arith.constant 3.200000e+01 : f32
    %940 = vector.broadcast %cst_354 : f32 to vector<16x1xf32>
    %941 = arith.divf %939, %940 : vector<16x1xf32>
    %942 = vector.broadcast %941 : vector<16x1xf32> to vector<16x32xf32>
    %943 = arith.subf %935, %942 : vector<16x32xf32>
    %944 = arith.mulf %943, %943 : vector<16x32xf32>
    %cst_355 = arith.constant dense<0.000000e+00> : vector<16xf32>
    %945 = vector.multi_reduction <add>, %944, %cst_355 [1] : vector<16x32xf32> to vector<16xf32>
    %946 = vector.shape_cast %945 : vector<16xf32> to vector<16x1xf32>
    %cst_356 = arith.constant 3.200000e+01 : f32
    %947 = vector.broadcast %cst_356 : f32 to vector<16x1xf32>
    %948 = arith.divf %946, %947 : vector<16x1xf32>
    %cst_357 = arith.constant 9.99999974E-6 : f32
    %949 = vector.broadcast %cst_357 : f32 to vector<16x1xf32>
    %950 = arith.addf %948, %949 : vector<16x1xf32>
    %951 = math.rsqrt %950 : vector<16x1xf32>
    %952 = vector.broadcast %951 : vector<16x1xf32> to vector<16x32xf32>
    %953 = arith.mulf %943, %952 : vector<16x32xf32>
    %954 = vector.broadcast %936 : vector<1x32xf32> to vector<16x32xf32>
    %955 = arith.mulf %953, %954 : vector<16x32xf32>
    %956 = vector.broadcast %937 : vector<1x32xf32> to vector<16x32xf32>
    %957 = arith.addf %955, %956 : vector<16x32xf32>
    %c0_358 = arith.constant 0 : index
    %c0_359 = arith.constant 0 : index
    %958 = vector.load %arg70[%c0_358, %c0_359] : memref<1x32xf32, #tpu.memory_space<vmem>>, vector<1x32xf32>
    %c0_360 = arith.constant 0 : index
    %c0_361 = arith.constant 0 : index
    %959 = vector.load %arg71[%c0_360, %c0_361] : memref<1x32xf32, #tpu.memory_space<vmem>>, vector<1x32xf32>
    %cst_362 = arith.constant dense<0.000000e+00> : vector<16xf32>
    %960 = vector.multi_reduction <add>, %957, %cst_362 [1] : vector<16x32xf32> to vector<16xf32>
    %961 = vector.shape_cast %960 : vector<16xf32> to vector<16x1xf32>
    %cst_363 = arith.constant 3.200000e+01 : f32
    %962 = vector.broadcast %cst_363 : f32 to vector<16x1xf32>
    %963 = arith.divf %961, %962 : vector<16x1xf32>
    %964 = vector.broadcast %963 : vector<16x1xf32> to vector<16x32xf32>
    %965 = arith.subf %957, %964 : vector<16x32xf32>
    %966 = arith.mulf %965, %965 : vector<16x32xf32>
    %cst_364 = arith.constant dense<0.000000e+00> : vector<16xf32>
    %967 = vector.multi_reduction <add>, %966, %cst_364 [1] : vector<16x32xf32> to vector<16xf32>
    %968 = vector.shape_cast %967 : vector<16xf32> to vector<16x1xf32>
    %cst_365 = arith.constant 3.200000e+01 : f32
    %969 = vector.broadcast %cst_365 : f32 to vector<16x1xf32>
    %970 = arith.divf %968, %969 : vector<16x1xf32>
    %cst_366 = arith.constant 9.99999974E-6 : f32
    %971 = vector.broadcast %cst_366 : f32 to vector<16x1xf32>
    %972 = arith.addf %970, %971 : vector<16x1xf32>
    %973 = math.rsqrt %972 : vector<16x1xf32>
    %974 = vector.broadcast %973 : vector<16x1xf32> to vector<16x32xf32>
    %975 = arith.mulf %965, %974 : vector<16x32xf32>
    %976 = vector.broadcast %958 : vector<1x32xf32> to vector<16x32xf32>
    %977 = arith.mulf %975, %976 : vector<16x32xf32>
    %978 = vector.broadcast %959 : vector<1x32xf32> to vector<16x32xf32>
    %979 = arith.addf %977, %978 : vector<16x32xf32>
    %c0_367 = arith.constant 0 : index
    %c0_368 = arith.constant 0 : index
    %980 = vector.load %arg72[%c0_367, %c0_368] : memref<32x64xf32, #tpu.memory_space<vmem>>, vector<32x64xf32>
    %c0_369 = arith.constant 0 : index
    %c0_370 = arith.constant 0 : index
    %981 = vector.load %arg73[%c0_369, %c0_370] : memref<1x64xf32, #tpu.memory_space<vmem>>, vector<1x64xf32>
    %cst_371 = arith.constant dense<0.000000e+00> : vector<16x64xf32>
    %982 = tpu.matmul %979, %980, %cst_371 {dimension_numbers = #tpu.dot_dimension_numbers<[1], [0], [0], [1], [0, 0, 1, 1], [], []>} : vector<16x32xf32>, vector<32x64xf32>, vector<16x64xf32> -> vector<16x64xf32>
    %983 = vector.broadcast %981 : vector<1x64xf32> to vector<16x64xf32>
    %984 = arith.addf %982, %983 : vector<16x64xf32>
    %cst_372 = arith.constant 0.000000e+00 : f32
    %985 = vector.broadcast %cst_372 : f32 to vector<16x64xf32>
    %986 = arith.cmpf oge, %984, %985 : vector<16x64xf32>
    %cst_373 = arith.constant 0.00999999977 : f32
    %987 = vector.broadcast %cst_373 : f32 to vector<16x64xf32>
    %988 = arith.mulf %987, %984 : vector<16x64xf32>
    %989 = arith.select %986, %984, %988 : vector<16x64xi1>, vector<16x64xf32>
    %c0_374 = arith.constant 0 : index
    %c0_375 = arith.constant 0 : index
    %990 = vector.load %arg74[%c0_374, %c0_375] : memref<64x32xf32, #tpu.memory_space<vmem>>, vector<64x32xf32>
    %c0_376 = arith.constant 0 : index
    %c0_377 = arith.constant 0 : index
    %991 = vector.load %arg75[%c0_376, %c0_377] : memref<1x32xf32, #tpu.memory_space<vmem>>, vector<1x32xf32>
    %cst_378 = arith.constant dense<0.000000e+00> : vector<16x32xf32>
    %992 = tpu.matmul %989, %990, %cst_378 {dimension_numbers = #tpu.dot_dimension_numbers<[1], [0], [0], [1], [0, 0, 1, 1], [], []>} : vector<16x64xf32>, vector<64x32xf32>, vector<16x32xf32> -> vector<16x32xf32>
    %993 = vector.broadcast %991 : vector<1x32xf32> to vector<16x32xf32>
    %994 = arith.addf %992, %993 : vector<16x32xf32>
    %cst_379 = arith.constant 0.000000e+00 : f32
    %995 = vector.broadcast %cst_379 : f32 to vector<16x32xf32>
    %996 = arith.cmpf oge, %994, %995 : vector<16x32xf32>
    %cst_380 = arith.constant 0.00999999977 : f32
    %997 = vector.broadcast %cst_380 : f32 to vector<16x32xf32>
    %998 = arith.mulf %997, %994 : vector<16x32xf32>
    %999 = arith.select %996, %994, %998 : vector<16x32xi1>, vector<16x32xf32>
    %c0_381 = arith.constant 0 : index
    %c0_382 = arith.constant 0 : index
    %1000 = vector.load %arg76[%c0_381, %c0_382] : memref<32x1xf32, #tpu.memory_space<vmem>>, vector<32x1xf32>
    %c0_383 = arith.constant 0 : index
    %c0_384 = arith.constant 0 : index
    %1001 = vector.load %arg77[%c0_383, %c0_384] : memref<1x1xf32, #tpu.memory_space<vmem>>, vector<1x1xf32>
    %cst_385 = arith.constant dense<0.000000e+00> : vector<16x1xf32>
    %1002 = tpu.matmul %999, %1000, %cst_385 {dimension_numbers = #tpu.dot_dimension_numbers<[1], [0], [0], [1], [0, 0, 1, 1], [], []>} : vector<16x32xf32>, vector<32x1xf32>, vector<16x1xf32> -> vector<16x1xf32>
    %1003 = vector.broadcast %1001 : vector<1x1xf32> to vector<16x1xf32>
    %1004 = arith.addf %1002, %1003 : vector<16x1xf32>
    %c0_386 = arith.constant 0 : index
    %c0_387 = arith.constant 0 : index
    %1005 = vector.load %arg78[%c0_386, %c0_387] : memref<16x1xf32, #tpu.memory_space<vmem>>, vector<16x1xf32>
    tpu.vector_store %arg78[%c0_386, %c0_387], %1004 {strides = array<i32>} : memref<16x1xf32, #tpu.memory_space<vmem>>, vector<16x1xf32>,
    return
  }
}

</mosaic_0001>

<llo_original>
// kernel: time_series_transformer.1
$region0: #{time_series_transformer.1}
  #allocation0 [shape = 'u32[]', space=smem, size = 0x4, offset = 0x4, fixed_abs, tag = 'smem constant byte address 0x4 - core index']
  #allocation1 [shape = 'u32[72,128]{1,0:T(1,128)}', space=vmem, size = 0x9000, scoped, tag = 'internal scratch']
  #allocation2 [shape = 'f32[1,1]{1,0:T(1,128)S(1)}', space=vmem, size = 0x200, scoped, tag = 'scoped memory for time_series_transformer.1']
  %s0 = inlined_call_operand.smem [shape: u32[79], index: -1, kind: input, shape index: {}]
  %s1 = sld [smem:[%s0]]
  %s2 = scalar_lea.smem %s0, 1
  %s3 = sld [smem:[%s2]]
  %s4 = scalar_lea.smem %s0, 2
  %s5 = sld [smem:[%s4]]
  %s6 = scalar_lea.smem %s0, 3
  %s7 = sld [smem:[%s6]]
  %s8 = scalar_lea.smem %s0, 4
  %s9 = sld [smem:[%s8]]
  %s10 = scalar_lea.smem %s0, 5
  %s11 = sld [smem:[%s10]]
  %s12 = scalar_lea.smem %s0, 6
  %s13 = sld [smem:[%s12]]
  %s14 = scalar_lea.smem %s0, 7
  %s15 = sld [smem:[%s14]]
  %s16 = scalar_lea.smem %s0, 8
  %s17 = sld [smem:[%s16]]
  %s18 = scalar_lea.smem %s0, 9
  %s19 = sld [smem:[%s18]]
  %s20 = scalar_lea.smem %s0, 10
  %s21 = sld [smem:[%s20]]
  %s22 = scalar_lea.smem %s0, 11
  %s23 = sld [smem:[%s22]]
  %s24 = scalar_lea.smem %s0, 12
  %s25 = sld [smem:[%s24]]
  %s26 = scalar_lea.smem %s0, 13
  %s27 = sld [smem:[%s26]]
  %s28 = scalar_lea.smem %s0, 14
  %s29 = sld [smem:[%s28]]
  %s30 = scalar_lea.smem %s0, 15
  %s31 = sld [smem:[%s30]]
  %s32 = scalar_lea.smem %s0, 16
  %s33 = sld [smem:[%s32]]
  %s34 = scalar_lea.smem %s0, 17
  %s35 = sld [smem:[%s34]]
  %s36 = scalar_lea.smem %s0, 18
  %s37 = sld [smem:[%s36]]
  %s38 = scalar_lea.smem %s0, 19
  %s39 = sld [smem:[%s38]]
  %s40 = scalar_lea.smem %s0, 20
  %s41 = sld [smem:[%s40]]
  %s42 = scalar_lea.smem %s0, 21
  %s43 = sld [smem:[%s42]]
  %s44 = scalar_lea.smem %s0, 22
  %s45 = sld [smem:[%s44]]
  %s46 = scalar_lea.smem %s0, 23
  %s47 = sld [smem:[%s46]]
  %s48 = scalar_lea.smem %s0, 24
  %s49 = sld [smem:[%s48]]
  %s50 = scalar_lea.smem %s0, 25
  %s51 = sld [smem:[%s50]]
  %s52 = scalar_lea.smem %s0, 26
  %s53 = sld [smem:[%s52]]
  %s54 = scalar_lea.smem %s0, 27
  %s55 = sld [smem:[%s54]]
  %s56 = scalar_lea.smem %s0, 28
  %s57 = sld [smem:[%s56]]
  %s58 = scalar_lea.smem %s0, 29
  %s59 = sld [smem:[%s58]]
  %s60 = scalar_lea.smem %s0, 30
  %s61 = sld [smem:[%s60]]
  %s62 = scalar_lea.smem %s0, 31
  %s63 = sld [smem:[%s62]]
  %s64 = scalar_lea.smem %s0, 32
  %s65 = sld [smem:[%s64]]
  %s66 = scalar_lea.smem %s0, 33
  %s67 = sld [smem:[%s66]]
  %s68 = scalar_lea.smem %s0, 34
  %s69 = sld [smem:[%s68]]
  %s70 = scalar_lea.smem %s0, 35
  %s71 = sld [smem:[%s70]]
  %s72 = scalar_lea.smem %s0, 36
  %s73 = sld [smem:[%s72]]
  %s74 = scalar_lea.smem %s0, 37
  %s75 = sld [smem:[%s74]]
  %s76 = scalar_lea.smem %s0, 38
  %s77 = sld [smem:[%s76]]
  %s78 = scalar_lea.smem %s0, 39
  %s79 = sld [smem:[%s78]]
  %s80 = scalar_lea.smem %s0, 40
  %s81 = sld [smem:[%s80]]
  %s82 = scalar_lea.smem %s0, 41
  %s83 = sld [smem:[%s82]]
  %s84 = scalar_lea.smem %s0, 42
  %s85 = sld [smem:[%s84]]
  %s86 = scalar_lea.smem %s0, 43
  %s87 = sld [smem:[%s86]]
  %s88 = scalar_lea.smem %s0, 44
  %s89 = sld [smem:[%s88]]
  %s90 = scalar_lea.smem %s0, 45
  %s91 = sld [smem:[%s90]]
  %s92 = scalar_lea.smem %s0, 46
  %s93 = sld [smem:[%s92]]
  %s94 = scalar_lea.smem %s0, 47
  %s95 = sld [smem:[%s94]]
  %s96 = scalar_lea.smem %s0, 48
  %s97 = sld [smem:[%s96]]
  %s98 = scalar_lea.smem %s0, 49
  %s99 = sld [smem:[%s98]]
  %s100 = scalar_lea.smem %s0, 50
  %s101 = sld [smem:[%s100]]
  %s102 = scalar_lea.smem %s0, 51
  %s103 = sld [smem:[%s102]]
  %s104 = scalar_lea.smem %s0, 52
  %s105 = sld [smem:[%s104]]
  %s106 = scalar_lea.smem %s0, 53
  %s107 = sld [smem:[%s106]]
  %s108 = scalar_lea.smem %s0, 54
  %s109 = sld [smem:[%s108]]
  %s110 = scalar_lea.smem %s0, 55
  %s111 = sld [smem:[%s110]]
  %s112 = scalar_lea.smem %s0, 56
  %s113 = sld [smem:[%s112]]
  %s114 = scalar_lea.smem %s0, 57
  %s115 = sld [smem:[%s114]]
  %s116 = scalar_lea.smem %s0, 58
  %s117 = sld [smem:[%s116]]
  %s118 = scalar_lea.smem %s0, 59
  %s119 = sld [smem:[%s118]]
  %s120 = scalar_lea.smem %s0, 60
  %s121 = sld [smem:[%s120]]
  %s122 = scalar_lea.smem %s0, 61
  %s123 = sld [smem:[%s122]]
  %s124 = scalar_lea.smem %s0, 62
  %s125 = sld [smem:[%s124]]
  %s126 = scalar_lea.smem %s0, 63
  %s127 = sld [smem:[%s126]]
  %s128 = scalar_lea.smem %s0, 64
  %s129 = sld [smem:[%s128]]
  %s130 = scalar_lea.smem %s0, 65
  %s131 = sld [smem:[%s130]]
  %s132 = scalar_lea.smem %s0, 66
  %s133 = sld [smem:[%s132]]
  %s134 = scalar_lea.smem %s0, 67
  %s135 = sld [smem:[%s134]]
  %s136 = scalar_lea.smem %s0, 68
  %s137 = sld [smem:[%s136]]
  %s138 = scalar_lea.smem %s0, 69
  %s139 = sld [smem:[%s138]]
  %s140 = scalar_lea.smem %s0, 70
  %s141 = sld [smem:[%s140]]
  %s142 = scalar_lea.smem %s0, 71
  %s143 = sld [smem:[%s142]]
  %s144 = scalar_lea.smem %s0, 72
  %s145 = sld [smem:[%s144]]
  %s146 = scalar_lea.smem %s0, 73
  %s147 = sld [smem:[%s146]]
  %s148 = scalar_lea.smem %s0, 74
  %s149 = sld [smem:[%s148]]
  %s150 = scalar_lea.smem %s0, 75
  %s151 = sld [smem:[%s150]]
  %s152 = scalar_lea.smem %s0, 76
  %s153 = sld [smem:[%s152]]
  %s154 = scalar_lea.smem %s0, 77
  %s155 = sld [smem:[%s154]]
  %s156 = scalar_lea.smem %s0, 78
  %s157 = sld [smem:[%s156]]
  %s158 = sld [smem:[#allocation0]]
  $region462: #{time_series_transformer.1} parent=0
    _
  %s160 = ssub.s32 1, %s158
  %s161 = scalar_select 0, %s160, %s158
  %v162 = vstv %s155
  %163 = vst [vmem:[#allocation2] sm:$0x1] %v162
  $region1: #{time_series_transformer.1} parent=0
    #allocation3 [shape = 'u8[512]{0}', space=vmem, size = 0x400, scoped, tag = 'input window, operand 13, single buffered']
    #allocation4 [shape = 's32[1]{0}', space=sflag, size = 0x4, scoped, tag = 'scoped memory for time_series_transformer.1']
    #allocation5 [shape = 'u8[512]{0}', space=vmem, size = 0x400, scoped, tag = 'input window, operand 14, single buffered']
    #allocation6 [shape = 's32[1]{0}', space=sflag, size = 0x4, scoped, tag = 'scoped memory for time_series_transformer.1']
    #allocation7 [shape = 'u8[512]{0}', space=vmem, size = 0x400, scoped, tag = 'input window, operand 15, single buffered']
    #allocation8 [shape = 'u8[512]{0}', space=vmem, size = 0x400, scoped, tag = 'input window, operand 31, single buffered']
    #allocation9 [shape = 's32[1]{0}', space=sflag, size = 0x4, scoped, tag = 'scoped memory for time_series_transformer.1']
    #allocation10 [shape = 'u8[512]{0}', space=vmem, size = 0x400, scoped, tag = 'input window, operand 33, single buffered']
    #allocation11 [shape = 'u8[512]{0}', space=vmem, size = 0x400, scoped, tag = 'input window, operand 34, single buffered']
    #allocation12 [shape = 's32[1]{0}', space=sflag, size = 0x4, scoped, tag = 'scoped memory for time_series_transformer.1']
    #allocation13 [shape = 'u8[512]{0}', space=vmem, size = 0x400, scoped, tag = 'input window, operand 35, single buffered']
    #allocation14 [shape = 'u8[512]{0}', space=vmem, size = 0x400, scoped, tag = 'input window, operand 37, single buffered']
    #allocation15 [shape = 's32[1]{0}', space=sflag, size = 0x4, scoped, tag = 'scoped memory for time_series_transformer.1']
    #allocation16 [shape = 'u8[512]{0}', space=vmem, size = 0x400, scoped, tag = 'input window, operand 39, single buffered']
    #allocation17 [shape = 'u8[512]{0}', space=vmem, size = 0x400, scoped, tag = 'input window, operand 41, single buffered']
    #allocation18 [shape = 's32[1]{0}', space=sflag, size = 0x4, scoped, tag = 'scoped memory for time_series_transformer.1']
    #allocation19 [shape = 'u8[512]{0}', space=vmem, size = 0x400, scoped, tag = 'input window, operand 42, single buffered']
    #allocation20 [shape = 'u8[512]{0}', space=vmem, size = 0x400, scoped, tag = 'input window, operand 43, single buffered']
    #allocation21 [shape = 's32[1]{0}', space=sflag, size = 0x4, scoped, tag = 'scoped memory for time_series_transformer.1']
    #allocation22 [shape = 'u8[512]{0}', space=vmem, size = 0x400, scoped, tag = 'input window, operand 45, single buffered']
    #allocation23 [shape = 'u8[512]{0}', space=vmem, size = 0x400, scoped, tag = 'input window, operand 47, single buffered']
    #allocation24 [shape = 's32[1]{0}', space=sflag, size = 0x4, scoped, tag = 'scoped memory for time_series_transformer.1']
    #allocation25 [shape = 'u8[512]{0}', space=vmem, size = 0x400, scoped, tag = 'input window, operand 48, single buffered']
    #allocation26 [shape = 'u8[512]{0}', space=vmem, size = 0x400, scoped, tag = 'input window, operand 49, single buffered']
    #allocation27 [shape = 's32[1]{0}', space=sflag, size = 0x4, scoped, tag = 'scoped memory for time_series_transformer.1']
    #allocation28 [shape = 'u8[512]{0}', space=vmem, size = 0x400, scoped, tag = 'input window, operand 51, single buffered']
    #allocation29 [shape = 'u8[512]{0}', space=vmem, size = 0x400, scoped, tag = 'input window, operand 53, single buffered']
    #allocation30 [shape = 's32[1]{0}', space=sflag, size = 0x4, scoped, tag = 'scoped memory for time_series_transformer.1']
    #allocation31 [shape = 'u8[512]{0}', space=vmem, size = 0x400, scoped, tag = 'input window, operand 54, single buffered']
    #allocation32 [shape = 'u8[512]{0}', space=vmem, size = 0x400, scoped, tag = 'input window, operand 55, single buffered']
    #allocation33 [shape = 's32[1]{0}', space=sflag, size = 0x4, scoped, tag = 'scoped memory for time_series_transformer.1']
    #allocation34 [shape = 'u8[512]{0}', space=vmem, size = 0x400, scoped, tag = 'input window, operand 57, single buffered']
    #allocation35 [shape = 'u8[512]{0}', space=vmem, size = 0x400, scoped, tag = 'input window, operand 59, single buffered']
    #allocation36 [shape = 's32[1]{0}', space=sflag, size = 0x4, scoped, tag = 'scoped memory for time_series_transformer.1']
    #allocation37 [shape = 'u8[16384]{0}', space=vmem, size = 0x4000, scoped, tag = 'input window, operand 60, single buffered']
    #allocation38 [shape = 'u8[512]{0}', space=vmem, size = 0x400, scoped, tag = 'input window, operand 61, single buffered']
    #allocation39 [shape = 's32[1]{0}', space=sflag, size = 0x4, scoped, tag = 'scoped memory for time_series_transformer.1']
    #allocation40 [shape = 'u8[512]{0}', space=vmem, size = 0x400, scoped, tag = 'input window, operand 62, single buffered']
    #allocation41 [shape = 'u8[512]{0}', space=vmem, size = 0x400, scoped, tag = 'input window, operand 63, single buffered']
    #allocation42 [shape = 's32[1]{0}', space=sflag, size = 0x4, scoped, tag = 'scoped memory for time_series_transformer.1']
    #allocation43 [shape = 'u8[16384]{0}', space=vmem, size = 0x4000, scoped, tag = 'input window, operand 64, single buffered']
    #allocation44 [shape = 'u8[512]{0}', space=vmem, size = 0x400, scoped, tag = 'input window, operand 65, single buffered']
    #allocation45 [shape = 's32[1]{0}', space=sflag, size = 0x4, scoped, tag = 'scoped memory for time_series_transformer.1']
    #allocation46 [shape = 'u8[512]{0}', space=vmem, size = 0x400, scoped, tag = 'input window, operand 67, single buffered']
    #allocation47 [shape = 'u8[512]{0}', space=vmem, size = 0x400, scoped, tag = 'input window, operand 68, single buffered']
    #allocation48 [shape = 's32[1]{0}', space=sflag, size = 0x4, scoped, tag = 'scoped memory for time_series_transformer.1']
    #allocation49 [shape = 'u8[512]{0}', space=vmem, size = 0x400, scoped, tag = 'input window, operand 69, single buffered']
    #allocation50 [shape = 'u8[512]{0}', space=vmem, size = 0x400, scoped, tag = 'input window, operand 70, single buffered']
    #allocation51 [shape = 's32[1]{0}', space=sflag, size = 0x4, scoped, tag = 'scoped memory for time_series_transformer.1']
    #allocation52 [shape = 'u8[512]{0}', space=vmem, size = 0x400, scoped, tag = 'input window, operand 71, single buffered']
    #allocation53 [shape = 'u8[512]{0}', space=vmem, size = 0x400, scoped, tag = 'input window, operand 73, single buffered']
    #allocation54 [shape = 's32[1]{0}', space=sflag, size = 0x4, scoped, tag = 'scoped memory for time_series_transformer.1']
    #allocation55 [shape = 'u8[512]{0}', space=vmem, size = 0x400, scoped, tag = 'input window, operand 75, single buffered']
    %164 = vsyncpa [#allocation4], 0
    %165 = vsyncpa [#allocation6], 0
    %166 = vsyncpa [#allocation9], 0
    %167 = vsyncpa [#allocation12], 0
    %168 = vsyncpa [#allocation15], 0
    %169 = vsyncpa [#allocation18], 0
    %170 = vsyncpa [#allocation21], 0
    %171 = vsyncpa [#allocation24], 0
    %172 = vsyncpa [#allocation27], 0
    %173 = vsyncpa [#allocation30], 0
    %174 = vsyncpa [#allocation33], 0
    %175 = vsyncpa [#allocation36], 0
    %176 = vsyncpa [#allocation39], 0
    %177 = vsyncpa [#allocation42], 0
    %178 = vsyncpa [#allocation45], 0
    %179 = vsyncpa [#allocation48], 0
    %180 = vsyncpa [#allocation51], 0
    %181 = vsyncpa [#allocation54], 0
    // Predicated region
    $region2: #{time_series_transformer.1} parent=1 // pred_check
      _
    $region3: #{time_series_transformer.1} parent=1 // pred_check_branch
      %183 = sbr.rel (0) target = $region5
    $region4: #{time_series_transformer.1} parent=1 // pred_region
      _
    $region5: #{time_series_transformer.1} parent=1 // pred_fallthru
      _
    // Predicated region
    $region6: #{time_series_transformer.1} parent=1 // pred_check
      _
    $region7: #{time_series_transformer.1} parent=1 // pred_check_branch
      %185 = sbr.rel (0) target = $region9
    $region8: #{time_series_transformer.1} parent=1 // pred_region
      _
    $region9: #{time_series_transformer.1} parent=1 // pred_fallthru
      _
    // Predicated region
    $region10: #{time_series_transformer.1} parent=1 // pred_check
      _
    $region11: #{time_series_transformer.1} parent=1 // pred_check_branch
      %187 = sbr.rel (0) target = $region13
    $region12: #{time_series_transformer.1} parent=1 // pred_region
      _
    $region13: #{time_series_transformer.1} parent=1 // pred_fallthru
      _
    // Predicated region
    $region14: #{time_series_transformer.1} parent=1 // pred_check
      _
    $region15: #{time_series_transformer.1} parent=1 // pred_check_branch
      %189 = sbr.rel (0) target = $region17
    $region16: #{time_series_transformer.1} parent=1 // pred_region
      _
    $region17: #{time_series_transformer.1} parent=1 // pred_fallthru
      _
    // Predicated region
    $region18: #{time_series_transformer.1} parent=1 // pred_check
      _
    $region19: #{time_series_transformer.1} parent=1 // pred_check_branch
      %191 = sbr.rel (0) target = $region21
    $region20: #{time_series_transformer.1} parent=1 // pred_region
      _
    $region21: #{time_series_transformer.1} parent=1 // pred_fallthru
      _
    // Predicated region
    $region22: #{time_series_transformer.1} parent=1 // pred_check
      _
    $region23: #{time_series_transformer.1} parent=1 // pred_check_branch
      %193 = sbr.rel (0) target = $region25
    $region24: #{time_series_transformer.1} parent=1 // pred_region
      _
    $region25: #{time_series_transformer.1} parent=1 // pred_fallthru
      _
    // Predicated region
    $region26: #{time_series_transformer.1} parent=1 // pred_check
      _
    $region27: #{time_series_transformer.1} parent=1 // pred_check_branch
      %195 = sbr.rel (0) target = $region29
    $region28: #{time_series_transformer.1} parent=1 // pred_region
      _
    $region29: #{time_series_transformer.1} parent=1 // pred_fallthru
      _
    // Predicated region
    $region30: #{time_series_transformer.1} parent=1 // pred_check
      _
    $region31: #{time_series_transformer.1} parent=1 // pred_check_branch
      %197 = sbr.rel (0) target = $region33
    $region32: #{time_series_transformer.1} parent=1 // pred_region
      _
    $region33: #{time_series_transformer.1} parent=1 // pred_fallthru
      _
    // Predicated region
    $region34: #{time_series_transformer.1} parent=1 // pred_check
      _
    $region35: #{time_series_transformer.1} parent=1 // pred_check_branch
      %199 = sbr.rel (0) target = $region37
    $region36: #{time_series_transformer.1} parent=1 // pred_region
      _
    $region37: #{time_series_transformer.1} parent=1 // pred_fallthru
      _
    // Predicated region
    $region38: #{time_series_transformer.1} parent=1 // pred_check
      _
    $region39: #{time_series_transformer.1} parent=1 // pred_check_branch
      %201 = sbr.rel (0) target = $region41
    $region40: #{time_series_transformer.1} parent=1 // pred_region
      _
    $region41: #{time_series_transformer.1} parent=1 // pred_fallthru
      _
    // Predicated region
    $region42: #{time_series_transformer.1} parent=1 // pred_check
      _
    $region43: #{time_series_transformer.1} parent=1 // pred_check_branch
      %203 = sbr.rel (0) target = $region45
    $region44: #{time_series_transformer.1} parent=1 // pred_region
      _
    $region45: #{time_series_transformer.1} parent=1 // pred_fallthru
      _
    // Predicated region
    $region46: #{time_series_transformer.1} parent=1 // pred_check
      _
    $region47: #{time_series_transformer.1} parent=1 // pred_check_branch
      %205 = sbr.rel (0) target = $region49
    $region48: #{time_series_transformer.1} parent=1 // pred_region
      _
    $region49: #{time_series_transformer.1} parent=1 // pred_fallthru
      _
    // Predicated region
    $region50: #{time_series_transformer.1} parent=1 // pred_check
      _
    $region51: #{time_series_transformer.1} parent=1 // pred_check_branch
      %207 = sbr.rel (0) target = $region53
    $region52: #{time_series_transformer.1} parent=1 // pred_region
      _
    $region53: #{time_series_transformer.1} parent=1 // pred_fallthru
      _
    // Predicated region
    $region54: #{time_series_transformer.1} parent=1 // pred_check
      _
    $region55: #{time_series_transformer.1} parent=1 // pred_check_branch
      %209 = sbr.rel (0) target = $region57
    $region56: #{time_series_transformer.1} parent=1 // pred_region
      %211 = vsyncadd [#allocation4], 0
      %s213 = sshll.u32 %s27, 4
      %s214 = int_to_ptr.hbm [resolvable:$true] %s213
      %s215 = sshll.u32 [#allocation3], 4
      %s216 = int_to_ptr.vmem [resolvable:$true] %s215
      %218 = dma.hbm_to_vmem [thread:$0]  %s214, 16, %s216, [#allocation4]
    $region57: #{time_series_transformer.1} parent=1 // pred_fallthru
      _
    // Predicated region
    $region58: #{time_series_transformer.1} parent=1 // pred_check
      _
    $region59: #{time_series_transformer.1} parent=1 // pred_check_branch
      %220 = sbr.rel (0) target = $region61
    $region60: #{time_series_transformer.1} parent=1 // pred_region
      %222 = vsyncadd [#allocation6], 0
      %s224 = sshll.u32 %s29, 4
      %s225 = int_to_ptr.hbm [resolvable:$true] %s224
      %s226 = sshll.u32 [#allocation5], 4
      %s227 = int_to_ptr.vmem [resolvable:$true] %s226
      %229 = dma.hbm_to_vmem [thread:$0]  %s225, 16, %s227, [#allocation6]
    $region61: #{time_series_transformer.1} parent=1 // pred_fallthru
      _
    // Predicated region
    $region62: #{time_series_transformer.1} parent=1 // pred_check
      _
    $region63: #{time_series_transformer.1} parent=1 // pred_check_branch
      %231 = sbr.rel (0) target = $region65
    $region64: #{time_series_transformer.1} parent=1 // pred_region
      %233 = vsyncadd [#allocation6], 0
      %s235 = sshll.u32 %s31, 4
      %s236 = int_to_ptr.hbm [resolvable:$true] %s235
      %s237 = sshll.u32 [#allocation7], 4
      %s238 = int_to_ptr.vmem [resolvable:$true] %s237
      %240 = dma.hbm_to_vmem [thread:$0]  %s236, 16, %s238, [#allocation6]
    $region65: #{time_series_transformer.1} parent=1 // pred_fallthru
      _
    // Predicated region
    $region66: #{time_series_transformer.1} parent=1 // pred_check
      _
    $region67: #{time_series_transformer.1} parent=1 // pred_check_branch
      %242 = sbr.rel (0) target = $region69
    $region68: #{time_series_transformer.1} parent=1 // pred_region
      _
    $region69: #{time_series_transformer.1} parent=1 // pred_fallthru
      _
    // Predicated region
    $region70: #{time_series_transformer.1} parent=1 // pred_check
      _
    $region71: #{time_series_transformer.1} parent=1 // pred_check_branch
      %244 = sbr.rel (0) target = $region73
    $region72: #{time_series_transformer.1} parent=1 // pred_region
      _
    $region73: #{time_series_transformer.1} parent=1 // pred_fallthru
      _
    // Predicated region
    $region74: #{time_series_transformer.1} parent=1 // pred_check
      _
    $region75: #{time_series_transformer.1} parent=1 // pred_check_branch
      %246 = sbr.rel (0) target = $region77
    $region76: #{time_series_transformer.1} parent=1 // pred_region
      _
    $region77: #{time_series_transformer.1} parent=1 // pred_fallthru
      _
    // Predicated region
    $region78: #{time_series_transformer.1} parent=1 // pred_check
      _
    $region79: #{time_series_transformer.1} parent=1 // pred_check_branch
      %248 = sbr.rel (0) target = $region81
    $region80: #{time_series_transformer.1} parent=1 // pred_region
      _
    $region81: #{time_series_transformer.1} parent=1 // pred_fallthru
      _
    // Predicated region
    $region82: #{time_series_transformer.1} parent=1 // pred_check
      _
    $region83: #{time_series_transformer.1} parent=1 // pred_check_branch
      %250 = sbr.rel (0) target = $region85
    $region84: #{time_series_transformer.1} parent=1 // pred_region
      _
    $region85: #{time_series_transformer.1} parent=1 // pred_fallthru
      _
    // Predicated region
    $region86: #{time_series_transformer.1} parent=1 // pred_check
      _
    $region87: #{time_series_transformer.1} parent=1 // pred_check_branch
      %252 = sbr.rel (0) target = $region89
    $region88: #{time_series_transformer.1} parent=1 // pred_region
      _
    $region89: #{time_series_transformer.1} parent=1 // pred_fallthru
      _
    // Predicated region
    $region90: #{time_series_transformer.1} parent=1 // pred_check
      _
    $region91: #{time_series_transformer.1} parent=1 // pred_check_branch
      %254 = sbr.rel (0) target = $region93
    $region92: #{time_series_transformer.1} parent=1 // pred_region
      _
    $region93: #{time_series_transformer.1} parent=1 // pred_fallthru
      _
    // Predicated region
    $region94: #{time_series_transformer.1} parent=1 // pred_check
      _
    $region95: #{time_series_transformer.1} parent=1 // pred_check_branch
      %256 = sbr.rel (0) target = $region97
    $region96: #{time_series_transformer.1} parent=1 // pred_region
      _
    $region97: #{time_series_transformer.1} parent=1 // pred_fallthru
      _
    // Predicated region
    $region98: #{time_series_transformer.1} parent=1 // pred_check
      _
    $region99: #{time_series_transformer.1} parent=1 // pred_check_branch
      %258 = sbr.rel (0) target = $region101
    $region100: #{time_series_transformer.1} parent=1 // pred_region
      _
    $region101: #{time_series_transformer.1} parent=1 // pred_fallthru
      _
    // Predicated region
    $region102: #{time_series_transformer.1} parent=1 // pred_check
      _
    $region103: #{time_series_transformer.1} parent=1 // pred_check_branch
      %260 = sbr.rel (0) target = $region105
    $region104: #{time_series_transformer.1} parent=1 // pred_region
      _
    $region105: #{time_series_transformer.1} parent=1 // pred_fallthru
      _
    // Predicated region
    $region106: #{time_series_transformer.1} parent=1 // pred_check
      _
    $region107: #{time_series_transformer.1} parent=1 // pred_check_branch
      %262 = sbr.rel (0) target = $region109
    $region108: #{time_series_transformer.1} parent=1 // pred_region
      _
    $region109: #{time_series_transformer.1} parent=1 // pred_fallthru
      _
    // Predicated region
    $region110: #{time_series_transformer.1} parent=1 // pred_check
      _
    $region111: #{time_series_transformer.1} parent=1 // pred_check_branch
      %264 = sbr.rel (0) target = $region113
    $region112: #{time_series_transformer.1} parent=1 // pred_region
      _
    $region113: #{time_series_transformer.1} parent=1 // pred_fallthru
      _
    // Predicated region
    $region114: #{time_series_transformer.1} parent=1 // pred_check
      _
    $region115: #{time_series_transformer.1} parent=1 // pred_check_branch
      %266 = sbr.rel (0) target = $region117
    $region116: #{time_series_transformer.1} parent=1 // pred_region
      _
    $region117: #{time_series_transformer.1} parent=1 // pred_fallthru
      _
    // Predicated region
    $region118: #{time_series_transformer.1} parent=1 // pred_check
      _
    $region119: #{time_series_transformer.1} parent=1 // pred_check_branch
      %268 = sbr.rel (0) target = $region121
    $region120: #{time_series_transformer.1} parent=1 // pred_region
      _
    $region121: #{time_series_transformer.1} parent=1 // pred_fallthru
      _
    // Predicated region
    $region122: #{time_series_transformer.1} parent=1 // pred_check
      _
    $region123: #{time_series_transformer.1} parent=1 // pred_check_branch
      %270 = sbr.rel (0) target = $region125
    $region124: #{time_series_transformer.1} parent=1 // pred_region
      _
    $region125: #{time_series_transformer.1} parent=1 // pred_fallthru
      _
    // Predicated region
    $region126: #{time_series_transformer.1} parent=1 // pred_check
      _
    $region127: #{time_series_transformer.1} parent=1 // pred_check_branch
      %272 = sbr.rel (0) target = $region129
    $region128: #{time_series_transformer.1} parent=1 // pred_region
      %274 = vsyncadd [#allocation9], 0
      %s276 = sshll.u32 %s63, 4
      %s277 = int_to_ptr.hbm [resolvable:$true] %s276
      %s278 = sshll.u32 [#allocation8], 4
      %s279 = int_to_ptr.vmem [resolvable:$true] %s278
      %281 = dma.hbm_to_vmem [thread:$0]  %s277, 16, %s279, [#allocation9]
    $region129: #{time_series_transformer.1} parent=1 // pred_fallthru
      _
    // Predicated region
    $region130: #{time_series_transformer.1} parent=1 // pred_check
      _
    $region131: #{time_series_transformer.1} parent=1 // pred_check_branch
      %283 = sbr.rel (0) target = $region133
    $region132: #{time_series_transformer.1} parent=1 // pred_region
      _
    $region133: #{time_series_transformer.1} parent=1 // pred_fallthru
      _
    // Predicated region
    $region134: #{time_series_transformer.1} parent=1 // pred_check
      _
    $region135: #{time_series_transformer.1} parent=1 // pred_check_branch
      %285 = sbr.rel (0) target = $region137
    $region136: #{time_series_transformer.1} parent=1 // pred_region
      %287 = vsyncadd [#allocation9], 0
      %s289 = sshll.u32 %s67, 4
      %s290 = int_to_ptr.hbm [resolvable:$true] %s289
      %s291 = sshll.u32 [#allocation10], 4
      %s292 = int_to_ptr.vmem [resolvable:$true] %s291
      %294 = dma.hbm_to_vmem [thread:$0]  %s290, 16, %s292, [#allocation9]
    $region137: #{time_series_transformer.1} parent=1 // pred_fallthru
      _
    // Predicated region
    $region138: #{time_series_transformer.1} parent=1 // pred_check
      _
    $region139: #{time_series_transformer.1} parent=1 // pred_check_branch
      %296 = sbr.rel (0) target = $region141
    $region140: #{time_series_transformer.1} parent=1 // pred_region
      %298 = vsyncadd [#allocation12], 0
      %s300 = sshll.u32 %s69, 4
      %s301 = int_to_ptr.hbm [resolvable:$true] %s300
      %s302 = sshll.u32 [#allocation11], 4
      %s303 = int_to_ptr.vmem [resolvable:$true] %s302
      %305 = dma.hbm_to_vmem [thread:$0]  %s301, 16, %s303, [#allocation12]
    $region141: #{time_series_transformer.1} parent=1 // pred_fallthru
      _
    // Predicated region
    $region142: #{time_series_transformer.1} parent=1 // pred_check
      _
    $region143: #{time_series_transformer.1} parent=1 // pred_check_branch
      %307 = sbr.rel (0) target = $region145
    $region144: #{time_series_transformer.1} parent=1 // pred_region
      %309 = vsyncadd [#allocation12], 0
      %s311 = sshll.u32 %s71, 4
      %s312 = int_to_ptr.hbm [resolvable:$true] %s311
      %s313 = sshll.u32 [#allocation13], 4
      %s314 = int_to_ptr.vmem [resolvable:$true] %s313
      %316 = dma.hbm_to_vmem [thread:$0]  %s312, 16, %s314, [#allocation12]
    $region145: #{time_series_transformer.1} parent=1 // pred_fallthru
      _
    // Predicated region
    $region146: #{time_series_transformer.1} parent=1 // pred_check
      _
    $region147: #{time_series_transformer.1} parent=1 // pred_check_branch
      %318 = sbr.rel (0) target = $region149
    $region148: #{time_series_transformer.1} parent=1 // pred_region
      _
    $region149: #{time_series_transformer.1} parent=1 // pred_fallthru
      _
    // Predicated region
    $region150: #{time_series_transformer.1} parent=1 // pred_check
      _
    $region151: #{time_series_transformer.1} parent=1 // pred_check_branch
      %320 = sbr.rel (0) target = $region153
    $region152: #{time_series_transformer.1} parent=1 // pred_region
      %322 = vsyncadd [#allocation15], 0
      %s324 = sshll.u32 %s75, 4
      %s325 = int_to_ptr.hbm [resolvable:$true] %s324
      %s326 = sshll.u32 [#allocation14], 4
      %s327 = int_to_ptr.vmem [resolvable:$true] %s326
      %329 = dma.hbm_to_vmem [thread:$0]  %s325, 16, %s327, [#allocation15]
    $region153: #{time_series_transformer.1} parent=1 // pred_fallthru
      _
    // Predicated region
    $region154: #{time_series_transformer.1} parent=1 // pred_check
      _
    $region155: #{time_series_transformer.1} parent=1 // pred_check_branch
      %331 = sbr.rel (0) target = $region157
    $region156: #{time_series_transformer.1} parent=1 // pred_region
      _
    $region157: #{time_series_transformer.1} parent=1 // pred_fallthru
      _
    // Predicated region
    $region158: #{time_series_transformer.1} parent=1 // pred_check
      _
    $region159: #{time_series_transformer.1} parent=1 // pred_check_branch
      %333 = sbr.rel (0) target = $region161
    $region160: #{time_series_transformer.1} parent=1 // pred_region
      %335 = vsyncadd [#allocation15], 0
      %s337 = sshll.u32 %s79, 4
      %s338 = int_to_ptr.hbm [resolvable:$true] %s337
      %s339 = sshll.u32 [#allocation16], 4
      %s340 = int_to_ptr.vmem [resolvable:$true] %s339
      %342 = dma.hbm_to_vmem [thread:$0]  %s338, 16, %s340, [#allocation15]
    $region161: #{time_series_transformer.1} parent=1 // pred_fallthru
      _
    // Predicated region
    $region162: #{time_series_transformer.1} parent=1 // pred_check
      _
    $region163: #{time_series_transformer.1} parent=1 // pred_check_branch
      %344 = sbr.rel (0) target = $region165
    $region164: #{time_series_transformer.1} parent=1 // pred_region
      _
    $region165: #{time_series_transformer.1} parent=1 // pred_fallthru
      _
    // Predicated region
    $region166: #{time_series_transformer.1} parent=1 // pred_check
      _
    $region167: #{time_series_transformer.1} parent=1 // pred_check_branch
      %346 = sbr.rel (0) target = $region169
    $region168: #{time_series_transformer.1} parent=1 // pred_region
      %348 = vsyncadd [#allocation18], 0
      %s350 = sshll.u32 %s83, 4
      %s351 = int_to_ptr.hbm [resolvable:$true] %s350
      %s352 = sshll.u32 [#allocation17], 4
      %s353 = int_to_ptr.vmem [resolvable:$true] %s352
      %355 = dma.hbm_to_vmem [thread:$0]  %s351, 16, %s353, [#allocation18]
    $region169: #{time_series_transformer.1} parent=1 // pred_fallthru
      _
    // Predicated region
    $region170: #{time_series_transformer.1} parent=1 // pred_check
      _
    $region171: #{time_series_transformer.1} parent=1 // pred_check_branch
      %357 = sbr.rel (0) target = $region173
    $region172: #{time_series_transformer.1} parent=1 // pred_region
      %359 = vsyncadd [#allocation18], 0
      %s361 = sshll.u32 %s85, 4
      %s362 = int_to_ptr.hbm [resolvable:$true] %s361
      %s363 = sshll.u32 [#allocation19], 4
      %s364 = int_to_ptr.vmem [resolvable:$true] %s363
      %366 = dma.hbm_to_vmem [thread:$0]  %s362, 16, %s364, [#allocation18]
    $region173: #{time_series_transformer.1} parent=1 // pred_fallthru
      _
    // Predicated region
    $region174: #{time_series_transformer.1} parent=1 // pred_check
      _
    $region175: #{time_series_transformer.1} parent=1 // pred_check_branch
      %368 = sbr.rel (0) target = $region177
    $region176: #{time_series_transformer.1} parent=1 // pred_region
      %370 = vsyncadd [#allocation21], 0
      %s372 = sshll.u32 %s87, 4
      %s373 = int_to_ptr.hbm [resolvable:$true] %s372
      %s374 = sshll.u32 [#allocation20], 4
      %s375 = int_to_ptr.vmem [resolvable:$true] %s374
      %377 = dma.hbm_to_vmem [thread:$0]  %s373, 16, %s375, [#allocation21]
    $region177: #{time_series_transformer.1} parent=1 // pred_fallthru
      _
    // Predicated region
    $region178: #{time_series_transformer.1} parent=1 // pred_check
      _
    $region179: #{time_series_transformer.1} parent=1 // pred_check_branch
      %379 = sbr.rel (0) target = $region181
    $region180: #{time_series_transformer.1} parent=1 // pred_region
      _
    $region181: #{time_series_transformer.1} parent=1 // pred_fallthru
      _
    // Predicated region
    $region182: #{time_series_transformer.1} parent=1 // pred_check
      _
    $region183: #{time_series_transformer.1} parent=1 // pred_check_branch
      %381 = sbr.rel (0) target = $region185
    $region184: #{time_series_transformer.1} parent=1 // pred_region
      %383 = vsyncadd [#allocation21], 0
      %s385 = sshll.u32 %s91, 4
      %s386 = int_to_ptr.hbm [resolvable:$true] %s385
      %s387 = sshll.u32 [#allocation22], 4
      %s388 = int_to_ptr.vmem [resolvable:$true] %s387
      %390 = dma.hbm_to_vmem [thread:$0]  %s386, 16, %s388, [#allocation21]
    $region185: #{time_series_transformer.1} parent=1 // pred_fallthru
      _
    // Predicated region
    $region186: #{time_series_transformer.1} parent=1 // pred_check
      _
    $region187: #{time_series_transformer.1} parent=1 // pred_check_branch
      %392 = sbr.rel (0) target = $region189
    $region188: #{time_series_transformer.1} parent=1 // pred_region
      _
    $region189: #{time_series_transformer.1} parent=1 // pred_fallthru
      _
    // Predicated region
    $region190: #{time_series_transformer.1} parent=1 // pred_check
      _
    $region191: #{time_series_transformer.1} parent=1 // pred_check_branch
      %394 = sbr.rel (0) target = $region193
    $region192: #{time_series_transformer.1} parent=1 // pred_region
      %396 = vsyncadd [#allocation24], 0
      %s398 = sshll.u32 %s95, 4
      %s399 = int_to_ptr.hbm [resolvable:$true] %s398
      %s400 = sshll.u32 [#allocation23], 4
      %s401 = int_to_ptr.vmem [resolvable:$true] %s400
      %403 = dma.hbm_to_vmem [thread:$0]  %s399, 16, %s401, [#allocation24]
    $region193: #{time_series_transformer.1} parent=1 // pred_fallthru
      _
    // Predicated region
    $region194: #{time_series_transformer.1} parent=1 // pred_check
      _
    $region195: #{time_series_transformer.1} parent=1 // pred_check_branch
      %405 = sbr.rel (0) target = $region197
    $region196: #{time_series_transformer.1} parent=1 // pred_region
      %407 = vsyncadd [#allocation24], 0
      %s409 = sshll.u32 %s97, 4
      %s410 = int_to_ptr.hbm [resolvable:$true] %s409
      %s411 = sshll.u32 [#allocation25], 4
      %s412 = int_to_ptr.vmem [resolvable:$true] %s411
      %414 = dma.hbm_to_vmem [thread:$0]  %s410, 16, %s412, [#allocation24]
    $region197: #{time_series_transformer.1} parent=1 // pred_fallthru
      _
    // Predicated region
    $region198: #{time_series_transformer.1} parent=1 // pred_check
      _
    $region199: #{time_series_transformer.1} parent=1 // pred_check_branch
      %416 = sbr.rel (0) target = $region201
    $region200: #{time_series_transformer.1} parent=1 // pred_region
      %418 = vsyncadd [#allocation27], 0
      %s420 = sshll.u32 %s99, 4
      %s421 = int_to_ptr.hbm [resolvable:$true] %s420
      %s422 = sshll.u32 [#allocation26], 4
      %s423 = int_to_ptr.vmem [resolvable:$true] %s422
      %425 = dma.hbm_to_vmem [thread:$0]  %s421, 16, %s423, [#allocation27]
    $region201: #{time_series_transformer.1} parent=1 // pred_fallthru
      _
    // Predicated region
    $region202: #{time_series_transformer.1} parent=1 // pred_check
      _
    $region203: #{time_series_transformer.1} parent=1 // pred_check_branch
      %427 = sbr.rel (0) target = $region205
    $region204: #{time_series_transformer.1} parent=1 // pred_region
      _
    $region205: #{time_series_transformer.1} parent=1 // pred_fallthru
      _
    // Predicated region
    $region206: #{time_series_transformer.1} parent=1 // pred_check
      _
    $region207: #{time_series_transformer.1} parent=1 // pred_check_branch
      %429 = sbr.rel (0) target = $region209
    $region208: #{time_series_transformer.1} parent=1 // pred_region
      %431 = vsyncadd [#allocation27], 0
      %s433 = sshll.u32 %s103, 4
      %s434 = int_to_ptr.hbm [resolvable:$true] %s433
      %s435 = sshll.u32 [#allocation28], 4
      %s436 = int_to_ptr.vmem [resolvable:$true] %s435
      %438 = dma.hbm_to_vmem [thread:$0]  %s434, 16, %s436, [#allocation27]
    $region209: #{time_series_transformer.1} parent=1 // pred_fallthru
      _
    // Predicated region
    $region210: #{time_series_transformer.1} parent=1 // pred_check
      _
    $region211: #{time_series_transformer.1} parent=1 // pred_check_branch
      %440 = sbr.rel (0) target = $region213
    $region212: #{time_series_transformer.1} parent=1 // pred_region
      _
    $region213: #{time_series_transformer.1} parent=1 // pred_fallthru
      _
    // Predicated region
    $region214: #{time_series_transformer.1} parent=1 // pred_check
      _
    $region215: #{time_series_transformer.1} parent=1 // pred_check_branch
      %442 = sbr.rel (0) target = $region217
    $region216: #{time_series_transformer.1} parent=1 // pred_region
      %444 = vsyncadd [#allocation30], 0
      %s446 = sshll.u32 %s107, 4
      %s447 = int_to_ptr.hbm [resolvable:$true] %s446
      %s448 = sshll.u32 [#allocation29], 4
      %s449 = int_to_ptr.vmem [resolvable:$true] %s448
      %451 = dma.hbm_to_vmem [thread:$0]  %s447, 16, %s449, [#allocation30]
    $region217: #{time_series_transformer.1} parent=1 // pred_fallthru
      _
    // Predicated region
    $region218: #{time_series_transformer.1} parent=1 // pred_check
      _
    $region219: #{time_series_transformer.1} parent=1 // pred_check_branch
      %453 = sbr.rel (0) target = $region221
    $region220: #{time_series_transformer.1} parent=1 // pred_region
      %455 = vsyncadd [#allocation30], 0
      %s457 = sshll.u32 %s109, 4
      %s458 = int_to_ptr.hbm [resolvable:$true] %s457
      %s459 = sshll.u32 [#allocation31], 4
      %s460 = int_to_ptr.vmem [resolvable:$true] %s459
      %462 = dma.hbm_to_vmem [thread:$0]  %s458, 16, %s460, [#allocation30]
    $region221: #{time_series_transformer.1} parent=1 // pred_fallthru
      _
    // Predicated region
    $region222: #{time_series_transformer.1} parent=1 // pred_check
      _
    $region223: #{time_series_transformer.1} parent=1 // pred_check_branch
      %464 = sbr.rel (0) target = $region225
    $region224: #{time_series_transformer.1} parent=1 // pred_region
      %466 = vsyncadd [#allocation33], 0
      %s468 = sshll.u32 %s111, 4
      %s469 = int_to_ptr.hbm [resolvable:$true] %s468
      %s470 = sshll.u32 [#allocation32], 4
      %s471 = int_to_ptr.vmem [resolvable:$true] %s470
      %473 = dma.hbm_to_vmem [thread:$0]  %s469, 16, %s471, [#allocation33]
    $region225: #{time_series_transformer.1} parent=1 // pred_fallthru
      _
    // Predicated region
    $region226: #{time_series_transformer.1} parent=1 // pred_check
      _
    $region227: #{time_series_transformer.1} parent=1 // pred_check_branch
      %475 = sbr.rel (0) target = $region229
    $region228: #{time_series_transformer.1} parent=1 // pred_region
      _
    $region229: #{time_series_transformer.1} parent=1 // pred_fallthru
      _
    // Predicated region
    $region230: #{time_series_transformer.1} parent=1 // pred_check
      _
    $region231: #{time_series_transformer.1} parent=1 // pred_check_branch
      %477 = sbr.rel (0) target = $region233
    $region232: #{time_series_transformer.1} parent=1 // pred_region
      %479 = vsyncadd [#allocation33], 0
      %s481 = sshll.u32 %s115, 4
      %s482 = int_to_ptr.hbm [resolvable:$true] %s481
      %s483 = sshll.u32 [#allocation34], 4
      %s484 = int_to_ptr.vmem [resolvable:$true] %s483
      %486 = dma.hbm_to_vmem [thread:$0]  %s482, 16, %s484, [#allocation33]
    $region233: #{time_series_transformer.1} parent=1 // pred_fallthru
      _
    // Predicated region
    $region234: #{time_series_transformer.1} parent=1 // pred_check
      _
    $region235: #{time_series_transformer.1} parent=1 // pred_check_branch
      %488 = sbr.rel (0) target = $region237
    $region236: #{time_series_transformer.1} parent=1 // pred_region
      _
    $region237: #{time_series_transformer.1} parent=1 // pred_fallthru
      _
    // Predicated region
    $region238: #{time_series_transformer.1} parent=1 // pred_check
      _
    $region239: #{time_series_transformer.1} parent=1 // pred_check_branch
      %490 = sbr.rel (0) target = $region241
    $region240: #{time_series_transformer.1} parent=1 // pred_region
      %492 = vsyncadd [#allocation36], 0
      %s494 = sshll.u32 %s119, 4
      %s495 = int_to_ptr.hbm [resolvable:$true] %s494
      %s496 = sshll.u32 [#allocation35], 4
      %s497 = int_to_ptr.vmem [resolvable:$true] %s496
      %499 = dma.hbm_to_vmem [thread:$0]  %s495, 16, %s497, [#allocation36]
    $region241: #{time_series_transformer.1} parent=1 // pred_fallthru
      _
    // Predicated region
    $region242: #{time_series_transformer.1} parent=1 // pred_check
      _
    $region243: #{time_series_transformer.1} parent=1 // pred_check_branch
      %501 = sbr.rel (0) target = $region245
    $region244: #{time_series_transformer.1} parent=1 // pred_region
      %503 = vsyncadd [#allocation36], 0
      %s504 = sshll.u32 %s121, 4
      %s505 = int_to_ptr.hbm [resolvable:$true] %s504
      %s506 = sshll.u32 [#allocation37], 4
      %s507 = int_to_ptr.vmem [resolvable:$true] %s506
      %512 = dma.hbm_to_vmem [thread:$0]  %s505, 512, %s507, [#allocation36], 128, 128, 8
    $region245: #{time_series_transformer.1} parent=1 // pred_fallthru
      _
    // Predicated region
    $region246: #{time_series_transformer.1} parent=1 // pred_check
      _
    $region247: #{time_series_transformer.1} parent=1 // pred_check_branch
      %514 = sbr.rel (0) target = $region249
    $region248: #{time_series_transformer.1} parent=1 // pred_region
      %516 = vsyncadd [#allocation39], 0
      %s518 = sshll.u32 %s123, 4
      %s519 = int_to_ptr.hbm [resolvable:$true] %s518
      %s520 = sshll.u32 [#allocation38], 4
      %s521 = int_to_ptr.vmem [resolvable:$true] %s520
      %523 = dma.hbm_to_vmem [thread:$0]  %s519, 16, %s521, [#allocation39]
    $region249: #{time_series_transformer.1} parent=1 // pred_fallthru
      _
    // Predicated region
    $region250: #{time_series_transformer.1} parent=1 // pred_check
      _
    $region251: #{time_series_transformer.1} parent=1 // pred_check_branch
      %525 = sbr.rel (0) target = $region253
    $region252: #{time_series_transformer.1} parent=1 // pred_region
      %527 = vsyncadd [#allocation39], 0
      %s529 = sshll.u32 %s125, 4
      %s530 = int_to_ptr.hbm [resolvable:$true] %s529
      %s531 = sshll.u32 [#allocation40], 4
      %s532 = int_to_ptr.vmem [resolvable:$true] %s531
      %534 = dma.hbm_to_vmem [thread:$0]  %s530, 16, %s532, [#allocation39]
    $region253: #{time_series_transformer.1} parent=1 // pred_fallthru
      _
    // Predicated region
    $region254: #{time_series_transformer.1} parent=1 // pred_check
      _
    $region255: #{time_series_transformer.1} parent=1 // pred_check_branch
      %536 = sbr.rel (0) target = $region257
    $region256: #{time_series_transformer.1} parent=1 // pred_region
      %538 = vsyncadd [#allocation42], 0
      %s540 = sshll.u32 %s127, 4
      %s541 = int_to_ptr.hbm [resolvable:$true] %s540
      %s542 = sshll.u32 [#allocation41], 4
      %s543 = int_to_ptr.vmem [resolvable:$true] %s542
      %545 = dma.hbm_to_vmem [thread:$0]  %s541, 16, %s543, [#allocation42]
    $region257: #{time_series_transformer.1} parent=1 // pred_fallthru
      _
    // Predicated region
    $region258: #{time_series_transformer.1} parent=1 // pred_check
      _
    $region259: #{time_series_transformer.1} parent=1 // pred_check_branch
      %547 = sbr.rel (0) target = $region261
    $region260: #{time_series_transformer.1} parent=1 // pred_region
      %549 = vsyncadd [#allocation42], 0
      %s550 = sshll.u32 %s129, 4
      %s551 = int_to_ptr.hbm [resolvable:$true] %s550
      %s552 = sshll.u32 [#allocation43], 4
      %s553 = int_to_ptr.vmem [resolvable:$true] %s552
      %558 = dma.hbm_to_vmem [thread:$0]  %s551, 512, %s553, [#allocation42], 128, 128, 8
    $region261: #{time_series_transformer.1} parent=1 // pred_fallthru
      _
    // Predicated region
    $region262: #{time_series_transformer.1} parent=1 // pred_check
      _
    $region263: #{time_series_transformer.1} parent=1 // pred_check_branch
      %560 = sbr.rel (0) target = $region265
    $region264: #{time_series_transformer.1} parent=1 // pred_region
      %562 = vsyncadd [#allocation45], 0
      %s564 = sshll.u32 %s131, 4
      %s565 = int_to_ptr.hbm [resolvable:$true] %s564
      %s566 = sshll.u32 [#allocation44], 4
      %s567 = int_to_ptr.vmem [resolvable:$true] %s566
      %569 = dma.hbm_to_vmem [thread:$0]  %s565, 16, %s567, [#allocation45]
    $region265: #{time_series_transformer.1} parent=1 // pred_fallthru
      _
    // Predicated region
    $region266: #{time_series_transformer.1} parent=1 // pred_check
      _
    $region267: #{time_series_transformer.1} parent=1 // pred_check_branch
      %571 = sbr.rel (0) target = $region269
    $region268: #{time_series_transformer.1} parent=1 // pred_region
      _
    $region269: #{time_series_transformer.1} parent=1 // pred_fallthru
      _
    // Predicated region
    $region270: #{time_series_transformer.1} parent=1 // pred_check
      _
    $region271: #{time_series_transformer.1} parent=1 // pred_check_branch
      %573 = sbr.rel (0) target = $region273
    $region272: #{time_series_transformer.1} parent=1 // pred_region
      %575 = vsyncadd [#allocation45], 0
      %s577 = sshll.u32 %s135, 4
      %s578 = int_to_ptr.hbm [resolvable:$true] %s577
      %s579 = sshll.u32 [#allocation46], 4
      %s580 = int_to_ptr.vmem [resolvable:$true] %s579
      %582 = dma.hbm_to_vmem [thread:$0]  %s578, 16, %s580, [#allocation45]
    $region273: #{time_series_transformer.1} parent=1 // pred_fallthru
      _
    // Predicated region
    $region274: #{time_series_transformer.1} parent=1 // pred_check
      _
    $region275: #{time_series_transformer.1} parent=1 // pred_check_branch
      %584 = sbr.rel (0) target = $region277
    $region276: #{time_series_transformer.1} parent=1 // pred_region
      %586 = vsyncadd [#allocation48], 0
      %s588 = sshll.u32 %s137, 4
      %s589 = int_to_ptr.hbm [resolvable:$true] %s588
      %s590 = sshll.u32 [#allocation47], 4
      %s591 = int_to_ptr.vmem [resolvable:$true] %s590
      %593 = dma.hbm_to_vmem [thread:$0]  %s589, 16, %s591, [#allocation48]
    $region277: #{time_series_transformer.1} parent=1 // pred_fallthru
      _
    // Predicated region
    $region278: #{time_series_transformer.1} parent=1 // pred_check
      _
    $region279: #{time_series_transformer.1} parent=1 // pred_check_branch
      %595 = sbr.rel (0) target = $region281
    $region280: #{time_series_transformer.1} parent=1 // pred_region
      %597 = vsyncadd [#allocation48], 0
      %s599 = sshll.u32 %s139, 4
      %s600 = int_to_ptr.hbm [resolvable:$true] %s599
      %s601 = sshll.u32 [#allocation49], 4
      %s602 = int_to_ptr.vmem [resolvable:$true] %s601
      %604 = dma.hbm_to_vmem [thread:$0]  %s600, 16, %s602, [#allocation48]
    $region281: #{time_series_transformer.1} parent=1 // pred_fallthru
      _
    // Predicated region
    $region282: #{time_series_transformer.1} parent=1 // pred_check
      _
    $region283: #{time_series_transformer.1} parent=1 // pred_check_branch
      %606 = sbr.rel (0) target = $region285
    $region284: #{time_series_transformer.1} parent=1 // pred_region
      %608 = vsyncadd [#allocation51], 0
      %s610 = sshll.u32 %s141, 4
      %s611 = int_to_ptr.hbm [resolvable:$true] %s610
      %s612 = sshll.u32 [#allocation50], 4
      %s613 = int_to_ptr.vmem [resolvable:$true] %s612
      %615 = dma.hbm_to_vmem [thread:$0]  %s611, 16, %s613, [#allocation51]
    $region285: #{time_series_transformer.1} parent=1 // pred_fallthru
      _
    // Predicated region
    $region286: #{time_series_transformer.1} parent=1 // pred_check
      _
    $region287: #{time_series_transformer.1} parent=1 // pred_check_branch
      %617 = sbr.rel (0) target = $region289
    $region288: #{time_series_transformer.1} parent=1 // pred_region
      %619 = vsyncadd [#allocation51], 0
      %s621 = sshll.u32 %s143, 4
      %s622 = int_to_ptr.hbm [resolvable:$true] %s621
      %s623 = sshll.u32 [#allocation52], 4
      %s624 = int_to_ptr.vmem [resolvable:$true] %s623
      %626 = dma.hbm_to_vmem [thread:$0]  %s622, 16, %s624, [#allocation51]
    $region289: #{time_series_transformer.1} parent=1 // pred_fallthru
      _
    // Predicated region
    $region290: #{time_series_transformer.1} parent=1 // pred_check
      _
    $region291: #{time_series_transformer.1} parent=1 // pred_check_branch
      %628 = sbr.rel (0) target = $region293
    $region292: #{time_series_transformer.1} parent=1 // pred_region
      _
    $region293: #{time_series_transformer.1} parent=1 // pred_fallthru
      _
    // Predicated region
    $region294: #{time_series_transformer.1} parent=1 // pred_check
      _
    $region295: #{time_series_transformer.1} parent=1 // pred_check_branch
      %630 = sbr.rel (0) target = $region297
    $region296: #{time_series_transformer.1} parent=1 // pred_region
      %632 = vsyncadd [#allocation54], 0
      %s634 = sshll.u32 %s147, 4
      %s635 = int_to_ptr.hbm [resolvable:$true] %s634
      %s636 = sshll.u32 [#allocation53], 4
      %s637 = int_to_ptr.vmem [resolvable:$true] %s636
      %639 = dma.hbm_to_vmem [thread:$0]  %s635, 16, %s637, [#allocation54]
    $region297: #{time_series_transformer.1} parent=1 // pred_fallthru
      _
    // Predicated region
    $region298: #{time_series_transformer.1} parent=1 // pred_check
      _
    $region299: #{time_series_transformer.1} parent=1 // pred_check_branch
      %641 = sbr.rel (0) target = $region301
    $region300: #{time_series_transformer.1} parent=1 // pred_region
      _
    $region301: #{time_series_transformer.1} parent=1 // pred_fallthru
      _
    // Predicated region
    $region302: #{time_series_transformer.1} parent=1 // pred_check
      _
    $region303: #{time_series_transformer.1} parent=1 // pred_check_branch
      %643 = sbr.rel (0) target = $region305
    $region304: #{time_series_transformer.1} parent=1 // pred_region
      %645 = vsyncadd [#allocation54], 0
      %s647 = sshll.u32 %s151, 4
      %s648 = int_to_ptr.hbm [resolvable:$true] %s647
      %s649 = sshll.u32 [#allocation55], 4
      %s650 = int_to_ptr.vmem [resolvable:$true] %s649
      %652 = dma.hbm_to_vmem [thread:$0]  %s648, 16, %s650, [#allocation54]
    $region305: #{time_series_transformer.1} parent=1 // pred_fallthru
      _
    // Predicated region
    $region306: #{time_series_transformer.1} parent=1 // pred_check
      _
    $region307: #{time_series_transformer.1} parent=1 // pred_check_branch
      %654 = sbr.rel (0) target = $region309
    $region308: #{time_series_transformer.1} parent=1 // pred_region
      _
    $region309: #{time_series_transformer.1} parent=1 // pred_fallthru
      _
    // Predicated region
    $region310: #{time_series_transformer.1} parent=1 // pred_check
      _
    $region311: #{time_series_transformer.1} parent=1 // pred_check_branch
      %656 = sbr.rel (0) target = $region313
    $region312: #{time_series_transformer.1} parent=1 // pred_region
      _
    $region313: #{time_series_transformer.1} parent=1 // pred_fallthru
      _
    // Predicated region
    $region314: #{time_series_transformer.1} parent=1 // pred_check
      _
    $region315: #{time_series_transformer.1} parent=1 // pred_check_branch
      %658 = sbr.rel (0) target = $region317
    $region316: #{time_series_transformer.1} parent=1 // pred_region
      %660 = dma.done [#allocation4], 16
    $region317: #{time_series_transformer.1} parent=1 // pred_fallthru
      _
    // Predicated region
    $region318: #{time_series_transformer.1} parent=1 // pred_check
      _
    $region319: #{time_series_transformer.1} parent=1 // pred_check_branch
      %662 = sbr.rel (0) target = $region321
    $region320: #{time_series_transformer.1} parent=1 // pred_region
      %664 = dma.done [#allocation6], 16
    $region321: #{time_series_transformer.1} parent=1 // pred_fallthru
      _
    // Predicated region
    $region322: #{time_series_transformer.1} parent=1 // pred_check
      _
    $region323: #{time_series_transformer.1} parent=1 // pred_check_branch
      %666 = sbr.rel (0) target = $region325
    $region324: #{time_series_transformer.1} parent=1 // pred_region
      %668 = dma.done [#allocation6], 16
    $region325: #{time_series_transformer.1} parent=1 // pred_fallthru
      _
    // Predicated region
    $region326: #{time_series_transformer.1} parent=1 // pred_check
      _
    $region327: #{time_series_transformer.1} parent=1 // pred_check_branch
      %670 = sbr.rel (0) target = $region329
    $region328: #{time_series_transformer.1} parent=1 // pred_region
      %672 = dma.done [#allocation9], 16
    $region329: #{time_series_transformer.1} parent=1 // pred_fallthru
      _
    // Predicated region
    $region330: #{time_series_transformer.1} parent=1 // pred_check
      _
    $region331: #{time_series_transformer.1} parent=1 // pred_check_branch
      %674 = sbr.rel (0) target = $region333
    $region332: #{time_series_transformer.1} parent=1 // pred_region
      %676 = dma.done [#allocation9], 16
    $region333: #{time_series_transformer.1} parent=1 // pred_fallthru
      _
    // Predicated region
    $region334: #{time_series_transformer.1} parent=1 // pred_check
      _
    $region335: #{time_series_transformer.1} parent=1 // pred_check_branch
      %678 = sbr.rel (0) target = $region337
    $region336: #{time_series_transformer.1} parent=1 // pred_region
      %680 = dma.done [#allocation12], 16
    $region337: #{time_series_transformer.1} parent=1 // pred_fallthru
      _
    // Predicated region
    $region338: #{time_series_transformer.1} parent=1 // pred_check
      _
    $region339: #{time_series_transformer.1} parent=1 // pred_check_branch
      %682 = sbr.rel (0) target = $region341
    $region340: #{time_series_transformer.1} parent=1 // pred_region
      %684 = dma.done [#allocation12], 16
    $region341: #{time_series_transformer.1} parent=1 // pred_fallthru
      _
    // Predicated region
    $region342: #{time_series_transformer.1} parent=1 // pred_check
      _
    $region343: #{time_series_transformer.1} parent=1 // pred_check_branch
      %686 = sbr.rel (0) target = $region345
    $region344: #{time_series_transformer.1} parent=1 // pred_region
      %688 = dma.done [#allocation15], 16
    $region345: #{time_series_transformer.1} parent=1 // pred_fallthru
      _
    // Predicated region
    $region346: #{time_series_transformer.1} parent=1 // pred_check
      _
    $region347: #{time_series_transformer.1} parent=1 // pred_check_branch
      %690 = sbr.rel (0) target = $region349
    $region348: #{time_series_transformer.1} parent=1 // pred_region
      %692 = dma.done [#allocation15], 16
    $region349: #{time_series_transformer.1} parent=1 // pred_fallthru
      _
    // Predicated region
    $region350: #{time_series_transformer.1} parent=1 // pred_check
      _
    $region351: #{time_series_transformer.1} parent=1 // pred_check_branch
      %694 = sbr.rel (0) target = $region353
    $region352: #{time_series_transformer.1} parent=1 // pred_region
      %696 = dma.done [#allocation18], 16
    $region353: #{time_series_transformer.1} parent=1 // pred_fallthru
      _
    // Predicated region
    $region354: #{time_series_transformer.1} parent=1 // pred_check
      _
    $region355: #{time_series_transformer.1} parent=1 // pred_check_branch
      %698 = sbr.rel (0) target = $region357
    $region356: #{time_series_transformer.1} parent=1 // pred_region
      %700 = dma.done [#allocation18], 16
    $region357: #{time_series_transformer.1} parent=1 // pred_fallthru
      _
    // Predicated region
    $region358: #{time_series_transformer.1} parent=1 // pred_check
      _
    $region359: #{time_series_transformer.1} parent=1 // pred_check_branch
      %702 = sbr.rel (0) target = $region361
    $region360: #{time_series_transformer.1} parent=1 // pred_region
      %704 = dma.done [#allocation21], 16
    $region361: #{time_series_transformer.1} parent=1 // pred_fallthru
      _
    // Predicated region
    $region362: #{time_series_transformer.1} parent=1 // pred_check
      _
    $region363: #{time_series_transformer.1} parent=1 // pred_check_branch
      %706 = sbr.rel (0) target = $region365
    $region364: #{time_series_transformer.1} parent=1 // pred_region
      %708 = dma.done [#allocation21], 16
    $region365: #{time_series_transformer.1} parent=1 // pred_fallthru
      _
    // Predicated region
    $region366: #{time_series_transformer.1} parent=1 // pred_check
      _
    $region367: #{time_series_transformer.1} parent=1 // pred_check_branch
      %710 = sbr.rel (0) target = $region369
    $region368: #{time_series_transformer.1} parent=1 // pred_region
      %712 = dma.done [#allocation24], 16
    $region369: #{time_series_transformer.1} parent=1 // pred_fallthru
      _
    // Predicated region
    $region370: #{time_series_transformer.1} parent=1 // pred_check
      _
    $region371: #{time_series_transformer.1} parent=1 // pred_check_branch
      %714 = sbr.rel (0) target = $region373
    $region372: #{time_series_transformer.1} parent=1 // pred_region
      %716 = dma.done [#allocation24], 16
    $region373: #{time_series_transformer.1} parent=1 // pred_fallthru
      _
    // Predicated region
    $region374: #{time_series_transformer.1} parent=1 // pred_check
      _
    $region375: #{time_series_transformer.1} parent=1 // pred_check_branch
      %718 = sbr.rel (0) target = $region377
    $region376: #{time_series_transformer.1} parent=1 // pred_region
      %720 = dma.done [#allocation27], 16
    $region377: #{time_series_transformer.1} parent=1 // pred_fallthru
      _
    // Predicated region
    $region378: #{time_series_transformer.1} parent=1 // pred_check
      _
    $region379: #{time_series_transformer.1} parent=1 // pred_check_branch
      %722 = sbr.rel (0) target = $region381
    $region380: #{time_series_transformer.1} parent=1 // pred_region
      %724 = dma.done [#allocation27], 16
    $region381: #{time_series_transformer.1} parent=1 // pred_fallthru
      _
    // Predicated region
    $region382: #{time_series_transformer.1} parent=1 // pred_check
      _
    $region383: #{time_series_transformer.1} parent=1 // pred_check_branch
      %726 = sbr.rel (0) target = $region385
    $region384: #{time_series_transformer.1} parent=1 // pred_region
      %728 = dma.done [#allocation30], 16
    $region385: #{time_series_transformer.1} parent=1 // pred_fallthru
      _
    // Predicated region
    $region386: #{time_series_transformer.1} parent=1 // pred_check
      _
    $region387: #{time_series_transformer.1} parent=1 // pred_check_branch
      %730 = sbr.rel (0) target = $region389
    $region388: #{time_series_transformer.1} parent=1 // pred_region
      %732 = dma.done [#allocation30], 16
    $region389: #{time_series_transformer.1} parent=1 // pred_fallthru
      _
    // Predicated region
    $region390: #{time_series_transformer.1} parent=1 // pred_check
      _
    $region391: #{time_series_transformer.1} parent=1 // pred_check_branch
      %734 = sbr.rel (0) target = $region393
    $region392: #{time_series_transformer.1} parent=1 // pred_region
      %736 = dma.done [#allocation33], 16
    $region393: #{time_series_transformer.1} parent=1 // pred_fallthru
      _
    // Predicated region
    $region394: #{time_series_transformer.1} parent=1 // pred_check
      _
    $region395: #{time_series_transformer.1} parent=1 // pred_check_branch
      %738 = sbr.rel (0) target = $region397
    $region396: #{time_series_transformer.1} parent=1 // pred_region
      %740 = dma.done [#allocation33], 16
    $region397: #{time_series_transformer.1} parent=1 // pred_fallthru
      _
    // Predicated region
    $region398: #{time_series_transformer.1} parent=1 // pred_check
      _
    $region399: #{time_series_transformer.1} parent=1 // pred_check_branch
      %742 = sbr.rel (0) target = $region401
    $region400: #{time_series_transformer.1} parent=1 // pred_region
      %744 = dma.done [#allocation36], 16
    $region401: #{time_series_transformer.1} parent=1 // pred_fallthru
      _
    // Predicated region
    $region402: #{time_series_transformer.1} parent=1 // pred_check
      _
    $region403: #{time_series_transformer.1} parent=1 // pred_check_branch
      %746 = sbr.rel (0) target = $region405
    $region404: #{time_series_transformer.1} parent=1 // pred_region
      %748 = dma.done [#allocation36], 512
    $region405: #{time_series_transformer.1} parent=1 // pred_fallthru
      _
    // Predicated region
    $region406: #{time_series_transformer.1} parent=1 // pred_check
      _
    $region407: #{time_series_transformer.1} parent=1 // pred_check_branch
      %750 = sbr.rel (0) target = $region409
    $region408: #{time_series_transformer.1} parent=1 // pred_region
      %752 = dma.done [#allocation39], 16
    $region409: #{time_series_transformer.1} parent=1 // pred_fallthru
      _
    // Predicated region
    $region410: #{time_series_transformer.1} parent=1 // pred_check
      _
    $region411: #{time_series_transformer.1} parent=1 // pred_check_branch
      %754 = sbr.rel (0) target = $region413
    $region412: #{time_series_transformer.1} parent=1 // pred_region
      %756 = dma.done [#allocation39], 16
    $region413: #{time_series_transformer.1} parent=1 // pred_fallthru
      _
    // Predicated region
    $region414: #{time_series_transformer.1} parent=1 // pred_check
      _
    $region415: #{time_series_transformer.1} parent=1 // pred_check_branch
      %758 = sbr.rel (0) target = $region417
    $region416: #{time_series_transformer.1} parent=1 // pred_region
      %760 = dma.done [#allocation42], 16
    $region417: #{time_series_transformer.1} parent=1 // pred_fallthru
      _
    // Predicated region
    $region418: #{time_series_transformer.1} parent=1 // pred_check
      _
    $region419: #{time_series_transformer.1} parent=1 // pred_check_branch
      %762 = sbr.rel (0) target = $region421
    $region420: #{time_series_transformer.1} parent=1 // pred_region
      %764 = dma.done [#allocation42], 512
    $region421: #{time_series_transformer.1} parent=1 // pred_fallthru
      _
    // Predicated region
    $region422: #{time_series_transformer.1} parent=1 // pred_check
      _
    $region423: #{time_series_transformer.1} parent=1 // pred_check_branch
      %766 = sbr.rel (0) target = $region425
    $region424: #{time_series_transformer.1} parent=1 // pred_region
      %768 = dma.done [#allocation45], 16
    $region425: #{time_series_transformer.1} parent=1 // pred_fallthru
      _
    // Predicated region
    $region426: #{time_series_transformer.1} parent=1 // pred_check
      _
    $region427: #{time_series_transformer.1} parent=1 // pred_check_branch
      %770 = sbr.rel (0) target = $region429
    $region428: #{time_series_transformer.1} parent=1 // pred_region
      %772 = dma.done [#allocation45], 16
    $region429: #{time_series_transformer.1} parent=1 // pred_fallthru
      _
    // Predicated region
    $region430: #{time_series_transformer.1} parent=1 // pred_check
      _
    $region431: #{time_series_transformer.1} parent=1 // pred_check_branch
      %774 = sbr.rel (0) target = $region433
    $region432: #{time_series_transformer.1} parent=1 // pred_region
      %776 = dma.done [#allocation48], 16
    $region433: #{time_series_transformer.1} parent=1 // pred_fallthru
      _
    // Predicated region
    $region434: #{time_series_transformer.1} parent=1 // pred_check
      _
    $region435: #{time_series_transformer.1} parent=1 // pred_check_branch
      %778 = sbr.rel (0) target = $region437
    $region436: #{time_series_transformer.1} parent=1 // pred_region
      %780 = dma.done [#allocation48], 16
    $region437: #{time_series_transformer.1} parent=1 // pred_fallthru
      _
    // Predicated region
    $region438: #{time_series_transformer.1} parent=1 // pred_check
      _
    $region439: #{time_series_transformer.1} parent=1 // pred_check_branch
      %782 = sbr.rel (0) target = $region441
    $region440: #{time_series_transformer.1} parent=1 // pred_region
      %784 = dma.done [#allocation51], 16
    $region441: #{time_series_transformer.1} parent=1 // pred_fallthru
      _
    // Predicated region
    $region442: #{time_series_transformer.1} parent=1 // pred_check
      _
    $region443: #{time_series_transformer.1} parent=1 // pred_check_branch
      %786 = sbr.rel (0) target = $region445
    $region444: #{time_series_transformer.1} parent=1 // pred_region
      %788 = dma.done [#allocation51], 16
    $region445: #{time_series_transformer.1} parent=1 // pred_fallthru
      _
    // Predicated region
    $region446: #{time_series_transformer.1} parent=1 // pred_check
      _
    $region447: #{time_series_transformer.1} parent=1 // pred_check_branch
      %790 = sbr.rel (0) target = $region449
    $region448: #{time_series_transformer.1} parent=1 // pred_region
      %792 = dma.done [#allocation54], 16
    $region449: #{time_series_transformer.1} parent=1 // pred_fallthru
      _
    // Predicated region
    $region450: #{time_series_transformer.1} parent=1 // pred_check
      _
    $region451: #{time_series_transformer.1} parent=1 // pred_check_branch
      %794 = sbr.rel (0) target = $region453
    $region452: #{time_series_transformer.1} parent=1 // pred_region
      %796 = dma.done [#allocation54], 16
    $region453: #{time_series_transformer.1} parent=1 // pred_fallthru
      _
    %v797 = vld [vmem:[%s1] sm:$0xff]
    %v798 = vld [vmem:[%s1 + $0x8] sm:$0xff]
    %v799 = vld [vmem:[%s3] sm:$0xff]
    %v800 = vld [vmem:[%s3 + $0x8] sm:$0xff]
    %v801 = vld [vmem:[%s5] sm:$0xf]
    %v802 = vld [vmem:[%s7] sm:$0x1]
    %v804 = vperm.slane %v802, 0
    %vm806 = vcmask 31744
    %v808 = vsel %vm806, %v797, 0
    %v811 = vsel %vm806, %v798, 0
    %vm813 = vcmask 1043456
    %v815 = vsel %vm813, %v801, 0
    %817 = vmatpush.msra.mxu0 0.0
    %818 = vmatpush.msra.mxu0 0.0
    %819 = vmatpush.msra.mxu0 0.0
    %820 = vmatpush.msra.mxu0 0.0
    %821 = vmatpush.msra.mxu0 0.0
    %822 = vmatpush.msra.mxu0 0.0
    %823 = vmatpush.msra.mxu0 0.0
    %824 = vmatpush.msra.mxu0 0.0
    %825 = vmatpush.msra.mxu0 0.0
    %826 = vmatpush.msra.mxu0 0.0
    %827 = vmatpush.msra.mxu0 0.0
    %828 = vmatpush.msra.mxu0 0.0
    %829 = vmatpush.msra.mxu0 0.0
    %830 = vmatpush.msra.mxu0 0.0
    %831 = vmatpush.msra.mxu0 0.0
    %832 = vmatpush.msra.mxu0 %v815
    %833 = vmatmul.f32.gmra.mxu0 %v808
    %v834 = vpop.f32.mrf.mxu0
    %v835 = vadd.f32 %v804, %v834
    %836 = vmatmul.f32.gmra.mxu0 %v811
    %v837 = vpop.f32.mrf.mxu0
    %v838 = vadd.f32 %v804, %v837
    %839 = vdwg.mxu0
    %v840 = vadd.f32 %v835, %v799
    %v841 = vadd.f32 %v838, %v800
    %v842 = vld [vmem:[%s9] sm:$0xff]
    %v843 = vld [vmem:[%s9 + $0x8] sm:$0xff]
    %v844 = vld [vmem:[%s9 + $0x10] sm:$0xff]
    %v845 = vld [vmem:[%s9 + $0x18] sm:$0xff]
    %v846 = vld [vmem:[%s11] sm:$0x1]
    %v848 = vperm.slane %v846, 0
    %vm850 = vcmask 261120
    %v852 = vsel %vm850, %v840, 0
    %v855 = vsel %vm850, %v841, 0
    %857 = vmatpush.msra.mxu0 0.0
    %858 = vmatpush.msra.mxu0 0.0
    %859 = vmatpush.msra.mxu0 0.0
    %860 = vmatpush.msra.mxu0 0.0
    %861 = vmatpush.msra.mxu0 0.0
    %862 = vmatpush.msra.mxu0 0.0
    %863 = vmatpush.msra.mxu0 0.0
    %864 = vmatpush.msra.mxu0 0.0
    %865 = vmatpush.msra.mxu0 0.0
    %866 = vmatpush.msra.mxu0 0.0
    %867 = vmatpush.msra.mxu0 0.0
    %868 = vmatpush.msra.mxu0 0.0
    %869 = vmatpush.msra.mxu0 %v845
    %870 = vmatpush.msra.mxu0 %v844
    %871 = vmatpush.msra.mxu0 %v843
    %872 = vmatpush.msra.mxu0 %v842
    %873 = vmatmul.f32.gmra.mxu0 %v852
    %v874 = vpop.f32.mrf.mxu0
    %v875 = vadd.f32 %v848, %v874
    %876 = vmatmul.f32.gmra.mxu0 %v855
    %v877 = vpop.f32.mrf.mxu0
    %v878 = vadd.f32 %v848, %v877
    %879 = vdwg.mxu0
    %v880 = vld [vmem:[%s13] sm:$0xff]
    %v881 = vld [vmem:[%s13 + $0x8] sm:$0xff]
    %v882 = vld [vmem:[%s13 + $0x10] sm:$0xff]
    %v883 = vld [vmem:[%s13 + $0x18] sm:$0xff]
    %v884 = vld [vmem:[%s15] sm:$0x1]
    %886 = vrot.lane.b32.xlu0 %v875, 96
    %v887 = vpop.permute.xlu0 %886
    %vm888 = vcmask 64512
    %v889 = vsel %vm888, %v875, 0
    %v891 = vsel %vm888, %v887, 0
    %893 = vmatpush.xpose.msra.mxu0 0.0
    %894 = vmatpush.xpose.msra.mxu0 0.0
    %895 = vmatpush.xpose.msra.mxu0 0.0
    %896 = vmatpush.xpose.msra.mxu0 0.0
    %897 = vmatpush.xpose.msra.mxu0 0.0
    %898 = vmatpush.xpose.msra.mxu0 0.0
    %899 = vmatpush.xpose.msra.mxu0 0.0
    %900 = vmatpush.xpose.msra.mxu0 0.0
    %901 = vmatpush.xpose.msra.mxu0 0.0
    %902 = vmatpush.xpose.msra.mxu0 0.0
    %903 = vmatpush.xpose.msra.mxu0 0.0
    %904 = vmatpush.xpose.msra.mxu0 0.0
    %905 = vmatpush.xpose.msra.mxu0 0.0
    %906 = vmatpush.xpose.msra.mxu0 0.0
    %907 = vmatpush.xpose.msra.mxu0 0.0
    %908 = vmatpush.xpose.msra.mxu0 %v891
    %909 = vmatmul.f32.gmra.mxu0 %v889
    %v910 = vpop.f32.mrf.mxu0
    %v911 = vadd.f32 0.0, %v910
    %912 = vdwg.mxu0
    %914 = vrot.lane.b32.xlu0 %v878, 96
    %v915 = vpop.permute.xlu0 %914
    %v916 = vsel %vm888, %v878, 0
    %v918 = vsel %vm888, %v915, 0
    %920 = vmatpush.xpose.msra.mxu0 0.0
    %921 = vmatpush.xpose.msra.mxu0 0.0
    %922 = vmatpush.xpose.msra.mxu0 0.0
    %923 = vmatpush.xpose.msra.mxu0 0.0
    %924 = vmatpush.xpose.msra.mxu0 0.0
    %925 = vmatpush.xpose.msra.mxu0 0.0
    %926 = vmatpush.xpose.msra.mxu0 0.0
    %927 = vmatpush.xpose.msra.mxu0 0.0
    %928 = vmatpush.xpose.msra.mxu0 0.0
    %929 = vmatpush.xpose.msra.mxu0 0.0
    %930 = vmatpush.xpose.msra.mxu0 0.0
    %931 = vmatpush.xpose.msra.mxu0 0.0
    %932 = vmatpush.xpose.msra.mxu0 0.0
    %933 = vmatpush.xpose.msra.mxu0 0.0
    %934 = vmatpush.xpose.msra.mxu0 0.0
    %935 = vmatpush.xpose.msra.mxu0 %v918
    %936 = vmatmul.f32.gmra.mxu0 %v916
    %v937 = vpop.f32.mrf.mxu0
    %v938 = vadd.f32 0.0, %v937
    %939 = vdwg.mxu0
    %v940 = vmul.f32 %v911, 0.35355338
    %v941 = vmul.f32 %v938, 0.35355338
    %v942 = vsel %vm888, %v940, -inf
    %943 = vmax.xlane.f32.xlu0 %v942
    %v944 = vpop.xlane.xlu0 %943
    %v945 = vsel %vm888, %v941, -inf
    %946 = vmax.xlane.f32.xlu0 %v945
    %v947 = vpop.xlane.xlu0 %946
    %v948 = vsub.f32 %v940, %v944
    %v949 = vsub.f32 %v941, %v947
    %v950 = vmul.f32 %v948, 1.442695
    %v951 = vpow.pop %v950
    %v952 = vmul.f32 %v949, 1.442695
    %v953 = vpow.pop %v952
    %v954 = vsel %vm888, %v951, 0.0
    %955 = vadd.xlane.f32.xlu0 %v954
    %v956 = vpop.xlane.xlu0 %955
    %v957 = vsel %vm888, %v953, 0.0
    %958 = vadd.xlane.f32.xlu0 %v957
    %v959 = vpop.xlane.xlu0 %958
    %v960 = vrcp.pop %v956
    %v961 = vrcp.pop %v959
    %v962 = vmul.f32 %v951, %v960
    %v963 = vmul.f32 %v953, %v961
    %964 = vrot.lane.b32.xlu0 %v875, 64
    %v965 = vpop.permute.xlu0 %964
    %v968 = vsel %vm888, %v962, 0
    %970 = vmatpush.msra.mxu0 0.0
    %971 = vmatpush.msra.mxu0 0.0
    %972 = vmatpush.msra.mxu0 0.0
    %973 = vmatpush.msra.mxu0 0.0
    %974 = vmatpush.msra.mxu0 0.0
    %975 = vmatpush.msra.mxu0 0.0
    %976 = vmatpush.msra.mxu0 0.0
    %977 = vmatpush.msra.mxu0 0.0
    %978 = vmatpush.msra.mxu0 0.0
    %979 = vmatpush.msra.mxu0 0.0
    %980 = vmatpush.msra.mxu0 0.0
    %981 = vmatpush.msra.mxu0 0.0
    %982 = vmatpush.msra.mxu0 0.0
    %983 = vmatpush.msra.mxu0 0.0
    %984 = vmatpush.msra.mxu0 0.0
    %985 = vmatpush.msra.mxu0 %v965
    %986 = vmatmul.f32.gmra.mxu0 %v968
    %v987 = vpop.f32.mrf.mxu0
    %v988 = vadd.f32 0.0, %v987
    %989 = vdwg.mxu0
    %990 = vrot.lane.b32.xlu0 %v878, 64
    %v991 = vpop.permute.xlu0 %990
    %v994 = vsel %vm888, %v963, 0
    %996 = vmatpush.msra.mxu0 0.0
    %997 = vmatpush.msra.mxu0 0.0
    %998 = vmatpush.msra.mxu0 0.0
    %999 = vmatpush.msra.mxu0 0.0
    %1000 = vmatpush.msra.mxu0 0.0
    %1001 = vmatpush.msra.mxu0 0.0
    %1002 = vmatpush.msra.mxu0 0.0
    %1003 = vmatpush.msra.mxu0 0.0
    %1004 = vmatpush.msra.mxu0 0.0
    %1005 = vmatpush.msra.mxu0 0.0
    %1006 = vmatpush.msra.mxu0 0.0
    %1007 = vmatpush.msra.mxu0 0.0
    %1008 = vmatpush.msra.mxu0 0.0
    %1009 = vmatpush.msra.mxu0 0.0
    %1010 = vmatpush.msra.mxu0 0.0
    %1011 = vmatpush.msra.mxu0 %v991
    %1012 = vmatmul.f32.gmra.mxu0 %v994
    %v1013 = vpop.f32.mrf.mxu0
    %v1014 = vadd.f32 0.0, %v1013
    %1015 = vdwg.mxu0
    %1016 = vrot.lane.b32.xlu0 %v875, 120
    %v1017 = vpop.permute.xlu0 %1016
    %1018 = vrot.lane.b32.xlu0 %v875, 88
    %v1019 = vpop.permute.xlu0 %1018
    %v1020 = vsel %vm888, %v1017, 0
    %v1022 = vsel %vm888, %v1019, 0
    %1024 = vmatpush.xpose.msra.mxu0 0.0
    %1025 = vmatpush.xpose.msra.mxu0 0.0
    %1026 = vmatpush.xpose.msra.mxu0 0.0
    %1027 = vmatpush.xpose.msra.mxu0 0.0
    %1028 = vmatpush.xpose.msra.mxu0 0.0
    %1029 = vmatpush.xpose.msra.mxu0 0.0
    %1030 = vmatpush.xpose.msra.mxu0 0.0
    %1031 = vmatpush.xpose.msra.mxu0 0.0
    %1032 = vmatpush.xpose.msra.mxu0 0.0
    %1033 = vmatpush.xpose.msra.mxu0 0.0
    %1034 = vmatpush.xpose.msra.mxu0 0.0
    %1035 = vmatpush.xpose.msra.mxu0 0.0
    %1036 = vmatpush.xpose.msra.mxu0 0.0
    %1037 = vmatpush.xpose.msra.mxu0 0.0
    %1038 = vmatpush.xpose.msra.mxu0 0.0
    %1039 = vmatpush.xpose.msra.mxu0 %v1022
    %1040 = vmatmul.f32.gmra.mxu0 %v1020
    %v1041 = vpop.f32.mrf.mxu0
    %v1042 = vadd.f32 0.0, %v1041
    %1043 = vdwg.mxu0
    %1044 = vrot.lane.b32.xlu0 %v878, 120
    %v1045 = vpop.permute.xlu0 %1044
    %1046 = vrot.lane.b32.xlu0 %v878, 88
    %v1047 = vpop.permute.xlu0 %1046
    %v1048 = vsel %vm888, %v1045, 0
    %v1050 = vsel %vm888, %v1047, 0
    %1052 = vmatpush.xpose.msra.mxu0 0.0
    %1053 = vmatpush.xpose.msra.mxu0 0.0
    %1054 = vmatpush.xpose.msra.mxu0 0.0
    %1055 = vmatpush.xpose.msra.mxu0 0.0
    %1056 = vmatpush.xpose.msra.mxu0 0.0
    %1057 = vmatpush.xpose.msra.mxu0 0.0
    %1058 = vmatpush.xpose.msra.mxu0 0.0
    %1059 = vmatpush.xpose.msra.mxu0 0.0
    %1060 = vmatpush.xpose.msra.mxu0 0.0
    %1061 = vmatpush.xpose.msra.mxu0 0.0
    %1062 = vmatpush.xpose.msra.mxu0 0.0
    %1063 = vmatpush.xpose.msra.mxu0 0.0
    %1064 = vmatpush.xpose.msra.mxu0 0.0
    %1065 = vmatpush.xpose.msra.mxu0 0.0
    %1066 = vmatpush.xpose.msra.mxu0 0.0
    %1067 = vmatpush.xpose.msra.mxu0 %v1050
    %1068 = vmatmul.f32.gmra.mxu0 %v1048
    %v1069 = vpop.f32.mrf.mxu0
    %v1070 = vadd.f32 0.0, %v1069
    %1071 = vdwg.mxu0
    %v1072 = vmul.f32 %v1042, 0.35355338
    %v1073 = vmul.f32 %v1070, 0.35355338
    %v1074 = vsel %vm888, %v1072, -inf
    %1075 = vmax.xlane.f32.xlu0 %v1074
    %v1076 = vpop.xlane.xlu0 %1075
    %v1077 = vsel %vm888, %v1073, -inf
    %1078 = vmax.xlane.f32.xlu0 %v1077
    %v1079 = vpop.xlane.xlu0 %1078
    %v1080 = vsub.f32 %v1072, %v1076
    %v1081 = vsub.f32 %v1073, %v1079
    %v1082 = vmul.f32 %v1080, 1.442695
    %v1083 = vpow.pop %v1082
    %v1084 = vmul.f32 %v1081, 1.442695
    %v1085 = vpow.pop %v1084
    %v1086 = vsel %vm888, %v1083, 0.0
    %1087 = vadd.xlane.f32.xlu0 %v1086
    %v1088 = vpop.xlane.xlu0 %1087
    %v1089 = vsel %vm888, %v1085, 0.0
    %1090 = vadd.xlane.f32.xlu0 %v1089
    %v1091 = vpop.xlane.xlu0 %1090
    %v1092 = vrcp.pop %v1088
    %v1093 = vrcp.pop %v1091
    %v1094 = vmul.f32 %v1083, %v1092
    %v1095 = vmul.f32 %v1085, %v1093
    %1096 = vrot.lane.b32.xlu0 %v875, 56
    %v1097 = vpop.permute.xlu0 %1096
    %v1100 = vsel %vm888, %v1094, 0
    %1102 = vmatpush.msra.mxu0 0.0
    %1103 = vmatpush.msra.mxu0 0.0
    %1104 = vmatpush.msra.mxu0 0.0
    %1105 = vmatpush.msra.mxu0 0.0
    %1106 = vmatpush.msra.mxu0 0.0
    %1107 = vmatpush.msra.mxu0 0.0
    %1108 = vmatpush.msra.mxu0 0.0
    %1109 = vmatpush.msra.mxu0 0.0
    %1110 = vmatpush.msra.mxu0 0.0
    %1111 = vmatpush.msra.mxu0 0.0
    %1112 = vmatpush.msra.mxu0 0.0
    %1113 = vmatpush.msra.mxu0 0.0
    %1114 = vmatpush.msra.mxu0 0.0
    %1115 = vmatpush.msra.mxu0 0.0
    %1116 = vmatpush.msra.mxu0 0.0
    %1117 = vmatpush.msra.mxu0 %v1097
    %1118 = vmatmul.f32.gmra.mxu0 %v1100
    %v1119 = vpop.f32.mrf.mxu0
    %v1120 = vadd.f32 0.0, %v1119
    %1121 = vdwg.mxu0
    %1122 = vrot.lane.b32.xlu0 %v878, 56
    %v1123 = vpop.permute.xlu0 %1122
    %v1126 = vsel %vm888, %v1095, 0
    %1128 = vmatpush.msra.mxu0 0.0
    %1129 = vmatpush.msra.mxu0 0.0
    %1130 = vmatpush.msra.mxu0 0.0
    %1131 = vmatpush.msra.mxu0 0.0
    %1132 = vmatpush.msra.mxu0 0.0
    %1133 = vmatpush.msra.mxu0 0.0
    %1134 = vmatpush.msra.mxu0 0.0
    %1135 = vmatpush.msra.mxu0 0.0
    %1136 = vmatpush.msra.mxu0 0.0
    %1137 = vmatpush.msra.mxu0 0.0
    %1138 = vmatpush.msra.mxu0 0.0
    %1139 = vmatpush.msra.mxu0 0.0
    %1140 = vmatpush.msra.mxu0 0.0
    %1141 = vmatpush.msra.mxu0 0.0
    %1142 = vmatpush.msra.mxu0 0.0
    %1143 = vmatpush.msra.mxu0 %v1123
    %1144 = vmatmul.f32.gmra.mxu0 %v1126
    %v1145 = vpop.f32.mrf.mxu0
    %v1146 = vadd.f32 0.0, %v1145
    %1147 = vdwg.mxu0
    %v1149 = vsel %vm888, %v1120, 0
    %v1152 = vsel %vm888, %v1146, 0
    %1154 = vmatpush.msra.mxu0 0.0
    %1155 = vmatpush.msra.mxu0 0.0
    %1156 = vmatpush.msra.mxu0 0.0
    %1157 = vmatpush.msra.mxu0 0.0
    %1158 = vmatpush.msra.mxu0 0.0
    %1159 = vmatpush.msra.mxu0 0.0
    %1160 = vmatpush.msra.mxu0 0.0
    %1161 = vmatpush.msra.mxu0 0.0
    %1162 = vmatpush.msra.mxu0 0.0
    %1163 = vmatpush.msra.mxu0 0.0
    %1164 = vmatpush.msra.mxu0 0.0
    %1165 = vmatpush.msra.mxu0 0.0
    %1166 = vmatpush.msra.mxu0 0.0
    %1167 = vmatpush.msra.mxu0 0.0
    %1168 = vmatpush.msra.mxu0 0.0
    %1169 = vmatpush.msra.mxu0 %v881
    %1170 = vmatmul.f32.gmra.mxu0 %v1149
    %v1171 = vpop.f32.mrf.mxu0
    %v1172 = vadd.f32 0.0, %v1171
    %1173 = vmatmul.f32.gmra.mxu0 %v1152
    %v1174 = vpop.f32.mrf.mxu0
    %v1175 = vadd.f32 0.0, %v1174
    %1176 = vdwg.mxu0
    %v1178 = vsel %vm888, %v988, 0
    %v1181 = vsel %vm888, %v1014, 0
    %1183 = vmatpush.msra.mxu0 0.0
    %1184 = vmatpush.msra.mxu0 0.0
    %1185 = vmatpush.msra.mxu0 0.0
    %1186 = vmatpush.msra.mxu0 0.0
    %1187 = vmatpush.msra.mxu0 0.0
    %1188 = vmatpush.msra.mxu0 0.0
    %1189 = vmatpush.msra.mxu0 0.0
    %1190 = vmatpush.msra.mxu0 0.0
    %1191 = vmatpush.msra.mxu0 0.0
    %1192 = vmatpush.msra.mxu0 0.0
    %1193 = vmatpush.msra.mxu0 0.0
    %1194 = vmatpush.msra.mxu0 0.0
    %1195 = vmatpush.msra.mxu0 0.0
    %1196 = vmatpush.msra.mxu0 0.0
    %1197 = vmatpush.msra.mxu0 0.0
    %1198 = vmatpush.msra.mxu0 %v880
    %1199 = vmatmul.f32.gmra.mxu0 %v1178
    %v1200 = vpop.f32.mrf.mxu0
    %v1201 = vadd.f32 %v1172, %v1200
    %1202 = vmatmul.f32.gmra.mxu0 %v1181
    %v1203 = vpop.f32.mrf.mxu0
    %v1204 = vadd.f32 %v1175, %v1203
    %1205 = vdwg.mxu0
    %1206 = vrot.lane.b32.xlu0 %v875, 112
    %v1207 = vpop.permute.xlu0 %1206
    %1208 = vrot.lane.b32.xlu0 %v875, 80
    %v1209 = vpop.permute.xlu0 %1208
    %v1210 = vsel %vm888, %v1207, 0
    %v1212 = vsel %vm888, %v1209, 0
    %1214 = vmatpush.xpose.msra.mxu0 0.0
    %1215 = vmatpush.xpose.msra.mxu0 0.0
    %1216 = vmatpush.xpose.msra.mxu0 0.0
    %1217 = vmatpush.xpose.msra.mxu0 0.0
    %1218 = vmatpush.xpose.msra.mxu0 0.0
    %1219 = vmatpush.xpose.msra.mxu0 0.0
    %1220 = vmatpush.xpose.msra.mxu0 0.0
    %1221 = vmatpush.xpose.msra.mxu0 0.0
    %1222 = vmatpush.xpose.msra.mxu0 0.0
    %1223 = vmatpush.xpose.msra.mxu0 0.0
    %1224 = vmatpush.xpose.msra.mxu0 0.0
    %1225 = vmatpush.xpose.msra.mxu0 0.0
    %1226 = vmatpush.xpose.msra.mxu0 0.0
    %1227 = vmatpush.xpose.msra.mxu0 0.0
    %1228 = vmatpush.xpose.msra.mxu0 0.0
    %1229 = vmatpush.xpose.msra.mxu0 %v1212
    %1230 = vmatmul.f32.gmra.mxu0 %v1210
    %v1231 = vpop.f32.mrf.mxu0
    %v1232 = vadd.f32 0.0, %v1231
    %1233 = vdwg.mxu0
    %1234 = vrot.lane.b32.xlu0 %v878, 112
    %v1235 = vpop.permute.xlu0 %1234
    %1236 = vrot.lane.b32.xlu0 %v878, 80
    %v1237 = vpop.permute.xlu0 %1236
    %v1238 = vsel %vm888, %v1235, 0
    %v1240 = vsel %vm888, %v1237, 0
    %1242 = vmatpush.xpose.msra.mxu0 0.0
    %1243 = vmatpush.xpose.msra.mxu0 0.0
    %1244 = vmatpush.xpose.msra.mxu0 0.0
    %1245 = vmatpush.xpose.msra.mxu0 0.0
    %1246 = vmatpush.xpose.msra.mxu0 0.0
    %1247 = vmatpush.xpose.msra.mxu0 0.0
    %1248 = vmatpush.xpose.msra.mxu0 0.0
    %1249 = vmatpush.xpose.msra.mxu0 0.0
    %1250 = vmatpush.xpose.msra.mxu0 0.0
    %1251 = vmatpush.xpose.msra.mxu0 0.0
    %1252 = vmatpush.xpose.msra.mxu0 0.0
    %1253 = vmatpush.xpose.msra.mxu0 0.0
    %1254 = vmatpush.xpose.msra.mxu0 0.0
    %1255 = vmatpush.xpose.msra.mxu0 0.0
    %1256 = vmatpush.xpose.msra.mxu0 0.0
    %1257 = vmatpush.xpose.msra.mxu0 %v1240
    %1258 = vmatmul.f32.gmra.mxu0 %v1238
    %v1259 = vpop.f32.mrf.mxu0
    %v1260 = vadd.f32 0.0, %v1259
    %1261 = vdwg.mxu0
    %v1262 = vmul.f32 %v1232, 0.35355338
    %v1263 = vmul.f32 %v1260, 0.35355338
    %v1264 = vsel %vm888, %v1262, -inf
    %1265 = vmax.xlane.f32.xlu0 %v1264
    %v1266 = vpop.xlane.xlu0 %1265
    %v1267 = vsel %vm888, %v1263, -inf
    %1268 = vmax.xlane.f32.xlu0 %v1267
    %v1269 = vpop.xlane.xlu0 %1268
    %v1270 = vsub.f32 %v1262, %v1266
    %v1271 = vsub.f32 %v1263, %v1269
    %v1272 = vmul.f32 %v1270, 1.442695
    %v1273 = vpow.pop %v1272
    %v1274 = vmul.f32 %v1271, 1.442695
    %v1275 = vpow.pop %v1274
    %v1276 = vsel %vm888, %v1273, 0.0
    %1277 = vadd.xlane.f32.xlu0 %v1276
    %v1278 = vpop.xlane.xlu0 %1277
    %v1279 = vsel %vm888, %v1275, 0.0
    %1280 = vadd.xlane.f32.xlu0 %v1279
    %v1281 = vpop.xlane.xlu0 %1280
    %v1282 = vrcp.pop %v1278
    %v1283 = vrcp.pop %v1281
    %v1284 = vmul.f32 %v1273, %v1282
    %v1285 = vmul.f32 %v1275, %v1283
    %1286 = vrot.lane.b32.xlu0 %v875, 48
    %v1287 = vpop.permute.xlu0 %1286
    %v1290 = vsel %vm888, %v1284, 0
    %1292 = vmatpush.msra.mxu0 0.0
    %1293 = vmatpush.msra.mxu0 0.0
    %1294 = vmatpush.msra.mxu0 0.0
    %1295 = vmatpush.msra.mxu0 0.0
    %1296 = vmatpush.msra.mxu0 0.0
    %1297 = vmatpush.msra.mxu0 0.0
    %1298 = vmatpush.msra.mxu0 0.0
    %1299 = vmatpush.msra.mxu0 0.0
    %1300 = vmatpush.msra.mxu0 0.0
    %1301 = vmatpush.msra.mxu0 0.0
    %1302 = vmatpush.msra.mxu0 0.0
    %1303 = vmatpush.msra.mxu0 0.0
    %1304 = vmatpush.msra.mxu0 0.0
    %1305 = vmatpush.msra.mxu0 0.0
    %1306 = vmatpush.msra.mxu0 0.0
    %1307 = vmatpush.msra.mxu0 %v1287
    %1308 = vmatmul.f32.gmra.mxu0 %v1290
    %v1309 = vpop.f32.mrf.mxu0
    %v1310 = vadd.f32 0.0, %v1309
    %1311 = vdwg.mxu0
    %1312 = vrot.lane.b32.xlu0 %v878, 48
    %v1313 = vpop.permute.xlu0 %1312
    %v1316 = vsel %vm888, %v1285, 0
    %1318 = vmatpush.msra.mxu0 0.0
    %1319 = vmatpush.msra.mxu0 0.0
    %1320 = vmatpush.msra.mxu0 0.0
    %1321 = vmatpush.msra.mxu0 0.0
    %1322 = vmatpush.msra.mxu0 0.0
    %1323 = vmatpush.msra.mxu0 0.0
    %1324 = vmatpush.msra.mxu0 0.0
    %1325 = vmatpush.msra.mxu0 0.0
    %1326 = vmatpush.msra.mxu0 0.0
    %1327 = vmatpush.msra.mxu0 0.0
    %1328 = vmatpush.msra.mxu0 0.0
    %1329 = vmatpush.msra.mxu0 0.0
    %1330 = vmatpush.msra.mxu0 0.0
    %1331 = vmatpush.msra.mxu0 0.0
    %1332 = vmatpush.msra.mxu0 0.0
    %1333 = vmatpush.msra.mxu0 %v1313
    %1334 = vmatmul.f32.gmra.mxu0 %v1316
    %v1335 = vpop.f32.mrf.mxu0
    %v1336 = vadd.f32 0.0, %v1335
    %1337 = vdwg.mxu0
    %v1339 = vsel %vm888, %v1310, 0
    %v1342 = vsel %vm888, %v1336, 0
    %1344 = vmatpush.msra.mxu0 0.0
    %1345 = vmatpush.msra.mxu0 0.0
    %1346 = vmatpush.msra.mxu0 0.0
    %1347 = vmatpush.msra.mxu0 0.0
    %1348 = vmatpush.msra.mxu0 0.0
    %1349 = vmatpush.msra.mxu0 0.0
    %1350 = vmatpush.msra.mxu0 0.0
    %1351 = vmatpush.msra.mxu0 0.0
    %1352 = vmatpush.msra.mxu0 0.0
    %1353 = vmatpush.msra.mxu0 0.0
    %1354 = vmatpush.msra.mxu0 0.0
    %1355 = vmatpush.msra.mxu0 0.0
    %1356 = vmatpush.msra.mxu0 0.0
    %1357 = vmatpush.msra.mxu0 0.0
    %1358 = vmatpush.msra.mxu0 0.0
    %1359 = vmatpush.msra.mxu0 %v882
    %1360 = vmatmul.f32.gmra.mxu0 %v1339
    %v1361 = vpop.f32.mrf.mxu0
    %v1362 = vadd.f32 0.0, %v1361
    %1363 = vmatmul.f32.gmra.mxu0 %v1342
    %v1364 = vpop.f32.mrf.mxu0
    %v1365 = vadd.f32 0.0, %v1364
    %1366 = vdwg.mxu0
    %v1367 = vadd.f32 %v1201, %v1362
    %v1368 = vadd.f32 %v1204, %v1365
    %1369 = vrot.lane.b32.xlu0 %v875, 104
    %v1370 = vpop.permute.xlu0 %1369
    %1371 = vrot.lane.b32.xlu0 %v875, 72
    %v1372 = vpop.permute.xlu0 %1371
    %v1373 = vsel %vm888, %v1370, 0
    %v1375 = vsel %vm888, %v1372, 0
    %1377 = vmatpush.xpose.msra.mxu0 0.0
    %1378 = vmatpush.xpose.msra.mxu0 0.0
    %1379 = vmatpush.xpose.msra.mxu0 0.0
    %1380 = vmatpush.xpose.msra.mxu0 0.0
    %1381 = vmatpush.xpose.msra.mxu0 0.0
    %1382 = vmatpush.xpose.msra.mxu0 0.0
    %1383 = vmatpush.xpose.msra.mxu0 0.0
    %1384 = vmatpush.xpose.msra.mxu0 0.0
    %1385 = vmatpush.xpose.msra.mxu0 0.0
    %1386 = vmatpush.xpose.msra.mxu0 0.0
    %1387 = vmatpush.xpose.msra.mxu0 0.0
    %1388 = vmatpush.xpose.msra.mxu0 0.0
    %1389 = vmatpush.xpose.msra.mxu0 0.0
    %1390 = vmatpush.xpose.msra.mxu0 0.0
    %1391 = vmatpush.xpose.msra.mxu0 0.0
    %1392 = vmatpush.xpose.msra.mxu0 %v1375
    %1393 = vmatmul.f32.gmra.mxu0 %v1373
    %v1394 = vpop.f32.mrf.mxu0
    %v1395 = vadd.f32 0.0, %v1394
    %1396 = vdwg.mxu0
    %1397 = vrot.lane.b32.xlu0 %v878, 104
    %v1398 = vpop.permute.xlu0 %1397
    %1399 = vrot.lane.b32.xlu0 %v878, 72
    %v1400 = vpop.permute.xlu0 %1399
    %v1401 = vsel %vm888, %v1398, 0
    %v1403 = vsel %vm888, %v1400, 0
    %1405 = vmatpush.xpose.msra.mxu0 0.0
    %1406 = vmatpush.xpose.msra.mxu0 0.0
    %1407 = vmatpush.xpose.msra.mxu0 0.0
    %1408 = vmatpush.xpose.msra.mxu0 0.0
    %1409 = vmatpush.xpose.msra.mxu0 0.0
    %1410 = vmatpush.xpose.msra.mxu0 0.0
    %1411 = vmatpush.xpose.msra.mxu0 0.0
    %1412 = vmatpush.xpose.msra.mxu0 0.0
    %1413 = vmatpush.xpose.msra.mxu0 0.0
    %1414 = vmatpush.xpose.msra.mxu0 0.0
    %1415 = vmatpush.xpose.msra.mxu0 0.0
    %1416 = vmatpush.xpose.msra.mxu0 0.0
    %1417 = vmatpush.xpose.msra.mxu0 0.0
    %1418 = vmatpush.xpose.msra.mxu0 0.0
    %1419 = vmatpush.xpose.msra.mxu0 0.0
    %1420 = vmatpush.xpose.msra.mxu0 %v1403
    %1421 = vmatmul.f32.gmra.mxu0 %v1401
    %v1422 = vpop.f32.mrf.mxu0
    %v1423 = vadd.f32 0.0, %v1422
    %1424 = vdwg.mxu0
    %v1425 = vmul.f32 %v1395, 0.35355338
    %v1426 = vmul.f32 %v1423, 0.35355338
    %v1427 = vsel %vm888, %v1425, -inf
    %1428 = vmax.xlane.f32.xlu0 %v1427
    %v1429 = vpop.xlane.xlu0 %1428
    %v1430 = vsel %vm888, %v1426, -inf
    %1431 = vmax.xlane.f32.xlu0 %v1430
    %v1432 = vpop.xlane.xlu0 %1431
    %v1433 = vsub.f32 %v1425, %v1429
    %v1434 = vsub.f32 %v1426, %v1432
    %v1435 = vmul.f32 %v1433, 1.442695
    %v1436 = vpow.pop %v1435
    %v1437 = vmul.f32 %v1434, 1.442695
    %v1438 = vpow.pop %v1437
    %v1439 = vsel %vm888, %v1436, 0.0
    %1440 = vadd.xlane.f32.xlu0 %v1439
    %v1441 = vpop.xlane.xlu0 %1440
    %v1442 = vsel %vm888, %v1438, 0.0
    %1443 = vadd.xlane.f32.xlu0 %v1442
    %v1444 = vpop.xlane.xlu0 %1443
    %v1445 = vrcp.pop %v1441
    %v1446 = vrcp.pop %v1444
    %v1447 = vmul.f32 %v1436, %v1445
    %v1448 = vmul.f32 %v1438, %v1446
    %1449 = vrot.lane.b32.xlu0 %v875, 40
    %v1450 = vpop.permute.xlu0 %1449
    %v1453 = vsel %vm888, %v1447, 0
    %1455 = vmatpush.msra.mxu0 0.0
    %1456 = vmatpush.msra.mxu0 0.0
    %1457 = vmatpush.msra.mxu0 0.0
    %1458 = vmatpush.msra.mxu0 0.0
    %1459 = vmatpush.msra.mxu0 0.0
    %1460 = vmatpush.msra.mxu0 0.0
    %1461 = vmatpush.msra.mxu0 0.0
    %1462 = vmatpush.msra.mxu0 0.0
    %1463 = vmatpush.msra.mxu0 0.0
    %1464 = vmatpush.msra.mxu0 0.0
    %1465 = vmatpush.msra.mxu0 0.0
    %1466 = vmatpush.msra.mxu0 0.0
    %1467 = vmatpush.msra.mxu0 0.0
    %1468 = vmatpush.msra.mxu0 0.0
    %1469 = vmatpush.msra.mxu0 0.0
    %1470 = vmatpush.msra.mxu0 %v1450
    %1471 = vmatmul.f32.gmra.mxu0 %v1453
    %v1472 = vpop.f32.mrf.mxu0
    %v1473 = vadd.f32 0.0, %v1472
    %1474 = vdwg.mxu0
    %1475 = vrot.lane.b32.xlu0 %v878, 40
    %v1476 = vpop.permute.xlu0 %1475
    %v1479 = vsel %vm888, %v1448, 0
    %1481 = vmatpush.msra.mxu0 0.0
    %1482 = vmatpush.msra.mxu0 0.0
    %1483 = vmatpush.msra.mxu0 0.0
    %1484 = vmatpush.msra.mxu0 0.0
    %1485 = vmatpush.msra.mxu0 0.0
    %1486 = vmatpush.msra.mxu0 0.0
    %1487 = vmatpush.msra.mxu0 0.0
    %1488 = vmatpush.msra.mxu0 0.0
    %1489 = vmatpush.msra.mxu0 0.0
    %1490 = vmatpush.msra.mxu0 0.0
    %1491 = vmatpush.msra.mxu0 0.0
    %1492 = vmatpush.msra.mxu0 0.0
    %1493 = vmatpush.msra.mxu0 0.0
    %1494 = vmatpush.msra.mxu0 0.0
    %1495 = vmatpush.msra.mxu0 0.0
    %1496 = vmatpush.msra.mxu0 %v1476
    %1497 = vmatmul.f32.gmra.mxu0 %v1479
    %v1498 = vpop.f32.mrf.mxu0
    %v1499 = vadd.f32 0.0, %v1498
    %1500 = vdwg.mxu0
    %v1502 = vsel %vm888, %v1473, 0
    %v1505 = vsel %vm888, %v1499, 0
    %1507 = vmatpush.msra.mxu0 0.0
    %1508 = vmatpush.msra.mxu0 0.0
    %1509 = vmatpush.msra.mxu0 0.0
    %1510 = vmatpush.msra.mxu0 0.0
    %1511 = vmatpush.msra.mxu0 0.0
    %1512 = vmatpush.msra.mxu0 0.0
    %1513 = vmatpush.msra.mxu0 0.0
    %1514 = vmatpush.msra.mxu0 0.0
    %1515 = vmatpush.msra.mxu0 0.0
    %1516 = vmatpush.msra.mxu0 0.0
    %1517 = vmatpush.msra.mxu0 0.0
    %1518 = vmatpush.msra.mxu0 0.0
    %1519 = vmatpush.msra.mxu0 0.0
    %1520 = vmatpush.msra.mxu0 0.0
    %1521 = vmatpush.msra.mxu0 0.0
    %1522 = vmatpush.msra.mxu0 %v883
    %1523 = vmatmul.f32.gmra.mxu0 %v1502
    %v1524 = vpop.f32.mrf.mxu0
    %v1525 = vadd.f32 0.0, %v1524
    %1526 = vmatmul.f32.gmra.mxu0 %v1505
    %v1527 = vpop.f32.mrf.mxu0
    %v1528 = vadd.f32 0.0, %v1527
    %1529 = vdwg.mxu0
    %v1530 = vadd.f32 %v1367, %v1525
    %v1531 = vadd.f32 %v1368, %v1528
    %v1533 = vperm.slane %v884, 0
    %v1535 = vadd.f32 %v1530, %v1533
    %v1536 = vadd.f32 %v1531, %v1533
    %v1537 = vadd.f32 %v840, %v1535
    %v1538 = vadd.f32 %v841, %v1536
    %v1539 = vld [vmem:[%s17] sm:$0x1]
    %v1540 = vld [vmem:[%s19] sm:$0x1]
    %v1541 = vsel %vm850, %v1537, 0.0
    %1542 = vadd.xlane.f32.xlu0 %v1541
    %v1543 = vpop.xlane.xlu0 %1542
    %v1544 = vsel %vm850, %v1538, 0.0
    %1545 = vadd.xlane.f32.xlu0 %v1544
    %v1546 = vpop.xlane.xlu0 %1545
    %v1547 = vrcp.pop 32.0
    %v1548 = vmul.f32 32.0, %v1547
    %v1549 = vsub.f32 1.0, %v1548
    %v1550 = vmul.f32 %v1547, %v1549
    %v1551 = vadd.f32 %v1547, %v1550
    %vm1552 = vweird.f32 %v1547
    %v1553 = vsel %vm1552, %v1547, %v1551
    %v1554 = vmul.f32 %v1543, %v1553
    %v1555 = vmul.f32 %v1546, %v1553
    %v1556 = vsub.f32 %v1537, %v1554
    %v1557 = vsub.f32 %v1538, %v1555
    %v1558 = vmul.f32 %v1556, %v1556
    %v1559 = vmul.f32 %v1557, %v1557
    %v1560 = vsel %vm850, %v1558, 0.0
    %1561 = vadd.xlane.f32.xlu0 %v1560
    %v1562 = vpop.xlane.xlu0 %1561
    %v1563 = vsel %vm850, %v1559, 0.0
    %1564 = vadd.xlane.f32.xlu0 %v1563
    %v1565 = vpop.xlane.xlu0 %1564
    %v1566 = vmul.f32 %v1562, %v1553
    %v1567 = vmul.f32 %v1565, %v1553
    %v1568 = vadd.f32 %v1566, 1e-05
    %v1569 = vadd.f32 %v1567, 1e-05
    %v1570 = vrsqrt.pop %v1568
    %v1571 = vmul.f32 %v1570, %v1568
    %v1572 = vmul.f32 %v1571, %v1570
    %v1573 = vmul.f32 0.5, %v1572
    %v1574 = vsub.f32 1.5, %v1573
    %v1575 = vmul.f32 %v1570, %v1574
    %vm1576 = vweird.f32 %v1568
    %vm1577 = vweird.f32 %v1570
    %vm1578 = vmor %vm1576, %vm1577
    %v1579 = vsel %vm1578, %v1570, %v1575
    %v1580 = vrsqrt.pop %v1569
    %v1581 = vmul.f32 %v1580, %v1569
    %v1582 = vmul.f32 %v1581, %v1580
    %v1583 = vmul.f32 0.5, %v1582
    %v1584 = vsub.f32 1.5, %v1583
    %v1585 = vmul.f32 %v1580, %v1584
    %vm1586 = vweird.f32 %v1569
    %vm1587 = vweird.f32 %v1580
    %vm1588 = vmor %vm1586, %vm1587
    %v1589 = vsel %vm1588, %v1580, %v1585
    %v1590 = vmul.f32 %v1556, %v1579
    %v1591 = vmul.f32 %v1557, %v1589
    %v1593 = vperm.slane %v1539, 0
    %v1595 = vmul.f32 %v1590, %v1593
    %v1596 = vmul.f32 %v1591, %v1593
    %v1598 = vperm.slane %v1540, 0
    %v1600 = vadd.f32 %v1595, %v1598
    %v1601 = vadd.f32 %v1596, %v1598
    %v1602 = vld [vmem:[%s21] sm:$0xff]
    %v1603 = vld [vmem:[%s21 + $0x8] sm:$0xff]
    %v1604 = vld [vmem:[%s21 + $0x10] sm:$0xff]
    %v1605 = vld [vmem:[%s21 + $0x18] sm:$0xff]
    %v1606 = vld [vmem:[%s23] sm:$0x1]
    %v1608 = vperm.slane %v1606, 0
    %v1611 = vsel %vm850, %v1600, 0
    %v1614 = vsel %vm850, %v1601, 0
    %1616 = vmatpush.msra.mxu0 0.0
    %1617 = vmatpush.msra.mxu0 0.0
    %1618 = vmatpush.msra.mxu0 0.0
    %1619 = vmatpush.msra.mxu0 0.0
    %1620 = vmatpush.msra.mxu0 0.0
    %1621 = vmatpush.msra.mxu0 0.0
    %1622 = vmatpush.msra.mxu0 0.0
    %1623 = vmatpush.msra.mxu0 0.0
    %1624 = vmatpush.msra.mxu0 0.0
    %1625 = vmatpush.msra.mxu0 0.0
    %1626 = vmatpush.msra.mxu0 0.0
    %1627 = vmatpush.msra.mxu0 0.0
    %1628 = vmatpush.msra.mxu0 %v1605
    %1629 = vmatpush.msra.mxu0 %v1604
    %1630 = vmatpush.msra.mxu0 %v1603
    %1631 = vmatpush.msra.mxu0 %v1602
    %1632 = vmatmul.f32.gmra.mxu0 %v1611
    %v1633 = vpop.f32.mrf.mxu0
    %v1634 = vadd.f32 %v1608, %v1633
    %1635 = vmatmul.f32.gmra.mxu0 %v1614
    %v1636 = vpop.f32.mrf.mxu0
    %v1637 = vadd.f32 %v1608, %v1636
    %1638 = vdwg.mxu0
    %v1639 = vmax.f32 %v1634, 0.0
    %v1640 = vmax.f32 %v1637, 0.0
    %v1641 = vld [vmem:[%s25] sm:$0xff]
    %v1642 = vld [vmem:[%s25 + $0x8] sm:$0xff]
    %v1643 = vld [vmem:[%s25 + $0x10] sm:$0xff]
    %v1644 = vld [vmem:[%s25 + $0x18] sm:$0xff]
    %v1645 = vld [vmem:[%s25 + $0x20] sm:$0xff]
    %v1646 = vld [vmem:[%s25 + $0x28] sm:$0xff]
    %v1647 = vld [vmem:[%s25 + $0x30] sm:$0xff]
    %v1648 = vld [vmem:[%s25 + $0x38] sm:$0xff]
    %v1649 = vld [vmem:[#allocation3] sm:$0x1]
    %v1651 = vperm.slane %v1649, 0
    %vm1653 = vcmask 523264
    %v1655 = vsel %vm1653, %v1639, 0
    %v1658 = vsel %vm1653, %v1640, 0
    %1660 = vmatpush.msra.mxu0 0.0
    %1661 = vmatpush.msra.mxu0 0.0
    %1662 = vmatpush.msra.mxu0 0.0
    %1663 = vmatpush.msra.mxu0 0.0
    %1664 = vmatpush.msra.mxu0 0.0
    %1665 = vmatpush.msra.mxu0 0.0
    %1666 = vmatpush.msra.mxu0 0.0
    %1667 = vmatpush.msra.mxu0 0.0
    %1668 = vmatpush.msra.mxu0 %v1648
    %1669 = vmatpush.msra.mxu0 %v1647
    %1670 = vmatpush.msra.mxu0 %v1646
    %1671 = vmatpush.msra.mxu0 %v1645
    %1672 = vmatpush.msra.mxu0 %v1644
    %1673 = vmatpush.msra.mxu0 %v1643
    %1674 = vmatpush.msra.mxu0 %v1642
    %1675 = vmatpush.msra.mxu0 %v1641
    %1676 = vmatmul.f32.gmra.mxu0 %v1655
    %v1677 = vpop.f32.mrf.mxu0
    %v1678 = vadd.f32 %v1651, %v1677
    %1679 = vmatmul.f32.gmra.mxu0 %v1658
    %v1680 = vpop.f32.mrf.mxu0
    %v1681 = vadd.f32 %v1651, %v1680
    %1682 = vdwg.mxu0
    %v1683 = vadd.f32 %v1600, %v1678
    %v1684 = vadd.f32 %v1601, %v1681
    %v1685 = vld [vmem:[#allocation5] sm:$0x1]
    %v1686 = vld [vmem:[#allocation7] sm:$0x1]
    %v1687 = vsel %vm850, %v1683, 0.0
    %1688 = vadd.xlane.f32.xlu0 %v1687
    %v1689 = vpop.xlane.xlu0 %1688
    %v1690 = vsel %vm850, %v1684, 0.0
    %1691 = vadd.xlane.f32.xlu0 %v1690
    %v1692 = vpop.xlane.xlu0 %1691
    %v1693 = vmul.f32 %v1689, %v1553
    %v1694 = vmul.f32 %v1692, %v1553
    %v1695 = vsub.f32 %v1683, %v1693
    %v1696 = vsub.f32 %v1684, %v1694
    %v1697 = vmul.f32 %v1695, %v1695
    %v1698 = vmul.f32 %v1696, %v1696
    %v1699 = vsel %vm850, %v1697, 0.0
    %1700 = vadd.xlane.f32.xlu0 %v1699
    %v1701 = vpop.xlane.xlu0 %1700
    %v1702 = vsel %vm850, %v1698, 0.0
    %1703 = vadd.xlane.f32.xlu0 %v1702
    %v1704 = vpop.xlane.xlu0 %1703
    %v1705 = vmul.f32 %v1701, %v1553
    %v1706 = vmul.f32 %v1704, %v1553
    %v1707 = vadd.f32 %v1705, 1e-05
    %v1708 = vadd.f32 %v1706, 1e-05
    %v1709 = vrsqrt.pop %v1707
    %v1710 = vmul.f32 %v1709, %v1707
    %v1711 = vmul.f32 %v1710, %v1709
    %v1712 = vmul.f32 0.5, %v1711
    %v1713 = vsub.f32 1.5, %v1712
    %v1714 = vmul.f32 %v1709, %v1713
    %vm1715 = vweird.f32 %v1707
    %vm1716 = vweird.f32 %v1709
    %vm1717 = vmor %vm1715, %vm1716
    %v1718 = vsel %vm1717, %v1709, %v1714
    %v1719 = vrsqrt.pop %v1708
    %v1720 = vmul.f32 %v1719, %v1708
    %v1721 = vmul.f32 %v1720, %v1719
    %v1722 = vmul.f32 0.5, %v1721
    %v1723 = vsub.f32 1.5, %v1722
    %v1724 = vmul.f32 %v1719, %v1723
    %vm1725 = vweird.f32 %v1708
    %vm1726 = vweird.f32 %v1719
    %vm1727 = vmor %vm1725, %vm1726
    %v1728 = vsel %vm1727, %v1719, %v1724
    %v1729 = vmul.f32 %v1695, %v1718
    %v1730 = vmul.f32 %v1696, %v1728
    %v1732 = vperm.slane %v1685, 0
    %v1734 = vmul.f32 %v1729, %v1732
    %v1735 = vmul.f32 %v1730, %v1732
    %v1737 = vperm.slane %v1686, 0
    %v1739 = vadd.f32 %v1734, %v1737
    %v1740 = vadd.f32 %v1735, %v1737
    %v1741 = vld [vmem:[%s33] sm:$0xff]
    %v1742 = vld [vmem:[%s33 + $0x8] sm:$0xff]
    %v1743 = vld [vmem:[%s33 + $0x10] sm:$0xff]
    %v1744 = vld [vmem:[%s33 + $0x18] sm:$0xff]
    %v1745 = vld [vmem:[%s35] sm:$0x1]
    %v1747 = vperm.slane %v1745, 0
    %v1750 = vsel %vm850, %v1739, 0
    %v1753 = vsel %vm850, %v1740, 0
    %1755 = vmatpush.msra.mxu0 0.0
    %1756 = vmatpush.msra.mxu0 0.0
    %1757 = vmatpush.msra.mxu0 0.0
    %1758 = vmatpush.msra.mxu0 0.0
    %1759 = vmatpush.msra.mxu0 0.0
    %1760 = vmatpush.msra.mxu0 0.0
    %1761 = vmatpush.msra.mxu0 0.0
    %1762 = vmatpush.msra.mxu0 0.0
    %1763 = vmatpush.msra.mxu0 0.0
    %1764 = vmatpush.msra.mxu0 0.0
    %1765 = vmatpush.msra.mxu0 0.0
    %1766 = vmatpush.msra.mxu0 0.0
    %1767 = vmatpush.msra.mxu0 %v1744
    %1768 = vmatpush.msra.mxu0 %v1743
    %1769 = vmatpush.msra.mxu0 %v1742
    %1770 = vmatpush.msra.mxu0 %v1741
    %1771 = vmatmul.f32.gmra.mxu0 %v1750
    %v1772 = vpop.f32.mrf.mxu0
    %v1773 = vadd.f32 %v1747, %v1772
    %1774 = vmatmul.f32.gmra.mxu0 %v1753
    %v1775 = vpop.f32.mrf.mxu0
    %v1776 = vadd.f32 %v1747, %v1775
    %1777 = vdwg.mxu0
    %v1778 = vld [vmem:[%s37] sm:$0xff]
    %v1779 = vld [vmem:[%s37 + $0x8] sm:$0xff]
    %v1780 = vld [vmem:[%s37 + $0x10] sm:$0xff]
    %v1781 = vld [vmem:[%s37 + $0x18] sm:$0xff]
    %v1782 = vld [vmem:[%s39] sm:$0x1]
    %1784 = vrot.lane.b32.xlu0 %v1773, 96
    %v1785 = vpop.permute.xlu0 %1784
    %v1786 = vsel %vm888, %v1773, 0
    %v1788 = vsel %vm888, %v1785, 0
    %1790 = vmatpush.xpose.msra.mxu0 0.0
    %1791 = vmatpush.xpose.msra.mxu0 0.0
    %1792 = vmatpush.xpose.msra.mxu0 0.0
    %1793 = vmatpush.xpose.msra.mxu0 0.0
    %1794 = vmatpush.xpose.msra.mxu0 0.0
    %1795 = vmatpush.xpose.msra.mxu0 0.0
    %1796 = vmatpush.xpose.msra.mxu0 0.0
    %1797 = vmatpush.xpose.msra.mxu0 0.0
    %1798 = vmatpush.xpose.msra.mxu0 0.0
    %1799 = vmatpush.xpose.msra.mxu0 0.0
    %1800 = vmatpush.xpose.msra.mxu0 0.0
    %1801 = vmatpush.xpose.msra.mxu0 0.0
    %1802 = vmatpush.xpose.msra.mxu0 0.0
    %1803 = vmatpush.xpose.msra.mxu0 0.0
    %1804 = vmatpush.xpose.msra.mxu0 0.0
    %1805 = vmatpush.xpose.msra.mxu0 %v1788
    %1806 = vmatmul.f32.gmra.mxu0 %v1786
    %v1807 = vpop.f32.mrf.mxu0
    %v1808 = vadd.f32 0.0, %v1807
    %1809 = vdwg.mxu0
    %1811 = vrot.lane.b32.xlu0 %v1776, 96
    %v1812 = vpop.permute.xlu0 %1811
    %v1813 = vsel %vm888, %v1776, 0
    %v1815 = vsel %vm888, %v1812, 0
    %1817 = vmatpush.xpose.msra.mxu0 0.0
    %1818 = vmatpush.xpose.msra.mxu0 0.0
    %1819 = vmatpush.xpose.msra.mxu0 0.0
    %1820 = vmatpush.xpose.msra.mxu0 0.0
    %1821 = vmatpush.xpose.msra.mxu0 0.0
    %1822 = vmatpush.xpose.msra.mxu0 0.0
    %1823 = vmatpush.xpose.msra.mxu0 0.0
    %1824 = vmatpush.xpose.msra.mxu0 0.0
    %1825 = vmatpush.xpose.msra.mxu0 0.0
    %1826 = vmatpush.xpose.msra.mxu0 0.0
    %1827 = vmatpush.xpose.msra.mxu0 0.0
    %1828 = vmatpush.xpose.msra.mxu0 0.0
    %1829 = vmatpush.xpose.msra.mxu0 0.0
    %1830 = vmatpush.xpose.msra.mxu0 0.0
    %1831 = vmatpush.xpose.msra.mxu0 0.0
    %1832 = vmatpush.xpose.msra.mxu0 %v1815
    %1833 = vmatmul.f32.gmra.mxu0 %v1813
    %v1834 = vpop.f32.mrf.mxu0
    %v1835 = vadd.f32 0.0, %v1834
    %1836 = vdwg.mxu0
    %v1837 = vmul.f32 %v1808, 0.35355338
    %v1838 = vmul.f32 %v1835, 0.35355338
    %v1839 = vsel %vm888, %v1837, -inf
    %1840 = vmax.xlane.f32.xlu0 %v1839
    %v1841 = vpop.xlane.xlu0 %1840
    %v1842 = vsel %vm888, %v1838, -inf
    %1843 = vmax.xlane.f32.xlu0 %v1842
    %v1844 = vpop.xlane.xlu0 %1843
    %v1845 = vsub.f32 %v1837, %v1841
    %v1846 = vsub.f32 %v1838, %v1844
    %v1847 = vmul.f32 %v1845, 1.442695
    %v1848 = vpow.pop %v1847
    %v1849 = vmul.f32 %v1846, 1.442695
    %v1850 = vpow.pop %v1849
    %v1851 = vsel %vm888, %v1848, 0.0
    %1852 = vadd.xlane.f32.xlu0 %v1851
    %v1853 = vpop.xlane.xlu0 %1852
    %v1854 = vsel %vm888, %v1850, 0.0
    %1855 = vadd.xlane.f32.xlu0 %v1854
    %v1856 = vpop.xlane.xlu0 %1855
    %v1857 = vrcp.pop %v1853
    %v1858 = vrcp.pop %v1856
    %v1859 = vmul.f32 %v1848, %v1857
    %v1860 = vmul.f32 %v1850, %v1858
    %1861 = vrot.lane.b32.xlu0 %v1773, 64
    %v1862 = vpop.permute.xlu0 %1861
    %v1865 = vsel %vm888, %v1859, 0
    %1867 = vmatpush.msra.mxu0 0.0
    %1868 = vmatpush.msra.mxu0 0.0
    %1869 = vmatpush.msra.mxu0 0.0
    %1870 = vmatpush.msra.mxu0 0.0
    %1871 = vmatpush.msra.mxu0 0.0
    %1872 = vmatpush.msra.mxu0 0.0
    %1873 = vmatpush.msra.mxu0 0.0
    %1874 = vmatpush.msra.mxu0 0.0
    %1875 = vmatpush.msra.mxu0 0.0
    %1876 = vmatpush.msra.mxu0 0.0
    %1877 = vmatpush.msra.mxu0 0.0
    %1878 = vmatpush.msra.mxu0 0.0
    %1879 = vmatpush.msra.mxu0 0.0
    %1880 = vmatpush.msra.mxu0 0.0
    %1881 = vmatpush.msra.mxu0 0.0
    %1882 = vmatpush.msra.mxu0 %v1862
    %1883 = vmatmul.f32.gmra.mxu0 %v1865
    %v1884 = vpop.f32.mrf.mxu0
    %v1885 = vadd.f32 0.0, %v1884
    %1886 = vdwg.mxu0
    %1887 = vrot.lane.b32.xlu0 %v1776, 64
    %v1888 = vpop.permute.xlu0 %1887
    %v1891 = vsel %vm888, %v1860, 0
    %1893 = vmatpush.msra.mxu0 0.0
    %1894 = vmatpush.msra.mxu0 0.0
    %1895 = vmatpush.msra.mxu0 0.0
    %1896 = vmatpush.msra.mxu0 0.0
    %1897 = vmatpush.msra.mxu0 0.0
    %1898 = vmatpush.msra.mxu0 0.0
    %1899 = vmatpush.msra.mxu0 0.0
    %1900 = vmatpush.msra.mxu0 0.0
    %1901 = vmatpush.msra.mxu0 0.0
    %1902 = vmatpush.msra.mxu0 0.0
    %1903 = vmatpush.msra.mxu0 0.0
    %1904 = vmatpush.msra.mxu0 0.0
    %1905 = vmatpush.msra.mxu0 0.0
    %1906 = vmatpush.msra.mxu0 0.0
    %1907 = vmatpush.msra.mxu0 0.0
    %1908 = vmatpush.msra.mxu0 %v1888
    %1909 = vmatmul.f32.gmra.mxu0 %v1891
    %v1910 = vpop.f32.mrf.mxu0
    %v1911 = vadd.f32 0.0, %v1910
    %1912 = vdwg.mxu0
    %1913 = vrot.lane.b32.xlu0 %v1773, 120
    %v1914 = vpop.permute.xlu0 %1913
    %1915 = vrot.lane.b32.xlu0 %v1773, 88
    %v1916 = vpop.permute.xlu0 %1915
    %v1917 = vsel %vm888, %v1914, 0
    %v1919 = vsel %vm888, %v1916, 0
    %1921 = vmatpush.xpose.msra.mxu0 0.0
    %1922 = vmatpush.xpose.msra.mxu0 0.0
    %1923 = vmatpush.xpose.msra.mxu0 0.0
    %1924 = vmatpush.xpose.msra.mxu0 0.0
    %1925 = vmatpush.xpose.msra.mxu0 0.0
    %1926 = vmatpush.xpose.msra.mxu0 0.0
    %1927 = vmatpush.xpose.msra.mxu0 0.0
    %1928 = vmatpush.xpose.msra.mxu0 0.0
    %1929 = vmatpush.xpose.msra.mxu0 0.0
    %1930 = vmatpush.xpose.msra.mxu0 0.0
    %1931 = vmatpush.xpose.msra.mxu0 0.0
    %1932 = vmatpush.xpose.msra.mxu0 0.0
    %1933 = vmatpush.xpose.msra.mxu0 0.0
    %1934 = vmatpush.xpose.msra.mxu0 0.0
    %1935 = vmatpush.xpose.msra.mxu0 0.0
    %1936 = vmatpush.xpose.msra.mxu0 %v1919
    %1937 = vmatmul.f32.gmra.mxu0 %v1917
    %v1938 = vpop.f32.mrf.mxu0
    %v1939 = vadd.f32 0.0, %v1938
    %1940 = vdwg.mxu0
    %1941 = vrot.lane.b32.xlu0 %v1776, 120
    %v1942 = vpop.permute.xlu0 %1941
    %1943 = vrot.lane.b32.xlu0 %v1776, 88
    %v1944 = vpop.permute.xlu0 %1943
    %v1945 = vsel %vm888, %v1942, 0
    %v1947 = vsel %vm888, %v1944, 0
    %1949 = vmatpush.xpose.msra.mxu0 0.0
    %1950 = vmatpush.xpose.msra.mxu0 0.0
    %1951 = vmatpush.xpose.msra.mxu0 0.0
    %1952 = vmatpush.xpose.msra.mxu0 0.0
    %1953 = vmatpush.xpose.msra.mxu0 0.0
    %1954 = vmatpush.xpose.msra.mxu0 0.0
    %1955 = vmatpush.xpose.msra.mxu0 0.0
    %1956 = vmatpush.xpose.msra.mxu0 0.0
    %1957 = vmatpush.xpose.msra.mxu0 0.0
    %1958 = vmatpush.xpose.msra.mxu0 0.0
    %1959 = vmatpush.xpose.msra.mxu0 0.0
    %1960 = vmatpush.xpose.msra.mxu0 0.0
    %1961 = vmatpush.xpose.msra.mxu0 0.0
    %1962 = vmatpush.xpose.msra.mxu0 0.0
    %1963 = vmatpush.xpose.msra.mxu0 0.0
    %1964 = vmatpush.xpose.msra.mxu0 %v1947
    %1965 = vmatmul.f32.gmra.mxu0 %v1945
    %v1966 = vpop.f32.mrf.mxu0
    %v1967 = vadd.f32 0.0, %v1966
    %1968 = vdwg.mxu0
    %v1969 = vmul.f32 %v1939, 0.35355338
    %v1970 = vmul.f32 %v1967, 0.35355338
    %v1971 = vsel %vm888, %v1969, -inf
    %1972 = vmax.xlane.f32.xlu0 %v1971
    %v1973 = vpop.xlane.xlu0 %1972
    %v1974 = vsel %vm888, %v1970, -inf
    %1975 = vmax.xlane.f32.xlu0 %v1974
    %v1976 = vpop.xlane.xlu0 %1975
    %v1977 = vsub.f32 %v1969, %v1973
    %v1978 = vsub.f32 %v1970, %v1976
    %v1979 = vmul.f32 %v1977, 1.442695
    %v1980 = vpow.pop %v1979
    %v1981 = vmul.f32 %v1978, 1.442695
    %v1982 = vpow.pop %v1981
    %v1983 = vsel %vm888, %v1980, 0.0
    %1984 = vadd.xlane.f32.xlu0 %v1983
    %v1985 = vpop.xlane.xlu0 %1984
    %v1986 = vsel %vm888, %v1982, 0.0
    %1987 = vadd.xlane.f32.xlu0 %v1986
    %v1988 = vpop.xlane.xlu0 %1987
    %v1989 = vrcp.pop %v1985
    %v1990 = vrcp.pop %v1988
    %v1991 = vmul.f32 %v1980, %v1989
    %v1992 = vmul.f32 %v1982, %v1990
    %1993 = vrot.lane.b32.xlu0 %v1773, 56
    %v1994 = vpop.permute.xlu0 %1993
    %v1997 = vsel %vm888, %v1991, 0
    %1999 = vmatpush.msra.mxu0 0.0
    %2000 = vmatpush.msra.mxu0 0.0
    %2001 = vmatpush.msra.mxu0 0.0
    %2002 = vmatpush.msra.mxu0 0.0
    %2003 = vmatpush.msra.mxu0 0.0
    %2004 = vmatpush.msra.mxu0 0.0
    %2005 = vmatpush.msra.mxu0 0.0
    %2006 = vmatpush.msra.mxu0 0.0
    %2007 = vmatpush.msra.mxu0 0.0
    %2008 = vmatpush.msra.mxu0 0.0
    %2009 = vmatpush.msra.mxu0 0.0
    %2010 = vmatpush.msra.mxu0 0.0
    %2011 = vmatpush.msra.mxu0 0.0
    %2012 = vmatpush.msra.mxu0 0.0
    %2013 = vmatpush.msra.mxu0 0.0
    %2014 = vmatpush.msra.mxu0 %v1994
    %2015 = vmatmul.f32.gmra.mxu0 %v1997
    %v2016 = vpop.f32.mrf.mxu0
    %v2017 = vadd.f32 0.0, %v2016
    %2018 = vdwg.mxu0
    %2019 = vrot.lane.b32.xlu0 %v1776, 56
    %v2020 = vpop.permute.xlu0 %2019
    %v2023 = vsel %vm888, %v1992, 0
    %2025 = vmatpush.msra.mxu0 0.0
    %2026 = vmatpush.msra.mxu0 0.0
    %2027 = vmatpush.msra.mxu0 0.0
    %2028 = vmatpush.msra.mxu0 0.0
    %2029 = vmatpush.msra.mxu0 0.0
    %2030 = vmatpush.msra.mxu0 0.0
    %2031 = vmatpush.msra.mxu0 0.0
    %2032 = vmatpush.msra.mxu0 0.0
    %2033 = vmatpush.msra.mxu0 0.0
    %2034 = vmatpush.msra.mxu0 0.0
    %2035 = vmatpush.msra.mxu0 0.0
    %2036 = vmatpush.msra.mxu0 0.0
    %2037 = vmatpush.msra.mxu0 0.0
    %2038 = vmatpush.msra.mxu0 0.0
    %2039 = vmatpush.msra.mxu0 0.0
    %2040 = vmatpush.msra.mxu0 %v2020
    %2041 = vmatmul.f32.gmra.mxu0 %v2023
    %v2042 = vpop.f32.mrf.mxu0
    %v2043 = vadd.f32 0.0, %v2042
    %2044 = vdwg.mxu0
    %v2046 = vsel %vm888, %v2017, 0
    %v2049 = vsel %vm888, %v2043, 0
    %2051 = vmatpush.msra.mxu0 0.0
    %2052 = vmatpush.msra.mxu0 0.0
    %2053 = vmatpush.msra.mxu0 0.0
    %2054 = vmatpush.msra.mxu0 0.0
    %2055 = vmatpush.msra.mxu0 0.0
    %2056 = vmatpush.msra.mxu0 0.0
    %2057 = vmatpush.msra.mxu0 0.0
    %2058 = vmatpush.msra.mxu0 0.0
    %2059 = vmatpush.msra.mxu0 0.0
    %2060 = vmatpush.msra.mxu0 0.0
    %2061 = vmatpush.msra.mxu0 0.0
    %2062 = vmatpush.msra.mxu0 0.0
    %2063 = vmatpush.msra.mxu0 0.0
    %2064 = vmatpush.msra.mxu0 0.0
    %2065 = vmatpush.msra.mxu0 0.0
    %2066 = vmatpush.msra.mxu0 %v1779
    %2067 = vmatmul.f32.gmra.mxu0 %v2046
    %v2068 = vpop.f32.mrf.mxu0
    %v2069 = vadd.f32 0.0, %v2068
    %2070 = vmatmul.f32.gmra.mxu0 %v2049
    %v2071 = vpop.f32.mrf.mxu0
    %v2072 = vadd.f32 0.0, %v2071
    %2073 = vdwg.mxu0
    %v2075 = vsel %vm888, %v1885, 0
    %v2078 = vsel %vm888, %v1911, 0
    %2080 = vmatpush.msra.mxu0 0.0
    %2081 = vmatpush.msra.mxu0 0.0
    %2082 = vmatpush.msra.mxu0 0.0
    %2083 = vmatpush.msra.mxu0 0.0
    %2084 = vmatpush.msra.mxu0 0.0
    %2085 = vmatpush.msra.mxu0 0.0
    %2086 = vmatpush.msra.mxu0 0.0
    %2087 = vmatpush.msra.mxu0 0.0
    %2088 = vmatpush.msra.mxu0 0.0
    %2089 = vmatpush.msra.mxu0 0.0
    %2090 = vmatpush.msra.mxu0 0.0
    %2091 = vmatpush.msra.mxu0 0.0
    %2092 = vmatpush.msra.mxu0 0.0
    %2093 = vmatpush.msra.mxu0 0.0
    %2094 = vmatpush.msra.mxu0 0.0
    %2095 = vmatpush.msra.mxu0 %v1778
    %2096 = vmatmul.f32.gmra.mxu0 %v2075
    %v2097 = vpop.f32.mrf.mxu0
    %v2098 = vadd.f32 %v2069, %v2097
    %2099 = vmatmul.f32.gmra.mxu0 %v2078
    %v2100 = vpop.f32.mrf.mxu0
    %v2101 = vadd.f32 %v2072, %v2100
    %2102 = vdwg.mxu0
    %2103 = vrot.lane.b32.xlu0 %v1773, 112
    %v2104 = vpop.permute.xlu0 %2103
    %2105 = vrot.lane.b32.xlu0 %v1773, 80
    %v2106 = vpop.permute.xlu0 %2105
    %v2107 = vsel %vm888, %v2104, 0
    %v2109 = vsel %vm888, %v2106, 0
    %2111 = vmatpush.xpose.msra.mxu0 0.0
    %2112 = vmatpush.xpose.msra.mxu0 0.0
    %2113 = vmatpush.xpose.msra.mxu0 0.0
    %2114 = vmatpush.xpose.msra.mxu0 0.0
    %2115 = vmatpush.xpose.msra.mxu0 0.0
    %2116 = vmatpush.xpose.msra.mxu0 0.0
    %2117 = vmatpush.xpose.msra.mxu0 0.0
    %2118 = vmatpush.xpose.msra.mxu0 0.0
    %2119 = vmatpush.xpose.msra.mxu0 0.0
    %2120 = vmatpush.xpose.msra.mxu0 0.0
    %2121 = vmatpush.xpose.msra.mxu0 0.0
    %2122 = vmatpush.xpose.msra.mxu0 0.0
    %2123 = vmatpush.xpose.msra.mxu0 0.0
    %2124 = vmatpush.xpose.msra.mxu0 0.0
    %2125 = vmatpush.xpose.msra.mxu0 0.0
    %2126 = vmatpush.xpose.msra.mxu0 %v2109
    %2127 = vmatmul.f32.gmra.mxu0 %v2107
    %v2128 = vpop.f32.mrf.mxu0
    %v2129 = vadd.f32 0.0, %v2128
    %2130 = vdwg.mxu0
    %2131 = vrot.lane.b32.xlu0 %v1776, 112
    %v2132 = vpop.permute.xlu0 %2131
    %2133 = vrot.lane.b32.xlu0 %v1776, 80
    %v2134 = vpop.permute.xlu0 %2133
    %v2135 = vsel %vm888, %v2132, 0
    %v2137 = vsel %vm888, %v2134, 0
    %2139 = vmatpush.xpose.msra.mxu0 0.0
    %2140 = vmatpush.xpose.msra.mxu0 0.0
    %2141 = vmatpush.xpose.msra.mxu0 0.0
    %2142 = vmatpush.xpose.msra.mxu0 0.0
    %2143 = vmatpush.xpose.msra.mxu0 0.0
    %2144 = vmatpush.xpose.msra.mxu0 0.0
    %2145 = vmatpush.xpose.msra.mxu0 0.0
    %2146 = vmatpush.xpose.msra.mxu0 0.0
    %2147 = vmatpush.xpose.msra.mxu0 0.0
    %2148 = vmatpush.xpose.msra.mxu0 0.0
    %2149 = vmatpush.xpose.msra.mxu0 0.0
    %2150 = vmatpush.xpose.msra.mxu0 0.0
    %2151 = vmatpush.xpose.msra.mxu0 0.0
    %2152 = vmatpush.xpose.msra.mxu0 0.0
    %2153 = vmatpush.xpose.msra.mxu0 0.0
    %2154 = vmatpush.xpose.msra.mxu0 %v2137
    %2155 = vmatmul.f32.gmra.mxu0 %v2135
    %v2156 = vpop.f32.mrf.mxu0
    %v2157 = vadd.f32 0.0, %v2156
    %2158 = vdwg.mxu0
    %v2159 = vmul.f32 %v2129, 0.35355338
    %v2160 = vmul.f32 %v2157, 0.35355338
    %v2161 = vsel %vm888, %v2159, -inf
    %2162 = vmax.xlane.f32.xlu0 %v2161
    %v2163 = vpop.xlane.xlu0 %2162
    %v2164 = vsel %vm888, %v2160, -inf
    %2165 = vmax.xlane.f32.xlu0 %v2164
    %v2166 = vpop.xlane.xlu0 %2165
    %v2167 = vsub.f32 %v2159, %v2163
    %v2168 = vsub.f32 %v2160, %v2166
    %v2169 = vmul.f32 %v2167, 1.442695
    %v2170 = vpow.pop %v2169
    %v2171 = vmul.f32 %v2168, 1.442695
    %v2172 = vpow.pop %v2171
    %v2173 = vsel %vm888, %v2170, 0.0
    %2174 = vadd.xlane.f32.xlu0 %v2173
    %v2175 = vpop.xlane.xlu0 %2174
    %v2176 = vsel %vm888, %v2172, 0.0
    %2177 = vadd.xlane.f32.xlu0 %v2176
    %v2178 = vpop.xlane.xlu0 %2177
    %v2179 = vrcp.pop %v2175
    %v2180 = vrcp.pop %v2178
    %v2181 = vmul.f32 %v2170, %v2179
    %v2182 = vmul.f32 %v2172, %v2180
    %2183 = vrot.lane.b32.xlu0 %v1773, 48
    %v2184 = vpop.permute.xlu0 %2183
    %v2187 = vsel %vm888, %v2181, 0
    %2189 = vmatpush.msra.mxu0 0.0
    %2190 = vmatpush.msra.mxu0 0.0
    %2191 = vmatpush.msra.mxu0 0.0
    %2192 = vmatpush.msra.mxu0 0.0
    %2193 = vmatpush.msra.mxu0 0.0
    %2194 = vmatpush.msra.mxu0 0.0
    %2195 = vmatpush.msra.mxu0 0.0
    %2196 = vmatpush.msra.mxu0 0.0
    %2197 = vmatpush.msra.mxu0 0.0
    %2198 = vmatpush.msra.mxu0 0.0
    %2199 = vmatpush.msra.mxu0 0.0
    %2200 = vmatpush.msra.mxu0 0.0
    %2201 = vmatpush.msra.mxu0 0.0
    %2202 = vmatpush.msra.mxu0 0.0
    %2203 = vmatpush.msra.mxu0 0.0
    %2204 = vmatpush.msra.mxu0 %v2184
    %2205 = vmatmul.f32.gmra.mxu0 %v2187
    %v2206 = vpop.f32.mrf.mxu0
    %v2207 = vadd.f32 0.0, %v2206
    %2208 = vdwg.mxu0
    %2209 = vrot.lane.b32.xlu0 %v1776, 48
    %v2210 = vpop.permute.xlu0 %2209
    %v2213 = vsel %vm888, %v2182, 0
    %2215 = vmatpush.msra.mxu0 0.0
    %2216 = vmatpush.msra.mxu0 0.0
    %2217 = vmatpush.msra.mxu0 0.0
    %2218 = vmatpush.msra.mxu0 0.0
    %2219 = vmatpush.msra.mxu0 0.0
    %2220 = vmatpush.msra.mxu0 0.0
    %2221 = vmatpush.msra.mxu0 0.0
    %2222 = vmatpush.msra.mxu0 0.0
    %2223 = vmatpush.msra.mxu0 0.0
    %2224 = vmatpush.msra.mxu0 0.0
    %2225 = vmatpush.msra.mxu0 0.0
    %2226 = vmatpush.msra.mxu0 0.0
    %2227 = vmatpush.msra.mxu0 0.0
    %2228 = vmatpush.msra.mxu0 0.0
    %2229 = vmatpush.msra.mxu0 0.0
    %2230 = vmatpush.msra.mxu0 %v2210
    %2231 = vmatmul.f32.gmra.mxu0 %v2213
    %v2232 = vpop.f32.mrf.mxu0
    %v2233 = vadd.f32 0.0, %v2232
    %2234 = vdwg.mxu0
    %v2236 = vsel %vm888, %v2207, 0
    %v2239 = vsel %vm888, %v2233, 0
    %2241 = vmatpush.msra.mxu0 0.0
    %2242 = vmatpush.msra.mxu0 0.0
    %2243 = vmatpush.msra.mxu0 0.0
    %2244 = vmatpush.msra.mxu0 0.0
    %2245 = vmatpush.msra.mxu0 0.0
    %2246 = vmatpush.msra.mxu0 0.0
    %2247 = vmatpush.msra.mxu0 0.0
    %2248 = vmatpush.msra.mxu0 0.0
    %2249 = vmatpush.msra.mxu0 0.0
    %2250 = vmatpush.msra.mxu0 0.0
    %2251 = vmatpush.msra.mxu0 0.0
    %2252 = vmatpush.msra.mxu0 0.0
    %2253 = vmatpush.msra.mxu0 0.0
    %2254 = vmatpush.msra.mxu0 0.0
    %2255 = vmatpush.msra.mxu0 0.0
    %2256 = vmatpush.msra.mxu0 %v1780
    %2257 = vmatmul.f32.gmra.mxu0 %v2236
    %v2258 = vpop.f32.mrf.mxu0
    %v2259 = vadd.f32 0.0, %v2258
    %2260 = vmatmul.f32.gmra.mxu0 %v2239
    %v2261 = vpop.f32.mrf.mxu0
    %v2262 = vadd.f32 0.0, %v2261
    %2263 = vdwg.mxu0
    %v2264 = vadd.f32 %v2098, %v2259
    %v2265 = vadd.f32 %v2101, %v2262
    %2266 = vrot.lane.b32.xlu0 %v1773, 104
    %v2267 = vpop.permute.xlu0 %2266
    %2268 = vrot.lane.b32.xlu0 %v1773, 72
    %v2269 = vpop.permute.xlu0 %2268
    %v2270 = vsel %vm888, %v2267, 0
    %v2272 = vsel %vm888, %v2269, 0
    %2274 = vmatpush.xpose.msra.mxu0 0.0
    %2275 = vmatpush.xpose.msra.mxu0 0.0
    %2276 = vmatpush.xpose.msra.mxu0 0.0
    %2277 = vmatpush.xpose.msra.mxu0 0.0
    %2278 = vmatpush.xpose.msra.mxu0 0.0
    %2279 = vmatpush.xpose.msra.mxu0 0.0
    %2280 = vmatpush.xpose.msra.mxu0 0.0
    %2281 = vmatpush.xpose.msra.mxu0 0.0
    %2282 = vmatpush.xpose.msra.mxu0 0.0
    %2283 = vmatpush.xpose.msra.mxu0 0.0
    %2284 = vmatpush.xpose.msra.mxu0 0.0
    %2285 = vmatpush.xpose.msra.mxu0 0.0
    %2286 = vmatpush.xpose.msra.mxu0 0.0
    %2287 = vmatpush.xpose.msra.mxu0 0.0
    %2288 = vmatpush.xpose.msra.mxu0 0.0
    %2289 = vmatpush.xpose.msra.mxu0 %v2272
    %2290 = vmatmul.f32.gmra.mxu0 %v2270
    %v2291 = vpop.f32.mrf.mxu0
    %v2292 = vadd.f32 0.0, %v2291
    %2293 = vdwg.mxu0
    %2294 = vrot.lane.b32.xlu0 %v1776, 104
    %v2295 = vpop.permute.xlu0 %2294
    %2296 = vrot.lane.b32.xlu0 %v1776, 72
    %v2297 = vpop.permute.xlu0 %2296
    %v2298 = vsel %vm888, %v2295, 0
    %v2300 = vsel %vm888, %v2297, 0
    %2302 = vmatpush.xpose.msra.mxu0 0.0
    %2303 = vmatpush.xpose.msra.mxu0 0.0
    %2304 = vmatpush.xpose.msra.mxu0 0.0
    %2305 = vmatpush.xpose.msra.mxu0 0.0
    %2306 = vmatpush.xpose.msra.mxu0 0.0
    %2307 = vmatpush.xpose.msra.mxu0 0.0
    %2308 = vmatpush.xpose.msra.mxu0 0.0
    %2309 = vmatpush.xpose.msra.mxu0 0.0
    %2310 = vmatpush.xpose.msra.mxu0 0.0
    %2311 = vmatpush.xpose.msra.mxu0 0.0
    %2312 = vmatpush.xpose.msra.mxu0 0.0
    %2313 = vmatpush.xpose.msra.mxu0 0.0
    %2314 = vmatpush.xpose.msra.mxu0 0.0
    %2315 = vmatpush.xpose.msra.mxu0 0.0
    %2316 = vmatpush.xpose.msra.mxu0 0.0
    %2317 = vmatpush.xpose.msra.mxu0 %v2300
    %2318 = vmatmul.f32.gmra.mxu0 %v2298
    %v2319 = vpop.f32.mrf.mxu0
    %v2320 = vadd.f32 0.0, %v2319
    %2321 = vdwg.mxu0
    %v2322 = vmul.f32 %v2292, 0.35355338
    %v2323 = vmul.f32 %v2320, 0.35355338
    %v2324 = vsel %vm888, %v2322, -inf
    %2325 = vmax.xlane.f32.xlu0 %v2324
    %v2326 = vpop.xlane.xlu0 %2325
    %v2327 = vsel %vm888, %v2323, -inf
    %2328 = vmax.xlane.f32.xlu0 %v2327
    %v2329 = vpop.xlane.xlu0 %2328
    %v2330 = vsub.f32 %v2322, %v2326
    %v2331 = vsub.f32 %v2323, %v2329
    %v2332 = vmul.f32 %v2330, 1.442695
    %v2333 = vpow.pop %v2332
    %v2334 = vmul.f32 %v2331, 1.442695
    %v2335 = vpow.pop %v2334
    %v2336 = vsel %vm888, %v2333, 0.0
    %2337 = vadd.xlane.f32.xlu0 %v2336
    %v2338 = vpop.xlane.xlu0 %2337
    %v2339 = vsel %vm888, %v2335, 0.0
    %2340 = vadd.xlane.f32.xlu0 %v2339
    %v2341 = vpop.xlane.xlu0 %2340
    %v2342 = vrcp.pop %v2338
    %v2343 = vrcp.pop %v2341
    %v2344 = vmul.f32 %v2333, %v2342
    %v2345 = vmul.f32 %v2335, %v2343
    %2346 = vrot.lane.b32.xlu0 %v1773, 40
    %v2347 = vpop.permute.xlu0 %2346
    %v2350 = vsel %vm888, %v2344, 0
    %2352 = vmatpush.msra.mxu0 0.0
    %2353 = vmatpush.msra.mxu0 0.0
    %2354 = vmatpush.msra.mxu0 0.0
    %2355 = vmatpush.msra.mxu0 0.0
    %2356 = vmatpush.msra.mxu0 0.0
    %2357 = vmatpush.msra.mxu0 0.0
    %2358 = vmatpush.msra.mxu0 0.0
    %2359 = vmatpush.msra.mxu0 0.0
    %2360 = vmatpush.msra.mxu0 0.0
    %2361 = vmatpush.msra.mxu0 0.0
    %2362 = vmatpush.msra.mxu0 0.0
    %2363 = vmatpush.msra.mxu0 0.0
    %2364 = vmatpush.msra.mxu0 0.0
    %2365 = vmatpush.msra.mxu0 0.0
    %2366 = vmatpush.msra.mxu0 0.0
    %2367 = vmatpush.msra.mxu0 %v2347
    %2368 = vmatmul.f32.gmra.mxu0 %v2350
    %v2369 = vpop.f32.mrf.mxu0
    %v2370 = vadd.f32 0.0, %v2369
    %2371 = vdwg.mxu0
    %2372 = vrot.lane.b32.xlu0 %v1776, 40
    %v2373 = vpop.permute.xlu0 %2372
    %v2376 = vsel %vm888, %v2345, 0
    %2378 = vmatpush.msra.mxu0 0.0
    %2379 = vmatpush.msra.mxu0 0.0
    %2380 = vmatpush.msra.mxu0 0.0
    %2381 = vmatpush.msra.mxu0 0.0
    %2382 = vmatpush.msra.mxu0 0.0
    %2383 = vmatpush.msra.mxu0 0.0
    %2384 = vmatpush.msra.mxu0 0.0
    %2385 = vmatpush.msra.mxu0 0.0
    %2386 = vmatpush.msra.mxu0 0.0
    %2387 = vmatpush.msra.mxu0 0.0
    %2388 = vmatpush.msra.mxu0 0.0
    %2389 = vmatpush.msra.mxu0 0.0
    %2390 = vmatpush.msra.mxu0 0.0
    %2391 = vmatpush.msra.mxu0 0.0
    %2392 = vmatpush.msra.mxu0 0.0
    %2393 = vmatpush.msra.mxu0 %v2373
    %2394 = vmatmul.f32.gmra.mxu0 %v2376
    %v2395 = vpop.f32.mrf.mxu0
    %v2396 = vadd.f32 0.0, %v2395
    %2397 = vdwg.mxu0
    %v2399 = vsel %vm888, %v2370, 0
    %v2402 = vsel %vm888, %v2396, 0
    %2404 = vmatpush.msra.mxu0 0.0
    %2405 = vmatpush.msra.mxu0 0.0
    %2406 = vmatpush.msra.mxu0 0.0
    %2407 = vmatpush.msra.mxu0 0.0
    %2408 = vmatpush.msra.mxu0 0.0
    %2409 = vmatpush.msra.mxu0 0.0
    %2410 = vmatpush.msra.mxu0 0.0
    %2411 = vmatpush.msra.mxu0 0.0
    %2412 = vmatpush.msra.mxu0 0.0
    %2413 = vmatpush.msra.mxu0 0.0
    %2414 = vmatpush.msra.mxu0 0.0
    %2415 = vmatpush.msra.mxu0 0.0
    %2416 = vmatpush.msra.mxu0 0.0
    %2417 = vmatpush.msra.mxu0 0.0
    %2418 = vmatpush.msra.mxu0 0.0
    %2419 = vmatpush.msra.mxu0 %v1781
    %2420 = vmatmul.f32.gmra.mxu0 %v2399
    %v2421 = vpop.f32.mrf.mxu0
    %v2422 = vadd.f32 0.0, %v2421
    %2423 = vmatmul.f32.gmra.mxu0 %v2402
    %v2424 = vpop.f32.mrf.mxu0
    %v2425 = vadd.f32 0.0, %v2424
    %2426 = vdwg.mxu0
    %v2427 = vadd.f32 %v2264, %v2422
    %v2428 = vadd.f32 %v2265, %v2425
    %v2430 = vperm.slane %v1782, 0
    %v2432 = vadd.f32 %v2427, %v2430
    %v2433 = vadd.f32 %v2428, %v2430
    %v2434 = vadd.f32 %v1739, %v2432
    %v2435 = vadd.f32 %v1740, %v2433
    %v2436 = vld [vmem:[%s41] sm:$0x1]
    %v2437 = vld [vmem:[%s43] sm:$0x1]
    %v2438 = vsel %vm850, %v2434, 0.0
    %2439 = vadd.xlane.f32.xlu0 %v2438
    %v2440 = vpop.xlane.xlu0 %2439
    %v2441 = vsel %vm850, %v2435, 0.0
    %2442 = vadd.xlane.f32.xlu0 %v2441
    %v2443 = vpop.xlane.xlu0 %2442
    %v2444 = vmul.f32 %v2440, %v1553
    %v2445 = vmul.f32 %v2443, %v1553
    %v2446 = vsub.f32 %v2434, %v2444
    %v2447 = vsub.f32 %v2435, %v2445
    %v2448 = vmul.f32 %v2446, %v2446
    %v2449 = vmul.f32 %v2447, %v2447
    %v2450 = vsel %vm850, %v2448, 0.0
    %2451 = vadd.xlane.f32.xlu0 %v2450
    %v2452 = vpop.xlane.xlu0 %2451
    %v2453 = vsel %vm850, %v2449, 0.0
    %2454 = vadd.xlane.f32.xlu0 %v2453
    %v2455 = vpop.xlane.xlu0 %2454
    %v2456 = vmul.f32 %v2452, %v1553
    %v2457 = vmul.f32 %v2455, %v1553
    %v2458 = vadd.f32 %v2456, 1e-05
    %v2459 = vadd.f32 %v2457, 1e-05
    %v2460 = vrsqrt.pop %v2458
    %v2461 = vmul.f32 %v2460, %v2458
    %v2462 = vmul.f32 %v2461, %v2460
    %v2463 = vmul.f32 0.5, %v2462
    %v2464 = vsub.f32 1.5, %v2463
    %v2465 = vmul.f32 %v2460, %v2464
    %vm2466 = vweird.f32 %v2458
    %vm2467 = vweird.f32 %v2460
    %vm2468 = vmor %vm2466, %vm2467
    %v2469 = vsel %vm2468, %v2460, %v2465
    %v2470 = vrsqrt.pop %v2459
    %v2471 = vmul.f32 %v2470, %v2459
    %v2472 = vmul.f32 %v2471, %v2470
    %v2473 = vmul.f32 0.5, %v2472
    %v2474 = vsub.f32 1.5, %v2473
    %v2475 = vmul.f32 %v2470, %v2474
    %vm2476 = vweird.f32 %v2459
    %vm2477 = vweird.f32 %v2470
    %vm2478 = vmor %vm2476, %vm2477
    %v2479 = vsel %vm2478, %v2470, %v2475
    %v2480 = vmul.f32 %v2446, %v2469
    %v2481 = vmul.f32 %v2447, %v2479
    %v2483 = vperm.slane %v2436, 0
    %v2485 = vmul.f32 %v2480, %v2483
    %v2486 = vmul.f32 %v2481, %v2483
    %v2488 = vperm.slane %v2437, 0
    %v2490 = vadd.f32 %v2485, %v2488
    %v2491 = vadd.f32 %v2486, %v2488
    %v2492 = vld [vmem:[%s45] sm:$0xff]
    %v2493 = vld [vmem:[%s45 + $0x8] sm:$0xff]
    %v2494 = vld [vmem:[%s45 + $0x10] sm:$0xff]
    %v2495 = vld [vmem:[%s45 + $0x18] sm:$0xff]
    %v2496 = vld [vmem:[%s47] sm:$0x1]
    %v2498 = vperm.slane %v2496, 0
    %v2501 = vsel %vm850, %v2490, 0
    %v2504 = vsel %vm850, %v2491, 0
    %2506 = vmatpush.msra.mxu0 0.0
    %2507 = vmatpush.msra.mxu0 0.0
    %2508 = vmatpush.msra.mxu0 0.0
    %2509 = vmatpush.msra.mxu0 0.0
    %2510 = vmatpush.msra.mxu0 0.0
    %2511 = vmatpush.msra.mxu0 0.0
    %2512 = vmatpush.msra.mxu0 0.0
    %2513 = vmatpush.msra.mxu0 0.0
    %2514 = vmatpush.msra.mxu0 0.0
    %2515 = vmatpush.msra.mxu0 0.0
    %2516 = vmatpush.msra.mxu0 0.0
    %2517 = vmatpush.msra.mxu0 0.0
    %2518 = vmatpush.msra.mxu0 %v2495
    %2519 = vmatpush.msra.mxu0 %v2494
    %2520 = vmatpush.msra.mxu0 %v2493
    %2521 = vmatpush.msra.mxu0 %v2492
    %2522 = vmatmul.f32.gmra.mxu0 %v2501
    %v2523 = vpop.f32.mrf.mxu0
    %v2524 = vadd.f32 %v2498, %v2523
    %2525 = vmatmul.f32.gmra.mxu0 %v2504
    %v2526 = vpop.f32.mrf.mxu0
    %v2527 = vadd.f32 %v2498, %v2526
    %2528 = vdwg.mxu0
    %v2529 = vmax.f32 %v2524, 0.0
    %v2530 = vmax.f32 %v2527, 0.0
    %v2531 = vld [vmem:[%s49] sm:$0xff]
    %v2532 = vld [vmem:[%s49 + $0x8] sm:$0xff]
    %v2533 = vld [vmem:[%s49 + $0x10] sm:$0xff]
    %v2534 = vld [vmem:[%s49 + $0x18] sm:$0xff]
    %v2535 = vld [vmem:[%s49 + $0x20] sm:$0xff]
    %v2536 = vld [vmem:[%s49 + $0x28] sm:$0xff]
    %v2537 = vld [vmem:[%s49 + $0x30] sm:$0xff]
    %v2538 = vld [vmem:[%s49 + $0x38] sm:$0xff]
    %v2539 = vld [vmem:[%s51] sm:$0x1]
    %v2541 = vperm.slane %v2539, 0
    %v2544 = vsel %vm1653, %v2529, 0
    %v2547 = vsel %vm1653, %v2530, 0
    %2549 = vmatpush.msra.mxu0 0.0
    %2550 = vmatpush.msra.mxu0 0.0
    %2551 = vmatpush.msra.mxu0 0.0
    %2552 = vmatpush.msra.mxu0 0.0
    %2553 = vmatpush.msra.mxu0 0.0
    %2554 = vmatpush.msra.mxu0 0.0
    %2555 = vmatpush.msra.mxu0 0.0
    %2556 = vmatpush.msra.mxu0 0.0
    %2557 = vmatpush.msra.mxu0 %v2538
    %2558 = vmatpush.msra.mxu0 %v2537
    %2559 = vmatpush.msra.mxu0 %v2536
    %2560 = vmatpush.msra.mxu0 %v2535
    %2561 = vmatpush.msra.mxu0 %v2534
    %2562 = vmatpush.msra.mxu0 %v2533
    %2563 = vmatpush.msra.mxu0 %v2532
    %2564 = vmatpush.msra.mxu0 %v2531
    %2565 = vmatmul.f32.gmra.mxu0 %v2544
    %v2566 = vpop.f32.mrf.mxu0
    %v2567 = vadd.f32 %v2541, %v2566
    %2568 = vmatmul.f32.gmra.mxu0 %v2547
    %v2569 = vpop.f32.mrf.mxu0
    %v2570 = vadd.f32 %v2541, %v2569
    %2571 = vdwg.mxu0
    %v2572 = vadd.f32 %v2490, %v2567
    %v2573 = vadd.f32 %v2491, %v2570
    %v2574 = vld [vmem:[%s53] sm:$0x1]
    %v2575 = vld [vmem:[%s55] sm:$0x1]
    %v2576 = vsel %vm850, %v2572, 0.0
    %2577 = vadd.xlane.f32.xlu0 %v2576
    %v2578 = vpop.xlane.xlu0 %2577
    %v2579 = vsel %vm850, %v2573, 0.0
    %2580 = vadd.xlane.f32.xlu0 %v2579
    %v2581 = vpop.xlane.xlu0 %2580
    %v2582 = vmul.f32 %v2578, %v1553
    %v2583 = vmul.f32 %v2581, %v1553
    %v2584 = vsub.f32 %v2572, %v2582
    %v2585 = vsub.f32 %v2573, %v2583
    %v2586 = vmul.f32 %v2584, %v2584
    %v2587 = vmul.f32 %v2585, %v2585
    %v2588 = vsel %vm850, %v2586, 0.0
    %2589 = vadd.xlane.f32.xlu0 %v2588
    %v2590 = vpop.xlane.xlu0 %2589
    %v2591 = vsel %vm850, %v2587, 0.0
    %2592 = vadd.xlane.f32.xlu0 %v2591
    %v2593 = vpop.xlane.xlu0 %2592
    %v2594 = vmul.f32 %v2590, %v1553
    %v2595 = vmul.f32 %v2593, %v1553
    %v2596 = vadd.f32 %v2594, 1e-05
    %v2597 = vadd.f32 %v2595, 1e-05
    %v2598 = vrsqrt.pop %v2596
    %v2599 = vmul.f32 %v2598, %v2596
    %v2600 = vmul.f32 %v2599, %v2598
    %v2601 = vmul.f32 0.5, %v2600
    %v2602 = vsub.f32 1.5, %v2601
    %v2603 = vmul.f32 %v2598, %v2602
    %vm2604 = vweird.f32 %v2596
    %vm2605 = vweird.f32 %v2598
    %vm2606 = vmor %vm2604, %vm2605
    %v2607 = vsel %vm2606, %v2598, %v2603
    %v2608 = vrsqrt.pop %v2597
    %v2609 = vmul.f32 %v2608, %v2597
    %v2610 = vmul.f32 %v2609, %v2608
    %v2611 = vmul.f32 0.5, %v2610
    %v2612 = vsub.f32 1.5, %v2611
    %v2613 = vmul.f32 %v2608, %v2612
    %vm2614 = vweird.f32 %v2597
    %vm2615 = vweird.f32 %v2608
    %vm2616 = vmor %vm2614, %vm2615
    %v2617 = vsel %vm2616, %v2608, %v2613
    %v2618 = vmul.f32 %v2584, %v2607
    %v2619 = vmul.f32 %v2585, %v2617
    %v2621 = vperm.slane %v2574, 0
    %v2623 = vmul.f32 %v2618, %v2621
    %v2624 = vmul.f32 %v2619, %v2621
    %v2626 = vperm.slane %v2575, 0
    %v2628 = vadd.f32 %v2623, %v2626
    %v2629 = vadd.f32 %v2624, %v2626
    %v2630 = vld [vmem:[%s57] sm:$0x1]
    %v2631 = vld [vmem:[%s59] sm:$0x1]
    %v2632 = vsel %vm850, %v2628, 0.0
    %2633 = vadd.xlane.f32.xlu0 %v2632
    %v2634 = vpop.xlane.xlu0 %2633
    %v2635 = vsel %vm850, %v2629, 0.0
    %2636 = vadd.xlane.f32.xlu0 %v2635
    %v2637 = vpop.xlane.xlu0 %2636
    %v2638 = vmul.f32 %v2634, %v1553
    %v2639 = vmul.f32 %v2637, %v1553
    %v2640 = vsub.f32 %v2628, %v2638
    %v2641 = vsub.f32 %v2629, %v2639
    %v2642 = vmul.f32 %v2640, %v2640
    %v2643 = vmul.f32 %v2641, %v2641
    %v2644 = vsel %vm850, %v2642, 0.0
    %2645 = vadd.xlane.f32.xlu0 %v2644
    %v2646 = vpop.xlane.xlu0 %2645
    %v2647 = vsel %vm850, %v2643, 0.0
    %2648 = vadd.xlane.f32.xlu0 %v2647
    %v2649 = vpop.xlane.xlu0 %2648
    %v2650 = vmul.f32 %v2646, %v1553
    %v2651 = vmul.f32 %v2649, %v1553
    %v2652 = vadd.f32 %v2650, 1e-05
    %v2653 = vadd.f32 %v2651, 1e-05
    %v2654 = vrsqrt.pop %v2652
    %v2655 = vmul.f32 %v2654, %v2652
    %v2656 = vmul.f32 %v2655, %v2654
    %v2657 = vmul.f32 0.5, %v2656
    %v2658 = vsub.f32 1.5, %v2657
    %v2659 = vmul.f32 %v2654, %v2658
    %vm2660 = vweird.f32 %v2652
    %vm2661 = vweird.f32 %v2654
    %vm2662 = vmor %vm2660, %vm2661
    %v2663 = vsel %vm2662, %v2654, %v2659
    %v2664 = vrsqrt.pop %v2653
    %v2665 = vmul.f32 %v2664, %v2653
    %v2666 = vmul.f32 %v2665, %v2664
    %v2667 = vmul.f32 0.5, %v2666
    %v2668 = vsub.f32 1.5, %v2667
    %v2669 = vmul.f32 %v2664, %v2668
    %vm2670 = vweird.f32 %v2653
    %vm2671 = vweird.f32 %v2664
    %vm2672 = vmor %vm2670, %vm2671
    %v2673 = vsel %vm2672, %v2664, %v2669
    %v2674 = vmul.f32 %v2640, %v2663
    %v2675 = vmul.f32 %v2641, %v2673
    %v2677 = vperm.slane %v2630, 0
    %v2679 = vmul.f32 %v2674, %v2677
    %v2680 = vmul.f32 %v2675, %v2677
    %v2682 = vperm.slane %v2631, 0
    %v2684 = vadd.f32 %v2679, %v2682
    %v2685 = vadd.f32 %v2680, %v2682
    %v2686 = vld [vmem:[%s61] sm:$0xff]
    %v2687 = vld [vmem:[%s61 + $0x8] sm:$0xff]
    %v2688 = vld [vmem:[%s61 + $0x10] sm:$0xff]
    %v2689 = vld [vmem:[%s61 + $0x18] sm:$0xff]
    %v2690 = vld [vmem:[#allocation8] sm:$0x1]
    %v2692 = vperm.slane %v2690, 0
    %2694 = vmatpush.msra.mxu0 0.0
    %2695 = vmatpush.msra.mxu0 0.0
    %2696 = vmatpush.msra.mxu0 0.0
    %2697 = vmatpush.msra.mxu0 0.0
    %2698 = vmatpush.msra.mxu0 0.0
    %2699 = vmatpush.msra.mxu0 0.0
    %2700 = vmatpush.msra.mxu0 0.0
    %2701 = vmatpush.msra.mxu0 0.0
    %2702 = vmatpush.msra.mxu0 0.0
    %2703 = vmatpush.msra.mxu0 0.0
    %2704 = vmatpush.msra.mxu0 0.0
    %2705 = vmatpush.msra.mxu0 0.0
    %2706 = vmatpush.msra.mxu0 %v2689
    %2707 = vmatpush.msra.mxu0 %v2688
    %2708 = vmatpush.msra.mxu0 %v2687
    %2709 = vmatpush.msra.mxu0 %v2686
    %2710 = vmatmul.f32.gmra.mxu0 %v852
    %v2711 = vpop.f32.mrf.mxu0
    %v2712 = vadd.f32 %v2692, %v2711
    %2713 = vmatmul.f32.gmra.mxu0 %v855
    %v2714 = vpop.f32.mrf.mxu0
    %v2715 = vadd.f32 %v2692, %v2714
    %2716 = vdwg.mxu0
    %v2717 = vld [vmem:[%s65] sm:$0xff]
    %v2718 = vld [vmem:[%s65 + $0x8] sm:$0xff]
    %v2719 = vld [vmem:[%s65 + $0x10] sm:$0xff]
    %v2720 = vld [vmem:[%s65 + $0x18] sm:$0xff]
    %v2721 = vld [vmem:[#allocation10] sm:$0x1]
    %2723 = vrot.lane.b32.xlu0 %v2712, 96
    %v2724 = vpop.permute.xlu0 %2723
    %v2725 = vsel %vm888, %v2712, 0
    %v2727 = vsel %vm888, %v2724, 0
    %2729 = vmatpush.xpose.msra.mxu0 0.0
    %2730 = vmatpush.xpose.msra.mxu0 0.0
    %2731 = vmatpush.xpose.msra.mxu0 0.0
    %2732 = vmatpush.xpose.msra.mxu0 0.0
    %2733 = vmatpush.xpose.msra.mxu0 0.0
    %2734 = vmatpush.xpose.msra.mxu0 0.0
    %2735 = vmatpush.xpose.msra.mxu0 0.0
    %2736 = vmatpush.xpose.msra.mxu0 0.0
    %2737 = vmatpush.xpose.msra.mxu0 0.0
    %2738 = vmatpush.xpose.msra.mxu0 0.0
    %2739 = vmatpush.xpose.msra.mxu0 0.0
    %2740 = vmatpush.xpose.msra.mxu0 0.0
    %2741 = vmatpush.xpose.msra.mxu0 0.0
    %2742 = vmatpush.xpose.msra.mxu0 0.0
    %2743 = vmatpush.xpose.msra.mxu0 0.0
    %2744 = vmatpush.xpose.msra.mxu0 %v2727
    %2745 = vmatmul.f32.gmra.mxu0 %v2725
    %v2746 = vpop.f32.mrf.mxu0
    %v2747 = vadd.f32 0.0, %v2746
    %2748 = vdwg.mxu0
    %2750 = vrot.lane.b32.xlu0 %v2715, 96
    %v2751 = vpop.permute.xlu0 %2750
    %v2752 = vsel %vm888, %v2715, 0
    %v2754 = vsel %vm888, %v2751, 0
    %2756 = vmatpush.xpose.msra.mxu0 0.0
    %2757 = vmatpush.xpose.msra.mxu0 0.0
    %2758 = vmatpush.xpose.msra.mxu0 0.0
    %2759 = vmatpush.xpose.msra.mxu0 0.0
    %2760 = vmatpush.xpose.msra.mxu0 0.0
    %2761 = vmatpush.xpose.msra.mxu0 0.0
    %2762 = vmatpush.xpose.msra.mxu0 0.0
    %2763 = vmatpush.xpose.msra.mxu0 0.0
    %2764 = vmatpush.xpose.msra.mxu0 0.0
    %2765 = vmatpush.xpose.msra.mxu0 0.0
    %2766 = vmatpush.xpose.msra.mxu0 0.0
    %2767 = vmatpush.xpose.msra.mxu0 0.0
    %2768 = vmatpush.xpose.msra.mxu0 0.0
    %2769 = vmatpush.xpose.msra.mxu0 0.0
    %2770 = vmatpush.xpose.msra.mxu0 0.0
    %2771 = vmatpush.xpose.msra.mxu0 %v2754
    %2772 = vmatmul.f32.gmra.mxu0 %v2752
    %v2773 = vpop.f32.mrf.mxu0
    %v2774 = vadd.f32 0.0, %v2773
    %2775 = vdwg.mxu0
    %v2776 = vmul.f32 %v2747, 0.35355338
    %v2777 = vmul.f32 %v2774, 0.35355338
    %v2778 = vsel %vm888, %v2776, -inf
    %2779 = vmax.xlane.f32.xlu0 %v2778
    %v2780 = vpop.xlane.xlu0 %2779
    %v2781 = vsel %vm888, %v2777, -inf
    %2782 = vmax.xlane.f32.xlu0 %v2781
    %v2783 = vpop.xlane.xlu0 %2782
    %v2784 = vsub.f32 %v2776, %v2780
    %v2785 = vsub.f32 %v2777, %v2783
    %v2786 = vmul.f32 %v2784, 1.442695
    %v2787 = vpow.pop %v2786
    %v2788 = vmul.f32 %v2785, 1.442695
    %v2789 = vpow.pop %v2788
    %v2790 = vsel %vm888, %v2787, 0.0
    %2791 = vadd.xlane.f32.xlu0 %v2790
    %v2792 = vpop.xlane.xlu0 %2791
    %v2793 = vsel %vm888, %v2789, 0.0
    %2794 = vadd.xlane.f32.xlu0 %v2793
    %v2795 = vpop.xlane.xlu0 %2794
    %v2796 = vrcp.pop %v2792
    %v2797 = vrcp.pop %v2795
    %v2798 = vmul.f32 %v2787, %v2796
    %v2799 = vmul.f32 %v2789, %v2797
    %2800 = vrot.lane.b32.xlu0 %v2712, 64
    %v2801 = vpop.permute.xlu0 %2800
    %v2804 = vsel %vm888, %v2798, 0
    %2806 = vmatpush.msra.mxu0 0.0
    %2807 = vmatpush.msra.mxu0 0.0
    %2808 = vmatpush.msra.mxu0 0.0
    %2809 = vmatpush.msra.mxu0 0.0
    %2810 = vmatpush.msra.mxu0 0.0
    %2811 = vmatpush.msra.mxu0 0.0
    %2812 = vmatpush.msra.mxu0 0.0
    %2813 = vmatpush.msra.mxu0 0.0
    %2814 = vmatpush.msra.mxu0 0.0
    %2815 = vmatpush.msra.mxu0 0.0
    %2816 = vmatpush.msra.mxu0 0.0
    %2817 = vmatpush.msra.mxu0 0.0
    %2818 = vmatpush.msra.mxu0 0.0
    %2819 = vmatpush.msra.mxu0 0.0
    %2820 = vmatpush.msra.mxu0 0.0
    %2821 = vmatpush.msra.mxu0 %v2801
    %2822 = vmatmul.f32.gmra.mxu0 %v2804
    %v2823 = vpop.f32.mrf.mxu0
    %v2824 = vadd.f32 0.0, %v2823
    %2825 = vdwg.mxu0
    %2826 = vrot.lane.b32.xlu0 %v2715, 64
    %v2827 = vpop.permute.xlu0 %2826
    %v2830 = vsel %vm888, %v2799, 0
    %2832 = vmatpush.msra.mxu0 0.0
    %2833 = vmatpush.msra.mxu0 0.0
    %2834 = vmatpush.msra.mxu0 0.0
    %2835 = vmatpush.msra.mxu0 0.0
    %2836 = vmatpush.msra.mxu0 0.0
    %2837 = vmatpush.msra.mxu0 0.0
    %2838 = vmatpush.msra.mxu0 0.0
    %2839 = vmatpush.msra.mxu0 0.0
    %2840 = vmatpush.msra.mxu0 0.0
    %2841 = vmatpush.msra.mxu0 0.0
    %2842 = vmatpush.msra.mxu0 0.0
    %2843 = vmatpush.msra.mxu0 0.0
    %2844 = vmatpush.msra.mxu0 0.0
    %2845 = vmatpush.msra.mxu0 0.0
    %2846 = vmatpush.msra.mxu0 0.0
    %2847 = vmatpush.msra.mxu0 %v2827
    %2848 = vmatmul.f32.gmra.mxu0 %v2830
    %v2849 = vpop.f32.mrf.mxu0
    %v2850 = vadd.f32 0.0, %v2849
    %2851 = vdwg.mxu0
    %2852 = vrot.lane.b32.xlu0 %v2712, 120
    %v2853 = vpop.permute.xlu0 %2852
    %2854 = vrot.lane.b32.xlu0 %v2712, 88
    %v2855 = vpop.permute.xlu0 %2854
    %v2856 = vsel %vm888, %v2853, 0
    %v2858 = vsel %vm888, %v2855, 0
    %2860 = vmatpush.xpose.msra.mxu0 0.0
    %2861 = vmatpush.xpose.msra.mxu0 0.0
    %2862 = vmatpush.xpose.msra.mxu0 0.0
    %2863 = vmatpush.xpose.msra.mxu0 0.0
    %2864 = vmatpush.xpose.msra.mxu0 0.0
    %2865 = vmatpush.xpose.msra.mxu0 0.0
    %2866 = vmatpush.xpose.msra.mxu0 0.0
    %2867 = vmatpush.xpose.msra.mxu0 0.0
    %2868 = vmatpush.xpose.msra.mxu0 0.0
    %2869 = vmatpush.xpose.msra.mxu0 0.0
    %2870 = vmatpush.xpose.msra.mxu0 0.0
    %2871 = vmatpush.xpose.msra.mxu0 0.0
    %2872 = vmatpush.xpose.msra.mxu0 0.0
    %2873 = vmatpush.xpose.msra.mxu0 0.0
    %2874 = vmatpush.xpose.msra.mxu0 0.0
    %2875 = vmatpush.xpose.msra.mxu0 %v2858
    %2876 = vmatmul.f32.gmra.mxu0 %v2856
    %v2877 = vpop.f32.mrf.mxu0
    %v2878 = vadd.f32 0.0, %v2877
    %2879 = vdwg.mxu0
    %2880 = vrot.lane.b32.xlu0 %v2715, 120
    %v2881 = vpop.permute.xlu0 %2880
    %2882 = vrot.lane.b32.xlu0 %v2715, 88
    %v2883 = vpop.permute.xlu0 %2882
    %v2884 = vsel %vm888, %v2881, 0
    %v2886 = vsel %vm888, %v2883, 0
    %2888 = vmatpush.xpose.msra.mxu0 0.0
    %2889 = vmatpush.xpose.msra.mxu0 0.0
    %2890 = vmatpush.xpose.msra.mxu0 0.0
    %2891 = vmatpush.xpose.msra.mxu0 0.0
    %2892 = vmatpush.xpose.msra.mxu0 0.0
    %2893 = vmatpush.xpose.msra.mxu0 0.0
    %2894 = vmatpush.xpose.msra.mxu0 0.0
    %2895 = vmatpush.xpose.msra.mxu0 0.0
    %2896 = vmatpush.xpose.msra.mxu0 0.0
    %2897 = vmatpush.xpose.msra.mxu0 0.0
    %2898 = vmatpush.xpose.msra.mxu0 0.0
    %2899 = vmatpush.xpose.msra.mxu0 0.0
    %2900 = vmatpush.xpose.msra.mxu0 0.0
    %2901 = vmatpush.xpose.msra.mxu0 0.0
    %2902 = vmatpush.xpose.msra.mxu0 0.0
    %2903 = vmatpush.xpose.msra.mxu0 %v2886
    %2904 = vmatmul.f32.gmra.mxu0 %v2884
    %v2905 = vpop.f32.mrf.mxu0
    %v2906 = vadd.f32 0.0, %v2905
    %2907 = vdwg.mxu0
    %v2908 = vmul.f32 %v2878, 0.35355338
    %v2909 = vmul.f32 %v2906, 0.35355338
    %v2910 = vsel %vm888, %v2908, -inf
    %2911 = vmax.xlane.f32.xlu0 %v2910
    %v2912 = vpop.xlane.xlu0 %2911
    %v2913 = vsel %vm888, %v2909, -inf
    %2914 = vmax.xlane.f32.xlu0 %v2913
    %v2915 = vpop.xlane.xlu0 %2914
    %v2916 = vsub.f32 %v2908, %v2912
    %v2917 = vsub.f32 %v2909, %v2915
    %v2918 = vmul.f32 %v2916, 1.442695
    %v2919 = vpow.pop %v2918
    %v2920 = vmul.f32 %v2917, 1.442695
    %v2921 = vpow.pop %v2920
    %v2922 = vsel %vm888, %v2919, 0.0
    %2923 = vadd.xlane.f32.xlu0 %v2922
    %v2924 = vpop.xlane.xlu0 %2923
    %v2925 = vsel %vm888, %v2921, 0.0
    %2926 = vadd.xlane.f32.xlu0 %v2925
    %v2927 = vpop.xlane.xlu0 %2926
    %v2928 = vrcp.pop %v2924
    %v2929 = vrcp.pop %v2927
    %v2930 = vmul.f32 %v2919, %v2928
    %v2931 = vmul.f32 %v2921, %v2929
    %2932 = vrot.lane.b32.xlu0 %v2712, 56
    %v2933 = vpop.permute.xlu0 %2932
    %v2936 = vsel %vm888, %v2930, 0
    %2938 = vmatpush.msra.mxu0 0.0
    %2939 = vmatpush.msra.mxu0 0.0
    %2940 = vmatpush.msra.mxu0 0.0
    %2941 = vmatpush.msra.mxu0 0.0
    %2942 = vmatpush.msra.mxu0 0.0
    %2943 = vmatpush.msra.mxu0 0.0
    %2944 = vmatpush.msra.mxu0 0.0
    %2945 = vmatpush.msra.mxu0 0.0
    %2946 = vmatpush.msra.mxu0 0.0
    %2947 = vmatpush.msra.mxu0 0.0
    %2948 = vmatpush.msra.mxu0 0.0
    %2949 = vmatpush.msra.mxu0 0.0
    %2950 = vmatpush.msra.mxu0 0.0
    %2951 = vmatpush.msra.mxu0 0.0
    %2952 = vmatpush.msra.mxu0 0.0
    %2953 = vmatpush.msra.mxu0 %v2933
    %2954 = vmatmul.f32.gmra.mxu0 %v2936
    %v2955 = vpop.f32.mrf.mxu0
    %v2956 = vadd.f32 0.0, %v2955
    %2957 = vdwg.mxu0
    %2958 = vrot.lane.b32.xlu0 %v2715, 56
    %v2959 = vpop.permute.xlu0 %2958
    %v2962 = vsel %vm888, %v2931, 0
    %2964 = vmatpush.msra.mxu0 0.0
    %2965 = vmatpush.msra.mxu0 0.0
    %2966 = vmatpush.msra.mxu0 0.0
    %2967 = vmatpush.msra.mxu0 0.0
    %2968 = vmatpush.msra.mxu0 0.0
    %2969 = vmatpush.msra.mxu0 0.0
    %2970 = vmatpush.msra.mxu0 0.0
    %2971 = vmatpush.msra.mxu0 0.0
    %2972 = vmatpush.msra.mxu0 0.0
    %2973 = vmatpush.msra.mxu0 0.0
    %2974 = vmatpush.msra.mxu0 0.0
    %2975 = vmatpush.msra.mxu0 0.0
    %2976 = vmatpush.msra.mxu0 0.0
    %2977 = vmatpush.msra.mxu0 0.0
    %2978 = vmatpush.msra.mxu0 0.0
    %2979 = vmatpush.msra.mxu0 %v2959
    %2980 = vmatmul.f32.gmra.mxu0 %v2962
    %v2981 = vpop.f32.mrf.mxu0
    %v2982 = vadd.f32 0.0, %v2981
    %2983 = vdwg.mxu0
    %v2985 = vsel %vm888, %v2956, 0
    %v2988 = vsel %vm888, %v2982, 0
    %2990 = vmatpush.msra.mxu0 0.0
    %2991 = vmatpush.msra.mxu0 0.0
    %2992 = vmatpush.msra.mxu0 0.0
    %2993 = vmatpush.msra.mxu0 0.0
    %2994 = vmatpush.msra.mxu0 0.0
    %2995 = vmatpush.msra.mxu0 0.0
    %2996 = vmatpush.msra.mxu0 0.0
    %2997 = vmatpush.msra.mxu0 0.0
    %2998 = vmatpush.msra.mxu0 0.0
    %2999 = vmatpush.msra.mxu0 0.0
    %3000 = vmatpush.msra.mxu0 0.0
    %3001 = vmatpush.msra.mxu0 0.0
    %3002 = vmatpush.msra.mxu0 0.0
    %3003 = vmatpush.msra.mxu0 0.0
    %3004 = vmatpush.msra.mxu0 0.0
    %3005 = vmatpush.msra.mxu0 %v2718
    %3006 = vmatmul.f32.gmra.mxu0 %v2985
    %v3007 = vpop.f32.mrf.mxu0
    %v3008 = vadd.f32 0.0, %v3007
    %3009 = vmatmul.f32.gmra.mxu0 %v2988
    %v3010 = vpop.f32.mrf.mxu0
    %v3011 = vadd.f32 0.0, %v3010
    %3012 = vdwg.mxu0
    %v3014 = vsel %vm888, %v2824, 0
    %v3017 = vsel %vm888, %v2850, 0
    %3019 = vmatpush.msra.mxu0 0.0
    %3020 = vmatpush.msra.mxu0 0.0
    %3021 = vmatpush.msra.mxu0 0.0
    %3022 = vmatpush.msra.mxu0 0.0
    %3023 = vmatpush.msra.mxu0 0.0
    %3024 = vmatpush.msra.mxu0 0.0
    %3025 = vmatpush.msra.mxu0 0.0
    %3026 = vmatpush.msra.mxu0 0.0
    %3027 = vmatpush.msra.mxu0 0.0
    %3028 = vmatpush.msra.mxu0 0.0
    %3029 = vmatpush.msra.mxu0 0.0
    %3030 = vmatpush.msra.mxu0 0.0
    %3031 = vmatpush.msra.mxu0 0.0
    %3032 = vmatpush.msra.mxu0 0.0
    %3033 = vmatpush.msra.mxu0 0.0
    %3034 = vmatpush.msra.mxu0 %v2717
    %3035 = vmatmul.f32.gmra.mxu0 %v3014
    %v3036 = vpop.f32.mrf.mxu0
    %v3037 = vadd.f32 %v3008, %v3036
    %3038 = vmatmul.f32.gmra.mxu0 %v3017
    %v3039 = vpop.f32.mrf.mxu0
    %v3040 = vadd.f32 %v3011, %v3039
    %3041 = vdwg.mxu0
    %3042 = vrot.lane.b32.xlu0 %v2712, 112
    %v3043 = vpop.permute.xlu0 %3042
    %3044 = vrot.lane.b32.xlu0 %v2712, 80
    %v3045 = vpop.permute.xlu0 %3044
    %v3046 = vsel %vm888, %v3043, 0
    %v3048 = vsel %vm888, %v3045, 0
    %3050 = vmatpush.xpose.msra.mxu0 0.0
    %3051 = vmatpush.xpose.msra.mxu0 0.0
    %3052 = vmatpush.xpose.msra.mxu0 0.0
    %3053 = vmatpush.xpose.msra.mxu0 0.0
    %3054 = vmatpush.xpose.msra.mxu0 0.0
    %3055 = vmatpush.xpose.msra.mxu0 0.0
    %3056 = vmatpush.xpose.msra.mxu0 0.0
    %3057 = vmatpush.xpose.msra.mxu0 0.0
    %3058 = vmatpush.xpose.msra.mxu0 0.0
    %3059 = vmatpush.xpose.msra.mxu0 0.0
    %3060 = vmatpush.xpose.msra.mxu0 0.0
    %3061 = vmatpush.xpose.msra.mxu0 0.0
    %3062 = vmatpush.xpose.msra.mxu0 0.0
    %3063 = vmatpush.xpose.msra.mxu0 0.0
    %3064 = vmatpush.xpose.msra.mxu0 0.0
    %3065 = vmatpush.xpose.msra.mxu0 %v3048
    %3066 = vmatmul.f32.gmra.mxu0 %v3046
    %v3067 = vpop.f32.mrf.mxu0
    %v3068 = vadd.f32 0.0, %v3067
    %3069 = vdwg.mxu0
    %3070 = vrot.lane.b32.xlu0 %v2715, 112
    %v3071 = vpop.permute.xlu0 %3070
    %3072 = vrot.lane.b32.xlu0 %v2715, 80
    %v3073 = vpop.permute.xlu0 %3072
    %v3074 = vsel %vm888, %v3071, 0
    %v3076 = vsel %vm888, %v3073, 0
    %3078 = vmatpush.xpose.msra.mxu0 0.0
    %3079 = vmatpush.xpose.msra.mxu0 0.0
    %3080 = vmatpush.xpose.msra.mxu0 0.0
    %3081 = vmatpush.xpose.msra.mxu0 0.0
    %3082 = vmatpush.xpose.msra.mxu0 0.0
    %3083 = vmatpush.xpose.msra.mxu0 0.0
    %3084 = vmatpush.xpose.msra.mxu0 0.0
    %3085 = vmatpush.xpose.msra.mxu0 0.0
    %3086 = vmatpush.xpose.msra.mxu0 0.0
    %3087 = vmatpush.xpose.msra.mxu0 0.0
    %3088 = vmatpush.xpose.msra.mxu0 0.0
    %3089 = vmatpush.xpose.msra.mxu0 0.0
    %3090 = vmatpush.xpose.msra.mxu0 0.0
    %3091 = vmatpush.xpose.msra.mxu0 0.0
    %3092 = vmatpush.xpose.msra.mxu0 0.0
    %3093 = vmatpush.xpose.msra.mxu0 %v3076
    %3094 = vmatmul.f32.gmra.mxu0 %v3074
    %v3095 = vpop.f32.mrf.mxu0
    %v3096 = vadd.f32 0.0, %v3095
    %3097 = vdwg.mxu0
    %v3098 = vmul.f32 %v3068, 0.35355338
    %v3099 = vmul.f32 %v3096, 0.35355338
    %v3100 = vsel %vm888, %v3098, -inf
    %3101 = vmax.xlane.f32.xlu0 %v3100
    %v3102 = vpop.xlane.xlu0 %3101
    %v3103 = vsel %vm888, %v3099, -inf
    %3104 = vmax.xlane.f32.xlu0 %v3103
    %v3105 = vpop.xlane.xlu0 %3104
    %v3106 = vsub.f32 %v3098, %v3102
    %v3107 = vsub.f32 %v3099, %v3105
    %v3108 = vmul.f32 %v3106, 1.442695
    %v3109 = vpow.pop %v3108
    %v3110 = vmul.f32 %v3107, 1.442695
    %v3111 = vpow.pop %v3110
    %v3112 = vsel %vm888, %v3109, 0.0
    %3113 = vadd.xlane.f32.xlu0 %v3112
    %v3114 = vpop.xlane.xlu0 %3113
    %v3115 = vsel %vm888, %v3111, 0.0
    %3116 = vadd.xlane.f32.xlu0 %v3115
    %v3117 = vpop.xlane.xlu0 %3116
    %v3118 = vrcp.pop %v3114
    %v3119 = vrcp.pop %v3117
    %v3120 = vmul.f32 %v3109, %v3118
    %v3121 = vmul.f32 %v3111, %v3119
    %3122 = vrot.lane.b32.xlu0 %v2712, 48
    %v3123 = vpop.permute.xlu0 %3122
    %v3126 = vsel %vm888, %v3120, 0
    %3128 = vmatpush.msra.mxu0 0.0
    %3129 = vmatpush.msra.mxu0 0.0
    %3130 = vmatpush.msra.mxu0 0.0
    %3131 = vmatpush.msra.mxu0 0.0
    %3132 = vmatpush.msra.mxu0 0.0
    %3133 = vmatpush.msra.mxu0 0.0
    %3134 = vmatpush.msra.mxu0 0.0
    %3135 = vmatpush.msra.mxu0 0.0
    %3136 = vmatpush.msra.mxu0 0.0
    %3137 = vmatpush.msra.mxu0 0.0
    %3138 = vmatpush.msra.mxu0 0.0
    %3139 = vmatpush.msra.mxu0 0.0
    %3140 = vmatpush.msra.mxu0 0.0
    %3141 = vmatpush.msra.mxu0 0.0
    %3142 = vmatpush.msra.mxu0 0.0
    %3143 = vmatpush.msra.mxu0 %v3123
    %3144 = vmatmul.f32.gmra.mxu0 %v3126
    %v3145 = vpop.f32.mrf.mxu0
    %v3146 = vadd.f32 0.0, %v3145
    %3147 = vdwg.mxu0
    %3148 = vrot.lane.b32.xlu0 %v2715, 48
    %v3149 = vpop.permute.xlu0 %3148
    %v3152 = vsel %vm888, %v3121, 0
    %3154 = vmatpush.msra.mxu0 0.0
    %3155 = vmatpush.msra.mxu0 0.0
    %3156 = vmatpush.msra.mxu0 0.0
    %3157 = vmatpush.msra.mxu0 0.0
    %3158 = vmatpush.msra.mxu0 0.0
    %3159 = vmatpush.msra.mxu0 0.0
    %3160 = vmatpush.msra.mxu0 0.0
    %3161 = vmatpush.msra.mxu0 0.0
    %3162 = vmatpush.msra.mxu0 0.0
    %3163 = vmatpush.msra.mxu0 0.0
    %3164 = vmatpush.msra.mxu0 0.0
    %3165 = vmatpush.msra.mxu0 0.0
    %3166 = vmatpush.msra.mxu0 0.0
    %3167 = vmatpush.msra.mxu0 0.0
    %3168 = vmatpush.msra.mxu0 0.0
    %3169 = vmatpush.msra.mxu0 %v3149
    %3170 = vmatmul.f32.gmra.mxu0 %v3152
    %v3171 = vpop.f32.mrf.mxu0
    %v3172 = vadd.f32 0.0, %v3171
    %3173 = vdwg.mxu0
    %v3175 = vsel %vm888, %v3146, 0
    %v3178 = vsel %vm888, %v3172, 0
    %3180 = vmatpush.msra.mxu0 0.0
    %3181 = vmatpush.msra.mxu0 0.0
    %3182 = vmatpush.msra.mxu0 0.0
    %3183 = vmatpush.msra.mxu0 0.0
    %3184 = vmatpush.msra.mxu0 0.0
    %3185 = vmatpush.msra.mxu0 0.0
    %3186 = vmatpush.msra.mxu0 0.0
    %3187 = vmatpush.msra.mxu0 0.0
    %3188 = vmatpush.msra.mxu0 0.0
    %3189 = vmatpush.msra.mxu0 0.0
    %3190 = vmatpush.msra.mxu0 0.0
    %3191 = vmatpush.msra.mxu0 0.0
    %3192 = vmatpush.msra.mxu0 0.0
    %3193 = vmatpush.msra.mxu0 0.0
    %3194 = vmatpush.msra.mxu0 0.0
    %3195 = vmatpush.msra.mxu0 %v2719
    %3196 = vmatmul.f32.gmra.mxu0 %v3175
    %v3197 = vpop.f32.mrf.mxu0
    %v3198 = vadd.f32 0.0, %v3197
    %3199 = vmatmul.f32.gmra.mxu0 %v3178
    %v3200 = vpop.f32.mrf.mxu0
    %v3201 = vadd.f32 0.0, %v3200
    %3202 = vdwg.mxu0
    %v3203 = vadd.f32 %v3037, %v3198
    %v3204 = vadd.f32 %v3040, %v3201
    %3205 = vrot.lane.b32.xlu0 %v2712, 104
    %v3206 = vpop.permute.xlu0 %3205
    %3207 = vrot.lane.b32.xlu0 %v2712, 72
    %v3208 = vpop.permute.xlu0 %3207
    %v3209 = vsel %vm888, %v3206, 0
    %v3211 = vsel %vm888, %v3208, 0
    %3213 = vmatpush.xpose.msra.mxu0 0.0
    %3214 = vmatpush.xpose.msra.mxu0 0.0
    %3215 = vmatpush.xpose.msra.mxu0 0.0
    %3216 = vmatpush.xpose.msra.mxu0 0.0
    %3217 = vmatpush.xpose.msra.mxu0 0.0
    %3218 = vmatpush.xpose.msra.mxu0 0.0
    %3219 = vmatpush.xpose.msra.mxu0 0.0
    %3220 = vmatpush.xpose.msra.mxu0 0.0
    %3221 = vmatpush.xpose.msra.mxu0 0.0
    %3222 = vmatpush.xpose.msra.mxu0 0.0
    %3223 = vmatpush.xpose.msra.mxu0 0.0
    %3224 = vmatpush.xpose.msra.mxu0 0.0
    %3225 = vmatpush.xpose.msra.mxu0 0.0
    %3226 = vmatpush.xpose.msra.mxu0 0.0
    %3227 = vmatpush.xpose.msra.mxu0 0.0
    %3228 = vmatpush.xpose.msra.mxu0 %v3211
    %3229 = vmatmul.f32.gmra.mxu0 %v3209
    %v3230 = vpop.f32.mrf.mxu0
    %v3231 = vadd.f32 0.0, %v3230
    %3232 = vdwg.mxu0
    %3233 = vrot.lane.b32.xlu0 %v2715, 104
    %v3234 = vpop.permute.xlu0 %3233
    %3235 = vrot.lane.b32.xlu0 %v2715, 72
    %v3236 = vpop.permute.xlu0 %3235
    %v3237 = vsel %vm888, %v3234, 0
    %v3239 = vsel %vm888, %v3236, 0
    %3241 = vmatpush.xpose.msra.mxu0 0.0
    %3242 = vmatpush.xpose.msra.mxu0 0.0
    %3243 = vmatpush.xpose.msra.mxu0 0.0
    %3244 = vmatpush.xpose.msra.mxu0 0.0
    %3245 = vmatpush.xpose.msra.mxu0 0.0
    %3246 = vmatpush.xpose.msra.mxu0 0.0
    %3247 = vmatpush.xpose.msra.mxu0 0.0
    %3248 = vmatpush.xpose.msra.mxu0 0.0
    %3249 = vmatpush.xpose.msra.mxu0 0.0
    %3250 = vmatpush.xpose.msra.mxu0 0.0
    %3251 = vmatpush.xpose.msra.mxu0 0.0
    %3252 = vmatpush.xpose.msra.mxu0 0.0
    %3253 = vmatpush.xpose.msra.mxu0 0.0
    %3254 = vmatpush.xpose.msra.mxu0 0.0
    %3255 = vmatpush.xpose.msra.mxu0 0.0
    %3256 = vmatpush.xpose.msra.mxu0 %v3239
    %3257 = vmatmul.f32.gmra.mxu0 %v3237
    %v3258 = vpop.f32.mrf.mxu0
    %v3259 = vadd.f32 0.0, %v3258
    %3260 = vdwg.mxu0
    %v3261 = vmul.f32 %v3231, 0.35355338
    %v3262 = vmul.f32 %v3259, 0.35355338
    %v3263 = vsel %vm888, %v3261, -inf
    %3264 = vmax.xlane.f32.xlu0 %v3263
    %v3265 = vpop.xlane.xlu0 %3264
    %v3266 = vsel %vm888, %v3262, -inf
    %3267 = vmax.xlane.f32.xlu0 %v3266
    %v3268 = vpop.xlane.xlu0 %3267
    %v3269 = vsub.f32 %v3261, %v3265
    %v3270 = vsub.f32 %v3262, %v3268
    %v3271 = vmul.f32 %v3269, 1.442695
    %v3272 = vpow.pop %v3271
    %v3273 = vmul.f32 %v3270, 1.442695
    %v3274 = vpow.pop %v3273
    %v3275 = vsel %vm888, %v3272, 0.0
    %3276 = vadd.xlane.f32.xlu0 %v3275
    %v3277 = vpop.xlane.xlu0 %3276
    %v3278 = vsel %vm888, %v3274, 0.0
    %3279 = vadd.xlane.f32.xlu0 %v3278
    %v3280 = vpop.xlane.xlu0 %3279
    %v3281 = vrcp.pop %v3277
    %v3282 = vrcp.pop %v3280
    %v3283 = vmul.f32 %v3272, %v3281
    %v3284 = vmul.f32 %v3274, %v3282
    %3285 = vrot.lane.b32.xlu0 %v2712, 40
    %v3286 = vpop.permute.xlu0 %3285
    %v3289 = vsel %vm888, %v3283, 0
    %3291 = vmatpush.msra.mxu0 0.0
    %3292 = vmatpush.msra.mxu0 0.0
    %3293 = vmatpush.msra.mxu0 0.0
    %3294 = vmatpush.msra.mxu0 0.0
    %3295 = vmatpush.msra.mxu0 0.0
    %3296 = vmatpush.msra.mxu0 0.0
    %3297 = vmatpush.msra.mxu0 0.0
    %3298 = vmatpush.msra.mxu0 0.0
    %3299 = vmatpush.msra.mxu0 0.0
    %3300 = vmatpush.msra.mxu0 0.0
    %3301 = vmatpush.msra.mxu0 0.0
    %3302 = vmatpush.msra.mxu0 0.0
    %3303 = vmatpush.msra.mxu0 0.0
    %3304 = vmatpush.msra.mxu0 0.0
    %3305 = vmatpush.msra.mxu0 0.0
    %3306 = vmatpush.msra.mxu0 %v3286
    %3307 = vmatmul.f32.gmra.mxu0 %v3289
    %v3308 = vpop.f32.mrf.mxu0
    %v3309 = vadd.f32 0.0, %v3308
    %3310 = vdwg.mxu0
    %3311 = vrot.lane.b32.xlu0 %v2715, 40
    %v3312 = vpop.permute.xlu0 %3311
    %v3315 = vsel %vm888, %v3284, 0
    %3317 = vmatpush.msra.mxu0 0.0
    %3318 = vmatpush.msra.mxu0 0.0
    %3319 = vmatpush.msra.mxu0 0.0
    %3320 = vmatpush.msra.mxu0 0.0
    %3321 = vmatpush.msra.mxu0 0.0
    %3322 = vmatpush.msra.mxu0 0.0
    %3323 = vmatpush.msra.mxu0 0.0
    %3324 = vmatpush.msra.mxu0 0.0
    %3325 = vmatpush.msra.mxu0 0.0
    %3326 = vmatpush.msra.mxu0 0.0
    %3327 = vmatpush.msra.mxu0 0.0
    %3328 = vmatpush.msra.mxu0 0.0
    %3329 = vmatpush.msra.mxu0 0.0
    %3330 = vmatpush.msra.mxu0 0.0
    %3331 = vmatpush.msra.mxu0 0.0
    %3332 = vmatpush.msra.mxu0 %v3312
    %3333 = vmatmul.f32.gmra.mxu0 %v3315
    %v3334 = vpop.f32.mrf.mxu0
    %v3335 = vadd.f32 0.0, %v3334
    %3336 = vdwg.mxu0
    %v3338 = vsel %vm888, %v3309, 0
    %v3341 = vsel %vm888, %v3335, 0
    %3343 = vmatpush.msra.mxu0 0.0
    %3344 = vmatpush.msra.mxu0 0.0
    %3345 = vmatpush.msra.mxu0 0.0
    %3346 = vmatpush.msra.mxu0 0.0
    %3347 = vmatpush.msra.mxu0 0.0
    %3348 = vmatpush.msra.mxu0 0.0
    %3349 = vmatpush.msra.mxu0 0.0
    %3350 = vmatpush.msra.mxu0 0.0
    %3351 = vmatpush.msra.mxu0 0.0
    %3352 = vmatpush.msra.mxu0 0.0
    %3353 = vmatpush.msra.mxu0 0.0
    %3354 = vmatpush.msra.mxu0 0.0
    %3355 = vmatpush.msra.mxu0 0.0
    %3356 = vmatpush.msra.mxu0 0.0
    %3357 = vmatpush.msra.mxu0 0.0
    %3358 = vmatpush.msra.mxu0 %v2720
    %3359 = vmatmul.f32.gmra.mxu0 %v3338
    %v3360 = vpop.f32.mrf.mxu0
    %v3361 = vadd.f32 0.0, %v3360
    %3362 = vmatmul.f32.gmra.mxu0 %v3341
    %v3363 = vpop.f32.mrf.mxu0
    %v3364 = vadd.f32 0.0, %v3363
    %3365 = vdwg.mxu0
    %v3366 = vadd.f32 %v3203, %v3361
    %v3367 = vadd.f32 %v3204, %v3364
    %v3369 = vperm.slane %v2721, 0
    %v3371 = vadd.f32 %v3366, %v3369
    %v3372 = vadd.f32 %v3367, %v3369
    %v3373 = vadd.f32 %v840, %v3371
    %v3374 = vadd.f32 %v841, %v3372
    %v3375 = vld [vmem:[#allocation11] sm:$0x1]
    %v3376 = vld [vmem:[#allocation13] sm:$0x1]
    %v3377 = vsel %vm850, %v3373, 0.0
    %3378 = vadd.xlane.f32.xlu0 %v3377
    %v3379 = vpop.xlane.xlu0 %3378
    %v3380 = vsel %vm850, %v3374, 0.0
    %3381 = vadd.xlane.f32.xlu0 %v3380
    %v3382 = vpop.xlane.xlu0 %3381
    %v3383 = vmul.f32 %v3379, %v1553
    %v3384 = vmul.f32 %v3382, %v1553
    %v3385 = vsub.f32 %v3373, %v3383
    %v3386 = vsub.f32 %v3374, %v3384
    %v3387 = vmul.f32 %v3385, %v3385
    %v3388 = vmul.f32 %v3386, %v3386
    %v3389 = vsel %vm850, %v3387, 0.0
    %3390 = vadd.xlane.f32.xlu0 %v3389
    %v3391 = vpop.xlane.xlu0 %3390
    %v3392 = vsel %vm850, %v3388, 0.0
    %3393 = vadd.xlane.f32.xlu0 %v3392
    %v3394 = vpop.xlane.xlu0 %3393
    %v3395 = vmul.f32 %v3391, %v1553
    %v3396 = vmul.f32 %v3394, %v1553
    %v3397 = vadd.f32 %v3395, 1e-05
    %v3398 = vadd.f32 %v3396, 1e-05
    %v3399 = vrsqrt.pop %v3397
    %v3400 = vmul.f32 %v3399, %v3397
    %v3401 = vmul.f32 %v3400, %v3399
    %v3402 = vmul.f32 0.5, %v3401
    %v3403 = vsub.f32 1.5, %v3402
    %v3404 = vmul.f32 %v3399, %v3403
    %vm3405 = vweird.f32 %v3397
    %vm3406 = vweird.f32 %v3399
    %vm3407 = vmor %vm3405, %vm3406
    %v3408 = vsel %vm3407, %v3399, %v3404
    %v3409 = vrsqrt.pop %v3398
    %v3410 = vmul.f32 %v3409, %v3398
    %v3411 = vmul.f32 %v3410, %v3409
    %v3412 = vmul.f32 0.5, %v3411
    %v3413 = vsub.f32 1.5, %v3412
    %v3414 = vmul.f32 %v3409, %v3413
    %vm3415 = vweird.f32 %v3398
    %vm3416 = vweird.f32 %v3409
    %vm3417 = vmor %vm3415, %vm3416
    %v3418 = vsel %vm3417, %v3409, %v3414
    %v3419 = vmul.f32 %v3385, %v3408
    %v3420 = vmul.f32 %v3386, %v3418
    %v3422 = vperm.slane %v3375, 0
    %v3424 = vmul.f32 %v3419, %v3422
    %v3425 = vmul.f32 %v3420, %v3422
    %v3427 = vperm.slane %v3376, 0
    %v3429 = vadd.f32 %v3424, %v3427
    %v3430 = vadd.f32 %v3425, %v3427
    %v3431 = vld [vmem:[%s73] sm:$0xff]
    %v3432 = vld [vmem:[%s73 + $0x8] sm:$0xff]
    %v3433 = vld [vmem:[%s73 + $0x10] sm:$0xff]
    %v3434 = vld [vmem:[%s73 + $0x18] sm:$0xff]
    %v3435 = vld [vmem:[#allocation14] sm:$0x1]
    %v3437 = vperm.slane %v3435, 0
    %v3440 = vsel %vm850, %v3429, 0
    %v3443 = vsel %vm850, %v3430, 0
    %3445 = vmatpush.msra.mxu0 0.0
    %3446 = vmatpush.msra.mxu0 0.0
    %3447 = vmatpush.msra.mxu0 0.0
    %3448 = vmatpush.msra.mxu0 0.0
    %3449 = vmatpush.msra.mxu0 0.0
    %3450 = vmatpush.msra.mxu0 0.0
    %3451 = vmatpush.msra.mxu0 0.0
    %3452 = vmatpush.msra.mxu0 0.0
    %3453 = vmatpush.msra.mxu0 0.0
    %3454 = vmatpush.msra.mxu0 0.0
    %3455 = vmatpush.msra.mxu0 0.0
    %3456 = vmatpush.msra.mxu0 0.0
    %3457 = vmatpush.msra.mxu0 %v3434
    %3458 = vmatpush.msra.mxu0 %v3433
    %3459 = vmatpush.msra.mxu0 %v3432
    %3460 = vmatpush.msra.mxu0 %v3431
    %3461 = vmatmul.f32.gmra.mxu0 %v3440
    %v3462 = vpop.f32.mrf.mxu0
    %v3463 = vadd.f32 %v3437, %v3462
    %3464 = vmatmul.f32.gmra.mxu0 %v3443
    %v3465 = vpop.f32.mrf.mxu0
    %v3466 = vadd.f32 %v3437, %v3465
    %3467 = vdwg.mxu0
    %v3468 = vld [vmem:[%s77] sm:$0xff]
    %v3469 = vld [vmem:[%s77 + $0x8] sm:$0xff]
    %v3470 = vld [vmem:[%s77 + $0x10] sm:$0xff]
    %v3471 = vld [vmem:[%s77 + $0x18] sm:$0xff]
    %v3472 = vld [vmem:[#allocation16] sm:$0x1]
    %v3474 = vperm.slane %v3472, 0
    %v3477 = vsel %vm850, %v2684, 0
    %v3480 = vsel %vm850, %v2685, 0
    %3482 = vmatpush.msra.mxu0 0.0
    %3483 = vmatpush.msra.mxu0 0.0
    %3484 = vmatpush.msra.mxu0 0.0
    %3485 = vmatpush.msra.mxu0 0.0
    %3486 = vmatpush.msra.mxu0 0.0
    %3487 = vmatpush.msra.mxu0 0.0
    %3488 = vmatpush.msra.mxu0 0.0
    %3489 = vmatpush.msra.mxu0 0.0
    %3490 = vmatpush.msra.mxu0 0.0
    %3491 = vmatpush.msra.mxu0 0.0
    %3492 = vmatpush.msra.mxu0 0.0
    %3493 = vmatpush.msra.mxu0 0.0
    %3494 = vmatpush.msra.mxu0 %v3471
    %3495 = vmatpush.msra.mxu0 %v3470
    %3496 = vmatpush.msra.mxu0 %v3469
    %3497 = vmatpush.msra.mxu0 %v3468
    %3498 = vmatmul.f32.gmra.mxu0 %v3477
    %v3499 = vpop.f32.mrf.mxu0
    %v3500 = vadd.f32 %v3474, %v3499
    %3501 = vmatmul.f32.gmra.mxu0 %v3480
    %v3502 = vpop.f32.mrf.mxu0
    %v3503 = vadd.f32 %v3474, %v3502
    %3504 = vdwg.mxu0
    %v3505 = vld [vmem:[%s81] sm:$0xff]
    %v3506 = vld [vmem:[%s81 + $0x8] sm:$0xff]
    %v3507 = vld [vmem:[%s81 + $0x10] sm:$0xff]
    %v3508 = vld [vmem:[%s81 + $0x18] sm:$0xff]
    %v3509 = vld [vmem:[#allocation17] sm:$0x1]
    %v3511 = vsel %vm888, %v3463, 0
    %v3514 = vsel %vm888, %v3500, 0
    %3516 = vmatpush.xpose.msra.mxu0 0.0
    %3517 = vmatpush.xpose.msra.mxu0 0.0
    %3518 = vmatpush.xpose.msra.mxu0 0.0
    %3519 = vmatpush.xpose.msra.mxu0 0.0
    %3520 = vmatpush.xpose.msra.mxu0 0.0
    %3521 = vmatpush.xpose.msra.mxu0 0.0
    %3522 = vmatpush.xpose.msra.mxu0 0.0
    %3523 = vmatpush.xpose.msra.mxu0 0.0
    %3524 = vmatpush.xpose.msra.mxu0 0.0
    %3525 = vmatpush.xpose.msra.mxu0 0.0
    %3526 = vmatpush.xpose.msra.mxu0 0.0
    %3527 = vmatpush.xpose.msra.mxu0 0.0
    %3528 = vmatpush.xpose.msra.mxu0 0.0
    %3529 = vmatpush.xpose.msra.mxu0 0.0
    %3530 = vmatpush.xpose.msra.mxu0 0.0
    %3531 = vmatpush.xpose.msra.mxu0 %v3514
    %3532 = vmatmul.f32.gmra.mxu0 %v3511
    %v3533 = vpop.f32.mrf.mxu0
    %v3534 = vadd.f32 0.0, %v3533
    %3535 = vdwg.mxu0
    %v3537 = vsel %vm888, %v3466, 0
    %v3540 = vsel %vm888, %v3503, 0
    %3542 = vmatpush.xpose.msra.mxu0 0.0
    %3543 = vmatpush.xpose.msra.mxu0 0.0
    %3544 = vmatpush.xpose.msra.mxu0 0.0
    %3545 = vmatpush.xpose.msra.mxu0 0.0
    %3546 = vmatpush.xpose.msra.mxu0 0.0
    %3547 = vmatpush.xpose.msra.mxu0 0.0
    %3548 = vmatpush.xpose.msra.mxu0 0.0
    %3549 = vmatpush.xpose.msra.mxu0 0.0
    %3550 = vmatpush.xpose.msra.mxu0 0.0
    %3551 = vmatpush.xpose.msra.mxu0 0.0
    %3552 = vmatpush.xpose.msra.mxu0 0.0
    %3553 = vmatpush.xpose.msra.mxu0 0.0
    %3554 = vmatpush.xpose.msra.mxu0 0.0
    %3555 = vmatpush.xpose.msra.mxu0 0.0
    %3556 = vmatpush.xpose.msra.mxu0 0.0
    %3557 = vmatpush.xpose.msra.mxu0 %v3540
    %3558 = vmatmul.f32.gmra.mxu0 %v3537
    %v3559 = vpop.f32.mrf.mxu0
    %v3560 = vadd.f32 0.0, %v3559
    %3561 = vdwg.mxu0
    %v3562 = vmul.f32 %v3534, 0.35355338
    %v3563 = vmul.f32 %v3560, 0.35355338
    %v3564 = vsel %vm888, %v3562, -inf
    %3565 = vmax.xlane.f32.xlu0 %v3564
    %v3566 = vpop.xlane.xlu0 %3565
    %v3567 = vsel %vm888, %v3563, -inf
    %3568 = vmax.xlane.f32.xlu0 %v3567
    %v3569 = vpop.xlane.xlu0 %3568
    %v3570 = vsub.f32 %v3562, %v3566
    %v3571 = vsub.f32 %v3563, %v3569
    %v3572 = vmul.f32 %v3570, 1.442695
    %v3573 = vpow.pop %v3572
    %v3574 = vmul.f32 %v3571, 1.442695
    %v3575 = vpow.pop %v3574
    %v3576 = vsel %vm888, %v3573, 0.0
    %3577 = vadd.xlane.f32.xlu0 %v3576
    %v3578 = vpop.xlane.xlu0 %3577
    %v3579 = vsel %vm888, %v3575, 0.0
    %3580 = vadd.xlane.f32.xlu0 %v3579
    %v3581 = vpop.xlane.xlu0 %3580
    %v3582 = vrcp.pop %v3578
    %v3583 = vrcp.pop %v3581
    %v3584 = vmul.f32 %v3573, %v3582
    %v3585 = vmul.f32 %v3575, %v3583
    %3586 = vrot.lane.b32.xlu0 %v3500, 96
    %v3587 = vpop.permute.xlu0 %3586
    %v3590 = vsel %vm888, %v3584, 0
    %3592 = vmatpush.msra.mxu0 0.0
    %3593 = vmatpush.msra.mxu0 0.0
    %3594 = vmatpush.msra.mxu0 0.0
    %3595 = vmatpush.msra.mxu0 0.0
    %3596 = vmatpush.msra.mxu0 0.0
    %3597 = vmatpush.msra.mxu0 0.0
    %3598 = vmatpush.msra.mxu0 0.0
    %3599 = vmatpush.msra.mxu0 0.0
    %3600 = vmatpush.msra.mxu0 0.0
    %3601 = vmatpush.msra.mxu0 0.0
    %3602 = vmatpush.msra.mxu0 0.0
    %3603 = vmatpush.msra.mxu0 0.0
    %3604 = vmatpush.msra.mxu0 0.0
    %3605 = vmatpush.msra.mxu0 0.0
    %3606 = vmatpush.msra.mxu0 0.0
    %3607 = vmatpush.msra.mxu0 %v3587
    %3608 = vmatmul.f32.gmra.mxu0 %v3590
    %v3609 = vpop.f32.mrf.mxu0
    %v3610 = vadd.f32 0.0, %v3609
    %3611 = vdwg.mxu0
    %3612 = vrot.lane.b32.xlu0 %v3503, 96
    %v3613 = vpop.permute.xlu0 %3612
    %v3616 = vsel %vm888, %v3585, 0
    %3618 = vmatpush.msra.mxu0 0.0
    %3619 = vmatpush.msra.mxu0 0.0
    %3620 = vmatpush.msra.mxu0 0.0
    %3621 = vmatpush.msra.mxu0 0.0
    %3622 = vmatpush.msra.mxu0 0.0
    %3623 = vmatpush.msra.mxu0 0.0
    %3624 = vmatpush.msra.mxu0 0.0
    %3625 = vmatpush.msra.mxu0 0.0
    %3626 = vmatpush.msra.mxu0 0.0
    %3627 = vmatpush.msra.mxu0 0.0
    %3628 = vmatpush.msra.mxu0 0.0
    %3629 = vmatpush.msra.mxu0 0.0
    %3630 = vmatpush.msra.mxu0 0.0
    %3631 = vmatpush.msra.mxu0 0.0
    %3632 = vmatpush.msra.mxu0 0.0
    %3633 = vmatpush.msra.mxu0 %v3613
    %3634 = vmatmul.f32.gmra.mxu0 %v3616
    %v3635 = vpop.f32.mrf.mxu0
    %v3636 = vadd.f32 0.0, %v3635
    %3637 = vdwg.mxu0
    %3638 = vrot.lane.b32.xlu0 %v3463, 120
    %v3639 = vpop.permute.xlu0 %3638
    %3640 = vrot.lane.b32.xlu0 %v3500, 120
    %v3641 = vpop.permute.xlu0 %3640
    %v3642 = vsel %vm888, %v3639, 0
    %v3644 = vsel %vm888, %v3641, 0
    %3646 = vmatpush.xpose.msra.mxu0 0.0
    %3647 = vmatpush.xpose.msra.mxu0 0.0
    %3648 = vmatpush.xpose.msra.mxu0 0.0
    %3649 = vmatpush.xpose.msra.mxu0 0.0
    %3650 = vmatpush.xpose.msra.mxu0 0.0
    %3651 = vmatpush.xpose.msra.mxu0 0.0
    %3652 = vmatpush.xpose.msra.mxu0 0.0
    %3653 = vmatpush.xpose.msra.mxu0 0.0
    %3654 = vmatpush.xpose.msra.mxu0 0.0
    %3655 = vmatpush.xpose.msra.mxu0 0.0
    %3656 = vmatpush.xpose.msra.mxu0 0.0
    %3657 = vmatpush.xpose.msra.mxu0 0.0
    %3658 = vmatpush.xpose.msra.mxu0 0.0
    %3659 = vmatpush.xpose.msra.mxu0 0.0
    %3660 = vmatpush.xpose.msra.mxu0 0.0
    %3661 = vmatpush.xpose.msra.mxu0 %v3644
    %3662 = vmatmul.f32.gmra.mxu0 %v3642
    %v3663 = vpop.f32.mrf.mxu0
    %v3664 = vadd.f32 0.0, %v3663
    %3665 = vdwg.mxu0
    %3666 = vrot.lane.b32.xlu0 %v3466, 120
    %v3667 = vpop.permute.xlu0 %3666
    %3668 = vrot.lane.b32.xlu0 %v3503, 120
    %v3669 = vpop.permute.xlu0 %3668
    %v3670 = vsel %vm888, %v3667, 0
    %v3672 = vsel %vm888, %v3669, 0
    %3674 = vmatpush.xpose.msra.mxu0 0.0
    %3675 = vmatpush.xpose.msra.mxu0 0.0
    %3676 = vmatpush.xpose.msra.mxu0 0.0
    %3677 = vmatpush.xpose.msra.mxu0 0.0
    %3678 = vmatpush.xpose.msra.mxu0 0.0
    %3679 = vmatpush.xpose.msra.mxu0 0.0
    %3680 = vmatpush.xpose.msra.mxu0 0.0
    %3681 = vmatpush.xpose.msra.mxu0 0.0
    %3682 = vmatpush.xpose.msra.mxu0 0.0
    %3683 = vmatpush.xpose.msra.mxu0 0.0
    %3684 = vmatpush.xpose.msra.mxu0 0.0
    %3685 = vmatpush.xpose.msra.mxu0 0.0
    %3686 = vmatpush.xpose.msra.mxu0 0.0
    %3687 = vmatpush.xpose.msra.mxu0 0.0
    %3688 = vmatpush.xpose.msra.mxu0 0.0
    %3689 = vmatpush.xpose.msra.mxu0 %v3672
    %3690 = vmatmul.f32.gmra.mxu0 %v3670
    %v3691 = vpop.f32.mrf.mxu0
    %v3692 = vadd.f32 0.0, %v3691
    %3693 = vdwg.mxu0
    %v3694 = vmul.f32 %v3664, 0.35355338
    %v3695 = vmul.f32 %v3692, 0.35355338
    %v3696 = vsel %vm888, %v3694, -inf
    %3697 = vmax.xlane.f32.xlu0 %v3696
    %v3698 = vpop.xlane.xlu0 %3697
    %v3699 = vsel %vm888, %v3695, -inf
    %3700 = vmax.xlane.f32.xlu0 %v3699
    %v3701 = vpop.xlane.xlu0 %3700
    %v3702 = vsub.f32 %v3694, %v3698
    %v3703 = vsub.f32 %v3695, %v3701
    %v3704 = vmul.f32 %v3702, 1.442695
    %v3705 = vpow.pop %v3704
    %v3706 = vmul.f32 %v3703, 1.442695
    %v3707 = vpow.pop %v3706
    %v3708 = vsel %vm888, %v3705, 0.0
    %3709 = vadd.xlane.f32.xlu0 %v3708
    %v3710 = vpop.xlane.xlu0 %3709
    %v3711 = vsel %vm888, %v3707, 0.0
    %3712 = vadd.xlane.f32.xlu0 %v3711
    %v3713 = vpop.xlane.xlu0 %3712
    %v3714 = vrcp.pop %v3710
    %v3715 = vrcp.pop %v3713
    %v3716 = vmul.f32 %v3705, %v3714
    %v3717 = vmul.f32 %v3707, %v3715
    %3718 = vrot.lane.b32.xlu0 %v3500, 88
    %v3719 = vpop.permute.xlu0 %3718
    %v3722 = vsel %vm888, %v3716, 0
    %3724 = vmatpush.msra.mxu0 0.0
    %3725 = vmatpush.msra.mxu0 0.0
    %3726 = vmatpush.msra.mxu0 0.0
    %3727 = vmatpush.msra.mxu0 0.0
    %3728 = vmatpush.msra.mxu0 0.0
    %3729 = vmatpush.msra.mxu0 0.0
    %3730 = vmatpush.msra.mxu0 0.0
    %3731 = vmatpush.msra.mxu0 0.0
    %3732 = vmatpush.msra.mxu0 0.0
    %3733 = vmatpush.msra.mxu0 0.0
    %3734 = vmatpush.msra.mxu0 0.0
    %3735 = vmatpush.msra.mxu0 0.0
    %3736 = vmatpush.msra.mxu0 0.0
    %3737 = vmatpush.msra.mxu0 0.0
    %3738 = vmatpush.msra.mxu0 0.0
    %3739 = vmatpush.msra.mxu0 %v3719
    %3740 = vmatmul.f32.gmra.mxu0 %v3722
    %v3741 = vpop.f32.mrf.mxu0
    %v3742 = vadd.f32 0.0, %v3741
    %3743 = vdwg.mxu0
    %3744 = vrot.lane.b32.xlu0 %v3503, 88
    %v3745 = vpop.permute.xlu0 %3744
    %v3748 = vsel %vm888, %v3717, 0
    %3750 = vmatpush.msra.mxu0 0.0
    %3751 = vmatpush.msra.mxu0 0.0
    %3752 = vmatpush.msra.mxu0 0.0
    %3753 = vmatpush.msra.mxu0 0.0
    %3754 = vmatpush.msra.mxu0 0.0
    %3755 = vmatpush.msra.mxu0 0.0
    %3756 = vmatpush.msra.mxu0 0.0
    %3757 = vmatpush.msra.mxu0 0.0
    %3758 = vmatpush.msra.mxu0 0.0
    %3759 = vmatpush.msra.mxu0 0.0
    %3760 = vmatpush.msra.mxu0 0.0
    %3761 = vmatpush.msra.mxu0 0.0
    %3762 = vmatpush.msra.mxu0 0.0
    %3763 = vmatpush.msra.mxu0 0.0
    %3764 = vmatpush.msra.mxu0 0.0
    %3765 = vmatpush.msra.mxu0 %v3745
    %3766 = vmatmul.f32.gmra.mxu0 %v3748
    %v3767 = vpop.f32.mrf.mxu0
    %v3768 = vadd.f32 0.0, %v3767
    %3769 = vdwg.mxu0
    %v3771 = vsel %vm888, %v3742, 0
    %v3774 = vsel %vm888, %v3768, 0
    %3776 = vmatpush.msra.mxu0 0.0
    %3777 = vmatpush.msra.mxu0 0.0
    %3778 = vmatpush.msra.mxu0 0.0
    %3779 = vmatpush.msra.mxu0 0.0
    %3780 = vmatpush.msra.mxu0 0.0
    %3781 = vmatpush.msra.mxu0 0.0
    %3782 = vmatpush.msra.mxu0 0.0
    %3783 = vmatpush.msra.mxu0 0.0
    %3784 = vmatpush.msra.mxu0 0.0
    %3785 = vmatpush.msra.mxu0 0.0
    %3786 = vmatpush.msra.mxu0 0.0
    %3787 = vmatpush.msra.mxu0 0.0
    %3788 = vmatpush.msra.mxu0 0.0
    %3789 = vmatpush.msra.mxu0 0.0
    %3790 = vmatpush.msra.mxu0 0.0
    %3791 = vmatpush.msra.mxu0 %v3506
    %3792 = vmatmul.f32.gmra.mxu0 %v3771
    %v3793 = vpop.f32.mrf.mxu0
    %v3794 = vadd.f32 0.0, %v3793
    %3795 = vmatmul.f32.gmra.mxu0 %v3774
    %v3796 = vpop.f32.mrf.mxu0
    %v3797 = vadd.f32 0.0, %v3796
    %3798 = vdwg.mxu0
    %v3800 = vsel %vm888, %v3610, 0
    %v3803 = vsel %vm888, %v3636, 0
    %3805 = vmatpush.msra.mxu0 0.0
    %3806 = vmatpush.msra.mxu0 0.0
    %3807 = vmatpush.msra.mxu0 0.0
    %3808 = vmatpush.msra.mxu0 0.0
    %3809 = vmatpush.msra.mxu0 0.0
    %3810 = vmatpush.msra.mxu0 0.0
    %3811 = vmatpush.msra.mxu0 0.0
    %3812 = vmatpush.msra.mxu0 0.0
    %3813 = vmatpush.msra.mxu0 0.0
    %3814 = vmatpush.msra.mxu0 0.0
    %3815 = vmatpush.msra.mxu0 0.0
    %3816 = vmatpush.msra.mxu0 0.0
    %3817 = vmatpush.msra.mxu0 0.0
    %3818 = vmatpush.msra.mxu0 0.0
    %3819 = vmatpush.msra.mxu0 0.0
    %3820 = vmatpush.msra.mxu0 %v3505
    %3821 = vmatmul.f32.gmra.mxu0 %v3800
    %v3822 = vpop.f32.mrf.mxu0
    %v3823 = vadd.f32 %v3794, %v3822
    %3824 = vmatmul.f32.gmra.mxu0 %v3803
    %v3825 = vpop.f32.mrf.mxu0
    %v3826 = vadd.f32 %v3797, %v3825
    %3827 = vdwg.mxu0
    %3828 = vrot.lane.b32.xlu0 %v3463, 112
    %v3829 = vpop.permute.xlu0 %3828
    %3830 = vrot.lane.b32.xlu0 %v3500, 112
    %v3831 = vpop.permute.xlu0 %3830
    %v3832 = vsel %vm888, %v3829, 0
    %v3834 = vsel %vm888, %v3831, 0
    %3836 = vmatpush.xpose.msra.mxu0 0.0
    %3837 = vmatpush.xpose.msra.mxu0 0.0
    %3838 = vmatpush.xpose.msra.mxu0 0.0
    %3839 = vmatpush.xpose.msra.mxu0 0.0
    %3840 = vmatpush.xpose.msra.mxu0 0.0
    %3841 = vmatpush.xpose.msra.mxu0 0.0
    %3842 = vmatpush.xpose.msra.mxu0 0.0
    %3843 = vmatpush.xpose.msra.mxu0 0.0
    %3844 = vmatpush.xpose.msra.mxu0 0.0
    %3845 = vmatpush.xpose.msra.mxu0 0.0
    %3846 = vmatpush.xpose.msra.mxu0 0.0
    %3847 = vmatpush.xpose.msra.mxu0 0.0
    %3848 = vmatpush.xpose.msra.mxu0 0.0
    %3849 = vmatpush.xpose.msra.mxu0 0.0
    %3850 = vmatpush.xpose.msra.mxu0 0.0
    %3851 = vmatpush.xpose.msra.mxu0 %v3834
    %3852 = vmatmul.f32.gmra.mxu0 %v3832
    %v3853 = vpop.f32.mrf.mxu0
    %v3854 = vadd.f32 0.0, %v3853
    %3855 = vdwg.mxu0
    %3856 = vrot.lane.b32.xlu0 %v3466, 112
    %v3857 = vpop.permute.xlu0 %3856
    %3858 = vrot.lane.b32.xlu0 %v3503, 112
    %v3859 = vpop.permute.xlu0 %3858
    %v3860 = vsel %vm888, %v3857, 0
    %v3862 = vsel %vm888, %v3859, 0
    %3864 = vmatpush.xpose.msra.mxu0 0.0
    %3865 = vmatpush.xpose.msra.mxu0 0.0
    %3866 = vmatpush.xpose.msra.mxu0 0.0
    %3867 = vmatpush.xpose.msra.mxu0 0.0
    %3868 = vmatpush.xpose.msra.mxu0 0.0
    %3869 = vmatpush.xpose.msra.mxu0 0.0
    %3870 = vmatpush.xpose.msra.mxu0 0.0
    %3871 = vmatpush.xpose.msra.mxu0 0.0
    %3872 = vmatpush.xpose.msra.mxu0 0.0
    %3873 = vmatpush.xpose.msra.mxu0 0.0
    %3874 = vmatpush.xpose.msra.mxu0 0.0
    %3875 = vmatpush.xpose.msra.mxu0 0.0
    %3876 = vmatpush.xpose.msra.mxu0 0.0
    %3877 = vmatpush.xpose.msra.mxu0 0.0
    %3878 = vmatpush.xpose.msra.mxu0 0.0
    %3879 = vmatpush.xpose.msra.mxu0 %v3862
    %3880 = vmatmul.f32.gmra.mxu0 %v3860
    %v3881 = vpop.f32.mrf.mxu0
    %v3882 = vadd.f32 0.0, %v3881
    %3883 = vdwg.mxu0
    %v3884 = vmul.f32 %v3854, 0.35355338
    %v3885 = vmul.f32 %v3882, 0.35355338
    %v3886 = vsel %vm888, %v3884, -inf
    %3887 = vmax.xlane.f32.xlu0 %v3886
    %v3888 = vpop.xlane.xlu0 %3887
    %v3889 = vsel %vm888, %v3885, -inf
    %3890 = vmax.xlane.f32.xlu0 %v3889
    %v3891 = vpop.xlane.xlu0 %3890
    %v3892 = vsub.f32 %v3884, %v3888
    %v3893 = vsub.f32 %v3885, %v3891
    %v3894 = vmul.f32 %v3892, 1.442695
    %v3895 = vpow.pop %v3894
    %v3896 = vmul.f32 %v3893, 1.442695
    %v3897 = vpow.pop %v3896
    %v3898 = vsel %vm888, %v3895, 0.0
    %3899 = vadd.xlane.f32.xlu0 %v3898
    %v3900 = vpop.xlane.xlu0 %3899
    %v3901 = vsel %vm888, %v3897, 0.0
    %3902 = vadd.xlane.f32.xlu0 %v3901
    %v3903 = vpop.xlane.xlu0 %3902
    %v3904 = vrcp.pop %v3900
    %v3905 = vrcp.pop %v3903
    %v3906 = vmul.f32 %v3895, %v3904
    %v3907 = vmul.f32 %v3897, %v3905
    %3908 = vrot.lane.b32.xlu0 %v3500, 80
    %v3909 = vpop.permute.xlu0 %3908
    %v3912 = vsel %vm888, %v3906, 0
    %3914 = vmatpush.msra.mxu0 0.0
    %3915 = vmatpush.msra.mxu0 0.0
    %3916 = vmatpush.msra.mxu0 0.0
    %3917 = vmatpush.msra.mxu0 0.0
    %3918 = vmatpush.msra.mxu0 0.0
    %3919 = vmatpush.msra.mxu0 0.0
    %3920 = vmatpush.msra.mxu0 0.0
    %3921 = vmatpush.msra.mxu0 0.0
    %3922 = vmatpush.msra.mxu0 0.0
    %3923 = vmatpush.msra.mxu0 0.0
    %3924 = vmatpush.msra.mxu0 0.0
    %3925 = vmatpush.msra.mxu0 0.0
    %3926 = vmatpush.msra.mxu0 0.0
    %3927 = vmatpush.msra.mxu0 0.0
    %3928 = vmatpush.msra.mxu0 0.0
    %3929 = vmatpush.msra.mxu0 %v3909
    %3930 = vmatmul.f32.gmra.mxu0 %v3912
    %v3931 = vpop.f32.mrf.mxu0
    %v3932 = vadd.f32 0.0, %v3931
    %3933 = vdwg.mxu0
    %3934 = vrot.lane.b32.xlu0 %v3503, 80
    %v3935 = vpop.permute.xlu0 %3934
    %v3938 = vsel %vm888, %v3907, 0
    %3940 = vmatpush.msra.mxu0 0.0
    %3941 = vmatpush.msra.mxu0 0.0
    %3942 = vmatpush.msra.mxu0 0.0
    %3943 = vmatpush.msra.mxu0 0.0
    %3944 = vmatpush.msra.mxu0 0.0
    %3945 = vmatpush.msra.mxu0 0.0
    %3946 = vmatpush.msra.mxu0 0.0
    %3947 = vmatpush.msra.mxu0 0.0
    %3948 = vmatpush.msra.mxu0 0.0
    %3949 = vmatpush.msra.mxu0 0.0
    %3950 = vmatpush.msra.mxu0 0.0
    %3951 = vmatpush.msra.mxu0 0.0
    %3952 = vmatpush.msra.mxu0 0.0
    %3953 = vmatpush.msra.mxu0 0.0
    %3954 = vmatpush.msra.mxu0 0.0
    %3955 = vmatpush.msra.mxu0 %v3935
    %3956 = vmatmul.f32.gmra.mxu0 %v3938
    %v3957 = vpop.f32.mrf.mxu0
    %v3958 = vadd.f32 0.0, %v3957
    %3959 = vdwg.mxu0
    %v3961 = vsel %vm888, %v3932, 0
    %v3964 = vsel %vm888, %v3958, 0
    %3966 = vmatpush.msra.mxu0 0.0
    %3967 = vmatpush.msra.mxu0 0.0
    %3968 = vmatpush.msra.mxu0 0.0
    %3969 = vmatpush.msra.mxu0 0.0
    %3970 = vmatpush.msra.mxu0 0.0
    %3971 = vmatpush.msra.mxu0 0.0
    %3972 = vmatpush.msra.mxu0 0.0
    %3973 = vmatpush.msra.mxu0 0.0
    %3974 = vmatpush.msra.mxu0 0.0
    %3975 = vmatpush.msra.mxu0 0.0
    %3976 = vmatpush.msra.mxu0 0.0
    %3977 = vmatpush.msra.mxu0 0.0
    %3978 = vmatpush.msra.mxu0 0.0
    %3979 = vmatpush.msra.mxu0 0.0
    %3980 = vmatpush.msra.mxu0 0.0
    %3981 = vmatpush.msra.mxu0 %v3507
    %3982 = vmatmul.f32.gmra.mxu0 %v3961
    %v3983 = vpop.f32.mrf.mxu0
    %v3984 = vadd.f32 0.0, %v3983
    %3985 = vmatmul.f32.gmra.mxu0 %v3964
    %v3986 = vpop.f32.mrf.mxu0
    %v3987 = vadd.f32 0.0, %v3986
    %3988 = vdwg.mxu0
    %v3989 = vadd.f32 %v3823, %v3984
    %v3990 = vadd.f32 %v3826, %v3987
    %3991 = vrot.lane.b32.xlu0 %v3463, 104
    %v3992 = vpop.permute.xlu0 %3991
    %3993 = vrot.lane.b32.xlu0 %v3500, 104
    %v3994 = vpop.permute.xlu0 %3993
    %v3995 = vsel %vm888, %v3992, 0
    %v3997 = vsel %vm888, %v3994, 0
    %3999 = vmatpush.xpose.msra.mxu0 0.0
    %4000 = vmatpush.xpose.msra.mxu0 0.0
    %4001 = vmatpush.xpose.msra.mxu0 0.0
    %4002 = vmatpush.xpose.msra.mxu0 0.0
    %4003 = vmatpush.xpose.msra.mxu0 0.0
    %4004 = vmatpush.xpose.msra.mxu0 0.0
    %4005 = vmatpush.xpose.msra.mxu0 0.0
    %4006 = vmatpush.xpose.msra.mxu0 0.0
    %4007 = vmatpush.xpose.msra.mxu0 0.0
    %4008 = vmatpush.xpose.msra.mxu0 0.0
    %4009 = vmatpush.xpose.msra.mxu0 0.0
    %4010 = vmatpush.xpose.msra.mxu0 0.0
    %4011 = vmatpush.xpose.msra.mxu0 0.0
    %4012 = vmatpush.xpose.msra.mxu0 0.0
    %4013 = vmatpush.xpose.msra.mxu0 0.0
    %4014 = vmatpush.xpose.msra.mxu0 %v3997
    %4015 = vmatmul.f32.gmra.mxu0 %v3995
    %v4016 = vpop.f32.mrf.mxu0
    %v4017 = vadd.f32 0.0, %v4016
    %4018 = vdwg.mxu0
    %4019 = vrot.lane.b32.xlu0 %v3466, 104
    %v4020 = vpop.permute.xlu0 %4019
    %4021 = vrot.lane.b32.xlu0 %v3503, 104
    %v4022 = vpop.permute.xlu0 %4021
    %v4023 = vsel %vm888, %v4020, 0
    %v4025 = vsel %vm888, %v4022, 0
    %4027 = vmatpush.xpose.msra.mxu0 0.0
    %4028 = vmatpush.xpose.msra.mxu0 0.0
    %4029 = vmatpush.xpose.msra.mxu0 0.0
    %4030 = vmatpush.xpose.msra.mxu0 0.0
    %4031 = vmatpush.xpose.msra.mxu0 0.0
    %4032 = vmatpush.xpose.msra.mxu0 0.0
    %4033 = vmatpush.xpose.msra.mxu0 0.0
    %4034 = vmatpush.xpose.msra.mxu0 0.0
    %4035 = vmatpush.xpose.msra.mxu0 0.0
    %4036 = vmatpush.xpose.msra.mxu0 0.0
    %4037 = vmatpush.xpose.msra.mxu0 0.0
    %4038 = vmatpush.xpose.msra.mxu0 0.0
    %4039 = vmatpush.xpose.msra.mxu0 0.0
    %4040 = vmatpush.xpose.msra.mxu0 0.0
    %4041 = vmatpush.xpose.msra.mxu0 0.0
    %4042 = vmatpush.xpose.msra.mxu0 %v4025
    %4043 = vmatmul.f32.gmra.mxu0 %v4023
    %v4044 = vpop.f32.mrf.mxu0
    %v4045 = vadd.f32 0.0, %v4044
    %4046 = vdwg.mxu0
    %v4047 = vmul.f32 %v4017, 0.35355338
    %v4048 = vmul.f32 %v4045, 0.35355338
    %v4049 = vsel %vm888, %v4047, -inf
    %4050 = vmax.xlane.f32.xlu0 %v4049
    %v4051 = vpop.xlane.xlu0 %4050
    %v4052 = vsel %vm888, %v4048, -inf
    %4053 = vmax.xlane.f32.xlu0 %v4052
    %v4054 = vpop.xlane.xlu0 %4053
    %v4055 = vsub.f32 %v4047, %v4051
    %v4056 = vsub.f32 %v4048, %v4054
    %v4057 = vmul.f32 %v4055, 1.442695
    %v4058 = vpow.pop %v4057
    %v4059 = vmul.f32 %v4056, 1.442695
    %v4060 = vpow.pop %v4059
    %v4061 = vsel %vm888, %v4058, 0.0
    %4062 = vadd.xlane.f32.xlu0 %v4061
    %v4063 = vpop.xlane.xlu0 %4062
    %v4064 = vsel %vm888, %v4060, 0.0
    %4065 = vadd.xlane.f32.xlu0 %v4064
    %v4066 = vpop.xlane.xlu0 %4065
    %v4067 = vrcp.pop %v4063
    %v4068 = vrcp.pop %v4066
    %v4069 = vmul.f32 %v4058, %v4067
    %v4070 = vmul.f32 %v4060, %v4068
    %4071 = vrot.lane.b32.xlu0 %v3500, 72
    %v4072 = vpop.permute.xlu0 %4071
    %v4075 = vsel %vm888, %v4069, 0
    %4077 = vmatpush.msra.mxu0 0.0
    %4078 = vmatpush.msra.mxu0 0.0
    %4079 = vmatpush.msra.mxu0 0.0
    %4080 = vmatpush.msra.mxu0 0.0
    %4081 = vmatpush.msra.mxu0 0.0
    %4082 = vmatpush.msra.mxu0 0.0
    %4083 = vmatpush.msra.mxu0 0.0
    %4084 = vmatpush.msra.mxu0 0.0
    %4085 = vmatpush.msra.mxu0 0.0
    %4086 = vmatpush.msra.mxu0 0.0
    %4087 = vmatpush.msra.mxu0 0.0
    %4088 = vmatpush.msra.mxu0 0.0
    %4089 = vmatpush.msra.mxu0 0.0
    %4090 = vmatpush.msra.mxu0 0.0
    %4091 = vmatpush.msra.mxu0 0.0
    %4092 = vmatpush.msra.mxu0 %v4072
    %4093 = vmatmul.f32.gmra.mxu0 %v4075
    %v4094 = vpop.f32.mrf.mxu0
    %v4095 = vadd.f32 0.0, %v4094
    %4096 = vdwg.mxu0
    %4097 = vrot.lane.b32.xlu0 %v3503, 72
    %v4098 = vpop.permute.xlu0 %4097
    %v4101 = vsel %vm888, %v4070, 0
    %4103 = vmatpush.msra.mxu0 0.0
    %4104 = vmatpush.msra.mxu0 0.0
    %4105 = vmatpush.msra.mxu0 0.0
    %4106 = vmatpush.msra.mxu0 0.0
    %4107 = vmatpush.msra.mxu0 0.0
    %4108 = vmatpush.msra.mxu0 0.0
    %4109 = vmatpush.msra.mxu0 0.0
    %4110 = vmatpush.msra.mxu0 0.0
    %4111 = vmatpush.msra.mxu0 0.0
    %4112 = vmatpush.msra.mxu0 0.0
    %4113 = vmatpush.msra.mxu0 0.0
    %4114 = vmatpush.msra.mxu0 0.0
    %4115 = vmatpush.msra.mxu0 0.0
    %4116 = vmatpush.msra.mxu0 0.0
    %4117 = vmatpush.msra.mxu0 0.0
    %4118 = vmatpush.msra.mxu0 %v4098
    %4119 = vmatmul.f32.gmra.mxu0 %v4101
    %v4120 = vpop.f32.mrf.mxu0
    %v4121 = vadd.f32 0.0, %v4120
    %4122 = vdwg.mxu0
    %v4124 = vsel %vm888, %v4095, 0
    %v4127 = vsel %vm888, %v4121, 0
    %4129 = vmatpush.msra.mxu0 0.0
    %4130 = vmatpush.msra.mxu0 0.0
    %4131 = vmatpush.msra.mxu0 0.0
    %4132 = vmatpush.msra.mxu0 0.0
    %4133 = vmatpush.msra.mxu0 0.0
    %4134 = vmatpush.msra.mxu0 0.0
    %4135 = vmatpush.msra.mxu0 0.0
    %4136 = vmatpush.msra.mxu0 0.0
    %4137 = vmatpush.msra.mxu0 0.0
    %4138 = vmatpush.msra.mxu0 0.0
    %4139 = vmatpush.msra.mxu0 0.0
    %4140 = vmatpush.msra.mxu0 0.0
    %4141 = vmatpush.msra.mxu0 0.0
    %4142 = vmatpush.msra.mxu0 0.0
    %4143 = vmatpush.msra.mxu0 0.0
    %4144 = vmatpush.msra.mxu0 %v3508
    %4145 = vmatmul.f32.gmra.mxu0 %v4124
    %v4146 = vpop.f32.mrf.mxu0
    %v4147 = vadd.f32 0.0, %v4146
    %4148 = vmatmul.f32.gmra.mxu0 %v4127
    %v4149 = vpop.f32.mrf.mxu0
    %v4150 = vadd.f32 0.0, %v4149
    %4151 = vdwg.mxu0
    %v4152 = vadd.f32 %v3989, %v4147
    %v4153 = vadd.f32 %v3990, %v4150
    %v4155 = vperm.slane %v3509, 0
    %v4157 = vadd.f32 %v4152, %v4155
    %v4158 = vadd.f32 %v4153, %v4155
    %v4159 = vadd.f32 %v3429, %v4157
    %v4160 = vadd.f32 %v3430, %v4158
    %v4161 = vld [vmem:[#allocation19] sm:$0x1]
    %v4162 = vld [vmem:[#allocation20] sm:$0x1]
    %v4163 = vsel %vm850, %v4159, 0.0
    %4164 = vadd.xlane.f32.xlu0 %v4163
    %v4165 = vpop.xlane.xlu0 %4164
    %v4166 = vsel %vm850, %v4160, 0.0
    %4167 = vadd.xlane.f32.xlu0 %v4166
    %v4168 = vpop.xlane.xlu0 %4167
    %v4169 = vmul.f32 %v4165, %v1553
    %v4170 = vmul.f32 %v4168, %v1553
    %v4171 = vsub.f32 %v4159, %v4169
    %v4172 = vsub.f32 %v4160, %v4170
    %v4173 = vmul.f32 %v4171, %v4171
    %v4174 = vmul.f32 %v4172, %v4172
    %v4175 = vsel %vm850, %v4173, 0.0
    %4176 = vadd.xlane.f32.xlu0 %v4175
    %v4177 = vpop.xlane.xlu0 %4176
    %v4178 = vsel %vm850, %v4174, 0.0
    %4179 = vadd.xlane.f32.xlu0 %v4178
    %v4180 = vpop.xlane.xlu0 %4179
    %v4181 = vmul.f32 %v4177, %v1553
    %v4182 = vmul.f32 %v4180, %v1553
    %v4183 = vadd.f32 %v4181, 1e-05
    %v4184 = vadd.f32 %v4182, 1e-05
    %v4185 = vrsqrt.pop %v4183
    %v4186 = vmul.f32 %v4185, %v4183
    %v4187 = vmul.f32 %v4186, %v4185
    %v4188 = vmul.f32 0.5, %v4187
    %v4189 = vsub.f32 1.5, %v4188
    %v4190 = vmul.f32 %v4185, %v4189
    %vm4191 = vweird.f32 %v4183
    %vm4192 = vweird.f32 %v4185
    %vm4193 = vmor %vm4191, %vm4192
    %v4194 = vsel %vm4193, %v4185, %v4190
    %v4195 = vrsqrt.pop %v4184
    %v4196 = vmul.f32 %v4195, %v4184
    %v4197 = vmul.f32 %v4196, %v4195
    %v4198 = vmul.f32 0.5, %v4197
    %v4199 = vsub.f32 1.5, %v4198
    %v4200 = vmul.f32 %v4195, %v4199
    %vm4201 = vweird.f32 %v4184
    %vm4202 = vweird.f32 %v4195
    %vm4203 = vmor %vm4201, %vm4202
    %v4204 = vsel %vm4203, %v4195, %v4200
    %v4205 = vmul.f32 %v4171, %v4194
    %v4206 = vmul.f32 %v4172, %v4204
    %v4208 = vperm.slane %v4161, 0
    %v4210 = vmul.f32 %v4205, %v4208
    %v4211 = vmul.f32 %v4206, %v4208
    %v4213 = vperm.slane %v4162, 0
    %v4215 = vadd.f32 %v4210, %v4213
    %v4216 = vadd.f32 %v4211, %v4213
    %v4217 = vld [vmem:[%s89] sm:$0xff]
    %v4218 = vld [vmem:[%s89 + $0x8] sm:$0xff]
    %v4219 = vld [vmem:[%s89 + $0x10] sm:$0xff]
    %v4220 = vld [vmem:[%s89 + $0x18] sm:$0xff]
    %v4221 = vld [vmem:[#allocation22] sm:$0x1]
    %v4223 = vperm.slane %v4221, 0
    %v4226 = vsel %vm850, %v4215, 0
    %v4229 = vsel %vm850, %v4216, 0
    %4231 = vmatpush.msra.mxu0 0.0
    %4232 = vmatpush.msra.mxu0 0.0
    %4233 = vmatpush.msra.mxu0 0.0
    %4234 = vmatpush.msra.mxu0 0.0
    %4235 = vmatpush.msra.mxu0 0.0
    %4236 = vmatpush.msra.mxu0 0.0
    %4237 = vmatpush.msra.mxu0 0.0
    %4238 = vmatpush.msra.mxu0 0.0
    %4239 = vmatpush.msra.mxu0 0.0
    %4240 = vmatpush.msra.mxu0 0.0
    %4241 = vmatpush.msra.mxu0 0.0
    %4242 = vmatpush.msra.mxu0 0.0
    %4243 = vmatpush.msra.mxu0 %v4220
    %4244 = vmatpush.msra.mxu0 %v4219
    %4245 = vmatpush.msra.mxu0 %v4218
    %4246 = vmatpush.msra.mxu0 %v4217
    %4247 = vmatmul.f32.gmra.mxu0 %v4226
    %v4248 = vpop.f32.mrf.mxu0
    %v4249 = vadd.f32 %v4223, %v4248
    %4250 = vmatmul.f32.gmra.mxu0 %v4229
    %v4251 = vpop.f32.mrf.mxu0
    %v4252 = vadd.f32 %v4223, %v4251
    %4253 = vdwg.mxu0
    %v4254 = vmax.f32 %v4249, 0.0
    %v4255 = vmax.f32 %v4252, 0.0
    %v4256 = vld [vmem:[%s93] sm:$0xff]
    %v4257 = vld [vmem:[%s93 + $0x8] sm:$0xff]
    %v4258 = vld [vmem:[%s93 + $0x10] sm:$0xff]
    %v4259 = vld [vmem:[%s93 + $0x18] sm:$0xff]
    %v4260 = vld [vmem:[%s93 + $0x20] sm:$0xff]
    %v4261 = vld [vmem:[%s93 + $0x28] sm:$0xff]
    %v4262 = vld [vmem:[%s93 + $0x30] sm:$0xff]
    %v4263 = vld [vmem:[%s93 + $0x38] sm:$0xff]
    %v4264 = vld [vmem:[#allocation23] sm:$0x1]
    %v4266 = vperm.slane %v4264, 0
    %v4269 = vsel %vm1653, %v4254, 0
    %v4272 = vsel %vm1653, %v4255, 0
    %4274 = vmatpush.msra.mxu0 0.0
    %4275 = vmatpush.msra.mxu0 0.0
    %4276 = vmatpush.msra.mxu0 0.0
    %4277 = vmatpush.msra.mxu0 0.0
    %4278 = vmatpush.msra.mxu0 0.0
    %4279 = vmatpush.msra.mxu0 0.0
    %4280 = vmatpush.msra.mxu0 0.0
    %4281 = vmatpush.msra.mxu0 0.0
    %4282 = vmatpush.msra.mxu0 %v4263
    %4283 = vmatpush.msra.mxu0 %v4262
    %4284 = vmatpush.msra.mxu0 %v4261
    %4285 = vmatpush.msra.mxu0 %v4260
    %4286 = vmatpush.msra.mxu0 %v4259
    %4287 = vmatpush.msra.mxu0 %v4258
    %4288 = vmatpush.msra.mxu0 %v4257
    %4289 = vmatpush.msra.mxu0 %v4256
    %4290 = vmatmul.f32.gmra.mxu0 %v4269
    %v4291 = vpop.f32.mrf.mxu0
    %v4292 = vadd.f32 %v4266, %v4291
    %4293 = vmatmul.f32.gmra.mxu0 %v4272
    %v4294 = vpop.f32.mrf.mxu0
    %v4295 = vadd.f32 %v4266, %v4294
    %4296 = vdwg.mxu0
    %v4297 = vadd.f32 %v4215, %v4292
    %v4298 = vadd.f32 %v4216, %v4295
    %v4299 = vld [vmem:[#allocation25] sm:$0x1]
    %v4300 = vld [vmem:[#allocation26] sm:$0x1]
    %v4301 = vsel %vm850, %v4297, 0.0
    %4302 = vadd.xlane.f32.xlu0 %v4301
    %v4303 = vpop.xlane.xlu0 %4302
    %v4304 = vsel %vm850, %v4298, 0.0
    %4305 = vadd.xlane.f32.xlu0 %v4304
    %v4306 = vpop.xlane.xlu0 %4305
    %v4307 = vmul.f32 %v4303, %v1553
    %v4308 = vmul.f32 %v4306, %v1553
    %v4309 = vsub.f32 %v4297, %v4307
    %v4310 = vsub.f32 %v4298, %v4308
    %v4311 = vmul.f32 %v4309, %v4309
    %v4312 = vmul.f32 %v4310, %v4310
    %v4313 = vsel %vm850, %v4311, 0.0
    %4314 = vadd.xlane.f32.xlu0 %v4313
    %v4315 = vpop.xlane.xlu0 %4314
    %v4316 = vsel %vm850, %v4312, 0.0
    %4317 = vadd.xlane.f32.xlu0 %v4316
    %v4318 = vpop.xlane.xlu0 %4317
    %v4319 = vmul.f32 %v4315, %v1553
    %v4320 = vmul.f32 %v4318, %v1553
    %v4321 = vadd.f32 %v4319, 1e-05
    %v4322 = vadd.f32 %v4320, 1e-05
    %v4323 = vrsqrt.pop %v4321
    %v4324 = vmul.f32 %v4323, %v4321
    %v4325 = vmul.f32 %v4324, %v4323
    %v4326 = vmul.f32 0.5, %v4325
    %v4327 = vsub.f32 1.5, %v4326
    %v4328 = vmul.f32 %v4323, %v4327
    %vm4329 = vweird.f32 %v4321
    %vm4330 = vweird.f32 %v4323
    %vm4331 = vmor %vm4329, %vm4330
    %v4332 = vsel %vm4331, %v4323, %v4328
    %v4333 = vrsqrt.pop %v4322
    %v4334 = vmul.f32 %v4333, %v4322
    %v4335 = vmul.f32 %v4334, %v4333
    %v4336 = vmul.f32 0.5, %v4335
    %v4337 = vsub.f32 1.5, %v4336
    %v4338 = vmul.f32 %v4333, %v4337
    %vm4339 = vweird.f32 %v4322
    %vm4340 = vweird.f32 %v4333
    %vm4341 = vmor %vm4339, %vm4340
    %v4342 = vsel %vm4341, %v4333, %v4338
    %v4343 = vmul.f32 %v4309, %v4332
    %v4344 = vmul.f32 %v4310, %v4342
    %v4346 = vperm.slane %v4299, 0
    %v4348 = vmul.f32 %v4343, %v4346
    %v4349 = vmul.f32 %v4344, %v4346
    %v4351 = vperm.slane %v4300, 0
    %v4353 = vadd.f32 %v4348, %v4351
    %v4354 = vadd.f32 %v4349, %v4351
    %v4355 = vld [vmem:[%s101] sm:$0xff]
    %v4356 = vld [vmem:[%s101 + $0x8] sm:$0xff]
    %v4357 = vld [vmem:[%s101 + $0x10] sm:$0xff]
    %v4358 = vld [vmem:[%s101 + $0x18] sm:$0xff]
    %v4359 = vld [vmem:[#allocation28] sm:$0x1]
    %v4361 = vperm.slane %v4359, 0
    %v4364 = vsel %vm850, %v4353, 0
    %v4367 = vsel %vm850, %v4354, 0
    %4369 = vmatpush.msra.mxu0 0.0
    %4370 = vmatpush.msra.mxu0 0.0
    %4371 = vmatpush.msra.mxu0 0.0
    %4372 = vmatpush.msra.mxu0 0.0
    %4373 = vmatpush.msra.mxu0 0.0
    %4374 = vmatpush.msra.mxu0 0.0
    %4375 = vmatpush.msra.mxu0 0.0
    %4376 = vmatpush.msra.mxu0 0.0
    %4377 = vmatpush.msra.mxu0 0.0
    %4378 = vmatpush.msra.mxu0 0.0
    %4379 = vmatpush.msra.mxu0 0.0
    %4380 = vmatpush.msra.mxu0 0.0
    %4381 = vmatpush.msra.mxu0 %v4358
    %4382 = vmatpush.msra.mxu0 %v4357
    %4383 = vmatpush.msra.mxu0 %v4356
    %4384 = vmatpush.msra.mxu0 %v4355
    %4385 = vmatmul.f32.gmra.mxu0 %v4364
    %v4386 = vpop.f32.mrf.mxu0
    %v4387 = vadd.f32 %v4361, %v4386
    %4388 = vmatmul.f32.gmra.mxu0 %v4367
    %v4389 = vpop.f32.mrf.mxu0
    %v4390 = vadd.f32 %v4361, %v4389
    %4391 = vdwg.mxu0
    %v4392 = vld [vmem:[%s105] sm:$0xff]
    %v4393 = vld [vmem:[%s105 + $0x8] sm:$0xff]
    %v4394 = vld [vmem:[%s105 + $0x10] sm:$0xff]
    %v4395 = vld [vmem:[%s105 + $0x18] sm:$0xff]
    %v4396 = vld [vmem:[#allocation29] sm:$0x1]
    %4398 = vrot.lane.b32.xlu0 %v4387, 96
    %v4399 = vpop.permute.xlu0 %4398
    %v4400 = vsel %vm888, %v4387, 0
    %v4402 = vsel %vm888, %v4399, 0
    %4404 = vmatpush.xpose.msra.mxu0 0.0
    %4405 = vmatpush.xpose.msra.mxu0 0.0
    %4406 = vmatpush.xpose.msra.mxu0 0.0
    %4407 = vmatpush.xpose.msra.mxu0 0.0
    %4408 = vmatpush.xpose.msra.mxu0 0.0
    %4409 = vmatpush.xpose.msra.mxu0 0.0
    %4410 = vmatpush.xpose.msra.mxu0 0.0
    %4411 = vmatpush.xpose.msra.mxu0 0.0
    %4412 = vmatpush.xpose.msra.mxu0 0.0
    %4413 = vmatpush.xpose.msra.mxu0 0.0
    %4414 = vmatpush.xpose.msra.mxu0 0.0
    %4415 = vmatpush.xpose.msra.mxu0 0.0
    %4416 = vmatpush.xpose.msra.mxu0 0.0
    %4417 = vmatpush.xpose.msra.mxu0 0.0
    %4418 = vmatpush.xpose.msra.mxu0 0.0
    %4419 = vmatpush.xpose.msra.mxu0 %v4402
    %4420 = vmatmul.f32.gmra.mxu0 %v4400
    %v4421 = vpop.f32.mrf.mxu0
    %v4422 = vadd.f32 0.0, %v4421
    %4423 = vdwg.mxu0
    %4425 = vrot.lane.b32.xlu0 %v4390, 96
    %v4426 = vpop.permute.xlu0 %4425
    %v4427 = vsel %vm888, %v4390, 0
    %v4429 = vsel %vm888, %v4426, 0
    %4431 = vmatpush.xpose.msra.mxu0 0.0
    %4432 = vmatpush.xpose.msra.mxu0 0.0
    %4433 = vmatpush.xpose.msra.mxu0 0.0
    %4434 = vmatpush.xpose.msra.mxu0 0.0
    %4435 = vmatpush.xpose.msra.mxu0 0.0
    %4436 = vmatpush.xpose.msra.mxu0 0.0
    %4437 = vmatpush.xpose.msra.mxu0 0.0
    %4438 = vmatpush.xpose.msra.mxu0 0.0
    %4439 = vmatpush.xpose.msra.mxu0 0.0
    %4440 = vmatpush.xpose.msra.mxu0 0.0
    %4441 = vmatpush.xpose.msra.mxu0 0.0
    %4442 = vmatpush.xpose.msra.mxu0 0.0
    %4443 = vmatpush.xpose.msra.mxu0 0.0
    %4444 = vmatpush.xpose.msra.mxu0 0.0
    %4445 = vmatpush.xpose.msra.mxu0 0.0
    %4446 = vmatpush.xpose.msra.mxu0 %v4429
    %4447 = vmatmul.f32.gmra.mxu0 %v4427
    %v4448 = vpop.f32.mrf.mxu0
    %v4449 = vadd.f32 0.0, %v4448
    %4450 = vdwg.mxu0
    %v4451 = vmul.f32 %v4422, 0.35355338
    %v4452 = vmul.f32 %v4449, 0.35355338
    %v4453 = vsel %vm888, %v4451, -inf
    %4454 = vmax.xlane.f32.xlu0 %v4453
    %v4455 = vpop.xlane.xlu0 %4454
    %v4456 = vsel %vm888, %v4452, -inf
    %4457 = vmax.xlane.f32.xlu0 %v4456
    %v4458 = vpop.xlane.xlu0 %4457
    %v4459 = vsub.f32 %v4451, %v4455
    %v4460 = vsub.f32 %v4452, %v4458
    %v4461 = vmul.f32 %v4459, 1.442695
    %v4462 = vpow.pop %v4461
    %v4463 = vmul.f32 %v4460, 1.442695
    %v4464 = vpow.pop %v4463
    %v4465 = vsel %vm888, %v4462, 0.0
    %4466 = vadd.xlane.f32.xlu0 %v4465
    %v4467 = vpop.xlane.xlu0 %4466
    %v4468 = vsel %vm888, %v4464, 0.0
    %4469 = vadd.xlane.f32.xlu0 %v4468
    %v4470 = vpop.xlane.xlu0 %4469
    %v4471 = vrcp.pop %v4467
    %v4472 = vrcp.pop %v4470
    %v4473 = vmul.f32 %v4462, %v4471
    %v4474 = vmul.f32 %v4464, %v4472
    %4475 = vrot.lane.b32.xlu0 %v4387, 64
    %v4476 = vpop.permute.xlu0 %4475
    %v4479 = vsel %vm888, %v4473, 0
    %4481 = vmatpush.msra.mxu0 0.0
    %4482 = vmatpush.msra.mxu0 0.0
    %4483 = vmatpush.msra.mxu0 0.0
    %4484 = vmatpush.msra.mxu0 0.0
    %4485 = vmatpush.msra.mxu0 0.0
    %4486 = vmatpush.msra.mxu0 0.0
    %4487 = vmatpush.msra.mxu0 0.0
    %4488 = vmatpush.msra.mxu0 0.0
    %4489 = vmatpush.msra.mxu0 0.0
    %4490 = vmatpush.msra.mxu0 0.0
    %4491 = vmatpush.msra.mxu0 0.0
    %4492 = vmatpush.msra.mxu0 0.0
    %4493 = vmatpush.msra.mxu0 0.0
    %4494 = vmatpush.msra.mxu0 0.0
    %4495 = vmatpush.msra.mxu0 0.0
    %4496 = vmatpush.msra.mxu0 %v4476
    %4497 = vmatmul.f32.gmra.mxu0 %v4479
    %v4498 = vpop.f32.mrf.mxu0
    %v4499 = vadd.f32 0.0, %v4498
    %4500 = vdwg.mxu0
    %4501 = vrot.lane.b32.xlu0 %v4390, 64
    %v4502 = vpop.permute.xlu0 %4501
    %v4505 = vsel %vm888, %v4474, 0
    %4507 = vmatpush.msra.mxu0 0.0
    %4508 = vmatpush.msra.mxu0 0.0
    %4509 = vmatpush.msra.mxu0 0.0
    %4510 = vmatpush.msra.mxu0 0.0
    %4511 = vmatpush.msra.mxu0 0.0
    %4512 = vmatpush.msra.mxu0 0.0
    %4513 = vmatpush.msra.mxu0 0.0
    %4514 = vmatpush.msra.mxu0 0.0
    %4515 = vmatpush.msra.mxu0 0.0
    %4516 = vmatpush.msra.mxu0 0.0
    %4517 = vmatpush.msra.mxu0 0.0
    %4518 = vmatpush.msra.mxu0 0.0
    %4519 = vmatpush.msra.mxu0 0.0
    %4520 = vmatpush.msra.mxu0 0.0
    %4521 = vmatpush.msra.mxu0 0.0
    %4522 = vmatpush.msra.mxu0 %v4502
    %4523 = vmatmul.f32.gmra.mxu0 %v4505
    %v4524 = vpop.f32.mrf.mxu0
    %v4525 = vadd.f32 0.0, %v4524
    %4526 = vdwg.mxu0
    %4527 = vrot.lane.b32.xlu0 %v4387, 120
    %v4528 = vpop.permute.xlu0 %4527
    %4529 = vrot.lane.b32.xlu0 %v4387, 88
    %v4530 = vpop.permute.xlu0 %4529
    %v4531 = vsel %vm888, %v4528, 0
    %v4533 = vsel %vm888, %v4530, 0
    %4535 = vmatpush.xpose.msra.mxu0 0.0
    %4536 = vmatpush.xpose.msra.mxu0 0.0
    %4537 = vmatpush.xpose.msra.mxu0 0.0
    %4538 = vmatpush.xpose.msra.mxu0 0.0
    %4539 = vmatpush.xpose.msra.mxu0 0.0
    %4540 = vmatpush.xpose.msra.mxu0 0.0
    %4541 = vmatpush.xpose.msra.mxu0 0.0
    %4542 = vmatpush.xpose.msra.mxu0 0.0
    %4543 = vmatpush.xpose.msra.mxu0 0.0
    %4544 = vmatpush.xpose.msra.mxu0 0.0
    %4545 = vmatpush.xpose.msra.mxu0 0.0
    %4546 = vmatpush.xpose.msra.mxu0 0.0
    %4547 = vmatpush.xpose.msra.mxu0 0.0
    %4548 = vmatpush.xpose.msra.mxu0 0.0
    %4549 = vmatpush.xpose.msra.mxu0 0.0
    %4550 = vmatpush.xpose.msra.mxu0 %v4533
    %4551 = vmatmul.f32.gmra.mxu0 %v4531
    %v4552 = vpop.f32.mrf.mxu0
    %v4553 = vadd.f32 0.0, %v4552
    %4554 = vdwg.mxu0
    %4555 = vrot.lane.b32.xlu0 %v4390, 120
    %v4556 = vpop.permute.xlu0 %4555
    %4557 = vrot.lane.b32.xlu0 %v4390, 88
    %v4558 = vpop.permute.xlu0 %4557
    %v4559 = vsel %vm888, %v4556, 0
    %v4561 = vsel %vm888, %v4558, 0
    %4563 = vmatpush.xpose.msra.mxu0 0.0
    %4564 = vmatpush.xpose.msra.mxu0 0.0
    %4565 = vmatpush.xpose.msra.mxu0 0.0
    %4566 = vmatpush.xpose.msra.mxu0 0.0
    %4567 = vmatpush.xpose.msra.mxu0 0.0
    %4568 = vmatpush.xpose.msra.mxu0 0.0
    %4569 = vmatpush.xpose.msra.mxu0 0.0
    %4570 = vmatpush.xpose.msra.mxu0 0.0
    %4571 = vmatpush.xpose.msra.mxu0 0.0
    %4572 = vmatpush.xpose.msra.mxu0 0.0
    %4573 = vmatpush.xpose.msra.mxu0 0.0
    %4574 = vmatpush.xpose.msra.mxu0 0.0
    %4575 = vmatpush.xpose.msra.mxu0 0.0
    %4576 = vmatpush.xpose.msra.mxu0 0.0
    %4577 = vmatpush.xpose.msra.mxu0 0.0
    %4578 = vmatpush.xpose.msra.mxu0 %v4561
    %4579 = vmatmul.f32.gmra.mxu0 %v4559
    %v4580 = vpop.f32.mrf.mxu0
    %v4581 = vadd.f32 0.0, %v4580
    %4582 = vdwg.mxu0
    %v4583 = vmul.f32 %v4553, 0.35355338
    %v4584 = vmul.f32 %v4581, 0.35355338
    %v4585 = vsel %vm888, %v4583, -inf
    %4586 = vmax.xlane.f32.xlu0 %v4585
    %v4587 = vpop.xlane.xlu0 %4586
    %v4588 = vsel %vm888, %v4584, -inf
    %4589 = vmax.xlane.f32.xlu0 %v4588
    %v4590 = vpop.xlane.xlu0 %4589
    %v4591 = vsub.f32 %v4583, %v4587
    %v4592 = vsub.f32 %v4584, %v4590
    %v4593 = vmul.f32 %v4591, 1.442695
    %v4594 = vpow.pop %v4593
    %v4595 = vmul.f32 %v4592, 1.442695
    %v4596 = vpow.pop %v4595
    %v4597 = vsel %vm888, %v4594, 0.0
    %4598 = vadd.xlane.f32.xlu0 %v4597
    %v4599 = vpop.xlane.xlu0 %4598
    %v4600 = vsel %vm888, %v4596, 0.0
    %4601 = vadd.xlane.f32.xlu0 %v4600
    %v4602 = vpop.xlane.xlu0 %4601
    %v4603 = vrcp.pop %v4599
    %v4604 = vrcp.pop %v4602
    %v4605 = vmul.f32 %v4594, %v4603
    %v4606 = vmul.f32 %v4596, %v4604
    %4607 = vrot.lane.b32.xlu0 %v4387, 56
    %v4608 = vpop.permute.xlu0 %4607
    %v4611 = vsel %vm888, %v4605, 0
    %4613 = vmatpush.msra.mxu0 0.0
    %4614 = vmatpush.msra.mxu0 0.0
    %4615 = vmatpush.msra.mxu0 0.0
    %4616 = vmatpush.msra.mxu0 0.0
    %4617 = vmatpush.msra.mxu0 0.0
    %4618 = vmatpush.msra.mxu0 0.0
    %4619 = vmatpush.msra.mxu0 0.0
    %4620 = vmatpush.msra.mxu0 0.0
    %4621 = vmatpush.msra.mxu0 0.0
    %4622 = vmatpush.msra.mxu0 0.0
    %4623 = vmatpush.msra.mxu0 0.0
    %4624 = vmatpush.msra.mxu0 0.0
    %4625 = vmatpush.msra.mxu0 0.0
    %4626 = vmatpush.msra.mxu0 0.0
    %4627 = vmatpush.msra.mxu0 0.0
    %4628 = vmatpush.msra.mxu0 %v4608
    %4629 = vmatmul.f32.gmra.mxu0 %v4611
    %v4630 = vpop.f32.mrf.mxu0
    %v4631 = vadd.f32 0.0, %v4630
    %4632 = vdwg.mxu0
    %4633 = vrot.lane.b32.xlu0 %v4390, 56
    %v4634 = vpop.permute.xlu0 %4633
    %v4637 = vsel %vm888, %v4606, 0
    %4639 = vmatpush.msra.mxu0 0.0
    %4640 = vmatpush.msra.mxu0 0.0
    %4641 = vmatpush.msra.mxu0 0.0
    %4642 = vmatpush.msra.mxu0 0.0
    %4643 = vmatpush.msra.mxu0 0.0
    %4644 = vmatpush.msra.mxu0 0.0
    %4645 = vmatpush.msra.mxu0 0.0
    %4646 = vmatpush.msra.mxu0 0.0
    %4647 = vmatpush.msra.mxu0 0.0
    %4648 = vmatpush.msra.mxu0 0.0
    %4649 = vmatpush.msra.mxu0 0.0
    %4650 = vmatpush.msra.mxu0 0.0
    %4651 = vmatpush.msra.mxu0 0.0
    %4652 = vmatpush.msra.mxu0 0.0
    %4653 = vmatpush.msra.mxu0 0.0
    %4654 = vmatpush.msra.mxu0 %v4634
    %4655 = vmatmul.f32.gmra.mxu0 %v4637
    %v4656 = vpop.f32.mrf.mxu0
    %v4657 = vadd.f32 0.0, %v4656
    %4658 = vdwg.mxu0
    %v4660 = vsel %vm888, %v4631, 0
    %v4663 = vsel %vm888, %v4657, 0
    %4665 = vmatpush.msra.mxu0 0.0
    %4666 = vmatpush.msra.mxu0 0.0
    %4667 = vmatpush.msra.mxu0 0.0
    %4668 = vmatpush.msra.mxu0 0.0
    %4669 = vmatpush.msra.mxu0 0.0
    %4670 = vmatpush.msra.mxu0 0.0
    %4671 = vmatpush.msra.mxu0 0.0
    %4672 = vmatpush.msra.mxu0 0.0
    %4673 = vmatpush.msra.mxu0 0.0
    %4674 = vmatpush.msra.mxu0 0.0
    %4675 = vmatpush.msra.mxu0 0.0
    %4676 = vmatpush.msra.mxu0 0.0
    %4677 = vmatpush.msra.mxu0 0.0
    %4678 = vmatpush.msra.mxu0 0.0
    %4679 = vmatpush.msra.mxu0 0.0
    %4680 = vmatpush.msra.mxu0 %v4393
    %4681 = vmatmul.f32.gmra.mxu0 %v4660
    %v4682 = vpop.f32.mrf.mxu0
    %v4683 = vadd.f32 0.0, %v4682
    %4684 = vmatmul.f32.gmra.mxu0 %v4663
    %v4685 = vpop.f32.mrf.mxu0
    %v4686 = vadd.f32 0.0, %v4685
    %4687 = vdwg.mxu0
    %v4689 = vsel %vm888, %v4499, 0
    %v4692 = vsel %vm888, %v4525, 0
    %4694 = vmatpush.msra.mxu0 0.0
    %4695 = vmatpush.msra.mxu0 0.0
    %4696 = vmatpush.msra.mxu0 0.0
    %4697 = vmatpush.msra.mxu0 0.0
    %4698 = vmatpush.msra.mxu0 0.0
    %4699 = vmatpush.msra.mxu0 0.0
    %4700 = vmatpush.msra.mxu0 0.0
    %4701 = vmatpush.msra.mxu0 0.0
    %4702 = vmatpush.msra.mxu0 0.0
    %4703 = vmatpush.msra.mxu0 0.0
    %4704 = vmatpush.msra.mxu0 0.0
    %4705 = vmatpush.msra.mxu0 0.0
    %4706 = vmatpush.msra.mxu0 0.0
    %4707 = vmatpush.msra.mxu0 0.0
    %4708 = vmatpush.msra.mxu0 0.0
    %4709 = vmatpush.msra.mxu0 %v4392
    %4710 = vmatmul.f32.gmra.mxu0 %v4689
    %v4711 = vpop.f32.mrf.mxu0
    %v4712 = vadd.f32 %v4683, %v4711
    %4713 = vmatmul.f32.gmra.mxu0 %v4692
    %v4714 = vpop.f32.mrf.mxu0
    %v4715 = vadd.f32 %v4686, %v4714
    %4716 = vdwg.mxu0
    %4717 = vrot.lane.b32.xlu0 %v4387, 112
    %v4718 = vpop.permute.xlu0 %4717
    %4719 = vrot.lane.b32.xlu0 %v4387, 80
    %v4720 = vpop.permute.xlu0 %4719
    %v4721 = vsel %vm888, %v4718, 0
    %v4723 = vsel %vm888, %v4720, 0
    %4725 = vmatpush.xpose.msra.mxu0 0.0
    %4726 = vmatpush.xpose.msra.mxu0 0.0
    %4727 = vmatpush.xpose.msra.mxu0 0.0
    %4728 = vmatpush.xpose.msra.mxu0 0.0
    %4729 = vmatpush.xpose.msra.mxu0 0.0
    %4730 = vmatpush.xpose.msra.mxu0 0.0
    %4731 = vmatpush.xpose.msra.mxu0 0.0
    %4732 = vmatpush.xpose.msra.mxu0 0.0
    %4733 = vmatpush.xpose.msra.mxu0 0.0
    %4734 = vmatpush.xpose.msra.mxu0 0.0
    %4735 = vmatpush.xpose.msra.mxu0 0.0
    %4736 = vmatpush.xpose.msra.mxu0 0.0
    %4737 = vmatpush.xpose.msra.mxu0 0.0
    %4738 = vmatpush.xpose.msra.mxu0 0.0
    %4739 = vmatpush.xpose.msra.mxu0 0.0
    %4740 = vmatpush.xpose.msra.mxu0 %v4723
    %4741 = vmatmul.f32.gmra.mxu0 %v4721
    %v4742 = vpop.f32.mrf.mxu0
    %v4743 = vadd.f32 0.0, %v4742
    %4744 = vdwg.mxu0
    %4745 = vrot.lane.b32.xlu0 %v4390, 112
    %v4746 = vpop.permute.xlu0 %4745
    %4747 = vrot.lane.b32.xlu0 %v4390, 80
    %v4748 = vpop.permute.xlu0 %4747
    %v4749 = vsel %vm888, %v4746, 0
    %v4751 = vsel %vm888, %v4748, 0
    %4753 = vmatpush.xpose.msra.mxu0 0.0
    %4754 = vmatpush.xpose.msra.mxu0 0.0
    %4755 = vmatpush.xpose.msra.mxu0 0.0
    %4756 = vmatpush.xpose.msra.mxu0 0.0
    %4757 = vmatpush.xpose.msra.mxu0 0.0
    %4758 = vmatpush.xpose.msra.mxu0 0.0
    %4759 = vmatpush.xpose.msra.mxu0 0.0
    %4760 = vmatpush.xpose.msra.mxu0 0.0
    %4761 = vmatpush.xpose.msra.mxu0 0.0
    %4762 = vmatpush.xpose.msra.mxu0 0.0
    %4763 = vmatpush.xpose.msra.mxu0 0.0
    %4764 = vmatpush.xpose.msra.mxu0 0.0
    %4765 = vmatpush.xpose.msra.mxu0 0.0
    %4766 = vmatpush.xpose.msra.mxu0 0.0
    %4767 = vmatpush.xpose.msra.mxu0 0.0
    %4768 = vmatpush.xpose.msra.mxu0 %v4751
    %4769 = vmatmul.f32.gmra.mxu0 %v4749
    %v4770 = vpop.f32.mrf.mxu0
    %v4771 = vadd.f32 0.0, %v4770
    %4772 = vdwg.mxu0
    %v4773 = vmul.f32 %v4743, 0.35355338
    %v4774 = vmul.f32 %v4771, 0.35355338
    %v4775 = vsel %vm888, %v4773, -inf
    %4776 = vmax.xlane.f32.xlu0 %v4775
    %v4777 = vpop.xlane.xlu0 %4776
    %v4778 = vsel %vm888, %v4774, -inf
    %4779 = vmax.xlane.f32.xlu0 %v4778
    %v4780 = vpop.xlane.xlu0 %4779
    %v4781 = vsub.f32 %v4773, %v4777
    %v4782 = vsub.f32 %v4774, %v4780
    %v4783 = vmul.f32 %v4781, 1.442695
    %v4784 = vpow.pop %v4783
    %v4785 = vmul.f32 %v4782, 1.442695
    %v4786 = vpow.pop %v4785
    %v4787 = vsel %vm888, %v4784, 0.0
    %4788 = vadd.xlane.f32.xlu0 %v4787
    %v4789 = vpop.xlane.xlu0 %4788
    %v4790 = vsel %vm888, %v4786, 0.0
    %4791 = vadd.xlane.f32.xlu0 %v4790
    %v4792 = vpop.xlane.xlu0 %4791
    %v4793 = vrcp.pop %v4789
    %v4794 = vrcp.pop %v4792
    %v4795 = vmul.f32 %v4784, %v4793
    %v4796 = vmul.f32 %v4786, %v4794
    %4797 = vrot.lane.b32.xlu0 %v4387, 48
    %v4798 = vpop.permute.xlu0 %4797
    %v4801 = vsel %vm888, %v4795, 0
    %4803 = vmatpush.msra.mxu0 0.0
    %4804 = vmatpush.msra.mxu0 0.0
    %4805 = vmatpush.msra.mxu0 0.0
    %4806 = vmatpush.msra.mxu0 0.0
    %4807 = vmatpush.msra.mxu0 0.0
    %4808 = vmatpush.msra.mxu0 0.0
    %4809 = vmatpush.msra.mxu0 0.0
    %4810 = vmatpush.msra.mxu0 0.0
    %4811 = vmatpush.msra.mxu0 0.0
    %4812 = vmatpush.msra.mxu0 0.0
    %4813 = vmatpush.msra.mxu0 0.0
    %4814 = vmatpush.msra.mxu0 0.0
    %4815 = vmatpush.msra.mxu0 0.0
    %4816 = vmatpush.msra.mxu0 0.0
    %4817 = vmatpush.msra.mxu0 0.0
    %4818 = vmatpush.msra.mxu0 %v4798
    %4819 = vmatmul.f32.gmra.mxu0 %v4801
    %v4820 = vpop.f32.mrf.mxu0
    %v4821 = vadd.f32 0.0, %v4820
    %4822 = vdwg.mxu0
    %4823 = vrot.lane.b32.xlu0 %v4390, 48
    %v4824 = vpop.permute.xlu0 %4823
    %v4827 = vsel %vm888, %v4796, 0
    %4829 = vmatpush.msra.mxu0 0.0
    %4830 = vmatpush.msra.mxu0 0.0
    %4831 = vmatpush.msra.mxu0 0.0
    %4832 = vmatpush.msra.mxu0 0.0
    %4833 = vmatpush.msra.mxu0 0.0
    %4834 = vmatpush.msra.mxu0 0.0
    %4835 = vmatpush.msra.mxu0 0.0
    %4836 = vmatpush.msra.mxu0 0.0
    %4837 = vmatpush.msra.mxu0 0.0
    %4838 = vmatpush.msra.mxu0 0.0
    %4839 = vmatpush.msra.mxu0 0.0
    %4840 = vmatpush.msra.mxu0 0.0
    %4841 = vmatpush.msra.mxu0 0.0
    %4842 = vmatpush.msra.mxu0 0.0
    %4843 = vmatpush.msra.mxu0 0.0
    %4844 = vmatpush.msra.mxu0 %v4824
    %4845 = vmatmul.f32.gmra.mxu0 %v4827
    %v4846 = vpop.f32.mrf.mxu0
    %v4847 = vadd.f32 0.0, %v4846
    %4848 = vdwg.mxu0
    %v4850 = vsel %vm888, %v4821, 0
    %v4853 = vsel %vm888, %v4847, 0
    %4855 = vmatpush.msra.mxu0 0.0
    %4856 = vmatpush.msra.mxu0 0.0
    %4857 = vmatpush.msra.mxu0 0.0
    %4858 = vmatpush.msra.mxu0 0.0
    %4859 = vmatpush.msra.mxu0 0.0
    %4860 = vmatpush.msra.mxu0 0.0
    %4861 = vmatpush.msra.mxu0 0.0
    %4862 = vmatpush.msra.mxu0 0.0
    %4863 = vmatpush.msra.mxu0 0.0
    %4864 = vmatpush.msra.mxu0 0.0
    %4865 = vmatpush.msra.mxu0 0.0
    %4866 = vmatpush.msra.mxu0 0.0
    %4867 = vmatpush.msra.mxu0 0.0
    %4868 = vmatpush.msra.mxu0 0.0
    %4869 = vmatpush.msra.mxu0 0.0
    %4870 = vmatpush.msra.mxu0 %v4394
    %4871 = vmatmul.f32.gmra.mxu0 %v4850
    %v4872 = vpop.f32.mrf.mxu0
    %v4873 = vadd.f32 0.0, %v4872
    %4874 = vmatmul.f32.gmra.mxu0 %v4853
    %v4875 = vpop.f32.mrf.mxu0
    %v4876 = vadd.f32 0.0, %v4875
    %4877 = vdwg.mxu0
    %v4878 = vadd.f32 %v4712, %v4873
    %v4879 = vadd.f32 %v4715, %v4876
    %4880 = vrot.lane.b32.xlu0 %v4387, 104
    %v4881 = vpop.permute.xlu0 %4880
    %4882 = vrot.lane.b32.xlu0 %v4387, 72
    %v4883 = vpop.permute.xlu0 %4882
    %v4884 = vsel %vm888, %v4881, 0
    %v4886 = vsel %vm888, %v4883, 0
    %4888 = vmatpush.xpose.msra.mxu0 0.0
    %4889 = vmatpush.xpose.msra.mxu0 0.0
    %4890 = vmatpush.xpose.msra.mxu0 0.0
    %4891 = vmatpush.xpose.msra.mxu0 0.0
    %4892 = vmatpush.xpose.msra.mxu0 0.0
    %4893 = vmatpush.xpose.msra.mxu0 0.0
    %4894 = vmatpush.xpose.msra.mxu0 0.0
    %4895 = vmatpush.xpose.msra.mxu0 0.0
    %4896 = vmatpush.xpose.msra.mxu0 0.0
    %4897 = vmatpush.xpose.msra.mxu0 0.0
    %4898 = vmatpush.xpose.msra.mxu0 0.0
    %4899 = vmatpush.xpose.msra.mxu0 0.0
    %4900 = vmatpush.xpose.msra.mxu0 0.0
    %4901 = vmatpush.xpose.msra.mxu0 0.0
    %4902 = vmatpush.xpose.msra.mxu0 0.0
    %4903 = vmatpush.xpose.msra.mxu0 %v4886
    %4904 = vmatmul.f32.gmra.mxu0 %v4884
    %v4905 = vpop.f32.mrf.mxu0
    %v4906 = vadd.f32 0.0, %v4905
    %4907 = vdwg.mxu0
    %4908 = vrot.lane.b32.xlu0 %v4390, 104
    %v4909 = vpop.permute.xlu0 %4908
    %4910 = vrot.lane.b32.xlu0 %v4390, 72
    %v4911 = vpop.permute.xlu0 %4910
    %v4912 = vsel %vm888, %v4909, 0
    %v4914 = vsel %vm888, %v4911, 0
    %4916 = vmatpush.xpose.msra.mxu0 0.0
    %4917 = vmatpush.xpose.msra.mxu0 0.0
    %4918 = vmatpush.xpose.msra.mxu0 0.0
    %4919 = vmatpush.xpose.msra.mxu0 0.0
    %4920 = vmatpush.xpose.msra.mxu0 0.0
    %4921 = vmatpush.xpose.msra.mxu0 0.0
    %4922 = vmatpush.xpose.msra.mxu0 0.0
    %4923 = vmatpush.xpose.msra.mxu0 0.0
    %4924 = vmatpush.xpose.msra.mxu0 0.0
    %4925 = vmatpush.xpose.msra.mxu0 0.0
    %4926 = vmatpush.xpose.msra.mxu0 0.0
    %4927 = vmatpush.xpose.msra.mxu0 0.0
    %4928 = vmatpush.xpose.msra.mxu0 0.0
    %4929 = vmatpush.xpose.msra.mxu0 0.0
    %4930 = vmatpush.xpose.msra.mxu0 0.0
    %4931 = vmatpush.xpose.msra.mxu0 %v4914
    %4932 = vmatmul.f32.gmra.mxu0 %v4912
    %v4933 = vpop.f32.mrf.mxu0
    %v4934 = vadd.f32 0.0, %v4933
    %4935 = vdwg.mxu0
    %v4936 = vmul.f32 %v4906, 0.35355338
    %v4937 = vmul.f32 %v4934, 0.35355338
    %v4938 = vsel %vm888, %v4936, -inf
    %4939 = vmax.xlane.f32.xlu0 %v4938
    %v4940 = vpop.xlane.xlu0 %4939
    %v4941 = vsel %vm888, %v4937, -inf
    %4942 = vmax.xlane.f32.xlu0 %v4941
    %v4943 = vpop.xlane.xlu0 %4942
    %v4944 = vsub.f32 %v4936, %v4940
    %v4945 = vsub.f32 %v4937, %v4943
    %v4946 = vmul.f32 %v4944, 1.442695
    %v4947 = vpow.pop %v4946
    %v4948 = vmul.f32 %v4945, 1.442695
    %v4949 = vpow.pop %v4948
    %v4950 = vsel %vm888, %v4947, 0.0
    %4951 = vadd.xlane.f32.xlu0 %v4950
    %v4952 = vpop.xlane.xlu0 %4951
    %v4953 = vsel %vm888, %v4949, 0.0
    %4954 = vadd.xlane.f32.xlu0 %v4953
    %v4955 = vpop.xlane.xlu0 %4954
    %v4956 = vrcp.pop %v4952
    %v4957 = vrcp.pop %v4955
    %v4958 = vmul.f32 %v4947, %v4956
    %v4959 = vmul.f32 %v4949, %v4957
    %4960 = vrot.lane.b32.xlu0 %v4387, 40
    %v4961 = vpop.permute.xlu0 %4960
    %v4964 = vsel %vm888, %v4958, 0
    %4966 = vmatpush.msra.mxu0 0.0
    %4967 = vmatpush.msra.mxu0 0.0
    %4968 = vmatpush.msra.mxu0 0.0
    %4969 = vmatpush.msra.mxu0 0.0
    %4970 = vmatpush.msra.mxu0 0.0
    %4971 = vmatpush.msra.mxu0 0.0
    %4972 = vmatpush.msra.mxu0 0.0
    %4973 = vmatpush.msra.mxu0 0.0
    %4974 = vmatpush.msra.mxu0 0.0
    %4975 = vmatpush.msra.mxu0 0.0
    %4976 = vmatpush.msra.mxu0 0.0
    %4977 = vmatpush.msra.mxu0 0.0
    %4978 = vmatpush.msra.mxu0 0.0
    %4979 = vmatpush.msra.mxu0 0.0
    %4980 = vmatpush.msra.mxu0 0.0
    %4981 = vmatpush.msra.mxu0 %v4961
    %4982 = vmatmul.f32.gmra.mxu0 %v4964
    %v4983 = vpop.f32.mrf.mxu0
    %v4984 = vadd.f32 0.0, %v4983
    %4985 = vdwg.mxu0
    %4986 = vrot.lane.b32.xlu0 %v4390, 40
    %v4987 = vpop.permute.xlu0 %4986
    %v4990 = vsel %vm888, %v4959, 0
    %4992 = vmatpush.msra.mxu0 0.0
    %4993 = vmatpush.msra.mxu0 0.0
    %4994 = vmatpush.msra.mxu0 0.0
    %4995 = vmatpush.msra.mxu0 0.0
    %4996 = vmatpush.msra.mxu0 0.0
    %4997 = vmatpush.msra.mxu0 0.0
    %4998 = vmatpush.msra.mxu0 0.0
    %4999 = vmatpush.msra.mxu0 0.0
    %5000 = vmatpush.msra.mxu0 0.0
    %5001 = vmatpush.msra.mxu0 0.0
    %5002 = vmatpush.msra.mxu0 0.0
    %5003 = vmatpush.msra.mxu0 0.0
    %5004 = vmatpush.msra.mxu0 0.0
    %5005 = vmatpush.msra.mxu0 0.0
    %5006 = vmatpush.msra.mxu0 0.0
    %5007 = vmatpush.msra.mxu0 %v4987
    %5008 = vmatmul.f32.gmra.mxu0 %v4990
    %v5009 = vpop.f32.mrf.mxu0
    %v5010 = vadd.f32 0.0, %v5009
    %5011 = vdwg.mxu0
    %v5013 = vsel %vm888, %v4984, 0
    %v5016 = vsel %vm888, %v5010, 0
    %5018 = vmatpush.msra.mxu0 0.0
    %5019 = vmatpush.msra.mxu0 0.0
    %5020 = vmatpush.msra.mxu0 0.0
    %5021 = vmatpush.msra.mxu0 0.0
    %5022 = vmatpush.msra.mxu0 0.0
    %5023 = vmatpush.msra.mxu0 0.0
    %5024 = vmatpush.msra.mxu0 0.0
    %5025 = vmatpush.msra.mxu0 0.0
    %5026 = vmatpush.msra.mxu0 0.0
    %5027 = vmatpush.msra.mxu0 0.0
    %5028 = vmatpush.msra.mxu0 0.0
    %5029 = vmatpush.msra.mxu0 0.0
    %5030 = vmatpush.msra.mxu0 0.0
    %5031 = vmatpush.msra.mxu0 0.0
    %5032 = vmatpush.msra.mxu0 0.0
    %5033 = vmatpush.msra.mxu0 %v4395
    %5034 = vmatmul.f32.gmra.mxu0 %v5013
    %v5035 = vpop.f32.mrf.mxu0
    %v5036 = vadd.f32 0.0, %v5035
    %5037 = vmatmul.f32.gmra.mxu0 %v5016
    %v5038 = vpop.f32.mrf.mxu0
    %v5039 = vadd.f32 0.0, %v5038
    %5040 = vdwg.mxu0
    %v5041 = vadd.f32 %v4878, %v5036
    %v5042 = vadd.f32 %v4879, %v5039
    %v5044 = vperm.slane %v4396, 0
    %v5046 = vadd.f32 %v5041, %v5044
    %v5047 = vadd.f32 %v5042, %v5044
    %v5048 = vadd.f32 %v4353, %v5046
    %v5049 = vadd.f32 %v4354, %v5047
    %v5050 = vld [vmem:[#allocation31] sm:$0x1]
    %v5051 = vld [vmem:[#allocation32] sm:$0x1]
    %v5052 = vsel %vm850, %v5048, 0.0
    %5053 = vadd.xlane.f32.xlu0 %v5052
    %v5054 = vpop.xlane.xlu0 %5053
    %v5055 = vsel %vm850, %v5049, 0.0
    %5056 = vadd.xlane.f32.xlu0 %v5055
    %v5057 = vpop.xlane.xlu0 %5056
    %v5058 = vmul.f32 %v5054, %v1553
    %v5059 = vmul.f32 %v5057, %v1553
    %v5060 = vsub.f32 %v5048, %v5058
    %v5061 = vsub.f32 %v5049, %v5059
    %v5062 = vmul.f32 %v5060, %v5060
    %v5063 = vmul.f32 %v5061, %v5061
    %v5064 = vsel %vm850, %v5062, 0.0
    %5065 = vadd.xlane.f32.xlu0 %v5064
    %v5066 = vpop.xlane.xlu0 %5065
    %v5067 = vsel %vm850, %v5063, 0.0
    %5068 = vadd.xlane.f32.xlu0 %v5067
    %v5069 = vpop.xlane.xlu0 %5068
    %v5070 = vmul.f32 %v5066, %v1553
    %v5071 = vmul.f32 %v5069, %v1553
    %v5072 = vadd.f32 %v5070, 1e-05
    %v5073 = vadd.f32 %v5071, 1e-05
    %v5074 = vrsqrt.pop %v5072
    %v5075 = vmul.f32 %v5074, %v5072
    %v5076 = vmul.f32 %v5075, %v5074
    %v5077 = vmul.f32 0.5, %v5076
    %v5078 = vsub.f32 1.5, %v5077
    %v5079 = vmul.f32 %v5074, %v5078
    %vm5080 = vweird.f32 %v5072
    %vm5081 = vweird.f32 %v5074
    %vm5082 = vmor %vm5080, %vm5081
    %v5083 = vsel %vm5082, %v5074, %v5079
    %v5084 = vrsqrt.pop %v5073
    %v5085 = vmul.f32 %v5084, %v5073
    %v5086 = vmul.f32 %v5085, %v5084
    %v5087 = vmul.f32 0.5, %v5086
    %v5088 = vsub.f32 1.5, %v5087
    %v5089 = vmul.f32 %v5084, %v5088
    %vm5090 = vweird.f32 %v5073
    %vm5091 = vweird.f32 %v5084
    %vm5092 = vmor %vm5090, %vm5091
    %v5093 = vsel %vm5092, %v5084, %v5089
    %v5094 = vmul.f32 %v5060, %v5083
    %v5095 = vmul.f32 %v5061, %v5093
    %v5097 = vperm.slane %v5050, 0
    %v5099 = vmul.f32 %v5094, %v5097
    %v5100 = vmul.f32 %v5095, %v5097
    %v5102 = vperm.slane %v5051, 0
    %v5104 = vadd.f32 %v5099, %v5102
    %v5105 = vadd.f32 %v5100, %v5102
    %v5106 = vld [vmem:[%s113] sm:$0xff]
    %v5107 = vld [vmem:[%s113 + $0x8] sm:$0xff]
    %v5108 = vld [vmem:[%s113 + $0x10] sm:$0xff]
    %v5109 = vld [vmem:[%s113 + $0x18] sm:$0xff]
    %v5110 = vld [vmem:[#allocation34] sm:$0x1]
    %v5112 = vperm.slane %v5110, 0
    %v5115 = vsel %vm850, %v5104, 0
    %v5118 = vsel %vm850, %v5105, 0
    %5120 = vmatpush.msra.mxu0 0.0
    %5121 = vmatpush.msra.mxu0 0.0
    %5122 = vmatpush.msra.mxu0 0.0
    %5123 = vmatpush.msra.mxu0 0.0
    %5124 = vmatpush.msra.mxu0 0.0
    %5125 = vmatpush.msra.mxu0 0.0
    %5126 = vmatpush.msra.mxu0 0.0
    %5127 = vmatpush.msra.mxu0 0.0
    %5128 = vmatpush.msra.mxu0 0.0
    %5129 = vmatpush.msra.mxu0 0.0
    %5130 = vmatpush.msra.mxu0 0.0
    %5131 = vmatpush.msra.mxu0 0.0
    %5132 = vmatpush.msra.mxu0 %v5109
    %5133 = vmatpush.msra.mxu0 %v5108
    %5134 = vmatpush.msra.mxu0 %v5107
    %5135 = vmatpush.msra.mxu0 %v5106
    %5136 = vmatmul.f32.gmra.mxu0 %v5115
    %v5137 = vpop.f32.mrf.mxu0
    %v5138 = vadd.f32 %v5112, %v5137
    %5139 = vmatmul.f32.gmra.mxu0 %v5118
    %v5140 = vpop.f32.mrf.mxu0
    %v5141 = vadd.f32 %v5112, %v5140
    %5142 = vdwg.mxu0
    %v5143 = vld [vmem:[%s117] sm:$0xff]
    %v5144 = vld [vmem:[%s117 + $0x8] sm:$0xff]
    %v5145 = vld [vmem:[%s117 + $0x10] sm:$0xff]
    %v5146 = vld [vmem:[%s117 + $0x18] sm:$0xff]
    %v5147 = vld [vmem:[#allocation35] sm:$0x1]
    %v5149 = vperm.slane %v5147, 0
    %5151 = vmatpush.msra.mxu0 0.0
    %5152 = vmatpush.msra.mxu0 0.0
    %5153 = vmatpush.msra.mxu0 0.0
    %5154 = vmatpush.msra.mxu0 0.0
    %5155 = vmatpush.msra.mxu0 0.0
    %5156 = vmatpush.msra.mxu0 0.0
    %5157 = vmatpush.msra.mxu0 0.0
    %5158 = vmatpush.msra.mxu0 0.0
    %5159 = vmatpush.msra.mxu0 0.0
    %5160 = vmatpush.msra.mxu0 0.0
    %5161 = vmatpush.msra.mxu0 0.0
    %5162 = vmatpush.msra.mxu0 0.0
    %5163 = vmatpush.msra.mxu0 %v5146
    %5164 = vmatpush.msra.mxu0 %v5145
    %5165 = vmatpush.msra.mxu0 %v5144
    %5166 = vmatpush.msra.mxu0 %v5143
    %5167 = vmatmul.f32.gmra.mxu0 %v3477
    %v5168 = vpop.f32.mrf.mxu0
    %v5169 = vadd.f32 %v5149, %v5168
    %5170 = vmatmul.f32.gmra.mxu0 %v3480
    %v5171 = vpop.f32.mrf.mxu0
    %v5172 = vadd.f32 %v5149, %v5171
    %5173 = vdwg.mxu0
    %v5174 = vld [vmem:[#allocation37] sm:$0xff]
    %v5175 = vld [vmem:[#allocation37 + $0x8] sm:$0xff]
    %v5176 = vld [vmem:[#allocation37 + $0x10] sm:$0xff]
    %v5177 = vld [vmem:[#allocation37 + $0x18] sm:$0xff]
    %v5178 = vld [vmem:[#allocation38] sm:$0x1]
    %v5180 = vsel %vm888, %v5138, 0
    %v5183 = vsel %vm888, %v5169, 0
    %5185 = vmatpush.xpose.msra.mxu0 0.0
    %5186 = vmatpush.xpose.msra.mxu0 0.0
    %5187 = vmatpush.xpose.msra.mxu0 0.0
    %5188 = vmatpush.xpose.msra.mxu0 0.0
    %5189 = vmatpush.xpose.msra.mxu0 0.0
    %5190 = vmatpush.xpose.msra.mxu0 0.0
    %5191 = vmatpush.xpose.msra.mxu0 0.0
    %5192 = vmatpush.xpose.msra.mxu0 0.0
    %5193 = vmatpush.xpose.msra.mxu0 0.0
    %5194 = vmatpush.xpose.msra.mxu0 0.0
    %5195 = vmatpush.xpose.msra.mxu0 0.0
    %5196 = vmatpush.xpose.msra.mxu0 0.0
    %5197 = vmatpush.xpose.msra.mxu0 0.0
    %5198 = vmatpush.xpose.msra.mxu0 0.0
    %5199 = vmatpush.xpose.msra.mxu0 0.0
    %5200 = vmatpush.xpose.msra.mxu0 %v5183
    %5201 = vmatmul.f32.gmra.mxu0 %v5180
    %v5202 = vpop.f32.mrf.mxu0
    %v5203 = vadd.f32 0.0, %v5202
    %5204 = vdwg.mxu0
    %v5206 = vsel %vm888, %v5141, 0
    %v5209 = vsel %vm888, %v5172, 0
    %5211 = vmatpush.xpose.msra.mxu0 0.0
    %5212 = vmatpush.xpose.msra.mxu0 0.0
    %5213 = vmatpush.xpose.msra.mxu0 0.0
    %5214 = vmatpush.xpose.msra.mxu0 0.0
    %5215 = vmatpush.xpose.msra.mxu0 0.0
    %5216 = vmatpush.xpose.msra.mxu0 0.0
    %5217 = vmatpush.xpose.msra.mxu0 0.0
    %5218 = vmatpush.xpose.msra.mxu0 0.0
    %5219 = vmatpush.xpose.msra.mxu0 0.0
    %5220 = vmatpush.xpose.msra.mxu0 0.0
    %5221 = vmatpush.xpose.msra.mxu0 0.0
    %5222 = vmatpush.xpose.msra.mxu0 0.0
    %5223 = vmatpush.xpose.msra.mxu0 0.0
    %5224 = vmatpush.xpose.msra.mxu0 0.0
    %5225 = vmatpush.xpose.msra.mxu0 0.0
    %5226 = vmatpush.xpose.msra.mxu0 %v5209
    %5227 = vmatmul.f32.gmra.mxu0 %v5206
    %v5228 = vpop.f32.mrf.mxu0
    %v5229 = vadd.f32 0.0, %v5228
    %5230 = vdwg.mxu0
    %v5231 = vmul.f32 %v5203, 0.35355338
    %v5232 = vmul.f32 %v5229, 0.35355338
    %v5233 = vsel %vm888, %v5231, -inf
    %5234 = vmax.xlane.f32.xlu0 %v5233
    %v5235 = vpop.xlane.xlu0 %5234
    %v5236 = vsel %vm888, %v5232, -inf
    %5237 = vmax.xlane.f32.xlu0 %v5236
    %v5238 = vpop.xlane.xlu0 %5237
    %v5239 = vsub.f32 %v5231, %v5235
    %v5240 = vsub.f32 %v5232, %v5238
    %v5241 = vmul.f32 %v5239, 1.442695
    %v5242 = vpow.pop %v5241
    %v5243 = vmul.f32 %v5240, 1.442695
    %v5244 = vpow.pop %v5243
    %v5245 = vsel %vm888, %v5242, 0.0
    %5246 = vadd.xlane.f32.xlu0 %v5245
    %v5247 = vpop.xlane.xlu0 %5246
    %v5248 = vsel %vm888, %v5244, 0.0
    %5249 = vadd.xlane.f32.xlu0 %v5248
    %v5250 = vpop.xlane.xlu0 %5249
    %v5251 = vrcp.pop %v5247
    %v5252 = vrcp.pop %v5250
    %v5253 = vmul.f32 %v5242, %v5251
    %v5254 = vmul.f32 %v5244, %v5252
    %5255 = vrot.lane.b32.xlu0 %v5169, 96
    %v5256 = vpop.permute.xlu0 %5255
    %v5259 = vsel %vm888, %v5253, 0
    %5261 = vmatpush.msra.mxu0 0.0
    %5262 = vmatpush.msra.mxu0 0.0
    %5263 = vmatpush.msra.mxu0 0.0
    %5264 = vmatpush.msra.mxu0 0.0
    %5265 = vmatpush.msra.mxu0 0.0
    %5266 = vmatpush.msra.mxu0 0.0
    %5267 = vmatpush.msra.mxu0 0.0
    %5268 = vmatpush.msra.mxu0 0.0
    %5269 = vmatpush.msra.mxu0 0.0
    %5270 = vmatpush.msra.mxu0 0.0
    %5271 = vmatpush.msra.mxu0 0.0
    %5272 = vmatpush.msra.mxu0 0.0
    %5273 = vmatpush.msra.mxu0 0.0
    %5274 = vmatpush.msra.mxu0 0.0
    %5275 = vmatpush.msra.mxu0 0.0
    %5276 = vmatpush.msra.mxu0 %v5256
    %5277 = vmatmul.f32.gmra.mxu0 %v5259
    %v5278 = vpop.f32.mrf.mxu0
    %v5279 = vadd.f32 0.0, %v5278
    %5280 = vdwg.mxu0
    %5281 = vrot.lane.b32.xlu0 %v5172, 96
    %v5282 = vpop.permute.xlu0 %5281
    %v5285 = vsel %vm888, %v5254, 0
    %5287 = vmatpush.msra.mxu0 0.0
    %5288 = vmatpush.msra.mxu0 0.0
    %5289 = vmatpush.msra.mxu0 0.0
    %5290 = vmatpush.msra.mxu0 0.0
    %5291 = vmatpush.msra.mxu0 0.0
    %5292 = vmatpush.msra.mxu0 0.0
    %5293 = vmatpush.msra.mxu0 0.0
    %5294 = vmatpush.msra.mxu0 0.0
    %5295 = vmatpush.msra.mxu0 0.0
    %5296 = vmatpush.msra.mxu0 0.0
    %5297 = vmatpush.msra.mxu0 0.0
    %5298 = vmatpush.msra.mxu0 0.0
    %5299 = vmatpush.msra.mxu0 0.0
    %5300 = vmatpush.msra.mxu0 0.0
    %5301 = vmatpush.msra.mxu0 0.0
    %5302 = vmatpush.msra.mxu0 %v5282
    %5303 = vmatmul.f32.gmra.mxu0 %v5285
    %v5304 = vpop.f32.mrf.mxu0
    %v5305 = vadd.f32 0.0, %v5304
    %5306 = vdwg.mxu0
    %5307 = vrot.lane.b32.xlu0 %v5138, 120
    %v5308 = vpop.permute.xlu0 %5307
    %5309 = vrot.lane.b32.xlu0 %v5169, 120
    %v5310 = vpop.permute.xlu0 %5309
    %v5311 = vsel %vm888, %v5308, 0
    %v5313 = vsel %vm888, %v5310, 0
    %5315 = vmatpush.xpose.msra.mxu0 0.0
    %5316 = vmatpush.xpose.msra.mxu0 0.0
    %5317 = vmatpush.xpose.msra.mxu0 0.0
    %5318 = vmatpush.xpose.msra.mxu0 0.0
    %5319 = vmatpush.xpose.msra.mxu0 0.0
    %5320 = vmatpush.xpose.msra.mxu0 0.0
    %5321 = vmatpush.xpose.msra.mxu0 0.0
    %5322 = vmatpush.xpose.msra.mxu0 0.0
    %5323 = vmatpush.xpose.msra.mxu0 0.0
    %5324 = vmatpush.xpose.msra.mxu0 0.0
    %5325 = vmatpush.xpose.msra.mxu0 0.0
    %5326 = vmatpush.xpose.msra.mxu0 0.0
    %5327 = vmatpush.xpose.msra.mxu0 0.0
    %5328 = vmatpush.xpose.msra.mxu0 0.0
    %5329 = vmatpush.xpose.msra.mxu0 0.0
    %5330 = vmatpush.xpose.msra.mxu0 %v5313
    %5331 = vmatmul.f32.gmra.mxu0 %v5311
    %v5332 = vpop.f32.mrf.mxu0
    %v5333 = vadd.f32 0.0, %v5332
    %5334 = vdwg.mxu0
    %5335 = vrot.lane.b32.xlu0 %v5141, 120
    %v5336 = vpop.permute.xlu0 %5335
    %5337 = vrot.lane.b32.xlu0 %v5172, 120
    %v5338 = vpop.permute.xlu0 %5337
    %v5339 = vsel %vm888, %v5336, 0
    %v5341 = vsel %vm888, %v5338, 0
    %5343 = vmatpush.xpose.msra.mxu0 0.0
    %5344 = vmatpush.xpose.msra.mxu0 0.0
    %5345 = vmatpush.xpose.msra.mxu0 0.0
    %5346 = vmatpush.xpose.msra.mxu0 0.0
    %5347 = vmatpush.xpose.msra.mxu0 0.0
    %5348 = vmatpush.xpose.msra.mxu0 0.0
    %5349 = vmatpush.xpose.msra.mxu0 0.0
    %5350 = vmatpush.xpose.msra.mxu0 0.0
    %5351 = vmatpush.xpose.msra.mxu0 0.0
    %5352 = vmatpush.xpose.msra.mxu0 0.0
    %5353 = vmatpush.xpose.msra.mxu0 0.0
    %5354 = vmatpush.xpose.msra.mxu0 0.0
    %5355 = vmatpush.xpose.msra.mxu0 0.0
    %5356 = vmatpush.xpose.msra.mxu0 0.0
    %5357 = vmatpush.xpose.msra.mxu0 0.0
    %5358 = vmatpush.xpose.msra.mxu0 %v5341
    %5359 = vmatmul.f32.gmra.mxu0 %v5339
    %v5360 = vpop.f32.mrf.mxu0
    %v5361 = vadd.f32 0.0, %v5360
    %5362 = vdwg.mxu0
    %v5363 = vmul.f32 %v5333, 0.35355338
    %v5364 = vmul.f32 %v5361, 0.35355338
    %v5365 = vsel %vm888, %v5363, -inf
    %5366 = vmax.xlane.f32.xlu0 %v5365
    %v5367 = vpop.xlane.xlu0 %5366
    %v5368 = vsel %vm888, %v5364, -inf
    %5369 = vmax.xlane.f32.xlu0 %v5368
    %v5370 = vpop.xlane.xlu0 %5369
    %v5371 = vsub.f32 %v5363, %v5367
    %v5372 = vsub.f32 %v5364, %v5370
    %v5373 = vmul.f32 %v5371, 1.442695
    %v5374 = vpow.pop %v5373
    %v5375 = vmul.f32 %v5372, 1.442695
    %v5376 = vpow.pop %v5375
    %v5377 = vsel %vm888, %v5374, 0.0
    %5378 = vadd.xlane.f32.xlu0 %v5377
    %v5379 = vpop.xlane.xlu0 %5378
    %v5380 = vsel %vm888, %v5376, 0.0
    %5381 = vadd.xlane.f32.xlu0 %v5380
    %v5382 = vpop.xlane.xlu0 %5381
    %v5383 = vrcp.pop %v5379
    %v5384 = vrcp.pop %v5382
    %v5385 = vmul.f32 %v5374, %v5383
    %v5386 = vmul.f32 %v5376, %v5384
    %5387 = vrot.lane.b32.xlu0 %v5169, 88
    %v5388 = vpop.permute.xlu0 %5387
    %v5391 = vsel %vm888, %v5385, 0
    %5393 = vmatpush.msra.mxu0 0.0
    %5394 = vmatpush.msra.mxu0 0.0
    %5395 = vmatpush.msra.mxu0 0.0
    %5396 = vmatpush.msra.mxu0 0.0
    %5397 = vmatpush.msra.mxu0 0.0
    %5398 = vmatpush.msra.mxu0 0.0
    %5399 = vmatpush.msra.mxu0 0.0
    %5400 = vmatpush.msra.mxu0 0.0
    %5401 = vmatpush.msra.mxu0 0.0
    %5402 = vmatpush.msra.mxu0 0.0
    %5403 = vmatpush.msra.mxu0 0.0
    %5404 = vmatpush.msra.mxu0 0.0
    %5405 = vmatpush.msra.mxu0 0.0
    %5406 = vmatpush.msra.mxu0 0.0
    %5407 = vmatpush.msra.mxu0 0.0
    %5408 = vmatpush.msra.mxu0 %v5388
    %5409 = vmatmul.f32.gmra.mxu0 %v5391
    %v5410 = vpop.f32.mrf.mxu0
    %v5411 = vadd.f32 0.0, %v5410
    %5412 = vdwg.mxu0
    %5413 = vrot.lane.b32.xlu0 %v5172, 88
    %v5414 = vpop.permute.xlu0 %5413
    %v5417 = vsel %vm888, %v5386, 0
    %5419 = vmatpush.msra.mxu0 0.0
    %5420 = vmatpush.msra.mxu0 0.0
    %5421 = vmatpush.msra.mxu0 0.0
    %5422 = vmatpush.msra.mxu0 0.0
    %5423 = vmatpush.msra.mxu0 0.0
    %5424 = vmatpush.msra.mxu0 0.0
    %5425 = vmatpush.msra.mxu0 0.0
    %5426 = vmatpush.msra.mxu0 0.0
    %5427 = vmatpush.msra.mxu0 0.0
    %5428 = vmatpush.msra.mxu0 0.0
    %5429 = vmatpush.msra.mxu0 0.0
    %5430 = vmatpush.msra.mxu0 0.0
    %5431 = vmatpush.msra.mxu0 0.0
    %5432 = vmatpush.msra.mxu0 0.0
    %5433 = vmatpush.msra.mxu0 0.0
    %5434 = vmatpush.msra.mxu0 %v5414
    %5435 = vmatmul.f32.gmra.mxu0 %v5417
    %v5436 = vpop.f32.mrf.mxu0
    %v5437 = vadd.f32 0.0, %v5436
    %5438 = vdwg.mxu0
    %v5440 = vsel %vm888, %v5411, 0
    %v5443 = vsel %vm888, %v5437, 0
    %5445 = vmatpush.msra.mxu0 0.0
    %5446 = vmatpush.msra.mxu0 0.0
    %5447 = vmatpush.msra.mxu0 0.0
    %5448 = vmatpush.msra.mxu0 0.0
    %5449 = vmatpush.msra.mxu0 0.0
    %5450 = vmatpush.msra.mxu0 0.0
    %5451 = vmatpush.msra.mxu0 0.0
    %5452 = vmatpush.msra.mxu0 0.0
    %5453 = vmatpush.msra.mxu0 0.0
    %5454 = vmatpush.msra.mxu0 0.0
    %5455 = vmatpush.msra.mxu0 0.0
    %5456 = vmatpush.msra.mxu0 0.0
    %5457 = vmatpush.msra.mxu0 0.0
    %5458 = vmatpush.msra.mxu0 0.0
    %5459 = vmatpush.msra.mxu0 0.0
    %5460 = vmatpush.msra.mxu0 %v5175
    %5461 = vmatmul.f32.gmra.mxu0 %v5440
    %v5462 = vpop.f32.mrf.mxu0
    %v5463 = vadd.f32 0.0, %v5462
    %5464 = vmatmul.f32.gmra.mxu0 %v5443
    %v5465 = vpop.f32.mrf.mxu0
    %v5466 = vadd.f32 0.0, %v5465
    %5467 = vdwg.mxu0
    %v5469 = vsel %vm888, %v5279, 0
    %v5472 = vsel %vm888, %v5305, 0
    %5474 = vmatpush.msra.mxu0 0.0
    %5475 = vmatpush.msra.mxu0 0.0
    %5476 = vmatpush.msra.mxu0 0.0
    %5477 = vmatpush.msra.mxu0 0.0
    %5478 = vmatpush.msra.mxu0 0.0
    %5479 = vmatpush.msra.mxu0 0.0
    %5480 = vmatpush.msra.mxu0 0.0
    %5481 = vmatpush.msra.mxu0 0.0
    %5482 = vmatpush.msra.mxu0 0.0
    %5483 = vmatpush.msra.mxu0 0.0
    %5484 = vmatpush.msra.mxu0 0.0
    %5485 = vmatpush.msra.mxu0 0.0
    %5486 = vmatpush.msra.mxu0 0.0
    %5487 = vmatpush.msra.mxu0 0.0
    %5488 = vmatpush.msra.mxu0 0.0
    %5489 = vmatpush.msra.mxu0 %v5174
    %5490 = vmatmul.f32.gmra.mxu0 %v5469
    %v5491 = vpop.f32.mrf.mxu0
    %v5492 = vadd.f32 %v5463, %v5491
    %5493 = vmatmul.f32.gmra.mxu0 %v5472
    %v5494 = vpop.f32.mrf.mxu0
    %v5495 = vadd.f32 %v5466, %v5494
    %5496 = vdwg.mxu0
    %5497 = vrot.lane.b32.xlu0 %v5138, 112
    %v5498 = vpop.permute.xlu0 %5497
    %5499 = vrot.lane.b32.xlu0 %v5169, 112
    %v5500 = vpop.permute.xlu0 %5499
    %v5501 = vsel %vm888, %v5498, 0
    %v5503 = vsel %vm888, %v5500, 0
    %5505 = vmatpush.xpose.msra.mxu0 0.0
    %5506 = vmatpush.xpose.msra.mxu0 0.0
    %5507 = vmatpush.xpose.msra.mxu0 0.0
    %5508 = vmatpush.xpose.msra.mxu0 0.0
    %5509 = vmatpush.xpose.msra.mxu0 0.0
    %5510 = vmatpush.xpose.msra.mxu0 0.0
    %5511 = vmatpush.xpose.msra.mxu0 0.0
    %5512 = vmatpush.xpose.msra.mxu0 0.0
    %5513 = vmatpush.xpose.msra.mxu0 0.0
    %5514 = vmatpush.xpose.msra.mxu0 0.0
    %5515 = vmatpush.xpose.msra.mxu0 0.0
    %5516 = vmatpush.xpose.msra.mxu0 0.0
    %5517 = vmatpush.xpose.msra.mxu0 0.0
    %5518 = vmatpush.xpose.msra.mxu0 0.0
    %5519 = vmatpush.xpose.msra.mxu0 0.0
    %5520 = vmatpush.xpose.msra.mxu0 %v5503
    %5521 = vmatmul.f32.gmra.mxu0 %v5501
    %v5522 = vpop.f32.mrf.mxu0
    %v5523 = vadd.f32 0.0, %v5522
    %5524 = vdwg.mxu0
    %5525 = vrot.lane.b32.xlu0 %v5141, 112
    %v5526 = vpop.permute.xlu0 %5525
    %5527 = vrot.lane.b32.xlu0 %v5172, 112
    %v5528 = vpop.permute.xlu0 %5527
    %v5529 = vsel %vm888, %v5526, 0
    %v5531 = vsel %vm888, %v5528, 0
    %5533 = vmatpush.xpose.msra.mxu0 0.0
    %5534 = vmatpush.xpose.msra.mxu0 0.0
    %5535 = vmatpush.xpose.msra.mxu0 0.0
    %5536 = vmatpush.xpose.msra.mxu0 0.0
    %5537 = vmatpush.xpose.msra.mxu0 0.0
    %5538 = vmatpush.xpose.msra.mxu0 0.0
    %5539 = vmatpush.xpose.msra.mxu0 0.0
    %5540 = vmatpush.xpose.msra.mxu0 0.0
    %5541 = vmatpush.xpose.msra.mxu0 0.0
    %5542 = vmatpush.xpose.msra.mxu0 0.0
    %5543 = vmatpush.xpose.msra.mxu0 0.0
    %5544 = vmatpush.xpose.msra.mxu0 0.0
    %5545 = vmatpush.xpose.msra.mxu0 0.0
    %5546 = vmatpush.xpose.msra.mxu0 0.0
    %5547 = vmatpush.xpose.msra.mxu0 0.0
    %5548 = vmatpush.xpose.msra.mxu0 %v5531
    %5549 = vmatmul.f32.gmra.mxu0 %v5529
    %v5550 = vpop.f32.mrf.mxu0
    %v5551 = vadd.f32 0.0, %v5550
    %5552 = vdwg.mxu0
    %v5553 = vmul.f32 %v5523, 0.35355338
    %v5554 = vmul.f32 %v5551, 0.35355338
    %v5555 = vsel %vm888, %v5553, -inf
    %5556 = vmax.xlane.f32.xlu0 %v5555
    %v5557 = vpop.xlane.xlu0 %5556
    %v5558 = vsel %vm888, %v5554, -inf
    %5559 = vmax.xlane.f32.xlu0 %v5558
    %v5560 = vpop.xlane.xlu0 %5559
    %v5561 = vsub.f32 %v5553, %v5557
    %v5562 = vsub.f32 %v5554, %v5560
    %v5563 = vmul.f32 %v5561, 1.442695
    %v5564 = vpow.pop %v5563
    %v5565 = vmul.f32 %v5562, 1.442695
    %v5566 = vpow.pop %v5565
    %v5567 = vsel %vm888, %v5564, 0.0
    %5568 = vadd.xlane.f32.xlu0 %v5567
    %v5569 = vpop.xlane.xlu0 %5568
    %v5570 = vsel %vm888, %v5566, 0.0
    %5571 = vadd.xlane.f32.xlu0 %v5570
    %v5572 = vpop.xlane.xlu0 %5571
    %v5573 = vrcp.pop %v5569
    %v5574 = vrcp.pop %v5572
    %v5575 = vmul.f32 %v5564, %v5573
    %v5576 = vmul.f32 %v5566, %v5574
    %5577 = vrot.lane.b32.xlu0 %v5169, 80
    %v5578 = vpop.permute.xlu0 %5577
    %v5581 = vsel %vm888, %v5575, 0
    %5583 = vmatpush.msra.mxu0 0.0
    %5584 = vmatpush.msra.mxu0 0.0
    %5585 = vmatpush.msra.mxu0 0.0
    %5586 = vmatpush.msra.mxu0 0.0
    %5587 = vmatpush.msra.mxu0 0.0
    %5588 = vmatpush.msra.mxu0 0.0
    %5589 = vmatpush.msra.mxu0 0.0
    %5590 = vmatpush.msra.mxu0 0.0
    %5591 = vmatpush.msra.mxu0 0.0
    %5592 = vmatpush.msra.mxu0 0.0
    %5593 = vmatpush.msra.mxu0 0.0
    %5594 = vmatpush.msra.mxu0 0.0
    %5595 = vmatpush.msra.mxu0 0.0
    %5596 = vmatpush.msra.mxu0 0.0
    %5597 = vmatpush.msra.mxu0 0.0
    %5598 = vmatpush.msra.mxu0 %v5578
    %5599 = vmatmul.f32.gmra.mxu0 %v5581
    %v5600 = vpop.f32.mrf.mxu0
    %v5601 = vadd.f32 0.0, %v5600
    %5602 = vdwg.mxu0
    %5603 = vrot.lane.b32.xlu0 %v5172, 80
    %v5604 = vpop.permute.xlu0 %5603
    %v5607 = vsel %vm888, %v5576, 0
    %5609 = vmatpush.msra.mxu0 0.0
    %5610 = vmatpush.msra.mxu0 0.0
    %5611 = vmatpush.msra.mxu0 0.0
    %5612 = vmatpush.msra.mxu0 0.0
    %5613 = vmatpush.msra.mxu0 0.0
    %5614 = vmatpush.msra.mxu0 0.0
    %5615 = vmatpush.msra.mxu0 0.0
    %5616 = vmatpush.msra.mxu0 0.0
    %5617 = vmatpush.msra.mxu0 0.0
    %5618 = vmatpush.msra.mxu0 0.0
    %5619 = vmatpush.msra.mxu0 0.0
    %5620 = vmatpush.msra.mxu0 0.0
    %5621 = vmatpush.msra.mxu0 0.0
    %5622 = vmatpush.msra.mxu0 0.0
    %5623 = vmatpush.msra.mxu0 0.0
    %5624 = vmatpush.msra.mxu0 %v5604
    %5625 = vmatmul.f32.gmra.mxu0 %v5607
    %v5626 = vpop.f32.mrf.mxu0
    %v5627 = vadd.f32 0.0, %v5626
    %5628 = vdwg.mxu0
    %v5630 = vsel %vm888, %v5601, 0
    %v5633 = vsel %vm888, %v5627, 0
    %5635 = vmatpush.msra.mxu0 0.0
    %5636 = vmatpush.msra.mxu0 0.0
    %5637 = vmatpush.msra.mxu0 0.0
    %5638 = vmatpush.msra.mxu0 0.0
    %5639 = vmatpush.msra.mxu0 0.0
    %5640 = vmatpush.msra.mxu0 0.0
    %5641 = vmatpush.msra.mxu0 0.0
    %5642 = vmatpush.msra.mxu0 0.0
    %5643 = vmatpush.msra.mxu0 0.0
    %5644 = vmatpush.msra.mxu0 0.0
    %5645 = vmatpush.msra.mxu0 0.0
    %5646 = vmatpush.msra.mxu0 0.0
    %5647 = vmatpush.msra.mxu0 0.0
    %5648 = vmatpush.msra.mxu0 0.0
    %5649 = vmatpush.msra.mxu0 0.0
    %5650 = vmatpush.msra.mxu0 %v5176
    %5651 = vmatmul.f32.gmra.mxu0 %v5630
    %v5652 = vpop.f32.mrf.mxu0
    %v5653 = vadd.f32 0.0, %v5652
    %5654 = vmatmul.f32.gmra.mxu0 %v5633
    %v5655 = vpop.f32.mrf.mxu0
    %v5656 = vadd.f32 0.0, %v5655
    %5657 = vdwg.mxu0
    %v5658 = vadd.f32 %v5492, %v5653
    %v5659 = vadd.f32 %v5495, %v5656
    %5660 = vrot.lane.b32.xlu0 %v5138, 104
    %v5661 = vpop.permute.xlu0 %5660
    %5662 = vrot.lane.b32.xlu0 %v5169, 104
    %v5663 = vpop.permute.xlu0 %5662
    %v5664 = vsel %vm888, %v5661, 0
    %v5666 = vsel %vm888, %v5663, 0
    %5668 = vmatpush.xpose.msra.mxu0 0.0
    %5669 = vmatpush.xpose.msra.mxu0 0.0
    %5670 = vmatpush.xpose.msra.mxu0 0.0
    %5671 = vmatpush.xpose.msra.mxu0 0.0
    %5672 = vmatpush.xpose.msra.mxu0 0.0
    %5673 = vmatpush.xpose.msra.mxu0 0.0
    %5674 = vmatpush.xpose.msra.mxu0 0.0
    %5675 = vmatpush.xpose.msra.mxu0 0.0
    %5676 = vmatpush.xpose.msra.mxu0 0.0
    %5677 = vmatpush.xpose.msra.mxu0 0.0
    %5678 = vmatpush.xpose.msra.mxu0 0.0
    %5679 = vmatpush.xpose.msra.mxu0 0.0
    %5680 = vmatpush.xpose.msra.mxu0 0.0
    %5681 = vmatpush.xpose.msra.mxu0 0.0
    %5682 = vmatpush.xpose.msra.mxu0 0.0
    %5683 = vmatpush.xpose.msra.mxu0 %v5666
    %5684 = vmatmul.f32.gmra.mxu0 %v5664
    %v5685 = vpop.f32.mrf.mxu0
    %v5686 = vadd.f32 0.0, %v5685
    %5687 = vdwg.mxu0
    %5688 = vrot.lane.b32.xlu0 %v5141, 104
    %v5689 = vpop.permute.xlu0 %5688
    %5690 = vrot.lane.b32.xlu0 %v5172, 104
    %v5691 = vpop.permute.xlu0 %5690
    %v5692 = vsel %vm888, %v5689, 0
    %v5694 = vsel %vm888, %v5691, 0
    %5696 = vmatpush.xpose.msra.mxu0 0.0
    %5697 = vmatpush.xpose.msra.mxu0 0.0
    %5698 = vmatpush.xpose.msra.mxu0 0.0
    %5699 = vmatpush.xpose.msra.mxu0 0.0
    %5700 = vmatpush.xpose.msra.mxu0 0.0
    %5701 = vmatpush.xpose.msra.mxu0 0.0
    %5702 = vmatpush.xpose.msra.mxu0 0.0
    %5703 = vmatpush.xpose.msra.mxu0 0.0
    %5704 = vmatpush.xpose.msra.mxu0 0.0
    %5705 = vmatpush.xpose.msra.mxu0 0.0
    %5706 = vmatpush.xpose.msra.mxu0 0.0
    %5707 = vmatpush.xpose.msra.mxu0 0.0
    %5708 = vmatpush.xpose.msra.mxu0 0.0
    %5709 = vmatpush.xpose.msra.mxu0 0.0
    %5710 = vmatpush.xpose.msra.mxu0 0.0
    %5711 = vmatpush.xpose.msra.mxu0 %v5694
    %5712 = vmatmul.f32.gmra.mxu0 %v5692
    %v5713 = vpop.f32.mrf.mxu0
    %v5714 = vadd.f32 0.0, %v5713
    %5715 = vdwg.mxu0
    %v5716 = vmul.f32 %v5686, 0.35355338
    %v5717 = vmul.f32 %v5714, 0.35355338
    %v5718 = vsel %vm888, %v5716, -inf
    %5719 = vmax.xlane.f32.xlu0 %v5718
    %v5720 = vpop.xlane.xlu0 %5719
    %v5721 = vsel %vm888, %v5717, -inf
    %5722 = vmax.xlane.f32.xlu0 %v5721
    %v5723 = vpop.xlane.xlu0 %5722
    %v5724 = vsub.f32 %v5716, %v5720
    %v5725 = vsub.f32 %v5717, %v5723
    %v5726 = vmul.f32 %v5724, 1.442695
    %v5727 = vpow.pop %v5726
    %v5728 = vmul.f32 %v5725, 1.442695
    %v5729 = vpow.pop %v5728
    %v5730 = vsel %vm888, %v5727, 0.0
    %5731 = vadd.xlane.f32.xlu0 %v5730
    %v5732 = vpop.xlane.xlu0 %5731
    %v5733 = vsel %vm888, %v5729, 0.0
    %5734 = vadd.xlane.f32.xlu0 %v5733
    %v5735 = vpop.xlane.xlu0 %5734
    %v5736 = vrcp.pop %v5732
    %v5737 = vrcp.pop %v5735
    %v5738 = vmul.f32 %v5727, %v5736
    %v5739 = vmul.f32 %v5729, %v5737
    %5740 = vrot.lane.b32.xlu0 %v5169, 72
    %v5741 = vpop.permute.xlu0 %5740
    %v5744 = vsel %vm888, %v5738, 0
    %5746 = vmatpush.msra.mxu0 0.0
    %5747 = vmatpush.msra.mxu0 0.0
    %5748 = vmatpush.msra.mxu0 0.0
    %5749 = vmatpush.msra.mxu0 0.0
    %5750 = vmatpush.msra.mxu0 0.0
    %5751 = vmatpush.msra.mxu0 0.0
    %5752 = vmatpush.msra.mxu0 0.0
    %5753 = vmatpush.msra.mxu0 0.0
    %5754 = vmatpush.msra.mxu0 0.0
    %5755 = vmatpush.msra.mxu0 0.0
    %5756 = vmatpush.msra.mxu0 0.0
    %5757 = vmatpush.msra.mxu0 0.0
    %5758 = vmatpush.msra.mxu0 0.0
    %5759 = vmatpush.msra.mxu0 0.0
    %5760 = vmatpush.msra.mxu0 0.0
    %5761 = vmatpush.msra.mxu0 %v5741
    %5762 = vmatmul.f32.gmra.mxu0 %v5744
    %v5763 = vpop.f32.mrf.mxu0
    %v5764 = vadd.f32 0.0, %v5763
    %5765 = vdwg.mxu0
    %5766 = vrot.lane.b32.xlu0 %v5172, 72
    %v5767 = vpop.permute.xlu0 %5766
    %v5770 = vsel %vm888, %v5739, 0
    %5772 = vmatpush.msra.mxu0 0.0
    %5773 = vmatpush.msra.mxu0 0.0
    %5774 = vmatpush.msra.mxu0 0.0
    %5775 = vmatpush.msra.mxu0 0.0
    %5776 = vmatpush.msra.mxu0 0.0
    %5777 = vmatpush.msra.mxu0 0.0
    %5778 = vmatpush.msra.mxu0 0.0
    %5779 = vmatpush.msra.mxu0 0.0
    %5780 = vmatpush.msra.mxu0 0.0
    %5781 = vmatpush.msra.mxu0 0.0
    %5782 = vmatpush.msra.mxu0 0.0
    %5783 = vmatpush.msra.mxu0 0.0
    %5784 = vmatpush.msra.mxu0 0.0
    %5785 = vmatpush.msra.mxu0 0.0
    %5786 = vmatpush.msra.mxu0 0.0
    %5787 = vmatpush.msra.mxu0 %v5767
    %5788 = vmatmul.f32.gmra.mxu0 %v5770
    %v5789 = vpop.f32.mrf.mxu0
    %v5790 = vadd.f32 0.0, %v5789
    %5791 = vdwg.mxu0
    %v5793 = vsel %vm888, %v5764, 0
    %v5796 = vsel %vm888, %v5790, 0
    %5798 = vmatpush.msra.mxu0 0.0
    %5799 = vmatpush.msra.mxu0 0.0
    %5800 = vmatpush.msra.mxu0 0.0
    %5801 = vmatpush.msra.mxu0 0.0
    %5802 = vmatpush.msra.mxu0 0.0
    %5803 = vmatpush.msra.mxu0 0.0
    %5804 = vmatpush.msra.mxu0 0.0
    %5805 = vmatpush.msra.mxu0 0.0
    %5806 = vmatpush.msra.mxu0 0.0
    %5807 = vmatpush.msra.mxu0 0.0
    %5808 = vmatpush.msra.mxu0 0.0
    %5809 = vmatpush.msra.mxu0 0.0
    %5810 = vmatpush.msra.mxu0 0.0
    %5811 = vmatpush.msra.mxu0 0.0
    %5812 = vmatpush.msra.mxu0 0.0
    %5813 = vmatpush.msra.mxu0 %v5177
    %5814 = vmatmul.f32.gmra.mxu0 %v5793
    %v5815 = vpop.f32.mrf.mxu0
    %v5816 = vadd.f32 0.0, %v5815
    %5817 = vmatmul.f32.gmra.mxu0 %v5796
    %v5818 = vpop.f32.mrf.mxu0
    %v5819 = vadd.f32 0.0, %v5818
    %5820 = vdwg.mxu0
    %v5821 = vadd.f32 %v5658, %v5816
    %v5822 = vadd.f32 %v5659, %v5819
    %v5824 = vperm.slane %v5178, 0
    %v5826 = vadd.f32 %v5821, %v5824
    %v5827 = vadd.f32 %v5822, %v5824
    %v5828 = vadd.f32 %v5104, %v5826
    %v5829 = vadd.f32 %v5105, %v5827
    %v5830 = vld [vmem:[#allocation40] sm:$0x1]
    %v5831 = vld [vmem:[#allocation41] sm:$0x1]
    %v5832 = vsel %vm850, %v5828, 0.0
    %5833 = vadd.xlane.f32.xlu0 %v5832
    %v5834 = vpop.xlane.xlu0 %5833
    %v5835 = vsel %vm850, %v5829, 0.0
    %5836 = vadd.xlane.f32.xlu0 %v5835
    %v5837 = vpop.xlane.xlu0 %5836
    %v5838 = vmul.f32 %v5834, %v1553
    %v5839 = vmul.f32 %v5837, %v1553
    %v5840 = vsub.f32 %v5828, %v5838
    %v5841 = vsub.f32 %v5829, %v5839
    %v5842 = vmul.f32 %v5840, %v5840
    %v5843 = vmul.f32 %v5841, %v5841
    %v5844 = vsel %vm850, %v5842, 0.0
    %5845 = vadd.xlane.f32.xlu0 %v5844
    %v5846 = vpop.xlane.xlu0 %5845
    %v5847 = vsel %vm850, %v5843, 0.0
    %5848 = vadd.xlane.f32.xlu0 %v5847
    %v5849 = vpop.xlane.xlu0 %5848
    %v5850 = vmul.f32 %v5846, %v1553
    %v5851 = vmul.f32 %v5849, %v1553
    %v5852 = vadd.f32 %v5850, 1e-05
    %v5853 = vadd.f32 %v5851, 1e-05
    %v5854 = vrsqrt.pop %v5852
    %v5855 = vmul.f32 %v5854, %v5852
    %v5856 = vmul.f32 %v5855, %v5854
    %v5857 = vmul.f32 0.5, %v5856
    %v5858 = vsub.f32 1.5, %v5857
    %v5859 = vmul.f32 %v5854, %v5858
    %vm5860 = vweird.f32 %v5852
    %vm5861 = vweird.f32 %v5854
    %vm5862 = vmor %vm5860, %vm5861
    %v5863 = vsel %vm5862, %v5854, %v5859
    %v5864 = vrsqrt.pop %v5853
    %v5865 = vmul.f32 %v5864, %v5853
    %v5866 = vmul.f32 %v5865, %v5864
    %v5867 = vmul.f32 0.5, %v5866
    %v5868 = vsub.f32 1.5, %v5867
    %v5869 = vmul.f32 %v5864, %v5868
    %vm5870 = vweird.f32 %v5853
    %vm5871 = vweird.f32 %v5864
    %vm5872 = vmor %vm5870, %vm5871
    %v5873 = vsel %vm5872, %v5864, %v5869
    %v5874 = vmul.f32 %v5840, %v5863
    %v5875 = vmul.f32 %v5841, %v5873
    %v5877 = vperm.slane %v5830, 0
    %v5879 = vmul.f32 %v5874, %v5877
    %v5880 = vmul.f32 %v5875, %v5877
    %v5882 = vperm.slane %v5831, 0
    %v5884 = vadd.f32 %v5879, %v5882
    %v5885 = vadd.f32 %v5880, %v5882
    %v5886 = vld [vmem:[#allocation43] sm:$0xff]
    %v5887 = vld [vmem:[#allocation43 + $0x8] sm:$0xff]
    %v5888 = vld [vmem:[#allocation43 + $0x10] sm:$0xff]
    %v5889 = vld [vmem:[#allocation43 + $0x18] sm:$0xff]
    %v5890 = vld [vmem:[#allocation44] sm:$0x1]
    %v5892 = vperm.slane %v5890, 0
    %v5895 = vsel %vm850, %v5884, 0
    %v5898 = vsel %vm850, %v5885, 0
    %5900 = vmatpush.msra.mxu0 0.0
    %5901 = vmatpush.msra.mxu0 0.0
    %5902 = vmatpush.msra.mxu0 0.0
    %5903 = vmatpush.msra.mxu0 0.0
    %5904 = vmatpush.msra.mxu0 0.0
    %5905 = vmatpush.msra.mxu0 0.0
    %5906 = vmatpush.msra.mxu0 0.0
    %5907 = vmatpush.msra.mxu0 0.0
    %5908 = vmatpush.msra.mxu0 0.0
    %5909 = vmatpush.msra.mxu0 0.0
    %5910 = vmatpush.msra.mxu0 0.0
    %5911 = vmatpush.msra.mxu0 0.0
    %5912 = vmatpush.msra.mxu0 %v5889
    %5913 = vmatpush.msra.mxu0 %v5888
    %5914 = vmatpush.msra.mxu0 %v5887
    %5915 = vmatpush.msra.mxu0 %v5886
    %5916 = vmatmul.f32.gmra.mxu0 %v5895
    %v5917 = vpop.f32.mrf.mxu0
    %v5918 = vadd.f32 %v5892, %v5917
    %5919 = vmatmul.f32.gmra.mxu0 %v5898
    %v5920 = vpop.f32.mrf.mxu0
    %v5921 = vadd.f32 %v5892, %v5920
    %5922 = vdwg.mxu0
    %v5923 = vmax.f32 %v5918, 0.0
    %v5924 = vmax.f32 %v5921, 0.0
    %v5925 = vld [vmem:[%s133] sm:$0xff]
    %v5926 = vld [vmem:[%s133 + $0x8] sm:$0xff]
    %v5927 = vld [vmem:[%s133 + $0x10] sm:$0xff]
    %v5928 = vld [vmem:[%s133 + $0x18] sm:$0xff]
    %v5929 = vld [vmem:[%s133 + $0x20] sm:$0xff]
    %v5930 = vld [vmem:[%s133 + $0x28] sm:$0xff]
    %v5931 = vld [vmem:[%s133 + $0x30] sm:$0xff]
    %v5932 = vld [vmem:[%s133 + $0x38] sm:$0xff]
    %v5933 = vld [vmem:[#allocation46] sm:$0x1]
    %v5935 = vperm.slane %v5933, 0
    %v5938 = vsel %vm1653, %v5923, 0
    %v5941 = vsel %vm1653, %v5924, 0
    %5943 = vmatpush.msra.mxu0 0.0
    %5944 = vmatpush.msra.mxu0 0.0
    %5945 = vmatpush.msra.mxu0 0.0
    %5946 = vmatpush.msra.mxu0 0.0
    %5947 = vmatpush.msra.mxu0 0.0
    %5948 = vmatpush.msra.mxu0 0.0
    %5949 = vmatpush.msra.mxu0 0.0
    %5950 = vmatpush.msra.mxu0 0.0
    %5951 = vmatpush.msra.mxu0 %v5932
    %5952 = vmatpush.msra.mxu0 %v5931
    %5953 = vmatpush.msra.mxu0 %v5930
    %5954 = vmatpush.msra.mxu0 %v5929
    %5955 = vmatpush.msra.mxu0 %v5928
    %5956 = vmatpush.msra.mxu0 %v5927
    %5957 = vmatpush.msra.mxu0 %v5926
    %5958 = vmatpush.msra.mxu0 %v5925
    %5959 = vmatmul.f32.gmra.mxu0 %v5938
    %v5960 = vpop.f32.mrf.mxu0
    %v5961 = vadd.f32 %v5935, %v5960
    %5962 = vmatmul.f32.gmra.mxu0 %v5941
    %v5963 = vpop.f32.mrf.mxu0
    %v5964 = vadd.f32 %v5935, %v5963
    %5965 = vdwg.mxu0
    %v5966 = vadd.f32 %v5884, %v5961
    %v5967 = vadd.f32 %v5885, %v5964
    %v5968 = vld [vmem:[#allocation47] sm:$0x1]
    %v5969 = vld [vmem:[#allocation49] sm:$0x1]
    %v5970 = vsel %vm850, %v5966, 0.0
    %5971 = vadd.xlane.f32.xlu0 %v5970
    %v5972 = vpop.xlane.xlu0 %5971
    %v5973 = vsel %vm850, %v5967, 0.0
    %5974 = vadd.xlane.f32.xlu0 %v5973
    %v5975 = vpop.xlane.xlu0 %5974
    %v5976 = vmul.f32 %v5972, %v1553
    %v5977 = vmul.f32 %v5975, %v1553
    %v5978 = vsub.f32 %v5966, %v5976
    %v5979 = vsub.f32 %v5967, %v5977
    %v5980 = vmul.f32 %v5978, %v5978
    %v5981 = vmul.f32 %v5979, %v5979
    %v5982 = vsel %vm850, %v5980, 0.0
    %5983 = vadd.xlane.f32.xlu0 %v5982
    %v5984 = vpop.xlane.xlu0 %5983
    %v5985 = vsel %vm850, %v5981, 0.0
    %5986 = vadd.xlane.f32.xlu0 %v5985
    %v5987 = vpop.xlane.xlu0 %5986
    %v5988 = vmul.f32 %v5984, %v1553
    %v5989 = vmul.f32 %v5987, %v1553
    %v5990 = vadd.f32 %v5988, 1e-05
    %v5991 = vadd.f32 %v5989, 1e-05
    %v5992 = vrsqrt.pop %v5990
    %v5993 = vmul.f32 %v5992, %v5990
    %v5994 = vmul.f32 %v5993, %v5992
    %v5995 = vmul.f32 0.5, %v5994
    %v5996 = vsub.f32 1.5, %v5995
    %v5997 = vmul.f32 %v5992, %v5996
    %vm5998 = vweird.f32 %v5990
    %vm5999 = vweird.f32 %v5992
    %vm6000 = vmor %vm5998, %vm5999
    %v6001 = vsel %vm6000, %v5992, %v5997
    %v6002 = vrsqrt.pop %v5991
    %v6003 = vmul.f32 %v6002, %v5991
    %v6004 = vmul.f32 %v6003, %v6002
    %v6005 = vmul.f32 0.5, %v6004
    %v6006 = vsub.f32 1.5, %v6005
    %v6007 = vmul.f32 %v6002, %v6006
    %vm6008 = vweird.f32 %v5991
    %vm6009 = vweird.f32 %v6002
    %vm6010 = vmor %vm6008, %vm6009
    %v6011 = vsel %vm6010, %v6002, %v6007
    %v6012 = vmul.f32 %v5978, %v6001
    %v6013 = vmul.f32 %v5979, %v6011
    %v6015 = vperm.slane %v5968, 0
    %v6017 = vmul.f32 %v6012, %v6015
    %v6018 = vmul.f32 %v6013, %v6015
    %v6020 = vperm.slane %v5969, 0
    %v6022 = vadd.f32 %v6017, %v6020
    %v6023 = vadd.f32 %v6018, %v6020
    %v6024 = vld [vmem:[#allocation50] sm:$0x1]
    %v6025 = vld [vmem:[#allocation52] sm:$0x1]
    %v6026 = vsel %vm850, %v6022, 0.0
    %6027 = vadd.xlane.f32.xlu0 %v6026
    %v6028 = vpop.xlane.xlu0 %6027
    %v6029 = vsel %vm850, %v6023, 0.0
    %6030 = vadd.xlane.f32.xlu0 %v6029
    %v6031 = vpop.xlane.xlu0 %6030
    %v6032 = vmul.f32 %v6028, %v1553
    %v6033 = vmul.f32 %v6031, %v1553
    %v6034 = vsub.f32 %v6022, %v6032
    %v6035 = vsub.f32 %v6023, %v6033
    %v6036 = vmul.f32 %v6034, %v6034
    %v6037 = vmul.f32 %v6035, %v6035
    %v6038 = vsel %vm850, %v6036, 0.0
    %6039 = vadd.xlane.f32.xlu0 %v6038
    %v6040 = vpop.xlane.xlu0 %6039
    %v6041 = vsel %vm850, %v6037, 0.0
    %6042 = vadd.xlane.f32.xlu0 %v6041
    %v6043 = vpop.xlane.xlu0 %6042
    %v6044 = vmul.f32 %v6040, %v1553
    %v6045 = vmul.f32 %v6043, %v1553
    %v6046 = vadd.f32 %v6044, 1e-05
    %v6047 = vadd.f32 %v6045, 1e-05
    %v6048 = vrsqrt.pop %v6046
    %v6049 = vmul.f32 %v6048, %v6046
    %v6050 = vmul.f32 %v6049, %v6048
    %v6051 = vmul.f32 0.5, %v6050
    %v6052 = vsub.f32 1.5, %v6051
    %v6053 = vmul.f32 %v6048, %v6052
    %vm6054 = vweird.f32 %v6046
    %vm6055 = vweird.f32 %v6048
    %vm6056 = vmor %vm6054, %vm6055
    %v6057 = vsel %vm6056, %v6048, %v6053
    %v6058 = vrsqrt.pop %v6047
    %v6059 = vmul.f32 %v6058, %v6047
    %v6060 = vmul.f32 %v6059, %v6058
    %v6061 = vmul.f32 0.5, %v6060
    %v6062 = vsub.f32 1.5, %v6061
    %v6063 = vmul.f32 %v6058, %v6062
    %vm6064 = vweird.f32 %v6047
    %vm6065 = vweird.f32 %v6058
    %vm6066 = vmor %vm6064, %vm6065
    %v6067 = vsel %vm6066, %v6058, %v6063
    %v6068 = vmul.f32 %v6034, %v6057
    %v6069 = vmul.f32 %v6035, %v6067
    %v6071 = vperm.slane %v6024, 0
    %v6073 = vmul.f32 %v6068, %v6071
    %v6074 = vmul.f32 %v6069, %v6071
    %v6076 = vperm.slane %v6025, 0
    %v6078 = vadd.f32 %v6073, %v6076
    %v6079 = vadd.f32 %v6074, %v6076
    %v6080 = vld [vmem:[%s145] sm:$0xff]
    %v6081 = vld [vmem:[%s145 + $0x8] sm:$0xff]
    %v6082 = vld [vmem:[%s145 + $0x10] sm:$0xff]
    %v6083 = vld [vmem:[%s145 + $0x18] sm:$0xff]
    %v6084 = vld [vmem:[#allocation53] sm:$0x1]
    %v6086 = vperm.slane %v6084, 0
    %v6089 = vsel %vm850, %v6078, 0
    %v6092 = vsel %vm850, %v6079, 0
    %6094 = vmatpush.msra.mxu0 0.0
    %6095 = vmatpush.msra.mxu0 0.0
    %6096 = vmatpush.msra.mxu0 0.0
    %6097 = vmatpush.msra.mxu0 0.0
    %6098 = vmatpush.msra.mxu0 0.0
    %6099 = vmatpush.msra.mxu0 0.0
    %6100 = vmatpush.msra.mxu0 0.0
    %6101 = vmatpush.msra.mxu0 0.0
    %6102 = vmatpush.msra.mxu0 0.0
    %6103 = vmatpush.msra.mxu0 0.0
    %6104 = vmatpush.msra.mxu0 0.0
    %6105 = vmatpush.msra.mxu0 0.0
    %6106 = vmatpush.msra.mxu0 %v6083
    %6107 = vmatpush.msra.mxu0 %v6082
    %6108 = vmatpush.msra.mxu0 %v6081
    %6109 = vmatpush.msra.mxu0 %v6080
    %6110 = vmatmul.f32.gmra.mxu0 %v6089
    %v6111 = vpop.f32.mrf.mxu0
    %v6112 = vadd.f32 %v6086, %v6111
    %6113 = vmatmul.f32.gmra.mxu0 %v6092
    %v6114 = vpop.f32.mrf.mxu0
    %v6115 = vadd.f32 %v6086, %v6114
    %6116 = vdwg.mxu0
    %vm6117 = vcmp.ge.f32.partialorder %v6112, 0.0
    %vm6118 = vcmp.ge.f32.partialorder %v6115, 0.0
    %v6119 = vmul.f32 %v6112, 0.01
    %v6120 = vmul.f32 %v6115, 0.01
    %v6121 = vsel %vm6117, %v6112, %v6119
    %v6122 = vsel %vm6118, %v6115, %v6120
    %v6123 = vld [vmem:[%s149] sm:$0xff]
    %v6124 = vld [vmem:[%s149 + $0x8] sm:$0xff]
    %v6125 = vld [vmem:[%s149 + $0x10] sm:$0xff]
    %v6126 = vld [vmem:[%s149 + $0x18] sm:$0xff]
    %v6127 = vld [vmem:[%s149 + $0x20] sm:$0xff]
    %v6128 = vld [vmem:[%s149 + $0x28] sm:$0xff]
    %v6129 = vld [vmem:[%s149 + $0x30] sm:$0xff]
    %v6130 = vld [vmem:[%s149 + $0x38] sm:$0xff]
    %v6131 = vld [vmem:[#allocation55] sm:$0x1]
    %v6133 = vperm.slane %v6131, 0
    %v6136 = vsel %vm1653, %v6121, 0
    %v6139 = vsel %vm1653, %v6122, 0
    %6141 = vmatpush.msra.mxu0 0.0
    %6142 = vmatpush.msra.mxu0 0.0
    %6143 = vmatpush.msra.mxu0 0.0
    %6144 = vmatpush.msra.mxu0 0.0
    %6145 = vmatpush.msra.mxu0 0.0
    %6146 = vmatpush.msra.mxu0 0.0
    %6147 = vmatpush.msra.mxu0 0.0
    %6148 = vmatpush.msra.mxu0 0.0
    %6149 = vmatpush.msra.mxu0 %v6130
    %6150 = vmatpush.msra.mxu0 %v6129
    %6151 = vmatpush.msra.mxu0 %v6128
    %6152 = vmatpush.msra.mxu0 %v6127
    %6153 = vmatpush.msra.mxu0 %v6126
    %6154 = vmatpush.msra.mxu0 %v6125
    %6155 = vmatpush.msra.mxu0 %v6124
    %6156 = vmatpush.msra.mxu0 %v6123
    %6157 = vmatmul.f32.gmra.mxu0 %v6136
    %v6158 = vpop.f32.mrf.mxu0
    %v6159 = vadd.f32 %v6133, %v6158
    %6160 = vmatmul.f32.gmra.mxu0 %v6139
    %v6161 = vpop.f32.mrf.mxu0
    %v6162 = vadd.f32 %v6133, %v6161
    %6163 = vdwg.mxu0
    %vm6164 = vcmp.ge.f32.partialorder %v6159, 0.0
    %vm6165 = vcmp.ge.f32.partialorder %v6162, 0.0
    %v6166 = vmul.f32 %v6159, 0.01
    %v6167 = vmul.f32 %v6162, 0.01
    %v6168 = vsel %vm6164, %v6159, %v6166
    %v6169 = vsel %vm6165, %v6162, %v6167
    %v6170 = vld [vmem:[%s153] sm:$0xff]
    %v6171 = vld [vmem:[%s153 + $0x8] sm:$0xff]
    %v6172 = vld [vmem:[%s153 + $0x10] sm:$0xff]
    %v6173 = vld [vmem:[%s153 + $0x18] sm:$0xff]
    %v6174 = vld [vmem:[#allocation2] sm:$0x1]
    %v6176 = vperm.slane %v6174, 0
    %v6179 = vsel %vm850, %v6168, 0
    %v6182 = vsel %vm850, %v6169, 0
    %6184 = vmatpush.msra.mxu0 0.0
    %6185 = vmatpush.msra.mxu0 0.0
    %6186 = vmatpush.msra.mxu0 0.0
    %6187 = vmatpush.msra.mxu0 0.0
    %6188 = vmatpush.msra.mxu0 0.0
    %6189 = vmatpush.msra.mxu0 0.0
    %6190 = vmatpush.msra.mxu0 0.0
    %6191 = vmatpush.msra.mxu0 0.0
    %6192 = vmatpush.msra.mxu0 0.0
    %6193 = vmatpush.msra.mxu0 0.0
    %6194 = vmatpush.msra.mxu0 0.0
    %6195 = vmatpush.msra.mxu0 0.0
    %6196 = vmatpush.msra.mxu0 %v6173
    %6197 = vmatpush.msra.mxu0 %v6172
    %6198 = vmatpush.msra.mxu0 %v6171
    %6199 = vmatpush.msra.mxu0 %v6170
    %6200 = vmatmul.f32.gmra.mxu0 %v6179
    %v6201 = vpop.f32.mrf.mxu0
    %v6202 = vadd.f32 %v6176, %v6201
    %6203 = vmatmul.f32.gmra.mxu0 %v6182
    %v6204 = vpop.f32.mrf.mxu0
    %v6205 = vadd.f32 %v6176, %v6204
    %6206 = vdwg.mxu0
    %vm6207 = vcmask 7168
    %6208 = vst.msk [vmem:[%s157] sm:$0xff] %vm6207, %v6202
    %6209 = vst.msk [vmem:[%s157 + $0x8] sm:$0xff] %vm6207, %v6205
    // Predicated region
    $region454: #{time_series_transformer.1} parent=1 // pred_check
      _
    $region455: #{time_series_transformer.1} parent=1 // pred_check_branch
      %6211 = sbr.rel (0) target = $region457
    $region456: #{time_series_transformer.1} parent=1 // pred_region
      _
    $region457: #{time_series_transformer.1} parent=1 // pred_fallthru
      _
    // Predicated region
    $region458: #{time_series_transformer.1} parent=1 // pred_check
      _
    $region459: #{time_series_transformer.1} parent=1 // pred_check_branch
      %6213 = sbr.rel (0) target = $region461
    $region460: #{time_series_transformer.1} parent=1 // pred_region
      _
    $region461: #{time_series_transformer.1} parent=1 // pred_fallthru
      _
    %6214 = vsyncpa [#allocation4], 1
    %6215 = vsyncpa [#allocation6], 1
    %6216 = vsyncpa [#allocation9], 1
    %6217 = vsyncpa [#allocation12], 1
    %6218 = vsyncpa [#allocation15], 1
    %6219 = vsyncpa [#allocation18], 1
    %6220 = vsyncpa [#allocation21], 1
    %6221 = vsyncpa [#allocation24], 1
    %6222 = vsyncpa [#allocation27], 1
    %6223 = vsyncpa [#allocation30], 1
    %6224 = vsyncpa [#allocation33], 1
    %6225 = vsyncpa [#allocation36], 1
    %6226 = vsyncpa [#allocation39], 1
    %6227 = vsyncpa [#allocation42], 1
    %6228 = vsyncpa [#allocation45], 1
    %6229 = vsyncpa [#allocation48], 1
    %6230 = vsyncpa [#allocation51], 1
    %6231 = vsyncpa [#allocation54], 1

</llo_original>
